<compile_context>
chip_gen: v5e
topology: v5e:2x2
jax: 0.10.0
libtpu: 0.0.40
codegen_flags: <defaults>
</compile_context>

<pallas_src>
import functools
import math

import jax
import jax.numpy as jnp
from jax.experimental import pallas as pl
from jax.experimental.pallas import tpu as pltpu


# ----------------------------------------------------------------- helpers

def _pick_tile(n, candidates=(256, 128, 64, 32, 16, 8)):
    # Largest token tile that divides N (cap 256 so >=2 tiles feed both TCs).
    for c in candidates:
        if n % c == 0:
            return c
    return n


_VMEM_LIMIT = 48 * 1024 * 1024   # safe on v5e/v6e (128 MiB) and below v7x 64 MiB physical


# ------------------------------------------------------- fused Linear+SwiGLU

def _lin_swiglu_kernel(x_ref, w0_ref, b0_ref, w1_ref, b1_ref, w2_ref, b2_ref, o_ref):
    # h = x @ W0 + b0 ; y = silu(h @ W1 + b1) * (h @ W2 + b2)
    x = x_ref[...]
    h = (jnp.dot(x, w0_ref[...], preferred_element_type=jnp.float32)
         + b0_ref[...]).astype(x.dtype)
    a = jnp.dot(h, w1_ref[...], preferred_element_type=jnp.float32) + b1_ref[...]
    g = jnp.dot(h, w2_ref[...], preferred_element_type=jnp.float32) + b2_ref[...]
    o_ref[...] = (jax.nn.silu(a) * g).astype(o_ref.dtype)


def _lin_swiglu_gate_kernel(x_ref, w0_ref, b0_ref, w1_ref, b1_ref, w2_ref, b2_ref,
                            wgate_ref, o_ref, logits_ref):
    # Same as above, plus router logits = y @ Wgate while y is resident in VMEM.
    x = x_ref[...]
    h = (jnp.dot(x, w0_ref[...], preferred_element_type=jnp.float32)
         + b0_ref[...]).astype(x.dtype)
    a = jnp.dot(h, w1_ref[...], preferred_element_type=jnp.float32) + b1_ref[...]
    g = jnp.dot(h, w2_ref[...], preferred_element_type=jnp.float32) + b2_ref[...]
    y = jax.nn.silu(a) * g
    o_ref[...] = y.astype(o_ref.dtype)
    logits_ref[...] = jnp.dot(y.astype(x.dtype), wgate_ref[...],
                              preferred_element_type=jnp.float32
                              ).astype(logits_ref.dtype)


def linear_swiglu_pallas(x, w0, b0, w1, b1, w2, b2, w_gate=None, *, tm=None):
    n, din = x.shape
    d = w0.shape[1]
    tm = tm or _pick_tile(n)
    assert n % tm == 0
    grid = (n // tm,)

    def full2d(a):
        return pl.BlockSpec(a.shape, lambda i: (0, 0))

    x_spec = pl.BlockSpec((tm, din), lambda i: (i, 0))
    y_spec = pl.BlockSpec((tm, d), lambda i: (i, 0))
    cparams = pltpu.CompilerParams(
        dimension_semantics=("parallel",),          # token tiles shard across TCs
        vmem_limit_bytes=_VMEM_LIMIT)

    if w_gate is None:
        return pl.pallas_call(
            _lin_swiglu_kernel,
            out_shape=jax.ShapeDtypeStruct((n, d), x.dtype),
            grid=grid,
            in_specs=[x_spec, full2d(w0), full2d(b0), full2d(w1), full2d(b1),
                      full2d(w2), full2d(b2)],
            out_specs=y_spec,
            compiler_params=cparams,
        )(x, w0, b0, w1, b1, w2, b2)

    e = w_gate.shape[1]
    return pl.pallas_call(
        _lin_swiglu_gate_kernel,
        out_shape=(jax.ShapeDtypeStruct((n, d), x.dtype),
                   jax.ShapeDtypeStruct((n, e), jnp.float32)),
        grid=grid,
        in_specs=[x_spec, full2d(w0), full2d(b0), full2d(w1), full2d(b1),
                  full2d(w2), full2d(b2), full2d(w_gate)],
        out_specs=(y_spec, pl.BlockSpec((tm, e), lambda i: (i, 0))),
        compiler_params=cparams,
    )(x, w0, b0, w1, b1, w2, b2, w_gate)


# -------------------------------------------------- MoE (routed + shared, fused)

def _moe_kernel(counts_ref,                       # SMEM (n_tiles, E) scalar-prefetch
                x_ref, gate_ref,
                weg_ref, weu_ref, wed_ref,        # routed expert weights (1, D, H)/(1, H, D)
                wsg_ref, wsu_ref, wsd_ref,        # shared-expert weights (full)
                o_ref, acc_ref):
    i = pl.program_id(0)
    e = pl.program_id(1)
    x = x_ref[...]

    @pl.when(e == 0)
    def _init_with_shared():
        # Shared-experts MLP computed once per token tile while x is resident;
        # it initializes the f32 accumulator.
        hs = (jax.nn.silu(jnp.dot(x, wsg_ref[...], preferred_element_type=jnp.float32))
              * jnp.dot(x, wsu_ref[...], preferred_element_type=jnp.float32)
              ).astype(x.dtype)
        acc_ref[...] = jnp.dot(hs, wsd_ref[...], preferred_element_type=jnp.float32)

    @pl.when(counts_ref[i, e] > 0)                # skip experts with no routed tokens
    def _routed():
        h = (jax.nn.silu(jnp.dot(x, weg_ref[0], preferred_element_type=jnp.float32))
             * jnp.dot(x, weu_ref[0], preferred_element_type=jnp.float32)
             ).astype(x.dtype)
        y = jnp.dot(h, wed_ref[0], preferred_element_type=jnp.float32)   # (tm, D)
        acc_ref[...] += gate_ref[0] * y           # gate_ref[0]: (tm, 1) per-token weight

    @pl.when(e == pl.num_programs(1) - 1)
    def _finalize():
        o_ref[...] = acc_ref[...].astype(o_ref.dtype)


def moe_pallas(x, gate_col, counts, weg, weu, wed, wsg, wsu, wsd, *, tm=None):
    n, d = x.shape
    num_experts, _, hidden = weg.shape
    tm = tm or _pick_tile(n)
    n_tiles = n // tm

    grid_spec = pltpu.PrefetchScalarGridSpec(
        num_scalar_prefetch=1,
        grid=(n_tiles, num_experts),
        in_specs=[
            pl.BlockSpec((tm, d), lambda i, e, c: (i, 0)),            # x tile
            pl.BlockSpec((1, tm, 1), lambda i, e, c: (e, i, 0)),      # gate column of expert e
            pl.BlockSpec((1, d, hidden), lambda i, e, c: (e, 0, 0)),  # expert gate proj
            pl.BlockSpec((1, d, hidden), lambda i, e, c: (e, 0, 0)),  # expert up proj
            pl.BlockSpec((1, hidden, d), lambda i, e, c: (e, 0, 0)),  # expert down proj
            pl.BlockSpec(wsg.shape, lambda i, e, c: (0, 0)),          # shared gate proj
            pl.BlockSpec(wsu.shape, lambda i, e, c: (0, 0)),          # shared up proj
            pl.BlockSpec(wsd.shape, lambda i, e, c: (0, 0)),          # shared down proj
        ],
        out_specs=pl.BlockSpec((tm, d), lambda i, e, c: (i, 0)),
        scratch_shapes=[pltpu.VMEM((tm, d), jnp.float32)],            # f32 accumulator
    )
    return pl.pallas_call(
        _moe_kernel,
        out_shape=jax.ShapeDtypeStruct((n, d), x.dtype),
        grid_spec=grid_spec,
        compiler_params=pltpu.CompilerParams(
            dimension_semantics=("parallel", "arbitrary"),
            vmem_limit_bytes=_VMEM_LIMIT),
    )(counts, x, gate_col, weg, weu, wed, wsg, wsu, wsd)


# -------------------------------------------------------------- param setup

def _init_linear(key, fan_in, fan_out, bias=True):
    # torch nn.Linear init bounds; weights stored PRE-TRANSPOSED to (in, out)
    # so kernels feed the MXU without an in-kernel transpose.
    k1, k2 = jax.random.split(key)
    bound = 1.0 / math.sqrt(fan_in)
    w = jax.random.uniform(k1, (fan_in, fan_out), jnp.float32, -bound, bound)
    b = (jax.random.uniform(k2, (1, fan_out), jnp.float32, -bound, bound)
         if bias else None)
    return w, b


def init_moeff_params(key, in_features, out_features, num_ff, num_experts,
                      n_shared_experts=2):
    keys = iter(jax.random.split(key, 256))
    p = {}
    p["lin0"] = _init_linear(next(keys), in_features, out_features)
    p["swiglu0"] = (*_init_linear(next(keys), out_features, out_features),
                    *_init_linear(next(keys), out_features, out_features))

    dim = out_features
    hidden = dim                              # hidden_dim=None -> expert hidden = dim
    E = num_experts
    w_gate, _ = _init_linear(next(keys), dim, E, bias=False)
    weg = jnp.stack([_init_linear(next(keys), dim, hidden, bias=False)[0] for _ in range(E)])
    weu = jnp.stack([_init_linear(next(keys), dim, hidden, bias=False)[0] for _ in range(E)])
    wed = jnp.stack([_init_linear(next(keys), hidden, dim, bias=False)[0] for _ in range(E)])
    sh = hidden * n_shared_experts
    shared = (_init_linear(next(keys), dim, sh, bias=False)[0],
              _init_linear(next(keys), dim, sh, bias=False)[0],
              _init_linear(next(keys), sh, dim, bias=False)[0])
    p["moe"] = dict(w_gate=w_gate, weg=weg, weu=weu, wed=wed, shared=shared)

    tail = []
    for _ in range(max(num_ff - 1, 0)):
        lin = _init_linear(next(keys), out_features, out_features)
        sw = (*_init_linear(next(keys), out_features, out_features),
              *_init_linear(next(keys), out_features, out_features))
        tail.append((lin, sw))
    p["tail"] = tail
    return p


# ----------------------------------------------------------------- forward

def moe_forward(mp, x, logits, top_k):
    # Routing glue (softmax / top_k / scatter) stays in plain JAX; all matmuls run in Pallas.
    n, d = x.shape
    E = mp["weg"].shape[0]

    scores = jax.nn.softmax(logits.astype(jnp.float32), axis=-1)
    topk_w, topk_idx = jax.lax.top_k(scores, top_k)        # greedy top-k, no renorm
    gate_dense = jnp.zeros((n, E), jnp.float32).at[
        jnp.arange(n)[:, None], topk_idx].set(topk_w)      # routed_scaling_factor = 1

    tm = _pick_tile(n)
    n_tiles = n // tm
    # (E, N, 1) layout -> kernel's gate BlockSpec slices one expert column per grid step.
    gate_col = gate_dense.T.reshape(E, n, 1)
    # per-(tile, expert) routed-token counts, scalar-prefetched to SMEM for empty-expert skip
    one_hot = jax.nn.one_hot(topk_idx, E, dtype=jnp.int32).sum(axis=1)      # (N, E)
    counts = one_hot.reshape(n_tiles, tm, E).sum(axis=1).astype(jnp.int32)  # (n_tiles, E)

    return moe_pallas(x, gate_col, counts, mp["weg"], mp["weu"], mp["wed"],
                      *mp["shared"], tm=tm)


@functools.partial(jax.jit, static_argnames=("top_k",))
def moeff_forward(params, x, *, top_k=4):
    B, S, Din = x.shape
    h = x.reshape(B * S, Din)
    # lin0 + swiglu0 fused; the same pass also emits the MoE router logits.
    h, logits = linear_swiglu_pallas(h, *params["lin0"], *params["swiglu0"],
                                     w_gate=params["moe"]["w_gate"])
    h = moe_forward(params["moe"], h, logits, top_k)
    for lin, sw in params["tail"]:
        h = linear_swiglu_pallas(h, *lin, *sw)
    return h.reshape(B, S, -1)


# --------------------------------------------------------------------- main

if __name__ == "__main__":
    key = jax.random.PRNGKey(0)
    k_param, k_x = jax.random.split(key)

    B, S = 2, 256                         # N = B*S = 512 tokens -> 2 token tiles of 256
    in_features, out_features = 128, 128  # 128-multiples -> (8,128)-aligned, lane-dense stores
    num_ff, num_experts = 2, 8

    params = init_moeff_params(k_param, in_features, out_features, num_ff, num_experts)
    x = jax.random.normal(k_x, (B, S, in_features), jnp.float32)

    y = moeff_forward(params, x, top_k=4)
    y = jax.block_until_ready(y)
    assert y.shape == (B, S, out_features) and y.dtype == jnp.float32
    assert bool(jnp.all(jnp.isfinite(y)))
    print("KERNEL_OK")
</pallas_src>

<mosaic_0001>
module attributes {stable_mosaic.version = 11 : i64} {
  func.func @_lin_swiglu_gate_kernel(%arg0: i32, %arg1: memref<256x128xf32, #tpu.memory_space<vmem>>, %arg2: memref<128x128xf32, #tpu.memory_space<vmem>>, %arg3: memref<1x128xf32, #tpu.memory_space<vmem>>, %arg4: memref<128x128xf32, #tpu.memory_space<vmem>>, %arg5: memref<1x128xf32, #tpu.memory_space<vmem>>, %arg6: memref<128x128xf32, #tpu.memory_space<vmem>>, %arg7: memref<1x128xf32, #tpu.memory_space<vmem>>, %arg8: memref<128x8xf32, #tpu.memory_space<vmem>>, %arg9: memref<256x128xf32, #tpu.memory_space<vmem>>, %arg10: memref<256x8xf32, #tpu.memory_space<vmem>>) attributes {dimension_semantics = [#tpu.dimension_semantics<parallel>], iteration_bounds = array<i64: 2>, scalar_prefetch = 0 : i64, scratch_operands = 0 : i64, tpu.core_type = #tpu.core_type<tc>, window_params = [{transform_indices = @transform_0, window_bounds = array<i64: 256, 128>}, {pipeline_mode = #tpu.pipeline_mode<synchronous>, transform_indices = @transform_1, window_bounds = array<i64: 128, 128>}, {pipeline_mode = #tpu.pipeline_mode<synchronous>, transform_indices = @transform_2, window_bounds = array<i64: 1, 128>}, {pipeline_mode = #tpu.pipeline_mode<synchronous>, transform_indices = @transform_3, window_bounds = array<i64: 128, 128>}, {pipeline_mode = #tpu.pipeline_mode<synchronous>, transform_indices = @transform_4, window_bounds = array<i64: 1, 128>}, {pipeline_mode = #tpu.pipeline_mode<synchronous>, transform_indices = @transform_5, window_bounds = array<i64: 128, 128>}, {pipeline_mode = #tpu.pipeline_mode<synchronous>, transform_indices = @transform_6, window_bounds = array<i64: 1, 128>}, {pipeline_mode = #tpu.pipeline_mode<synchronous>, transform_indices = @transform_7, window_bounds = array<i64: 128, 8>}, {transform_indices = @transform_8, window_bounds = array<i64: 256, 128>}, {transform_indices = @transform_9, window_bounds = array<i64: 256, 8>}]} {
    %c0 = arith.constant 0 : index
    %c0_0 = arith.constant 0 : index
    %0 = vector.load %arg1[%c0, %c0_0] : memref<256x128xf32, #tpu.memory_space<vmem>>, vector<256x128xf32>
    %c0_1 = arith.constant 0 : index
    %c0_2 = arith.constant 0 : index
    %1 = vector.load %arg2[%c0_1, %c0_2] : memref<128x128xf32, #tpu.memory_space<vmem>>, vector<128x128xf32>
    %cst = arith.constant dense<0.000000e+00> : vector<256x128xf32>
    %2 = tpu.matmul %0, %1, %cst {dimension_numbers = #tpu.dot_dimension_numbers<[1], [0], [0], [1], [0, 0, 1, 1], [], []>} : vector<256x128xf32>, vector<128x128xf32>, vector<256x128xf32> -> vector<256x128xf32>
    %c0_3 = arith.constant 0 : index
    %c0_4 = arith.constant 0 : index
    %3 = vector.load %arg3[%c0_3, %c0_4] : memref<1x128xf32, #tpu.memory_space<vmem>>, vector<1x128xf32>
    %4 = vector.broadcast %3 : vector<1x128xf32> to vector<256x128xf32>
    %5 = arith.addf %2, %4 : vector<256x128xf32>
    %c0_5 = arith.constant 0 : index
    %c0_6 = arith.constant 0 : index
    %6 = vector.load %arg4[%c0_5, %c0_6] : memref<128x128xf32, #tpu.memory_space<vmem>>, vector<128x128xf32>
    %cst_7 = arith.constant dense<0.000000e+00> : vector<256x128xf32>
    %7 = tpu.matmul %5, %6, %cst_7 {dimension_numbers = #tpu.dot_dimension_numbers<[1], [0], [0], [1], [0, 0, 1, 1], [], []>} : vector<256x128xf32>, vector<128x128xf32>, vector<256x128xf32> -> vector<256x128xf32>
    %c0_8 = arith.constant 0 : index
    %c0_9 = arith.constant 0 : index
    %8 = vector.load %arg5[%c0_8, %c0_9] : memref<1x128xf32, #tpu.memory_space<vmem>>, vector<1x128xf32>
    %9 = vector.broadcast %8 : vector<1x128xf32> to vector<256x128xf32>
    %10 = arith.addf %7, %9 : vector<256x128xf32>
    %c0_10 = arith.constant 0 : index
    %c0_11 = arith.constant 0 : index
    %11 = vector.load %arg6[%c0_10, %c0_11] : memref<128x128xf32, #tpu.memory_space<vmem>>, vector<128x128xf32>
    %cst_12 = arith.constant dense<0.000000e+00> : vector<256x128xf32>
    %12 = tpu.matmul %5, %11, %cst_12 {dimension_numbers = #tpu.dot_dimension_numbers<[1], [0], [0], [1], [0, 0, 1, 1], [], []>} : vector<256x128xf32>, vector<128x128xf32>, vector<256x128xf32> -> vector<256x128xf32>
    %c0_13 = arith.constant 0 : index
    %c0_14 = arith.constant 0 : index
    %13 = vector.load %arg7[%c0_13, %c0_14] : memref<1x128xf32, #tpu.memory_space<vmem>>, vector<1x128xf32>
    %14 = vector.broadcast %13 : vector<1x128xf32> to vector<256x128xf32>
    %15 = arith.addf %12, %14 : vector<256x128xf32>
    %16 = arith.negf %10 : vector<256x128xf32>
    %17 = math.exp %16 : vector<256x128xf32>
    %cst_15 = arith.constant 1.000000e+00 : f32
    %18 = vector.broadcast %cst_15 : f32 to vector<256x128xf32>
    %19 = arith.addf %18, %17 : vector<256x128xf32>
    %20 = arith.divf %18, %19 : vector<256x128xf32>
    %21 = arith.mulf %10, %20 : vector<256x128xf32>
    %22 = arith.mulf %21, %15 : vector<256x128xf32>
    %c0_16 = arith.constant 0 : index
    %c0_17 = arith.constant 0 : index
    %23 = vector.load %arg9[%c0_16, %c0_17] : memref<256x128xf32, #tpu.memory_space<vmem>>, vector<256x128xf32>
    tpu.vector_store %arg9[%c0_16, %c0_17], %22 {strides = array<i32>} : memref<256x128xf32, #tpu.memory_space<vmem>>, vector<256x128xf32>,
    %c0_18 = arith.constant 0 : index
    %c0_19 = arith.constant 0 : index
    %24 = vector.load %arg8[%c0_18, %c0_19] : memref<128x8xf32, #tpu.memory_space<vmem>>, vector<128x8xf32>
    %cst_20 = arith.constant dense<0.000000e+00> : vector<256x8xf32>
    %25 = tpu.matmul %22, %24, %cst_20 {dimension_numbers = #tpu.dot_dimension_numbers<[1], [0], [0], [1], [0, 0, 1, 1], [], []>} : vector<256x128xf32>, vector<128x8xf32>, vector<256x8xf32> -> vector<256x8xf32>
    %c0_21 = arith.constant 0 : index
    %c0_22 = arith.constant 0 : index
    %26 = vector.load %arg10[%c0_21, %c0_22] : memref<256x8xf32, #tpu.memory_space<vmem>>, vector<256x8xf32>
    tpu.vector_store %arg10[%c0_21, %c0_22], %25 {strides = array<i32>} : memref<256x8xf32, #tpu.memory_space<vmem>>, vector<256x8xf32>,
    return
  }
  func.func @transform_0(%arg0: i32) -> (i32, i32) {
    %c0_i32 = arith.constant 0 : i32
    %c0_i32_0 = arith.constant 0 : i32
    return %arg0, %c0_i32 : i32, i32
  }
  func.func @transform_1(%arg0: i32) -> (i32, i32) {
    %c0_i32 = arith.constant 0 : i32
    %c0_i32_0 = arith.constant 0 : i32
    %c0_i32_1 = arith.constant 0 : i32
    return %c0_i32, %c0_i32_0 : i32, i32
  }
  func.func @transform_2(%arg0: i32) -> (i32, i32) {
    %c0_i32 = arith.constant 0 : i32
    %c0_i32_0 = arith.constant 0 : i32
    %c0_i32_1 = arith.constant 0 : i32
    return %c0_i32, %c0_i32_0 : i32, i32
  }
  func.func @transform_3(%arg0: i32) -> (i32, i32) {
    %c0_i32 = arith.constant 0 : i32
    %c0_i32_0 = arith.constant 0 : i32
    %c0_i32_1 = arith.constant 0 : i32
    return %c0_i32, %c0_i32_0 : i32, i32
  }
  func.func @transform_4(%arg0: i32) -> (i32, i32) {
    %c0_i32 = arith.constant 0 : i32
    %c0_i32_0 = arith.constant 0 : i32
    %c0_i32_1 = arith.constant 0 : i32
    return %c0_i32, %c0_i32_0 : i32, i32
  }
  func.func @transform_5(%arg0: i32) -> (i32, i32) {
    %c0_i32 = arith.constant 0 : i32
    %c0_i32_0 = arith.constant 0 : i32
    %c0_i32_1 = arith.constant 0 : i32
    return %c0_i32, %c0_i32_0 : i32, i32
  }
  func.func @transform_6(%arg0: i32) -> (i32, i32) {
    %c0_i32 = arith.constant 0 : i32
    %c0_i32_0 = arith.constant 0 : i32
    %c0_i32_1 = arith.constant 0 : i32
    return %c0_i32, %c0_i32_0 : i32, i32
  }
  func.func @transform_7(%arg0: i32) -> (i32, i32) {
    %c0_i32 = arith.constant 0 : i32
    %c0_i32_0 = arith.constant 0 : i32
    %c0_i32_1 = arith.constant 0 : i32
    return %c0_i32, %c0_i32_0 : i32, i32
  }
  func.func @transform_8(%arg0: i32) -> (i32, i32) {
    %c0_i32 = arith.constant 0 : i32
    %c0_i32_0 = arith.constant 0 : i32
    return %arg0, %c0_i32 : i32, i32
  }
  func.func @transform_9(%arg0: i32) -> (i32, i32) {
    %c0_i32 = arith.constant 0 : i32
    %c0_i32_0 = arith.constant 0 : i32
    return %arg0, %c0_i32 : i32, i32
  }
}

module attributes {stable_mosaic.version = 11 : i64} {
  func.func @_moe_kernel(%arg0: i32, %arg1: i32, %arg2: memref<2x8xi32, #tpu.memory_space<smem>>, %arg3: memref<256x128xf32, #tpu.memory_space<vmem>>, %arg4: memref<1x256x1xf32, #tpu.memory_space<vmem>>, %arg5: memref<1x128x128xf32, #tpu.memory_space<vmem>>, %arg6: memref<1x128x128xf32, #tpu.memory_space<vmem>>, %arg7: memref<1x128x128xf32, #tpu.memory_space<vmem>>, %arg8: memref<128x256xf32, #tpu.memory_space<vmem>>, %arg9: memref<128x256xf32, #tpu.memory_space<vmem>>, %arg10: memref<256x128xf32, #tpu.memory_space<vmem>>, %arg11: memref<256x128xf32, #tpu.memory_space<vmem>>, %arg12: memref<256x128xf32, #tpu.memory_space<vmem>>) attributes {dimension_semantics = [#tpu.dimension_semantics<parallel>, #tpu.dimension_semantics<arbitrary>], iteration_bounds = array<i64: 2, 8>, scalar_prefetch = 1 : i64, scratch_operands = 1 : i64, tpu.core_type = #tpu.core_type<tc>, window_params = [{transform_indices = @transform_0, window_bounds = array<i64: 256, 128>}, {transform_indices = @transform_1, window_bounds = array<i64: 1, 256, 1>}, {transform_indices = @transform_2, window_bounds = array<i64: 1, 128, 128>}, {transform_indices = @transform_3, window_bounds = array<i64: 1, 128, 128>}, {transform_indices = @transform_4, window_bounds = array<i64: 1, 128, 128>}, {pipeline_mode = #tpu.pipeline_mode<synchronous>, transform_indices = @transform_5, window_bounds = array<i64: 128, 256>}, {pipeline_mode = #tpu.pipeline_mode<synchronous>, transform_indices = @transform_6, window_bounds = array<i64: 128, 256>}, {pipeline_mode = #tpu.pipeline_mode<synchronous>, transform_indices = @transform_7, window_bounds = array<i64: 256, 128>}, {transform_indices = @transform_8, window_bounds = array<i64: 256, 128>}]} {
    %c0 = arith.constant 0 : index
    %c0_0 = arith.constant 0 : index
    %0 = vector.load %arg3[%c0, %c0_0] : memref<256x128xf32, #tpu.memory_space<vmem>>, vector<256x128xf32>
    %c0_i32 = arith.constant 0 : i32
    %1 = arith.cmpi eq, %arg1, %c0_i32 : i32
    %2 = arith.extui %1 : i1 to i32
    %c0_i32_1 = arith.constant 0 : i32
    %3 = arith.cmpi ne, %2, %c0_i32_1 : i32
    scf.if %3 {
      %c0_5 = arith.constant 0 : index
      %c0_6 = arith.constant 0 : index
      %13 = vector.load %arg8[%c0_5, %c0_6] : memref<128x256xf32, #tpu.memory_space<vmem>>, vector<128x256xf32>
      %cst = arith.constant dense<0.000000e+00> : vector<256x256xf32>
      %14 = tpu.matmul %0, %13, %cst {dimension_numbers = #tpu.dot_dimension_numbers<[1], [0], [0], [1], [0, 0, 1, 1], [], []>} : vector<256x128xf32>, vector<128x256xf32>, vector<256x256xf32> -> vector<256x256xf32>
      %15 = arith.negf %14 : vector<256x256xf32>
      %16 = math.exp %15 : vector<256x256xf32>
      %cst_7 = arith.constant 1.000000e+00 : f32
      %17 = vector.broadcast %cst_7 : f32 to vector<256x256xf32>
      %18 = arith.addf %17, %16 : vector<256x256xf32>
      %19 = arith.divf %17, %18 : vector<256x256xf32>
      %20 = arith.mulf %14, %19 : vector<256x256xf32>
      %c0_8 = arith.constant 0 : index
      %c0_9 = arith.constant 0 : index
      %21 = vector.load %arg9[%c0_8, %c0_9] : memref<128x256xf32, #tpu.memory_space<vmem>>, vector<128x256xf32>
      %cst_10 = arith.constant dense<0.000000e+00> : vector<256x256xf32>
      %22 = tpu.matmul %0, %21, %cst_10 {dimension_numbers = #tpu.dot_dimension_numbers<[1], [0], [0], [1], [0, 0, 1, 1], [], []>} : vector<256x128xf32>, vector<128x256xf32>, vector<256x256xf32> -> vector<256x256xf32>
      %23 = arith.mulf %20, %22 : vector<256x256xf32>
      %c0_11 = arith.constant 0 : index
      %c0_12 = arith.constant 0 : index
      %24 = vector.load %arg10[%c0_11, %c0_12] : memref<256x128xf32, #tpu.memory_space<vmem>>, vector<256x128xf32>
      %cst_13 = arith.constant dense<0.000000e+00> : vector<256x128xf32>
      %25 = tpu.matmul %23, %24, %cst_13 {dimension_numbers = #tpu.dot_dimension_numbers<[1], [0], [0], [1], [0, 0, 1, 1], [], []>} : vector<256x256xf32>, vector<256x128xf32>, vector<256x128xf32> -> vector<256x128xf32>
      %c0_14 = arith.constant 0 : index
      %c0_15 = arith.constant 0 : index
      %26 = vector.load %arg12[%c0_14, %c0_15] : memref<256x128xf32, #tpu.memory_space<vmem>>, vector<256x128xf32>
      tpu.vector_store %arg12[%c0_14, %c0_15], %25 {strides = array<i32>} : memref<256x128xf32, #tpu.memory_space<vmem>>, vector<256x128xf32>,
    } else {
    }
    %4 = arith.index_cast %arg0 : i32 to index
    %5 = arith.index_cast %arg1 : i32 to index
    %6 = memref.load %arg2[%4, %5] : memref<2x8xi32, #tpu.memory_space<smem>>
    %c0_i32_2 = arith.constant 0 : i32
    %7 = arith.cmpi sgt, %6, %c0_i32_2 : i32
    %8 = arith.extui %7 : i1 to i32
    %c0_i32_3 = arith.constant 0 : i32
    %9 = arith.cmpi ne, %8, %c0_i32_3 : i32
    scf.if %9 {
      %c0_5 = arith.constant 0 : index
      %c0_6 = arith.constant 0 : index
      %c0_7 = arith.constant 0 : index
      %13 = vector.load %arg5[%c0_5, %c0_6, %c0_7] : memref<1x128x128xf32, #tpu.memory_space<vmem>>, vector<1x128x128xf32>
      %14 = vector.shape_cast %13 : vector<1x128x128xf32> to vector<128x128xf32>
      %cst = arith.constant dense<0.000000e+00> : vector<256x128xf32>
      %15 = tpu.matmul %0, %14, %cst {dimension_numbers = #tpu.dot_dimension_numbers<[1], [0], [0], [1], [0, 0, 1, 1], [], []>} : vector<256x128xf32>, vector<128x128xf32>, vector<256x128xf32> -> vector<256x128xf32>
      %16 = arith.negf %15 : vector<256x128xf32>
      %17 = math.exp %16 : vector<256x128xf32>
      %cst_8 = arith.constant 1.000000e+00 : f32
      %18 = vector.broadcast %cst_8 : f32 to vector<256x128xf32>
      %19 = arith.addf %18, %17 : vector<256x128xf32>
      %20 = arith.divf %18, %19 : vector<256x128xf32>
      %21 = arith.mulf %15, %20 : vector<256x128xf32>
      %c0_9 = arith.constant 0 : index
      %c0_10 = arith.constant 0 : index
      %c0_11 = arith.constant 0 : index
      %22 = vector.load %arg6[%c0_9, %c0_10, %c0_11] : memref<1x128x128xf32, #tpu.memory_space<vmem>>, vector<1x128x128xf32>
      %23 = vector.shape_cast %22 : vector<1x128x128xf32> to vector<128x128xf32>
      %cst_12 = arith.constant dense<0.000000e+00> : vector<256x128xf32>
      %24 = tpu.matmul %0, %23, %cst_12 {dimension_numbers = #tpu.dot_dimension_numbers<[1], [0], [0], [1], [0, 0, 1, 1], [], []>} : vector<256x128xf32>, vector<128x128xf32>, vector<256x128xf32> -> vector<256x128xf32>
      %25 = arith.mulf %21, %24 : vector<256x128xf32>
      %c0_13 = arith.constant 0 : index
      %c0_14 = arith.constant 0 : index
      %c0_15 = arith.constant 0 : index
      %26 = vector.load %arg7[%c0_13, %c0_14, %c0_15] : memref<1x128x128xf32, #tpu.memory_space<vmem>>, vector<1x128x128xf32>
      %27 = vector.shape_cast %26 : vector<1x128x128xf32> to vector<128x128xf32>
      %cst_16 = arith.constant dense<0.000000e+00> : vector<256x128xf32>
      %28 = tpu.matmul %25, %27, %cst_16 {dimension_numbers = #tpu.dot_dimension_numbers<[1], [0], [0], [1], [0, 0, 1, 1], [], []>} : vector<256x128xf32>, vector<128x128xf32>, vector<256x128xf32> -> vector<256x128xf32>
      %c0_17 = arith.constant 0 : index
      %c0_18 = arith.constant 0 : index
      %29 = vector.load %arg12[%c0_17, %c0_18] : memref<256x128xf32, #tpu.memory_space<vmem>>, vector<256x128xf32>
      %c0_19 = arith.constant 0 : index
      %c0_20 = arith.constant 0 : index
      %c0_21 = arith.constant 0 : index
      %30 = vector.load %arg4[%c0_19, %c0_20, %c0_21] : memref<1x256x1xf32, #tpu.memory_space<vmem>>, vector<1x256x1xf32>
      %31 = vector.shape_cast %30 : vector<1x256x1xf32> to vector<256x1xf32>
      %32 = vector.broadcast %31 : vector<256x1xf32> to vector<256x128xf32>
      %33 = arith.mulf %32, %28 : vector<256x128xf32>
      %34 = arith.addf %29, %33 : vector<256x128xf32>
      %c0_22 = arith.constant 0 : index
      %c0_23 = arith.constant 0 : index
      %35 = vector.load %arg12[%c0_22, %c0_23] : memref<256x128xf32, #tpu.memory_space<vmem>>, vector<256x128xf32>
      tpu.vector_store %arg12[%c0_22, %c0_23], %34 {strides = array<i32>} : memref<256x128xf32, #tpu.memory_space<vmem>>, vector<256x128xf32>,
    } else {
    }
    %c7_i32 = arith.constant 7 : i32
    %10 = arith.cmpi eq, %arg1, %c7_i32 : i32
    %11 = arith.extui %10 : i1 to i32
    %c0_i32_4 = arith.constant 0 : i32
    %12 = arith.cmpi ne, %11, %c0_i32_4 : i32
    scf.if %12 {
      %c0_5 = arith.constant 0 : index
      %c0_6 = arith.constant 0 : index
      %13 = vector.load %arg12[%c0_5, %c0_6] : memref<256x128xf32, #tpu.memory_space<vmem>>, vector<256x128xf32>
      %c0_7 = arith.constant 0 : index
      %c0_8 = arith.constant 0 : index
      %14 = vector.load %arg11[%c0_7, %c0_8] : memref<256x128xf32, #tpu.memory_space<vmem>>, vector<256x128xf32>
      tpu.vector_store %arg11[%c0_7, %c0_8], %13 {strides = array<i32>} : memref<256x128xf32, #tpu.memory_space<vmem>>, vector<256x128xf32>,
    } else {
    }
    return
  }
  func.func @transform_0(%arg0: i32, %arg1: i32, %arg2: memref<2x8xi32, #tpu.memory_space<smem>>) -> (i32, i32) {
    %c0_i32 = arith.constant 0 : i32
    %c0_i32_0 = arith.constant 0 : i32
    return %arg0, %c0_i32 : i32, i32
  }
  func.func @transform_1(%arg0: i32, %arg1: i32, %arg2: memref<2x8xi32, #tpu.memory_space<smem>>) -> (i32, i32, i32) {
    %c0_i32 = arith.constant 0 : i32
    %c0_i32_0 = arith.constant 0 : i32
    return %arg1, %arg0, %c0_i32 : i32, i32, i32
  }
  func.func @transform_2(%arg0: i32, %arg1: i32, %arg2: memref<2x8xi32, #tpu.memory_space<smem>>) -> (i32, i32, i32) {
    %c0_i32 = arith.constant 0 : i32
    %c0_i32_0 = arith.constant 0 : i32
    %c0_i32_1 = arith.constant 0 : i32
    return %arg1, %c0_i32, %c0_i32_0 : i32, i32, i32
  }
  func.func @transform_3(%arg0: i32, %arg1: i32, %arg2: memref<2x8xi32, #tpu.memory_space<smem>>) -> (i32, i32, i32) {
    %c0_i32 = arith.constant 0 : i32
    %c0_i32_0 = arith.constant 0 : i32
    %c0_i32_1 = arith.constant 0 : i32
    return %arg1, %c0_i32, %c0_i32_0 : i32, i32, i32
  }
  func.func @transform_4(%arg0: i32, %arg1: i32, %arg2: memref<2x8xi32, #tpu.memory_space<smem>>) -> (i32, i32, i32) {
    %c0_i32 = arith.constant 0 : i32
    %c0_i32_0 = arith.constant 0 : i32
    %c0_i32_1 = arith.constant 0 : i32
    return %arg1, %c0_i32, %c0_i32_0 : i32, i32, i32
  }
  func.func @transform_5(%arg0: i32, %arg1: i32, %arg2: memref<2x8xi32, #tpu.memory_space<smem>>) -> (i32, i32) {
    %c0_i32 = arith.constant 0 : i32
    %c0_i32_0 = arith.constant 0 : i32
    %c0_i32_1 = arith.constant 0 : i32
    return %c0_i32, %c0_i32_0 : i32, i32
  }
  func.func @transform_6(%arg0: i32, %arg1: i32, %arg2: memref<2x8xi32, #tpu.memory_space<smem>>) -> (i32, i32) {
    %c0_i32 = arith.constant 0 : i32
    %c0_i32_0 = arith.constant 0 : i32
    %c0_i32_1 = arith.constant 0 : i32
    return %c0_i32, %c0_i32_0 : i32, i32
  }
  func.func @transform_7(%arg0: i32, %arg1: i32, %arg2: memref<2x8xi32, #tpu.memory_space<smem>>) -> (i32, i32) {
    %c0_i32 = arith.constant 0 : i32
    %c0_i32_0 = arith.constant 0 : i32
    %c0_i32_1 = arith.constant 0 : i32
    return %c0_i32, %c0_i32_0 : i32, i32
  }
  func.func @transform_8(%arg0: i32, %arg1: i32, %arg2: memref<2x8xi32, #tpu.memory_space<smem>>) -> (i32, i32) {
    %c0_i32 = arith.constant 0 : i32
    %c0_i32_0 = arith.constant 0 : i32
    return %arg0, %c0_i32 : i32, i32
  }
}

module attributes {stable_mosaic.version = 11 : i64} {
  func.func @_lin_swiglu_kernel(%arg0: i32, %arg1: memref<256x128xf32, #tpu.memory_space<vmem>>, %arg2: memref<128x128xf32, #tpu.memory_space<vmem>>, %arg3: memref<1x128xf32, #tpu.memory_space<vmem>>, %arg4: memref<128x128xf32, #tpu.memory_space<vmem>>, %arg5: memref<1x128xf32, #tpu.memory_space<vmem>>, %arg6: memref<128x128xf32, #tpu.memory_space<vmem>>, %arg7: memref<1x128xf32, #tpu.memory_space<vmem>>, %arg8: memref<256x128xf32, #tpu.memory_space<vmem>>) attributes {dimension_semantics = [#tpu.dimension_semantics<parallel>], iteration_bounds = array<i64: 2>, scalar_prefetch = 0 : i64, scratch_operands = 0 : i64, tpu.core_type = #tpu.core_type<tc>, window_params = [{transform_indices = @transform_0, window_bounds = array<i64: 256, 128>}, {pipeline_mode = #tpu.pipeline_mode<synchronous>, transform_indices = @transform_1, window_bounds = array<i64: 128, 128>}, {pipeline_mode = #tpu.pipeline_mode<synchronous>, transform_indices = @transform_2, window_bounds = array<i64: 1, 128>}, {pipeline_mode = #tpu.pipeline_mode<synchronous>, transform_indices = @transform_3, window_bounds = array<i64: 128, 128>}, {pipeline_mode = #tpu.pipeline_mode<synchronous>, transform_indices = @transform_4, window_bounds = array<i64: 1, 128>}, {pipeline_mode = #tpu.pipeline_mode<synchronous>, transform_indices = @transform_5, window_bounds = array<i64: 128, 128>}, {pipeline_mode = #tpu.pipeline_mode<synchronous>, transform_indices = @transform_6, window_bounds = array<i64: 1, 128>}, {transform_indices = @transform_7, window_bounds = array<i64: 256, 128>}]} {
    %c0 = arith.constant 0 : index
    %c0_0 = arith.constant 0 : index
    %0 = vector.load %arg1[%c0, %c0_0] : memref<256x128xf32, #tpu.memory_space<vmem>>, vector<256x128xf32>
    %c0_1 = arith.constant 0 : index
    %c0_2 = arith.constant 0 : index
    %1 = vector.load %arg2[%c0_1, %c0_2] : memref<128x128xf32, #tpu.memory_space<vmem>>, vector<128x128xf32>
    %cst = arith.constant dense<0.000000e+00> : vector<256x128xf32>
    %2 = tpu.matmul %0, %1, %cst {dimension_numbers = #tpu.dot_dimension_numbers<[1], [0], [0], [1], [0, 0, 1, 1], [], []>} : vector<256x128xf32>, vector<128x128xf32>, vector<256x128xf32> -> vector<256x128xf32>
    %c0_3 = arith.constant 0 : index
    %c0_4 = arith.constant 0 : index
    %3 = vector.load %arg3[%c0_3, %c0_4] : memref<1x128xf32, #tpu.memory_space<vmem>>, vector<1x128xf32>
    %4 = vector.broadcast %3 : vector<1x128xf32> to vector<256x128xf32>
    %5 = arith.addf %2, %4 : vector<256x128xf32>
    %c0_5 = arith.constant 0 : index
    %c0_6 = arith.constant 0 : index
    %6 = vector.load %arg4[%c0_5, %c0_6] : memref<128x128xf32, #tpu.memory_space<vmem>>, vector<128x128xf32>
    %cst_7 = arith.constant dense<0.000000e+00> : vector<256x128xf32>
    %7 = tpu.matmul %5, %6, %cst_7 {dimension_numbers = #tpu.dot_dimension_numbers<[1], [0], [0], [1], [0, 0, 1, 1], [], []>} : vector<256x128xf32>, vector<128x128xf32>, vector<256x128xf32> -> vector<256x128xf32>
    %c0_8 = arith.constant 0 : index
    %c0_9 = arith.constant 0 : index
    %8 = vector.load %arg5[%c0_8, %c0_9] : memref<1x128xf32, #tpu.memory_space<vmem>>, vector<1x128xf32>
    %9 = vector.broadcast %8 : vector<1x128xf32> to vector<256x128xf32>
    %10 = arith.addf %7, %9 : vector<256x128xf32>
    %c0_10 = arith.constant 0 : index
    %c0_11 = arith.constant 0 : index
    %11 = vector.load %arg6[%c0_10, %c0_11] : memref<128x128xf32, #tpu.memory_space<vmem>>, vector<128x128xf32>
    %cst_12 = arith.constant dense<0.000000e+00> : vector<256x128xf32>
    %12 = tpu.matmul %5, %11, %cst_12 {dimension_numbers = #tpu.dot_dimension_numbers<[1], [0], [0], [1], [0, 0, 1, 1], [], []>} : vector<256x128xf32>, vector<128x128xf32>, vector<256x128xf32> -> vector<256x128xf32>
    %c0_13 = arith.constant 0 : index
    %c0_14 = arith.constant 0 : index
    %13 = vector.load %arg7[%c0_13, %c0_14] : memref<1x128xf32, #tpu.memory_space<vmem>>, vector<1x128xf32>
    %14 = vector.broadcast %13 : vector<1x128xf32> to vector<256x128xf32>
    %15 = arith.addf %12, %14 : vector<256x128xf32>
    %16 = arith.negf %10 : vector<256x128xf32>
    %17 = math.exp %16 : vector<256x128xf32>
    %cst_15 = arith.constant 1.000000e+00 : f32
    %18 = vector.broadcast %cst_15 : f32 to vector<256x128xf32>
    %19 = arith.addf %18, %17 : vector<256x128xf32>
    %20 = arith.divf %18, %19 : vector<256x128xf32>
    %21 = arith.mulf %10, %20 : vector<256x128xf32>
    %22 = arith.mulf %21, %15 : vector<256x128xf32>
    %c0_16 = arith.constant 0 : index
    %c0_17 = arith.constant 0 : index
    %23 = vector.load %arg8[%c0_16, %c0_17] : memref<256x128xf32, #tpu.memory_space<vmem>>, vector<256x128xf32>
    tpu.vector_store %arg8[%c0_16, %c0_17], %22 {strides = array<i32>} : memref<256x128xf32, #tpu.memory_space<vmem>>, vector<256x128xf32>,
    return
  }
  func.func @transform_0(%arg0: i32) -> (i32, i32) {
    %c0_i32 = arith.constant 0 : i32
    %c0_i32_0 = arith.constant 0 : i32
    return %arg0, %c0_i32 : i32, i32
  }
  func.func @transform_1(%arg0: i32) -> (i32, i32) {
    %c0_i32 = arith.constant 0 : i32
    %c0_i32_0 = arith.constant 0 : i32
    %c0_i32_1 = arith.constant 0 : i32
    return %c0_i32, %c0_i32_0 : i32, i32
  }
  func.func @transform_2(%arg0: i32) -> (i32, i32) {
    %c0_i32 = arith.constant 0 : i32
    %c0_i32_0 = arith.constant 0 : i32
    %c0_i32_1 = arith.constant 0 : i32
    return %c0_i32, %c0_i32_0 : i32, i32
  }
  func.func @transform_3(%arg0: i32) -> (i32, i32) {
    %c0_i32 = arith.constant 0 : i32
    %c0_i32_0 = arith.constant 0 : i32
    %c0_i32_1 = arith.constant 0 : i32
    return %c0_i32, %c0_i32_0 : i32, i32
  }
  func.func @transform_4(%arg0: i32) -> (i32, i32) {
    %c0_i32 = arith.constant 0 : i32
    %c0_i32_0 = arith.constant 0 : i32
    %c0_i32_1 = arith.constant 0 : i32
    return %c0_i32, %c0_i32_0 : i32, i32
  }
  func.func @transform_5(%arg0: i32) -> (i32, i32) {
    %c0_i32 = arith.constant 0 : i32
    %c0_i32_0 = arith.constant 0 : i32
    %c0_i32_1 = arith.constant 0 : i32
    return %c0_i32, %c0_i32_0 : i32, i32
  }
  func.func @transform_6(%arg0: i32) -> (i32, i32) {
    %c0_i32 = arith.constant 0 : i32
    %c0_i32_0 = arith.constant 0 : i32
    %c0_i32_1 = arith.constant 0 : i32
    return %c0_i32, %c0_i32_0 : i32, i32
  }
  func.func @transform_7(%arg0: i32) -> (i32, i32) {
    %c0_i32 = arith.constant 0 : i32
    %c0_i32_0 = arith.constant 0 : i32
    return %arg0, %c0_i32 : i32, i32
  }
}

</mosaic_0001>

<llo_original>
// kernel: moeff_forward.3
$region0: #{moeff_forward.3}
  #allocation0 [shape = 'u32[]', space=smem, size = 0x4, offset = 0x4, fixed_abs, tag = 'smem constant byte address 0x4 - core index']
  #allocation1 [shape = 'u32[72,128]{1,0:T(1,128)}', space=vmem, size = 0x9000, scoped, tag = 'internal scratch']
  %s0 = inlined_call_operand.hbm [shape: f32[512,128], index: 0, kind: input, shape index: {}]
  %s1 = inlined_call_operand.hbm [shape: f32[128,128], index: 1, kind: input, shape index: {}]
  %s2 = inlined_call_operand.hbm [shape: f32[1,128], index: 2, kind: input, shape index: {}]
  %s3 = inlined_call_operand.hbm [shape: f32[128,128], index: 3, kind: input, shape index: {}]
  %s4 = inlined_call_operand.hbm [shape: f32[1,128], index: 4, kind: input, shape index: {}]
  %s5 = inlined_call_operand.hbm [shape: f32[128,128], index: 5, kind: input, shape index: {}]
  %s6 = inlined_call_operand.hbm [shape: f32[1,128], index: 6, kind: input, shape index: {}]
  %s7 = inlined_call_operand.vmem [shape: f32[128,8], index: 7, kind: input, shape index: {}]
  %s8 = inlined_call_operand.vmem [shape: f32[512,128], index: 8, kind: output, shape index: {0}]
  %s9 = inlined_call_operand.vmem [shape: f32[512,8], index: 9, kind: output, shape index: {1}]
  %10 = xla_tuple %s8, %s9
  %s11 = sld [smem:[#allocation0]]
  $region101: #{moeff_forward.3} parent=0
    _
  %s13 = ssub.s32 1, %s11
  %s14 = scalar_select 0, %s13, %s11
  $region1: #{moeff_forward.3} parent=0
    #allocation2 [shape = 'u8[262144]{0}', space=vmem, size = 0x40000, scoped, tag = 'input window, operand 0']
    #allocation3 [shape = 's32[2]{0}', space=sflag, size = 0x8, scoped, tag = 'scoped memory for moeff_forward.3']
    #allocation4 [shape = 'u8[65536]{0}', space=vmem, size = 0x10000, scoped, tag = 'input window, operand 1, single buffered']
    #allocation5 [shape = 's32[1]{0}', space=sflag, size = 0x4, scoped, tag = 'scoped memory for moeff_forward.3']
    #allocation6 [shape = 'u8[512]{0}', space=vmem, size = 0x400, scoped, tag = 'input window, operand 2, single buffered']
    #allocation7 [shape = 'u8[65536]{0}', space=vmem, size = 0x10000, scoped, tag = 'input window, operand 3, single buffered']
    #allocation8 [shape = 's32[1]{0}', space=sflag, size = 0x4, scoped, tag = 'scoped memory for moeff_forward.3']
    #allocation9 [shape = 'u8[512]{0}', space=vmem, size = 0x400, scoped, tag = 'input window, operand 4, single buffered']
    #allocation10 [shape = 'u8[65536]{0}', space=vmem, size = 0x10000, scoped, tag = 'input window, operand 5, single buffered']
    #allocation11 [shape = 's32[1]{0}', space=sflag, size = 0x4, scoped, tag = 'scoped memory for moeff_forward.3']
    #allocation12 [shape = 'u8[512]{0}', space=vmem, size = 0x400, scoped, tag = 'input window, operand 6, single buffered']
    %15 = vsyncpa [#allocation3], 0
    %s16 = scalar_lea.sflag [#allocation3], 1
    %17 = vsyncpa %s16, 0
    %18 = vsyncpa [#allocation5], 0
    %19 = vsyncpa [#allocation8], 0
    %20 = vsyncpa [#allocation11], 0
    loop: start=0, step=1, limit=4
    $region2: #{moeff_forward.3} parent=1 // loop_pre_header
      _
    $region3: #{moeff_forward.3} parent=1 // loop_header
      %s22 = sphi 0, %s26
      %p23 = scmp.ge.s32.totalorder %s22, 4
      %s32 = sphi 0, %s34
      %s35 = sphi 0, %s32
      %s36 = sphi 0, %s35
      %s52 = sphi 0, %s36
      %s56 = sphi 0, %s56
      %s58 = sphi 0, %s56
      %s59 = sphi 0, %s58
      %s73 = sphi 0, %s59
      %s77 = sphi 0, %s77
      %s79 = sphi 0, %s77
      %s80 = sphi 0, %s79
      %s94 = sphi 0, %s80
      %s98 = sphi 0, %s98
      %s100 = sphi 0, %s98
      %s101 = sphi 0, %s100
      %s115 = sphi 0, %s101
      %s119 = sphi 0, %s119
      %s121 = sphi 0, %s119
      %s122 = sphi 0, %s121
      %s136 = sphi 0, %s122
      %s140 = sphi 0, %s140
      %s142 = sphi 0, %s140
      %s143 = sphi 0, %s142
      %s157 = sphi 0, %s143
      %s161 = sphi 0, %s161
      %s163 = sphi 0, %s161
      %s164 = sphi 0, %s163
      %s178 = sphi 0, %s164
      %s182 = sphi 0, %s182
      %s184 = sphi 0, %s182
      %s185 = sphi 0, %s184
      %s199 = sphi 0, %s185
      %s205 = sphi 0, %s207
      %s208 = sphi 0, %s205
      %s209 = sphi 0, %s208
      %s225 = sphi 0, %s209
      %s231 = sphi 0, %s233
      %s234 = sphi 0, %s231
      %s235 = sphi 0, %s234
      %s251 = sphi 0, %s235
    $region4: #{moeff_forward.3} parent=1 // loop_header_branch
      %25 = sbr.rel (%p23) target = $region8
    $region5: #{moeff_forward.3} parent=1 // loop_body
      %s27 = ssub.s32 %s22, 1
      %s28 = ssub.s32 %s22, 2
      %s29 = sadd.s32 %s22, 1
      %s30 = ssub.s32 %s22, %s29
      %p31 = scmp.eq.s32.totalorder %s30, 0
      %s33 = sadd.s32 %s32, 1
      %s34 = scalar_select %p31, %s32, %s33
      %p37 = pneg %p31
      %p38 = scmp.eq.s32.totalorder %s22, 1
      %p39 = por %p37, %p38
      %p40 = scmp.ne.s32.totalorder %s32, %s35
      %p41 = scmp.eq.s32.totalorder %s22, 0
      %p42 = por %p40, %p41
      %p43 = scmp.ne.s32.totalorder %s32, %s35
      %p44 = scmp.eq.s32.totalorder %s27, 1
      %p45 = por %p43, %p44
      %p46 = scmp.ne.s32.totalorder %s35, %s36
      %p47 = scmp.eq.s32.totalorder %s27, 0
      %p48 = por %p46, %p47
      %p49 = scmp.ne.s32.totalorder %s35, %s36
      %p50 = scmp.eq.s32.totalorder %s28, 1
      %p51 = por %p49, %p50
      %p53 = scmp.ne.s32.totalorder %s36, %s52
      %p54 = scmp.eq.s32.totalorder %s28, 0
      %p55 = por %p53, %p54
      %s57 = sadd.s32 %s56, 1
      %p60 = scmp.eq.s32.totalorder %s22, 1
      %p61 = scmp.ne.s32.totalorder %s56, %s58
      %p62 = scmp.eq.s32.totalorder %s22, 0
      %p63 = por %p61, %p62
      %p64 = scmp.ne.s32.totalorder %s56, %s58
      %p65 = scmp.eq.s32.totalorder %s27, 1
      %p66 = por %p64, %p65
      %p67 = scmp.ne.s32.totalorder %s58, %s59
      %p68 = scmp.eq.s32.totalorder %s27, 0
      %p69 = por %p67, %p68
      %p70 = scmp.ne.s32.totalorder %s58, %s59
      %p71 = scmp.eq.s32.totalorder %s28, 1
      %p72 = por %p70, %p71
      %p74 = scmp.ne.s32.totalorder %s59, %s73
      %p75 = scmp.eq.s32.totalorder %s28, 0
      %p76 = por %p74, %p75
      %s78 = sadd.s32 %s77, 1
      %p81 = scmp.eq.s32.totalorder %s22, 1
      %p82 = scmp.ne.s32.totalorder %s77, %s79
      %p83 = scmp.eq.s32.totalorder %s22, 0
      %p84 = por %p82, %p83
      %p85 = scmp.ne.s32.totalorder %s77, %s79
      %p86 = scmp.eq.s32.totalorder %s27, 1
      %p87 = por %p85, %p86
      %p88 = scmp.ne.s32.totalorder %s79, %s80
      %p89 = scmp.eq.s32.totalorder %s27, 0
      %p90 = por %p88, %p89
      %p91 = scmp.ne.s32.totalorder %s79, %s80
      %p92 = scmp.eq.s32.totalorder %s28, 1
      %p93 = por %p91, %p92
      %p95 = scmp.ne.s32.totalorder %s80, %s94
      %p96 = scmp.eq.s32.totalorder %s28, 0
      %p97 = por %p95, %p96
      %s99 = sadd.s32 %s98, 1
      %p102 = scmp.eq.s32.totalorder %s22, 1
      %p103 = scmp.ne.s32.totalorder %s98, %s100
      %p104 = scmp.eq.s32.totalorder %s22, 0
      %p105 = por %p103, %p104
      %p106 = scmp.ne.s32.totalorder %s98, %s100
      %p107 = scmp.eq.s32.totalorder %s27, 1
      %p108 = por %p106, %p107
      %p109 = scmp.ne.s32.totalorder %s100, %s101
      %p110 = scmp.eq.s32.totalorder %s27, 0
      %p111 = por %p109, %p110
      %p112 = scmp.ne.s32.totalorder %s100, %s101
      %p113 = scmp.eq.s32.totalorder %s28, 1
      %p114 = por %p112, %p113
      %p116 = scmp.ne.s32.totalorder %s101, %s115
      %p117 = scmp.eq.s32.totalorder %s28, 0
      %p118 = por %p116, %p117
      %s120 = sadd.s32 %s119, 1
      %p123 = scmp.eq.s32.totalorder %s22, 1
      %p124 = scmp.ne.s32.totalorder %s119, %s121
      %p125 = scmp.eq.s32.totalorder %s22, 0
      %p126 = por %p124, %p125
      %p127 = scmp.ne.s32.totalorder %s119, %s121
      %p128 = scmp.eq.s32.totalorder %s27, 1
      %p129 = por %p127, %p128
      %p130 = scmp.ne.s32.totalorder %s121, %s122
      %p131 = scmp.eq.s32.totalorder %s27, 0
      %p132 = por %p130, %p131
      %p133 = scmp.ne.s32.totalorder %s121, %s122
      %p134 = scmp.eq.s32.totalorder %s28, 1
      %p135 = por %p133, %p134
      %p137 = scmp.ne.s32.totalorder %s122, %s136
      %p138 = scmp.eq.s32.totalorder %s28, 0
      %p139 = por %p137, %p138
      %s141 = sadd.s32 %s140, 1
      %p144 = scmp.eq.s32.totalorder %s22, 1
      %p145 = scmp.ne.s32.totalorder %s140, %s142
      %p146 = scmp.eq.s32.totalorder %s22, 0
      %p147 = por %p145, %p146
      %p148 = scmp.ne.s32.totalorder %s140, %s142
      %p149 = scmp.eq.s32.totalorder %s27, 1
      %p150 = por %p148, %p149
      %p151 = scmp.ne.s32.totalorder %s142, %s143
      %p152 = scmp.eq.s32.totalorder %s27, 0
      %p153 = por %p151, %p152
      %p154 = scmp.ne.s32.totalorder %s142, %s143
      %p155 = scmp.eq.s32.totalorder %s28, 1
      %p156 = por %p154, %p155
      %p158 = scmp.ne.s32.totalorder %s143, %s157
      %p159 = scmp.eq.s32.totalorder %s28, 0
      %p160 = por %p158, %p159
      %s162 = sadd.s32 %s161, 1
      %p165 = scmp.eq.s32.totalorder %s22, 1
      %p166 = scmp.ne.s32.totalorder %s161, %s163
      %p167 = scmp.eq.s32.totalorder %s22, 0
      %p168 = por %p166, %p167
      %p169 = scmp.ne.s32.totalorder %s161, %s163
      %p170 = scmp.eq.s32.totalorder %s27, 1
      %p171 = por %p169, %p170
      %p172 = scmp.ne.s32.totalorder %s163, %s164
      %p173 = scmp.eq.s32.totalorder %s27, 0
      %p174 = por %p172, %p173
      %p175 = scmp.ne.s32.totalorder %s163, %s164
      %p176 = scmp.eq.s32.totalorder %s28, 1
      %p177 = por %p175, %p176
      %p179 = scmp.ne.s32.totalorder %s164, %s178
      %p180 = scmp.eq.s32.totalorder %s28, 0
      %p181 = por %p179, %p180
      %s183 = sadd.s32 %s182, 1
      %p186 = scmp.eq.s32.totalorder %s22, 1
      %p187 = scmp.ne.s32.totalorder %s182, %s184
      %p188 = scmp.eq.s32.totalorder %s22, 0
      %p189 = por %p187, %p188
      %p190 = scmp.ne.s32.totalorder %s182, %s184
      %p191 = scmp.eq.s32.totalorder %s27, 1
      %p192 = por %p190, %p191
      %p193 = scmp.ne.s32.totalorder %s184, %s185
      %p194 = scmp.eq.s32.totalorder %s27, 0
      %p195 = por %p193, %p194
      %p196 = scmp.ne.s32.totalorder %s184, %s185
      %p197 = scmp.eq.s32.totalorder %s28, 1
      %p198 = por %p196, %p197
      %p200 = scmp.ne.s32.totalorder %s185, %s199
      %p201 = scmp.eq.s32.totalorder %s28, 0
      %p202 = por %p200, %p201
      %s203 = ssub.s32 %s22, %s29
      %p204 = scmp.eq.s32.totalorder %s203, 0
      %s206 = sadd.s32 %s205, 1
      %s207 = scalar_select %p204, %s205, %s206
      %p210 = pneg %p204
      %p211 = scmp.eq.s32.totalorder %s22, 1
      %p212 = por %p210, %p211
      %p213 = scmp.ne.s32.totalorder %s205, %s208
      %p214 = scmp.eq.s32.totalorder %s22, 0
      %p215 = por %p213, %p214
      %p216 = scmp.ne.s32.totalorder %s205, %s208
      %p217 = scmp.eq.s32.totalorder %s27, 1
      %p218 = por %p216, %p217
      %p219 = scmp.ne.s32.totalorder %s208, %s209
      %p220 = scmp.eq.s32.totalorder %s27, 0
      %p221 = por %p219, %p220
      %p222 = scmp.ne.s32.totalorder %s208, %s209
      %p223 = scmp.eq.s32.totalorder %s28, 1
      %p224 = por %p222, %p223
      %p226 = scmp.ne.s32.totalorder %s209, %s225
      %p227 = scmp.eq.s32.totalorder %s28, 0
      %p228 = por %p226, %p227
      %s229 = ssub.s32 %s22, %s29
      %p230 = scmp.eq.s32.totalorder %s229, 0
      %s232 = sadd.s32 %s231, 1
      %s233 = scalar_select %p230, %s231, %s232
      %p236 = pneg %p230
      %p237 = scmp.eq.s32.totalorder %s22, 1
      %p238 = por %p236, %p237
      %p239 = scmp.ne.s32.totalorder %s231, %s234
      %p240 = scmp.eq.s32.totalorder %s22, 0
      %p241 = por %p239, %p240
      %p242 = scmp.ne.s32.totalorder %s231, %s234
      %p243 = scmp.eq.s32.totalorder %s27, 1
      %p244 = por %p242, %p243
      %p245 = scmp.ne.s32.totalorder %s234, %s235
      %p246 = scmp.eq.s32.totalorder %s27, 0
      %p247 = por %p245, %p246
      %p248 = scmp.ne.s32.totalorder %s234, %s235
      %p249 = scmp.eq.s32.totalorder %s28, 1
      %p250 = por %p248, %p249
      %p252 = scmp.ne.s32.totalorder %s235, %s251
      %p253 = scmp.eq.s32.totalorder %s28, 0
      %p254 = por %p252, %p253
      %p255 = scmp.le.s32.totalorder 1, %s22
      %p256 = scmp.lt.s32.totalorder %s22, 3
      %p257 = pnand %p255, %p256
      %p258 = pneg %p257
      // Predicated region
      $region9: #{moeff_forward.3} parent=5 // pred_check
        _
      $region10: #{moeff_forward.3} parent=5 // pred_check_branch
        %260 = sbr.rel (%p257) target = $region12
      $region11: #{moeff_forward.3} parent=5 // pred_region
        %s261 = ssub.s32 %s22, 1
        // Predicated region
        $region13: #{moeff_forward.3} parent=11 // pred_check
          %p262 = pneg %p69
        $region14: #{moeff_forward.3} parent=11 // pred_check_branch
          %264 = sbr.rel (%p262) target = $region16
        $region15: #{moeff_forward.3} parent=11 // pred_region
          %266 = vsyncadd [#allocation5], 0
          %s267 = sshll.u32 %s1, 4
          %s268 = int_to_ptr.hbm [resolvable:$true] %s267
          %s269 = sshll.u32 [#allocation4], 4
          %s270 = int_to_ptr.vmem [resolvable:$true] %s269
          %275 = dma.hbm_to_vmem [thread:$0]  %s268, 2048, %s270, [#allocation5], 128, 128, 8
        $region16: #{moeff_forward.3} parent=11 // pred_fallthru
          _
        // Predicated region
        $region17: #{moeff_forward.3} parent=11 // pred_check
          %p276 = pneg %p90
        $region18: #{moeff_forward.3} parent=11 // pred_check_branch
          %278 = sbr.rel (%p276) target = $region20
        $region19: #{moeff_forward.3} parent=11 // pred_region
          %280 = vsyncadd [#allocation5], 0
          %s282 = sshll.u32 %s2, 4
          %s283 = int_to_ptr.hbm [resolvable:$true] %s282
          %s284 = sshll.u32 [#allocation6], 4
          %s285 = int_to_ptr.vmem [resolvable:$true] %s284
          %287 = dma.hbm_to_vmem [thread:$0]  %s283, 16, %s285, [#allocation5]
        $region20: #{moeff_forward.3} parent=11 // pred_fallthru
          _
        // Predicated region
        $region21: #{moeff_forward.3} parent=11 // pred_check
          %p288 = pneg %p111
        $region22: #{moeff_forward.3} parent=11 // pred_check_branch
          %290 = sbr.rel (%p288) target = $region24
        $region23: #{moeff_forward.3} parent=11 // pred_region
          %292 = vsyncadd [#allocation8], 0
          %s293 = sshll.u32 %s3, 4
          %s294 = int_to_ptr.hbm [resolvable:$true] %s293
          %s295 = sshll.u32 [#allocation7], 4
          %s296 = int_to_ptr.vmem [resolvable:$true] %s295
          %301 = dma.hbm_to_vmem [thread:$0]  %s294, 2048, %s296, [#allocation8], 128, 128, 8
        $region24: #{moeff_forward.3} parent=11 // pred_fallthru
          _
        // Predicated region
        $region25: #{moeff_forward.3} parent=11 // pred_check
          %p302 = pneg %p132
        $region26: #{moeff_forward.3} parent=11 // pred_check_branch
          %304 = sbr.rel (%p302) target = $region28
        $region27: #{moeff_forward.3} parent=11 // pred_region
          %306 = vsyncadd [#allocation8], 0
          %s308 = sshll.u32 %s4, 4
          %s309 = int_to_ptr.hbm [resolvable:$true] %s308
          %s310 = sshll.u32 [#allocation9], 4
          %s311 = int_to_ptr.vmem [resolvable:$true] %s310
          %313 = dma.hbm_to_vmem [thread:$0]  %s309, 16, %s311, [#allocation8]
        $region28: #{moeff_forward.3} parent=11 // pred_fallthru
          _
        // Predicated region
        $region29: #{moeff_forward.3} parent=11 // pred_check
          %p314 = pneg %p153
        $region30: #{moeff_forward.3} parent=11 // pred_check_branch
          %316 = sbr.rel (%p314) target = $region32
        $region31: #{moeff_forward.3} parent=11 // pred_region
          %318 = vsyncadd [#allocation11], 0
          %s319 = sshll.u32 %s5, 4
          %s320 = int_to_ptr.hbm [resolvable:$true] %s319
          %s321 = sshll.u32 [#allocation10], 4
          %s322 = int_to_ptr.vmem [resolvable:$true] %s321
          %327 = dma.hbm_to_vmem [thread:$0]  %s320, 2048, %s322, [#allocation11], 128, 128, 8
        $region32: #{moeff_forward.3} parent=11 // pred_fallthru
          _
        // Predicated region
        $region33: #{moeff_forward.3} parent=11 // pred_check
          %p328 = pneg %p174
        $region34: #{moeff_forward.3} parent=11 // pred_check_branch
          %330 = sbr.rel (%p328) target = $region36
        $region35: #{moeff_forward.3} parent=11 // pred_region
          %332 = vsyncadd [#allocation11], 0
          %s334 = sshll.u32 %s6, 4
          %s335 = int_to_ptr.hbm [resolvable:$true] %s334
          %s336 = sshll.u32 [#allocation12], 4
          %s337 = int_to_ptr.vmem [resolvable:$true] %s336
          %339 = dma.hbm_to_vmem [thread:$0]  %s335, 16, %s337, [#allocation11]
        $region36: #{moeff_forward.3} parent=11 // pred_fallthru
          _
        // Predicated region
        $region37: #{moeff_forward.3} parent=11 // pred_check
          %p340 = pneg %p195
        $region38: #{moeff_forward.3} parent=11 // pred_check_branch
          %342 = sbr.rel (%p340) target = $region40
        $region39: #{moeff_forward.3} parent=11 // pred_region
          _
        $region40: #{moeff_forward.3} parent=11 // pred_fallthru
          _
      $region12: #{moeff_forward.3} parent=5 // pred_fallthru
        _
      %p343 = scmp.lt.s32.totalorder %s22, 2
      // Predicated region
      $region41: #{moeff_forward.3} parent=5 // pred_check
        %p344 = pneg %p343
      $region42: #{moeff_forward.3} parent=5 // pred_check_branch
        %346 = sbr.rel (%p344) target = $region44
      $region43: #{moeff_forward.3} parent=5 // pred_region
        // Predicated region
        $region45: #{moeff_forward.3} parent=43 // pred_check
          %p347 = pneg %p42
        $region46: #{moeff_forward.3} parent=43 // pred_check_branch
          %349 = sbr.rel (%p347) target = $region48
        $region47: #{moeff_forward.3} parent=43 // pred_region
          %s350 = sand.u32 %s32, 1
          %s351 = scalar_lea.sflag [#allocation3], %s350
          %s352 = sand.u32 %s32, 1
          %s353 = smul.addr %s352, 256
          %s354 = scalar_lea.vmem [#allocation2], %s353
          %s355 = smul.u32 32, %s22
          %357 = vsyncadd %s351, 0
          %s358 = smul.addr %s355, 8
          %s359 = scalar_lea.hbm %s0, %s358
          %s360 = sshll.u32 %s359, 4
          %s361 = int_to_ptr.hbm [resolvable:$true] %s360
          %s362 = sshll.u32 %s354, 4
          %s363 = int_to_ptr.vmem [resolvable:$true] %s362
          %368 = dma.hbm_to_vmem [thread:$0]  %s361, 4096, %s363, %s351, 128, 128, 8
        $region48: #{moeff_forward.3} parent=43 // pred_fallthru
          _
      $region44: #{moeff_forward.3} parent=5 // pred_fallthru
        _
      %p369 = scmp.le.s32.totalorder 1, %s22
      %p370 = scmp.lt.s32.totalorder %s22, 3
      %p371 = pnand %p369, %p370
      %p372 = pneg %p371
      // Predicated region
      $region49: #{moeff_forward.3} parent=5 // pred_check
        _
      $region50: #{moeff_forward.3} parent=5 // pred_check_branch
        %374 = sbr.rel (%p371) target = $region52
      $region51: #{moeff_forward.3} parent=5 // pred_region
        %s375 = ssub.s32 %s22, 1
        %s376 = sand.u32 %s35, 1
        %s377 = scalar_lea.sflag [#allocation3], %s376
        %s378 = sand.u32 %s35, 1
        %s379 = smul.addr %s378, 256
        %s380 = scalar_lea.vmem [#allocation2], %s379
        // Predicated region
        $region53: #{moeff_forward.3} parent=51 // pred_check
          %p381 = pneg %p48
        $region54: #{moeff_forward.3} parent=51 // pred_check_branch
          %383 = sbr.rel (%p381) target = $region56
        $region55: #{moeff_forward.3} parent=51 // pred_region
          %385 = dma.done %s377, 4096
        $region56: #{moeff_forward.3} parent=51 // pred_fallthru
          _
        // Predicated region
        $region57: #{moeff_forward.3} parent=51 // pred_check
          %p386 = pneg %p69
        $region58: #{moeff_forward.3} parent=51 // pred_check_branch
          %388 = sbr.rel (%p386) target = $region60
        $region59: #{moeff_forward.3} parent=51 // pred_region
          %390 = dma.done [#allocation5], 2048
        $region60: #{moeff_forward.3} parent=51 // pred_fallthru
          _
        // Predicated region
        $region61: #{moeff_forward.3} parent=51 // pred_check
          %p391 = pneg %p90
        $region62: #{moeff_forward.3} parent=51 // pred_check_branch
          %393 = sbr.rel (%p391) target = $region64
        $region63: #{moeff_forward.3} parent=51 // pred_region
          %395 = dma.done [#allocation5], 16
        $region64: #{moeff_forward.3} parent=51 // pred_fallthru
          _
        // Predicated region
        $region65: #{moeff_forward.3} parent=51 // pred_check
          %p396 = pneg %p111
        $region66: #{moeff_forward.3} parent=51 // pred_check_branch
          %398 = sbr.rel (%p396) target = $region68
        $region67: #{moeff_forward.3} parent=51 // pred_region
          %400 = dma.done [#allocation8], 2048
        $region68: #{moeff_forward.3} parent=51 // pred_fallthru
          _
        // Predicated region
        $region69: #{moeff_forward.3} parent=51 // pred_check
          %p401 = pneg %p132
        $region70: #{moeff_forward.3} parent=51 // pred_check_branch
          %403 = sbr.rel (%p401) target = $region72
        $region71: #{moeff_forward.3} parent=51 // pred_region
          %405 = dma.done [#allocation8], 16
        $region72: #{moeff_forward.3} parent=51 // pred_fallthru
          _
        // Predicated region
        $region73: #{moeff_forward.3} parent=51 // pred_check
          %p406 = pneg %p153
        $region74: #{moeff_forward.3} parent=51 // pred_check_branch
          %408 = sbr.rel (%p406) target = $region76
        $region75: #{moeff_forward.3} parent=51 // pred_region
          %410 = dma.done [#allocation11], 2048
        $region76: #{moeff_forward.3} parent=51 // pred_fallthru
          _
        // Predicated region
        $region77: #{moeff_forward.3} parent=51 // pred_check
          %p411 = pneg %p174
        $region78: #{moeff_forward.3} parent=51 // pred_check_branch
          %413 = sbr.rel (%p411) target = $region80
        $region79: #{moeff_forward.3} parent=51 // pred_region
          %415 = dma.done [#allocation11], 16
        $region80: #{moeff_forward.3} parent=51 // pred_fallthru
          _
        %s416 = sand.u32 %s35, 1
        %s417 = scalar_lea.sflag [#allocation3], %s416
        %s418 = sand.u32 %s35, 1
        %s419 = smul.addr %s418, 256
        %s420 = scalar_lea.vmem [#allocation2], %s419
        %p421 = pneg %p48
        %p422 = pneg %p45
        %p423 = pneg %p69
        %p424 = pneg %p66
        %p425 = pneg %p90
        %p426 = pneg %p87
        %p427 = pneg %p111
        %p428 = pneg %p108
        %p429 = pneg %p132
        %p430 = pneg %p129
        %p431 = pneg %p153
        %p432 = pneg %p150
        %p433 = pneg %p174
        %p434 = pneg %p171
        %p435 = pneg %p195
        %p436 = pneg %p192
        %p437 = pneg %p221
        %p438 = pneg %p218
        %s439 = smul.u32 32, %s27
        %p440 = scmp.lt.s32.totalorder %s439, 63
        %s441 = scalar_select %p440, %s439, 63
        %s442 = smul.addr %s441, 8
        %s443 = scalar_lea.vmem %s8, %s442
        %p444 = pneg %p247
        %p445 = pneg %p244
        %s446 = smul.u32 32, %s27
        %p447 = scmp.lt.s32.totalorder %s446, 63
        %s448 = scalar_select %p447, %s446, 63
        %s449 = smul.addr %s448, 8
        %s450 = scalar_lea.vmem %s9, %s449
        %s451 = smul.u32 32, %s27
        %s452 = smul.u32 32, %s27
        %p453 = scmp.lt.s32.totalorder %s452, 63
        %s454 = scalar_select %p453, %s452, 63
        %s455 = smul.addr %s454, 8
        %s456 = scalar_lea.vmem %s8, %s455
        %s457 = smul.u32 32, %s27
        %s458 = smul.u32 32, %s27
        %p459 = scmp.lt.s32.totalorder %s458, 63
        %s460 = scalar_select %p459, %s458, 63
        %s461 = smul.addr %s460, 8
        %s462 = scalar_lea.vmem %s9, %s461
        %s463 = smul.u32 32, %s27
        %v464 = vld [vmem:[%s380] sm:$0xff]
        %v465 = vld [vmem:[%s380 + $0x8] sm:$0xff]
        %v466 = vld [vmem:[%s380 + $0x10] sm:$0xff]
        %v467 = vld [vmem:[%s380 + $0x18] sm:$0xff]
        %v468 = vld [vmem:[%s380 + $0x20] sm:$0xff]
        %v469 = vld [vmem:[%s380 + $0x28] sm:$0xff]
        %v470 = vld [vmem:[%s380 + $0x30] sm:$0xff]
        %v471 = vld [vmem:[%s380 + $0x38] sm:$0xff]
        %v472 = vld [vmem:[%s380 + $0x40] sm:$0xff]
        %v473 = vld [vmem:[%s380 + $0x48] sm:$0xff]
        %v474 = vld [vmem:[%s380 + $0x50] sm:$0xff]
        %v475 = vld [vmem:[%s380 + $0x58] sm:$0xff]
        %v476 = vld [vmem:[%s380 + $0x60] sm:$0xff]
        %v477 = vld [vmem:[%s380 + $0x68] sm:$0xff]
        %v478 = vld [vmem:[%s380 + $0x70] sm:$0xff]
        %v479 = vld [vmem:[%s380 + $0x78] sm:$0xff]
        %v480 = vld [vmem:[%s380 + $0x80] sm:$0xff]
        %v481 = vld [vmem:[%s380 + $0x88] sm:$0xff]
        %v482 = vld [vmem:[%s380 + $0x90] sm:$0xff]
        %v483 = vld [vmem:[%s380 + $0x98] sm:$0xff]
        %v484 = vld [vmem:[%s380 + $0xa0] sm:$0xff]
        %v485 = vld [vmem:[%s380 + $0xa8] sm:$0xff]
        %v486 = vld [vmem:[%s380 + $0xb0] sm:$0xff]
        %v487 = vld [vmem:[%s380 + $0xb8] sm:$0xff]
        %v488 = vld [vmem:[%s380 + $0xc0] sm:$0xff]
        %v489 = vld [vmem:[%s380 + $0xc8] sm:$0xff]
        %v490 = vld [vmem:[%s380 + $0xd0] sm:$0xff]
        %v491 = vld [vmem:[%s380 + $0xd8] sm:$0xff]
        %v492 = vld [vmem:[%s380 + $0xe0] sm:$0xff]
        %v493 = vld [vmem:[%s380 + $0xe8] sm:$0xff]
        %v494 = vld [vmem:[%s380 + $0xf0] sm:$0xff]
        %v495 = vld [vmem:[%s380 + $0xf8] sm:$0xff]
        %v496 = vld [vmem:[#allocation4] sm:$0xff]
        %v497 = vld [vmem:[#allocation4 + $0x8] sm:$0xff]
        %v498 = vld [vmem:[#allocation4 + $0x10] sm:$0xff]
        %v499 = vld [vmem:[#allocation4 + $0x18] sm:$0xff]
        %v500 = vld [vmem:[#allocation4 + $0x20] sm:$0xff]
        %v501 = vld [vmem:[#allocation4 + $0x28] sm:$0xff]
        %v502 = vld [vmem:[#allocation4 + $0x30] sm:$0xff]
        %v503 = vld [vmem:[#allocation4 + $0x38] sm:$0xff]
        %v504 = vld [vmem:[#allocation4 + $0x40] sm:$0xff]
        %v505 = vld [vmem:[#allocation4 + $0x48] sm:$0xff]
        %v506 = vld [vmem:[#allocation4 + $0x50] sm:$0xff]
        %v507 = vld [vmem:[#allocation4 + $0x58] sm:$0xff]
        %v508 = vld [vmem:[#allocation4 + $0x60] sm:$0xff]
        %v509 = vld [vmem:[#allocation4 + $0x68] sm:$0xff]
        %v510 = vld [vmem:[#allocation4 + $0x70] sm:$0xff]
        %v511 = vld [vmem:[#allocation4 + $0x78] sm:$0xff]
        %v512 = vld [vmem:[#allocation6] sm:$0x1]
        %v514 = vperm.slane %v512, 0
        %516 = vmatpush.msra.mxu0 %v511
        %517 = vmatpush.msra.mxu0 %v510
        %518 = vmatpush.msra.mxu0 %v509
        %519 = vmatpush.msra.mxu0 %v508
        %520 = vmatpush.msra.mxu0 %v507
        %521 = vmatpush.msra.mxu0 %v506
        %522 = vmatpush.msra.mxu0 %v505
        %523 = vmatpush.msra.mxu0 %v504
        %524 = vmatpush.msra.mxu0 %v503
        %525 = vmatpush.msra.mxu0 %v502
        %526 = vmatpush.msra.mxu0 %v501
        %527 = vmatpush.msra.mxu0 %v500
        %528 = vmatpush.msra.mxu0 %v499
        %529 = vmatpush.msra.mxu0 %v498
        %530 = vmatpush.msra.mxu0 %v497
        %531 = vmatpush.msra.mxu0 %v496
        %532 = vmatmul.f32.gmra.mxu0 %v464
        %v533 = vpop.f32.mrf.mxu0
        %v534 = vadd.f32 %v514, %v533
        %535 = vmatmul.f32.gmra.mxu0 %v465
        %v536 = vpop.f32.mrf.mxu0
        %v537 = vadd.f32 %v514, %v536
        %538 = vmatmul.f32.gmra.mxu0 %v466
        %v539 = vpop.f32.mrf.mxu0
        %v540 = vadd.f32 %v514, %v539
        %541 = vmatmul.f32.gmra.mxu0 %v467
        %v542 = vpop.f32.mrf.mxu0
        %v543 = vadd.f32 %v514, %v542
        %544 = vmatmul.f32.gmra.mxu0 %v468
        %v545 = vpop.f32.mrf.mxu0
        %v546 = vadd.f32 %v514, %v545
        %547 = vmatmul.f32.gmra.mxu0 %v469
        %v548 = vpop.f32.mrf.mxu0
        %v549 = vadd.f32 %v514, %v548
        %550 = vmatmul.f32.gmra.mxu0 %v470
        %v551 = vpop.f32.mrf.mxu0
        %v552 = vadd.f32 %v514, %v551
        %553 = vmatmul.f32.gmra.mxu0 %v471
        %v554 = vpop.f32.mrf.mxu0
        %v555 = vadd.f32 %v514, %v554
        %556 = vmatmul.f32.gmra.mxu0 %v472
        %v557 = vpop.f32.mrf.mxu0
        %v558 = vadd.f32 %v514, %v557
        %559 = vmatmul.f32.gmra.mxu0 %v473
        %v560 = vpop.f32.mrf.mxu0
        %v561 = vadd.f32 %v514, %v560
        %562 = vmatmul.f32.gmra.mxu0 %v474
        %v563 = vpop.f32.mrf.mxu0
        %v564 = vadd.f32 %v514, %v563
        %565 = vmatmul.f32.gmra.mxu0 %v475
        %v566 = vpop.f32.mrf.mxu0
        %v567 = vadd.f32 %v514, %v566
        %568 = vmatmul.f32.gmra.mxu0 %v476
        %v569 = vpop.f32.mrf.mxu0
        %v570 = vadd.f32 %v514, %v569
        %571 = vmatmul.f32.gmra.mxu0 %v477
        %v572 = vpop.f32.mrf.mxu0
        %v573 = vadd.f32 %v514, %v572
        %574 = vmatmul.f32.gmra.mxu0 %v478
        %v575 = vpop.f32.mrf.mxu0
        %v576 = vadd.f32 %v514, %v575
        %577 = vmatmul.f32.gmra.mxu0 %v479
        %v578 = vpop.f32.mrf.mxu0
        %v579 = vadd.f32 %v514, %v578
        %580 = vmatmul.f32.gmra.mxu0 %v480
        %v581 = vpop.f32.mrf.mxu0
        %v582 = vadd.f32 %v514, %v581
        %583 = vmatmul.f32.gmra.mxu0 %v481
        %v584 = vpop.f32.mrf.mxu0
        %v585 = vadd.f32 %v514, %v584
        %586 = vmatmul.f32.gmra.mxu0 %v482
        %v587 = vpop.f32.mrf.mxu0
        %v588 = vadd.f32 %v514, %v587
        %589 = vmatmul.f32.gmra.mxu0 %v483
        %v590 = vpop.f32.mrf.mxu0
        %v591 = vadd.f32 %v514, %v590
        %592 = vmatmul.f32.gmra.mxu0 %v484
        %v593 = vpop.f32.mrf.mxu0
        %v594 = vadd.f32 %v514, %v593
        %595 = vmatmul.f32.gmra.mxu0 %v485
        %v596 = vpop.f32.mrf.mxu0
        %v597 = vadd.f32 %v514, %v596
        %598 = vmatmul.f32.gmra.mxu0 %v486
        %v599 = vpop.f32.mrf.mxu0
        %v600 = vadd.f32 %v514, %v599
        %601 = vmatmul.f32.gmra.mxu0 %v487
        %v602 = vpop.f32.mrf.mxu0
        %v603 = vadd.f32 %v514, %v602
        %604 = vmatmul.f32.gmra.mxu0 %v488
        %v605 = vpop.f32.mrf.mxu0
        %v606 = vadd.f32 %v514, %v605
        %607 = vmatmul.f32.gmra.mxu0 %v489
        %v608 = vpop.f32.mrf.mxu0
        %v609 = vadd.f32 %v514, %v608
        %610 = vmatmul.f32.gmra.mxu0 %v490
        %v611 = vpop.f32.mrf.mxu0
        %v612 = vadd.f32 %v514, %v611
        %613 = vmatmul.f32.gmra.mxu0 %v491
        %v614 = vpop.f32.mrf.mxu0
        %v615 = vadd.f32 %v514, %v614
        %616 = vmatmul.f32.gmra.mxu0 %v492
        %v617 = vpop.f32.mrf.mxu0
        %v618 = vadd.f32 %v514, %v617
        %619 = vmatmul.f32.gmra.mxu0 %v493
        %v620 = vpop.f32.mrf.mxu0
        %v621 = vadd.f32 %v514, %v620
        %622 = vmatmul.f32.gmra.mxu0 %v494
        %v623 = vpop.f32.mrf.mxu0
        %v624 = vadd.f32 %v514, %v623
        %625 = vmatmul.f32.gmra.mxu0 %v495
        %v626 = vpop.f32.mrf.mxu0
        %v627 = vadd.f32 %v514, %v626
        %628 = vdwg.mxu0
        %v629 = vld [vmem:[#allocation7] sm:$0xff]
        %v630 = vld [vmem:[#allocation7 + $0x8] sm:$0xff]
        %v631 = vld [vmem:[#allocation7 + $0x10] sm:$0xff]
        %v632 = vld [vmem:[#allocation7 + $0x18] sm:$0xff]
        %v633 = vld [vmem:[#allocation7 + $0x20] sm:$0xff]
        %v634 = vld [vmem:[#allocation7 + $0x28] sm:$0xff]
        %v635 = vld [vmem:[#allocation7 + $0x30] sm:$0xff]
        %v636 = vld [vmem:[#allocation7 + $0x38] sm:$0xff]
        %v637 = vld [vmem:[#allocation7 + $0x40] sm:$0xff]
        %v638 = vld [vmem:[#allocation7 + $0x48] sm:$0xff]
        %v639 = vld [vmem:[#allocation7 + $0x50] sm:$0xff]
        %v640 = vld [vmem:[#allocation7 + $0x58] sm:$0xff]
        %v641 = vld [vmem:[#allocation7 + $0x60] sm:$0xff]
        %v642 = vld [vmem:[#allocation7 + $0x68] sm:$0xff]
        %v643 = vld [vmem:[#allocation7 + $0x70] sm:$0xff]
        %v644 = vld [vmem:[#allocation7 + $0x78] sm:$0xff]
        %v645 = vld [vmem:[#allocation9] sm:$0x1]
        %v647 = vperm.slane %v645, 0
        %649 = vmatpush.msra.mxu0 %v644
        %650 = vmatpush.msra.mxu0 %v643
        %651 = vmatpush.msra.mxu0 %v642
        %652 = vmatpush.msra.mxu0 %v641
        %653 = vmatpush.msra.mxu0 %v640
        %654 = vmatpush.msra.mxu0 %v639
        %655 = vmatpush.msra.mxu0 %v638
        %656 = vmatpush.msra.mxu0 %v637
        %657 = vmatpush.msra.mxu0 %v636
        %658 = vmatpush.msra.mxu0 %v635
        %659 = vmatpush.msra.mxu0 %v634
        %660 = vmatpush.msra.mxu0 %v633
        %661 = vmatpush.msra.mxu0 %v632
        %662 = vmatpush.msra.mxu0 %v631
        %663 = vmatpush.msra.mxu0 %v630
        %664 = vmatpush.msra.mxu0 %v629
        %665 = vmatmul.f32.gmra.mxu0 %v534
        %v666 = vpop.f32.mrf.mxu0
        %v667 = vadd.f32 %v647, %v666
        %668 = vmatmul.f32.gmra.mxu0 %v537
        %v669 = vpop.f32.mrf.mxu0
        %v670 = vadd.f32 %v647, %v669
        %671 = vmatmul.f32.gmra.mxu0 %v540
        %v672 = vpop.f32.mrf.mxu0
        %v673 = vadd.f32 %v647, %v672
        %674 = vmatmul.f32.gmra.mxu0 %v543
        %v675 = vpop.f32.mrf.mxu0
        %v676 = vadd.f32 %v647, %v675
        %677 = vmatmul.f32.gmra.mxu0 %v546
        %v678 = vpop.f32.mrf.mxu0
        %v679 = vadd.f32 %v647, %v678
        %680 = vmatmul.f32.gmra.mxu0 %v549
        %v681 = vpop.f32.mrf.mxu0
        %v682 = vadd.f32 %v647, %v681
        %683 = vmatmul.f32.gmra.mxu0 %v552
        %v684 = vpop.f32.mrf.mxu0
        %v685 = vadd.f32 %v647, %v684
        %686 = vmatmul.f32.gmra.mxu0 %v555
        %v687 = vpop.f32.mrf.mxu0
        %v688 = vadd.f32 %v647, %v687
        %689 = vmatmul.f32.gmra.mxu0 %v558
        %v690 = vpop.f32.mrf.mxu0
        %v691 = vadd.f32 %v647, %v690
        %692 = vmatmul.f32.gmra.mxu0 %v561
        %v693 = vpop.f32.mrf.mxu0
        %v694 = vadd.f32 %v647, %v693
        %695 = vmatmul.f32.gmra.mxu0 %v564
        %v696 = vpop.f32.mrf.mxu0
        %v697 = vadd.f32 %v647, %v696
        %698 = vmatmul.f32.gmra.mxu0 %v567
        %v699 = vpop.f32.mrf.mxu0
        %v700 = vadd.f32 %v647, %v699
        %701 = vmatmul.f32.gmra.mxu0 %v570
        %v702 = vpop.f32.mrf.mxu0
        %v703 = vadd.f32 %v647, %v702
        %704 = vmatmul.f32.gmra.mxu0 %v573
        %v705 = vpop.f32.mrf.mxu0
        %v706 = vadd.f32 %v647, %v705
        %707 = vmatmul.f32.gmra.mxu0 %v576
        %v708 = vpop.f32.mrf.mxu0
        %v709 = vadd.f32 %v647, %v708
        %710 = vmatmul.f32.gmra.mxu0 %v579
        %v711 = vpop.f32.mrf.mxu0
        %v712 = vadd.f32 %v647, %v711
        %713 = vmatmul.f32.gmra.mxu0 %v582
        %v714 = vpop.f32.mrf.mxu0
        %v715 = vadd.f32 %v647, %v714
        %716 = vmatmul.f32.gmra.mxu0 %v585
        %v717 = vpop.f32.mrf.mxu0
        %v718 = vadd.f32 %v647, %v717
        %719 = vmatmul.f32.gmra.mxu0 %v588
        %v720 = vpop.f32.mrf.mxu0
        %v721 = vadd.f32 %v647, %v720
        %722 = vmatmul.f32.gmra.mxu0 %v591
        %v723 = vpop.f32.mrf.mxu0
        %v724 = vadd.f32 %v647, %v723
        %725 = vmatmul.f32.gmra.mxu0 %v594
        %v726 = vpop.f32.mrf.mxu0
        %v727 = vadd.f32 %v647, %v726
        %728 = vmatmul.f32.gmra.mxu0 %v597
        %v729 = vpop.f32.mrf.mxu0
        %v730 = vadd.f32 %v647, %v729
        %731 = vmatmul.f32.gmra.mxu0 %v600
        %v732 = vpop.f32.mrf.mxu0
        %v733 = vadd.f32 %v647, %v732
        %734 = vmatmul.f32.gmra.mxu0 %v603
        %v735 = vpop.f32.mrf.mxu0
        %v736 = vadd.f32 %v647, %v735
        %737 = vmatmul.f32.gmra.mxu0 %v606
        %v738 = vpop.f32.mrf.mxu0
        %v739 = vadd.f32 %v647, %v738
        %740 = vmatmul.f32.gmra.mxu0 %v609
        %v741 = vpop.f32.mrf.mxu0
        %v742 = vadd.f32 %v647, %v741
        %743 = vmatmul.f32.gmra.mxu0 %v612
        %v744 = vpop.f32.mrf.mxu0
        %v745 = vadd.f32 %v647, %v744
        %746 = vmatmul.f32.gmra.mxu0 %v615
        %v747 = vpop.f32.mrf.mxu0
        %v748 = vadd.f32 %v647, %v747
        %749 = vmatmul.f32.gmra.mxu0 %v618
        %v750 = vpop.f32.mrf.mxu0
        %v751 = vadd.f32 %v647, %v750
        %752 = vmatmul.f32.gmra.mxu0 %v621
        %v753 = vpop.f32.mrf.mxu0
        %v754 = vadd.f32 %v647, %v753
        %755 = vmatmul.f32.gmra.mxu0 %v624
        %v756 = vpop.f32.mrf.mxu0
        %v757 = vadd.f32 %v647, %v756
        %758 = vmatmul.f32.gmra.mxu0 %v627
        %v759 = vpop.f32.mrf.mxu0
        %v760 = vadd.f32 %v647, %v759
        %761 = vdwg.mxu0
        %v762 = vld [vmem:[#allocation10] sm:$0xff]
        %v763 = vld [vmem:[#allocation10 + $0x8] sm:$0xff]
        %v764 = vld [vmem:[#allocation10 + $0x10] sm:$0xff]
        %v765 = vld [vmem:[#allocation10 + $0x18] sm:$0xff]
        %v766 = vld [vmem:[#allocation10 + $0x20] sm:$0xff]
        %v767 = vld [vmem:[#allocation10 + $0x28] sm:$0xff]
        %v768 = vld [vmem:[#allocation10 + $0x30] sm:$0xff]
        %v769 = vld [vmem:[#allocation10 + $0x38] sm:$0xff]
        %v770 = vld [vmem:[#allocation10 + $0x40] sm:$0xff]
        %v771 = vld [vmem:[#allocation10 + $0x48] sm:$0xff]
        %v772 = vld [vmem:[#allocation10 + $0x50] sm:$0xff]
        %v773 = vld [vmem:[#allocation10 + $0x58] sm:$0xff]
        %v774 = vld [vmem:[#allocation10 + $0x60] sm:$0xff]
        %v775 = vld [vmem:[#allocation10 + $0x68] sm:$0xff]
        %v776 = vld [vmem:[#allocation10 + $0x70] sm:$0xff]
        %v777 = vld [vmem:[#allocation10 + $0x78] sm:$0xff]
        %v778 = vld [vmem:[#allocation12] sm:$0x1]
        %v780 = vperm.slane %v778, 0
        %782 = vmatpush.msra.mxu0 %v777
        %783 = vmatpush.msra.mxu0 %v776
        %784 = vmatpush.msra.mxu0 %v775
        %785 = vmatpush.msra.mxu0 %v774
        %786 = vmatpush.msra.mxu0 %v773
        %787 = vmatpush.msra.mxu0 %v772
        %788 = vmatpush.msra.mxu0 %v771
        %789 = vmatpush.msra.mxu0 %v770
        %790 = vmatpush.msra.mxu0 %v769
        %791 = vmatpush.msra.mxu0 %v768
        %792 = vmatpush.msra.mxu0 %v767
        %793 = vmatpush.msra.mxu0 %v766
        %794 = vmatpush.msra.mxu0 %v765
        %795 = vmatpush.msra.mxu0 %v764
        %796 = vmatpush.msra.mxu0 %v763
        %797 = vmatpush.msra.mxu0 %v762
        %798 = vmatmul.f32.gmra.mxu0 %v534
        %v799 = vpop.f32.mrf.mxu0
        %v800 = vadd.f32 %v780, %v799
        %801 = vmatmul.f32.gmra.mxu0 %v537
        %v802 = vpop.f32.mrf.mxu0
        %v803 = vadd.f32 %v780, %v802
        %804 = vmatmul.f32.gmra.mxu0 %v540
        %v805 = vpop.f32.mrf.mxu0
        %v806 = vadd.f32 %v780, %v805
        %807 = vmatmul.f32.gmra.mxu0 %v543
        %v808 = vpop.f32.mrf.mxu0
        %v809 = vadd.f32 %v780, %v808
        %810 = vmatmul.f32.gmra.mxu0 %v546
        %v811 = vpop.f32.mrf.mxu0
        %v812 = vadd.f32 %v780, %v811
        %813 = vmatmul.f32.gmra.mxu0 %v549
        %v814 = vpop.f32.mrf.mxu0
        %v815 = vadd.f32 %v780, %v814
        %816 = vmatmul.f32.gmra.mxu0 %v552
        %v817 = vpop.f32.mrf.mxu0
        %v818 = vadd.f32 %v780, %v817
        %819 = vmatmul.f32.gmra.mxu0 %v555
        %v820 = vpop.f32.mrf.mxu0
        %v821 = vadd.f32 %v780, %v820
        %822 = vmatmul.f32.gmra.mxu0 %v558
        %v823 = vpop.f32.mrf.mxu0
        %v824 = vadd.f32 %v780, %v823
        %825 = vmatmul.f32.gmra.mxu0 %v561
        %v826 = vpop.f32.mrf.mxu0
        %v827 = vadd.f32 %v780, %v826
        %828 = vmatmul.f32.gmra.mxu0 %v564
        %v829 = vpop.f32.mrf.mxu0
        %v830 = vadd.f32 %v780, %v829
        %831 = vmatmul.f32.gmra.mxu0 %v567
        %v832 = vpop.f32.mrf.mxu0
        %v833 = vadd.f32 %v780, %v832
        %834 = vmatmul.f32.gmra.mxu0 %v570
        %v835 = vpop.f32.mrf.mxu0
        %v836 = vadd.f32 %v780, %v835
        %837 = vmatmul.f32.gmra.mxu0 %v573
        %v838 = vpop.f32.mrf.mxu0
        %v839 = vadd.f32 %v780, %v838
        %840 = vmatmul.f32.gmra.mxu0 %v576
        %v841 = vpop.f32.mrf.mxu0
        %v842 = vadd.f32 %v780, %v841
        %843 = vmatmul.f32.gmra.mxu0 %v579
        %v844 = vpop.f32.mrf.mxu0
        %v845 = vadd.f32 %v780, %v844
        %846 = vmatmul.f32.gmra.mxu0 %v582
        %v847 = vpop.f32.mrf.mxu0
        %v848 = vadd.f32 %v780, %v847
        %849 = vmatmul.f32.gmra.mxu0 %v585
        %v850 = vpop.f32.mrf.mxu0
        %v851 = vadd.f32 %v780, %v850
        %852 = vmatmul.f32.gmra.mxu0 %v588
        %v853 = vpop.f32.mrf.mxu0
        %v854 = vadd.f32 %v780, %v853
        %855 = vmatmul.f32.gmra.mxu0 %v591
        %v856 = vpop.f32.mrf.mxu0
        %v857 = vadd.f32 %v780, %v856
        %858 = vmatmul.f32.gmra.mxu0 %v594
        %v859 = vpop.f32.mrf.mxu0
        %v860 = vadd.f32 %v780, %v859
        %861 = vmatmul.f32.gmra.mxu0 %v597
        %v862 = vpop.f32.mrf.mxu0
        %v863 = vadd.f32 %v780, %v862
        %864 = vmatmul.f32.gmra.mxu0 %v600
        %v865 = vpop.f32.mrf.mxu0
        %v866 = vadd.f32 %v780, %v865
        %867 = vmatmul.f32.gmra.mxu0 %v603
        %v868 = vpop.f32.mrf.mxu0
        %v869 = vadd.f32 %v780, %v868
        %870 = vmatmul.f32.gmra.mxu0 %v606
        %v871 = vpop.f32.mrf.mxu0
        %v872 = vadd.f32 %v780, %v871
        %873 = vmatmul.f32.gmra.mxu0 %v609
        %v874 = vpop.f32.mrf.mxu0
        %v875 = vadd.f32 %v780, %v874
        %876 = vmatmul.f32.gmra.mxu0 %v612
        %v877 = vpop.f32.mrf.mxu0
        %v878 = vadd.f32 %v780, %v877
        %879 = vmatmul.f32.gmra.mxu0 %v615
        %v880 = vpop.f32.mrf.mxu0
        %v881 = vadd.f32 %v780, %v880
        %882 = vmatmul.f32.gmra.mxu0 %v618
        %v883 = vpop.f32.mrf.mxu0
        %v884 = vadd.f32 %v780, %v883
        %885 = vmatmul.f32.gmra.mxu0 %v621
        %v886 = vpop.f32.mrf.mxu0
        %v887 = vadd.f32 %v780, %v886
        %888 = vmatmul.f32.gmra.mxu0 %v624
        %v889 = vpop.f32.mrf.mxu0
        %v890 = vadd.f32 %v780, %v889
        %891 = vmatmul.f32.gmra.mxu0 %v627
        %v892 = vpop.f32.mrf.mxu0
        %v893 = vadd.f32 %v780, %v892
        %894 = vdwg.mxu0
        %v895 = vxor.u32 %v667, 2147483648
        %v896 = vxor.u32 %v670, 2147483648
        %v897 = vxor.u32 %v673, 2147483648
        %v898 = vxor.u32 %v676, 2147483648
        %v899 = vxor.u32 %v679, 2147483648
        %v900 = vxor.u32 %v682, 2147483648
        %v901 = vxor.u32 %v685, 2147483648
        %v902 = vxor.u32 %v688, 2147483648
        %v903 = vxor.u32 %v691, 2147483648
        %v904 = vxor.u32 %v694, 2147483648
        %v905 = vxor.u32 %v697, 2147483648
        %v906 = vxor.u32 %v700, 2147483648
        %v907 = vxor.u32 %v703, 2147483648
        %v908 = vxor.u32 %v706, 2147483648
        %v909 = vxor.u32 %v709, 2147483648
        %v910 = vxor.u32 %v712, 2147483648
        %v911 = vxor.u32 %v715, 2147483648
        %v912 = vxor.u32 %v718, 2147483648
        %v913 = vxor.u32 %v721, 2147483648
        %v914 = vxor.u32 %v724, 2147483648
        %v915 = vxor.u32 %v727, 2147483648
        %v916 = vxor.u32 %v730, 2147483648
        %v917 = vxor.u32 %v733, 2147483648
        %v918 = vxor.u32 %v736, 2147483648
        %v919 = vxor.u32 %v739, 2147483648
        %v920 = vxor.u32 %v742, 2147483648
        %v921 = vxor.u32 %v745, 2147483648
        %v922 = vxor.u32 %v748, 2147483648
        %v923 = vxor.u32 %v751, 2147483648
        %v924 = vxor.u32 %v754, 2147483648
        %v925 = vxor.u32 %v757, 2147483648
        %v926 = vxor.u32 %v760, 2147483648
        %v927 = vmul.f32 %v895, 1.442695
        %v928 = vpow.pop %v927
        %v929 = vmul.f32 %v896, 1.442695
        %v930 = vpow.pop %v929
        %v931 = vmul.f32 %v897, 1.442695
        %v932 = vpow.pop %v931
        %v933 = vmul.f32 %v898, 1.442695
        %v934 = vpow.pop %v933
        %v935 = vmul.f32 %v899, 1.442695
        %v936 = vpow.pop %v935
        %v937 = vmul.f32 %v900, 1.442695
        %v938 = vpow.pop %v937
        %v939 = vmul.f32 %v901, 1.442695
        %v940 = vpow.pop %v939
        %v941 = vmul.f32 %v902, 1.442695
        %v942 = vpow.pop %v941
        %v943 = vmul.f32 %v903, 1.442695
        %v944 = vpow.pop %v943
        %v945 = vmul.f32 %v904, 1.442695
        %v946 = vpow.pop %v945
        %v947 = vmul.f32 %v905, 1.442695
        %v948 = vpow.pop %v947
        %v949 = vmul.f32 %v906, 1.442695
        %v950 = vpow.pop %v949
        %v951 = vmul.f32 %v907, 1.442695
        %v952 = vpow.pop %v951
        %v953 = vmul.f32 %v908, 1.442695
        %v954 = vpow.pop %v953
        %v955 = vmul.f32 %v909, 1.442695
        %v956 = vpow.pop %v955
        %v957 = vmul.f32 %v910, 1.442695
        %v958 = vpow.pop %v957
        %v959 = vmul.f32 %v911, 1.442695
        %v960 = vpow.pop %v959
        %v961 = vmul.f32 %v912, 1.442695
        %v962 = vpow.pop %v961
        %v963 = vmul.f32 %v913, 1.442695
        %v964 = vpow.pop %v963
        %v965 = vmul.f32 %v914, 1.442695
        %v966 = vpow.pop %v965
        %v967 = vmul.f32 %v915, 1.442695
        %v968 = vpow.pop %v967
        %v969 = vmul.f32 %v916, 1.442695
        %v970 = vpow.pop %v969
        %v971 = vmul.f32 %v917, 1.442695
        %v972 = vpow.pop %v971
        %v973 = vmul.f32 %v918, 1.442695
        %v974 = vpow.pop %v973
        %v975 = vmul.f32 %v919, 1.442695
        %v976 = vpow.pop %v975
        %v977 = vmul.f32 %v920, 1.442695
        %v978 = vpow.pop %v977
        %v979 = vmul.f32 %v921, 1.442695
        %v980 = vpow.pop %v979
        %v981 = vmul.f32 %v922, 1.442695
        %v982 = vpow.pop %v981
        %v983 = vmul.f32 %v923, 1.442695
        %v984 = vpow.pop %v983
        %v985 = vmul.f32 %v924, 1.442695
        %v986 = vpow.pop %v985
        %v987 = vmul.f32 %v925, 1.442695
        %v988 = vpow.pop %v987
        %v989 = vmul.f32 %v926, 1.442695
        %v990 = vpow.pop %v989
        %v991 = vadd.f32 %v928, 1.0
        %v992 = vadd.f32 %v930, 1.0
        %v993 = vadd.f32 %v932, 1.0
        %v994 = vadd.f32 %v934, 1.0
        %v995 = vadd.f32 %v936, 1.0
        %v996 = vadd.f32 %v938, 1.0
        %v997 = vadd.f32 %v940, 1.0
        %v998 = vadd.f32 %v942, 1.0
        %v999 = vadd.f32 %v944, 1.0
        %v1000 = vadd.f32 %v946, 1.0
        %v1001 = vadd.f32 %v948, 1.0
        %v1002 = vadd.f32 %v950, 1.0
        %v1003 = vadd.f32 %v952, 1.0
        %v1004 = vadd.f32 %v954, 1.0
        %v1005 = vadd.f32 %v956, 1.0
        %v1006 = vadd.f32 %v958, 1.0
        %v1007 = vadd.f32 %v960, 1.0
        %v1008 = vadd.f32 %v962, 1.0
        %v1009 = vadd.f32 %v964, 1.0
        %v1010 = vadd.f32 %v966, 1.0
        %v1011 = vadd.f32 %v968, 1.0
        %v1012 = vadd.f32 %v970, 1.0
        %v1013 = vadd.f32 %v972, 1.0
        %v1014 = vadd.f32 %v974, 1.0
        %v1015 = vadd.f32 %v976, 1.0
        %v1016 = vadd.f32 %v978, 1.0
        %v1017 = vadd.f32 %v980, 1.0
        %v1018 = vadd.f32 %v982, 1.0
        %v1019 = vadd.f32 %v984, 1.0
        %v1020 = vadd.f32 %v986, 1.0
        %v1021 = vadd.f32 %v988, 1.0
        %v1022 = vadd.f32 %v990, 1.0
        %v1023 = vrcp.pop %v991
        %v1024 = vmul.f32 %v991, %v1023
        %v1025 = vsub.f32 1.0, %v1024
        %v1026 = vmul.f32 %v1023, %v1025
        %v1027 = vadd.f32 %v1023, %v1026
        %vm1028 = vweird.f32 %v991
        %vm1029 = vweird.f32 %v1023
        %vm1030 = vmor %vm1028, %vm1029
        %v1031 = vsel %vm1030, %v1023, %v1027
        %v1032 = vand.u32 2147483647, %v991
        %vm1033 = vcmp.eq.f32.partialorder %v1032, 8.507059e+37
        %v1034 = vand.u32 %v991, 2147483648
        %v1035 = vor.u32 1.1754944e-38, %v1034
        %v1036 = vsel %vm1033, %v1035, %v1031
        %v1037 = vmul.f32 1.0, %v1036
        %v1038 = vrcp.pop %v992
        %v1039 = vmul.f32 %v992, %v1038
        %v1040 = vsub.f32 1.0, %v1039
        %v1041 = vmul.f32 %v1038, %v1040
        %v1042 = vadd.f32 %v1038, %v1041
        %vm1043 = vweird.f32 %v992
        %vm1044 = vweird.f32 %v1038
        %vm1045 = vmor %vm1043, %vm1044
        %v1046 = vsel %vm1045, %v1038, %v1042
        %v1047 = vand.u32 2147483647, %v992
        %vm1048 = vcmp.eq.f32.partialorder %v1047, 8.507059e+37
        %v1049 = vand.u32 %v992, 2147483648
        %v1050 = vor.u32 1.1754944e-38, %v1049
        %v1051 = vsel %vm1048, %v1050, %v1046
        %v1052 = vmul.f32 1.0, %v1051
        %v1053 = vrcp.pop %v993
        %v1054 = vmul.f32 %v993, %v1053
        %v1055 = vsub.f32 1.0, %v1054
        %v1056 = vmul.f32 %v1053, %v1055
        %v1057 = vadd.f32 %v1053, %v1056
        %vm1058 = vweird.f32 %v993
        %vm1059 = vweird.f32 %v1053
        %vm1060 = vmor %vm1058, %vm1059
        %v1061 = vsel %vm1060, %v1053, %v1057
        %v1062 = vand.u32 2147483647, %v993
        %vm1063 = vcmp.eq.f32.partialorder %v1062, 8.507059e+37
        %v1064 = vand.u32 %v993, 2147483648
        %v1065 = vor.u32 1.1754944e-38, %v1064
        %v1066 = vsel %vm1063, %v1065, %v1061
        %v1067 = vmul.f32 1.0, %v1066
        %v1068 = vrcp.pop %v994
        %v1069 = vmul.f32 %v994, %v1068
        %v1070 = vsub.f32 1.0, %v1069
        %v1071 = vmul.f32 %v1068, %v1070
        %v1072 = vadd.f32 %v1068, %v1071
        %vm1073 = vweird.f32 %v994
        %vm1074 = vweird.f32 %v1068
        %vm1075 = vmor %vm1073, %vm1074
        %v1076 = vsel %vm1075, %v1068, %v1072
        %v1077 = vand.u32 2147483647, %v994
        %vm1078 = vcmp.eq.f32.partialorder %v1077, 8.507059e+37
        %v1079 = vand.u32 %v994, 2147483648
        %v1080 = vor.u32 1.1754944e-38, %v1079
        %v1081 = vsel %vm1078, %v1080, %v1076
        %v1082 = vmul.f32 1.0, %v1081
        %v1083 = vrcp.pop %v995
        %v1084 = vmul.f32 %v995, %v1083
        %v1085 = vsub.f32 1.0, %v1084
        %v1086 = vmul.f32 %v1083, %v1085
        %v1087 = vadd.f32 %v1083, %v1086
        %vm1088 = vweird.f32 %v995
        %vm1089 = vweird.f32 %v1083
        %vm1090 = vmor %vm1088, %vm1089
        %v1091 = vsel %vm1090, %v1083, %v1087
        %v1092 = vand.u32 2147483647, %v995
        %vm1093 = vcmp.eq.f32.partialorder %v1092, 8.507059e+37
        %v1094 = vand.u32 %v995, 2147483648
        %v1095 = vor.u32 1.1754944e-38, %v1094
        %v1096 = vsel %vm1093, %v1095, %v1091
        %v1097 = vmul.f32 1.0, %v1096
        %v1098 = vrcp.pop %v996
        %v1099 = vmul.f32 %v996, %v1098
        %v1100 = vsub.f32 1.0, %v1099
        %v1101 = vmul.f32 %v1098, %v1100
        %v1102 = vadd.f32 %v1098, %v1101
        %vm1103 = vweird.f32 %v996
        %vm1104 = vweird.f32 %v1098
        %vm1105 = vmor %vm1103, %vm1104
        %v1106 = vsel %vm1105, %v1098, %v1102
        %v1107 = vand.u32 2147483647, %v996
        %vm1108 = vcmp.eq.f32.partialorder %v1107, 8.507059e+37
        %v1109 = vand.u32 %v996, 2147483648
        %v1110 = vor.u32 1.1754944e-38, %v1109
        %v1111 = vsel %vm1108, %v1110, %v1106
        %v1112 = vmul.f32 1.0, %v1111
        %v1113 = vrcp.pop %v997
        %v1114 = vmul.f32 %v997, %v1113
        %v1115 = vsub.f32 1.0, %v1114
        %v1116 = vmul.f32 %v1113, %v1115
        %v1117 = vadd.f32 %v1113, %v1116
        %vm1118 = vweird.f32 %v997
        %vm1119 = vweird.f32 %v1113
        %vm1120 = vmor %vm1118, %vm1119
        %v1121 = vsel %vm1120, %v1113, %v1117
        %v1122 = vand.u32 2147483647, %v997
        %vm1123 = vcmp.eq.f32.partialorder %v1122, 8.507059e+37
        %v1124 = vand.u32 %v997, 2147483648
        %v1125 = vor.u32 1.1754944e-38, %v1124
        %v1126 = vsel %vm1123, %v1125, %v1121
        %v1127 = vmul.f32 1.0, %v1126
        %v1128 = vrcp.pop %v998
        %v1129 = vmul.f32 %v998, %v1128
        %v1130 = vsub.f32 1.0, %v1129
        %v1131 = vmul.f32 %v1128, %v1130
        %v1132 = vadd.f32 %v1128, %v1131
        %vm1133 = vweird.f32 %v998
        %vm1134 = vweird.f32 %v1128
        %vm1135 = vmor %vm1133, %vm1134
        %v1136 = vsel %vm1135, %v1128, %v1132
        %v1137 = vand.u32 2147483647, %v998
        %vm1138 = vcmp.eq.f32.partialorder %v1137, 8.507059e+37
        %v1139 = vand.u32 %v998, 2147483648
        %v1140 = vor.u32 1.1754944e-38, %v1139
        %v1141 = vsel %vm1138, %v1140, %v1136
        %v1142 = vmul.f32 1.0, %v1141
        %v1143 = vrcp.pop %v999
        %v1144 = vmul.f32 %v999, %v1143
        %v1145 = vsub.f32 1.0, %v1144
        %v1146 = vmul.f32 %v1143, %v1145
        %v1147 = vadd.f32 %v1143, %v1146
        %vm1148 = vweird.f32 %v999
        %vm1149 = vweird.f32 %v1143
        %vm1150 = vmor %vm1148, %vm1149
        %v1151 = vsel %vm1150, %v1143, %v1147
        %v1152 = vand.u32 2147483647, %v999
        %vm1153 = vcmp.eq.f32.partialorder %v1152, 8.507059e+37
        %v1154 = vand.u32 %v999, 2147483648
        %v1155 = vor.u32 1.1754944e-38, %v1154
        %v1156 = vsel %vm1153, %v1155, %v1151
        %v1157 = vmul.f32 1.0, %v1156
        %v1158 = vrcp.pop %v1000
        %v1159 = vmul.f32 %v1000, %v1158
        %v1160 = vsub.f32 1.0, %v1159
        %v1161 = vmul.f32 %v1158, %v1160
        %v1162 = vadd.f32 %v1158, %v1161
        %vm1163 = vweird.f32 %v1000
        %vm1164 = vweird.f32 %v1158
        %vm1165 = vmor %vm1163, %vm1164
        %v1166 = vsel %vm1165, %v1158, %v1162
        %v1167 = vand.u32 2147483647, %v1000
        %vm1168 = vcmp.eq.f32.partialorder %v1167, 8.507059e+37
        %v1169 = vand.u32 %v1000, 2147483648
        %v1170 = vor.u32 1.1754944e-38, %v1169
        %v1171 = vsel %vm1168, %v1170, %v1166
        %v1172 = vmul.f32 1.0, %v1171
        %v1173 = vrcp.pop %v1001
        %v1174 = vmul.f32 %v1001, %v1173
        %v1175 = vsub.f32 1.0, %v1174
        %v1176 = vmul.f32 %v1173, %v1175
        %v1177 = vadd.f32 %v1173, %v1176
        %vm1178 = vweird.f32 %v1001
        %vm1179 = vweird.f32 %v1173
        %vm1180 = vmor %vm1178, %vm1179
        %v1181 = vsel %vm1180, %v1173, %v1177
        %v1182 = vand.u32 2147483647, %v1001
        %vm1183 = vcmp.eq.f32.partialorder %v1182, 8.507059e+37
        %v1184 = vand.u32 %v1001, 2147483648
        %v1185 = vor.u32 1.1754944e-38, %v1184
        %v1186 = vsel %vm1183, %v1185, %v1181
        %v1187 = vmul.f32 1.0, %v1186
        %v1188 = vrcp.pop %v1002
        %v1189 = vmul.f32 %v1002, %v1188
        %v1190 = vsub.f32 1.0, %v1189
        %v1191 = vmul.f32 %v1188, %v1190
        %v1192 = vadd.f32 %v1188, %v1191
        %vm1193 = vweird.f32 %v1002
        %vm1194 = vweird.f32 %v1188
        %vm1195 = vmor %vm1193, %vm1194
        %v1196 = vsel %vm1195, %v1188, %v1192
        %v1197 = vand.u32 2147483647, %v1002
        %vm1198 = vcmp.eq.f32.partialorder %v1197, 8.507059e+37
        %v1199 = vand.u32 %v1002, 2147483648
        %v1200 = vor.u32 1.1754944e-38, %v1199
        %v1201 = vsel %vm1198, %v1200, %v1196
        %v1202 = vmul.f32 1.0, %v1201
        %v1203 = vrcp.pop %v1003
        %v1204 = vmul.f32 %v1003, %v1203
        %v1205 = vsub.f32 1.0, %v1204
        %v1206 = vmul.f32 %v1203, %v1205
        %v1207 = vadd.f32 %v1203, %v1206
        %vm1208 = vweird.f32 %v1003
        %vm1209 = vweird.f32 %v1203
        %vm1210 = vmor %vm1208, %vm1209
        %v1211 = vsel %vm1210, %v1203, %v1207
        %v1212 = vand.u32 2147483647, %v1003
        %vm1213 = vcmp.eq.f32.partialorder %v1212, 8.507059e+37
        %v1214 = vand.u32 %v1003, 2147483648
        %v1215 = vor.u32 1.1754944e-38, %v1214
        %v1216 = vsel %vm1213, %v1215, %v1211
        %v1217 = vmul.f32 1.0, %v1216
        %v1218 = vrcp.pop %v1004
        %v1219 = vmul.f32 %v1004, %v1218
        %v1220 = vsub.f32 1.0, %v1219
        %v1221 = vmul.f32 %v1218, %v1220
        %v1222 = vadd.f32 %v1218, %v1221
        %vm1223 = vweird.f32 %v1004
        %vm1224 = vweird.f32 %v1218
        %vm1225 = vmor %vm1223, %vm1224
        %v1226 = vsel %vm1225, %v1218, %v1222
        %v1227 = vand.u32 2147483647, %v1004
        %vm1228 = vcmp.eq.f32.partialorder %v1227, 8.507059e+37
        %v1229 = vand.u32 %v1004, 2147483648
        %v1230 = vor.u32 1.1754944e-38, %v1229
        %v1231 = vsel %vm1228, %v1230, %v1226
        %v1232 = vmul.f32 1.0, %v1231
        %v1233 = vrcp.pop %v1005
        %v1234 = vmul.f32 %v1005, %v1233
        %v1235 = vsub.f32 1.0, %v1234
        %v1236 = vmul.f32 %v1233, %v1235
        %v1237 = vadd.f32 %v1233, %v1236
        %vm1238 = vweird.f32 %v1005
        %vm1239 = vweird.f32 %v1233
        %vm1240 = vmor %vm1238, %vm1239
        %v1241 = vsel %vm1240, %v1233, %v1237
        %v1242 = vand.u32 2147483647, %v1005
        %vm1243 = vcmp.eq.f32.partialorder %v1242, 8.507059e+37
        %v1244 = vand.u32 %v1005, 2147483648
        %v1245 = vor.u32 1.1754944e-38, %v1244
        %v1246 = vsel %vm1243, %v1245, %v1241
        %v1247 = vmul.f32 1.0, %v1246
        %v1248 = vrcp.pop %v1006
        %v1249 = vmul.f32 %v1006, %v1248
        %v1250 = vsub.f32 1.0, %v1249
        %v1251 = vmul.f32 %v1248, %v1250
        %v1252 = vadd.f32 %v1248, %v1251
        %vm1253 = vweird.f32 %v1006
        %vm1254 = vweird.f32 %v1248
        %vm1255 = vmor %vm1253, %vm1254
        %v1256 = vsel %vm1255, %v1248, %v1252
        %v1257 = vand.u32 2147483647, %v1006
        %vm1258 = vcmp.eq.f32.partialorder %v1257, 8.507059e+37
        %v1259 = vand.u32 %v1006, 2147483648
        %v1260 = vor.u32 1.1754944e-38, %v1259
        %v1261 = vsel %vm1258, %v1260, %v1256
        %v1262 = vmul.f32 1.0, %v1261
        %v1263 = vrcp.pop %v1007
        %v1264 = vmul.f32 %v1007, %v1263
        %v1265 = vsub.f32 1.0, %v1264
        %v1266 = vmul.f32 %v1263, %v1265
        %v1267 = vadd.f32 %v1263, %v1266
        %vm1268 = vweird.f32 %v1007
        %vm1269 = vweird.f32 %v1263
        %vm1270 = vmor %vm1268, %vm1269
        %v1271 = vsel %vm1270, %v1263, %v1267
        %v1272 = vand.u32 2147483647, %v1007
        %vm1273 = vcmp.eq.f32.partialorder %v1272, 8.507059e+37
        %v1274 = vand.u32 %v1007, 2147483648
        %v1275 = vor.u32 1.1754944e-38, %v1274
        %v1276 = vsel %vm1273, %v1275, %v1271
        %v1277 = vmul.f32 1.0, %v1276
        %v1278 = vrcp.pop %v1008
        %v1279 = vmul.f32 %v1008, %v1278
        %v1280 = vsub.f32 1.0, %v1279
        %v1281 = vmul.f32 %v1278, %v1280
        %v1282 = vadd.f32 %v1278, %v1281
        %vm1283 = vweird.f32 %v1008
        %vm1284 = vweird.f32 %v1278
        %vm1285 = vmor %vm1283, %vm1284
        %v1286 = vsel %vm1285, %v1278, %v1282
        %v1287 = vand.u32 2147483647, %v1008
        %vm1288 = vcmp.eq.f32.partialorder %v1287, 8.507059e+37
        %v1289 = vand.u32 %v1008, 2147483648
        %v1290 = vor.u32 1.1754944e-38, %v1289
        %v1291 = vsel %vm1288, %v1290, %v1286
        %v1292 = vmul.f32 1.0, %v1291
        %v1293 = vrcp.pop %v1009
        %v1294 = vmul.f32 %v1009, %v1293
        %v1295 = vsub.f32 1.0, %v1294
        %v1296 = vmul.f32 %v1293, %v1295
        %v1297 = vadd.f32 %v1293, %v1296
        %vm1298 = vweird.f32 %v1009
        %vm1299 = vweird.f32 %v1293
        %vm1300 = vmor %vm1298, %vm1299
        %v1301 = vsel %vm1300, %v1293, %v1297
        %v1302 = vand.u32 2147483647, %v1009
        %vm1303 = vcmp.eq.f32.partialorder %v1302, 8.507059e+37
        %v1304 = vand.u32 %v1009, 2147483648
        %v1305 = vor.u32 1.1754944e-38, %v1304
        %v1306 = vsel %vm1303, %v1305, %v1301
        %v1307 = vmul.f32 1.0, %v1306
        %v1308 = vrcp.pop %v1010
        %v1309 = vmul.f32 %v1010, %v1308
        %v1310 = vsub.f32 1.0, %v1309
        %v1311 = vmul.f32 %v1308, %v1310
        %v1312 = vadd.f32 %v1308, %v1311
        %vm1313 = vweird.f32 %v1010
        %vm1314 = vweird.f32 %v1308
        %vm1315 = vmor %vm1313, %vm1314
        %v1316 = vsel %vm1315, %v1308, %v1312
        %v1317 = vand.u32 2147483647, %v1010
        %vm1318 = vcmp.eq.f32.partialorder %v1317, 8.507059e+37
        %v1319 = vand.u32 %v1010, 2147483648
        %v1320 = vor.u32 1.1754944e-38, %v1319
        %v1321 = vsel %vm1318, %v1320, %v1316
        %v1322 = vmul.f32 1.0, %v1321
        %v1323 = vrcp.pop %v1011
        %v1324 = vmul.f32 %v1011, %v1323
        %v1325 = vsub.f32 1.0, %v1324
        %v1326 = vmul.f32 %v1323, %v1325
        %v1327 = vadd.f32 %v1323, %v1326
        %vm1328 = vweird.f32 %v1011
        %vm1329 = vweird.f32 %v1323
        %vm1330 = vmor %vm1328, %vm1329
        %v1331 = vsel %vm1330, %v1323, %v1327
        %v1332 = vand.u32 2147483647, %v1011
        %vm1333 = vcmp.eq.f32.partialorder %v1332, 8.507059e+37
        %v1334 = vand.u32 %v1011, 2147483648
        %v1335 = vor.u32 1.1754944e-38, %v1334
        %v1336 = vsel %vm1333, %v1335, %v1331
        %v1337 = vmul.f32 1.0, %v1336
        %v1338 = vrcp.pop %v1012
        %v1339 = vmul.f32 %v1012, %v1338
        %v1340 = vsub.f32 1.0, %v1339
        %v1341 = vmul.f32 %v1338, %v1340
        %v1342 = vadd.f32 %v1338, %v1341
        %vm1343 = vweird.f32 %v1012
        %vm1344 = vweird.f32 %v1338
        %vm1345 = vmor %vm1343, %vm1344
        %v1346 = vsel %vm1345, %v1338, %v1342
        %v1347 = vand.u32 2147483647, %v1012
        %vm1348 = vcmp.eq.f32.partialorder %v1347, 8.507059e+37
        %v1349 = vand.u32 %v1012, 2147483648
        %v1350 = vor.u32 1.1754944e-38, %v1349
        %v1351 = vsel %vm1348, %v1350, %v1346
        %v1352 = vmul.f32 1.0, %v1351
        %v1353 = vrcp.pop %v1013
        %v1354 = vmul.f32 %v1013, %v1353
        %v1355 = vsub.f32 1.0, %v1354
        %v1356 = vmul.f32 %v1353, %v1355
        %v1357 = vadd.f32 %v1353, %v1356
        %vm1358 = vweird.f32 %v1013
        %vm1359 = vweird.f32 %v1353
        %vm1360 = vmor %vm1358, %vm1359
        %v1361 = vsel %vm1360, %v1353, %v1357
        %v1362 = vand.u32 2147483647, %v1013
        %vm1363 = vcmp.eq.f32.partialorder %v1362, 8.507059e+37
        %v1364 = vand.u32 %v1013, 2147483648
        %v1365 = vor.u32 1.1754944e-38, %v1364
        %v1366 = vsel %vm1363, %v1365, %v1361
        %v1367 = vmul.f32 1.0, %v1366
        %v1368 = vrcp.pop %v1014
        %v1369 = vmul.f32 %v1014, %v1368
        %v1370 = vsub.f32 1.0, %v1369
        %v1371 = vmul.f32 %v1368, %v1370
        %v1372 = vadd.f32 %v1368, %v1371
        %vm1373 = vweird.f32 %v1014
        %vm1374 = vweird.f32 %v1368
        %vm1375 = vmor %vm1373, %vm1374
        %v1376 = vsel %vm1375, %v1368, %v1372
        %v1377 = vand.u32 2147483647, %v1014
        %vm1378 = vcmp.eq.f32.partialorder %v1377, 8.507059e+37
        %v1379 = vand.u32 %v1014, 2147483648
        %v1380 = vor.u32 1.1754944e-38, %v1379
        %v1381 = vsel %vm1378, %v1380, %v1376
        %v1382 = vmul.f32 1.0, %v1381
        %v1383 = vrcp.pop %v1015
        %v1384 = vmul.f32 %v1015, %v1383
        %v1385 = vsub.f32 1.0, %v1384
        %v1386 = vmul.f32 %v1383, %v1385
        %v1387 = vadd.f32 %v1383, %v1386
        %vm1388 = vweird.f32 %v1015
        %vm1389 = vweird.f32 %v1383
        %vm1390 = vmor %vm1388, %vm1389
        %v1391 = vsel %vm1390, %v1383, %v1387
        %v1392 = vand.u32 2147483647, %v1015
        %vm1393 = vcmp.eq.f32.partialorder %v1392, 8.507059e+37
        %v1394 = vand.u32 %v1015, 2147483648
        %v1395 = vor.u32 1.1754944e-38, %v1394
        %v1396 = vsel %vm1393, %v1395, %v1391
        %v1397 = vmul.f32 1.0, %v1396
        %v1398 = vrcp.pop %v1016
        %v1399 = vmul.f32 %v1016, %v1398
        %v1400 = vsub.f32 1.0, %v1399
        %v1401 = vmul.f32 %v1398, %v1400
        %v1402 = vadd.f32 %v1398, %v1401
        %vm1403 = vweird.f32 %v1016
        %vm1404 = vweird.f32 %v1398
        %vm1405 = vmor %vm1403, %vm1404
        %v1406 = vsel %vm1405, %v1398, %v1402
        %v1407 = vand.u32 2147483647, %v1016
        %vm1408 = vcmp.eq.f32.partialorder %v1407, 8.507059e+37
        %v1409 = vand.u32 %v1016, 2147483648
        %v1410 = vor.u32 1.1754944e-38, %v1409
        %v1411 = vsel %vm1408, %v1410, %v1406
        %v1412 = vmul.f32 1.0, %v1411
        %v1413 = vrcp.pop %v1017
        %v1414 = vmul.f32 %v1017, %v1413
        %v1415 = vsub.f32 1.0, %v1414
        %v1416 = vmul.f32 %v1413, %v1415
        %v1417 = vadd.f32 %v1413, %v1416
        %vm1418 = vweird.f32 %v1017
        %vm1419 = vweird.f32 %v1413
        %vm1420 = vmor %vm1418, %vm1419
        %v1421 = vsel %vm1420, %v1413, %v1417
        %v1422 = vand.u32 2147483647, %v1017
        %vm1423 = vcmp.eq.f32.partialorder %v1422, 8.507059e+37
        %v1424 = vand.u32 %v1017, 2147483648
        %v1425 = vor.u32 1.1754944e-38, %v1424
        %v1426 = vsel %vm1423, %v1425, %v1421
        %v1427 = vmul.f32 1.0, %v1426
        %v1428 = vrcp.pop %v1018
        %v1429 = vmul.f32 %v1018, %v1428
        %v1430 = vsub.f32 1.0, %v1429
        %v1431 = vmul.f32 %v1428, %v1430
        %v1432 = vadd.f32 %v1428, %v1431
        %vm1433 = vweird.f32 %v1018
        %vm1434 = vweird.f32 %v1428
        %vm1435 = vmor %vm1433, %vm1434
        %v1436 = vsel %vm1435, %v1428, %v1432
        %v1437 = vand.u32 2147483647, %v1018
        %vm1438 = vcmp.eq.f32.partialorder %v1437, 8.507059e+37
        %v1439 = vand.u32 %v1018, 2147483648
        %v1440 = vor.u32 1.1754944e-38, %v1439
        %v1441 = vsel %vm1438, %v1440, %v1436
        %v1442 = vmul.f32 1.0, %v1441
        %v1443 = vrcp.pop %v1019
        %v1444 = vmul.f32 %v1019, %v1443
        %v1445 = vsub.f32 1.0, %v1444
        %v1446 = vmul.f32 %v1443, %v1445
        %v1447 = vadd.f32 %v1443, %v1446
        %vm1448 = vweird.f32 %v1019
        %vm1449 = vweird.f32 %v1443
        %vm1450 = vmor %vm1448, %vm1449
        %v1451 = vsel %vm1450, %v1443, %v1447
        %v1452 = vand.u32 2147483647, %v1019
        %vm1453 = vcmp.eq.f32.partialorder %v1452, 8.507059e+37
        %v1454 = vand.u32 %v1019, 2147483648
        %v1455 = vor.u32 1.1754944e-38, %v1454
        %v1456 = vsel %vm1453, %v1455, %v1451
        %v1457 = vmul.f32 1.0, %v1456
        %v1458 = vrcp.pop %v1020
        %v1459 = vmul.f32 %v1020, %v1458
        %v1460 = vsub.f32 1.0, %v1459
        %v1461 = vmul.f32 %v1458, %v1460
        %v1462 = vadd.f32 %v1458, %v1461
        %vm1463 = vweird.f32 %v1020
        %vm1464 = vweird.f32 %v1458
        %vm1465 = vmor %vm1463, %vm1464
        %v1466 = vsel %vm1465, %v1458, %v1462
        %v1467 = vand.u32 2147483647, %v1020
        %vm1468 = vcmp.eq.f32.partialorder %v1467, 8.507059e+37
        %v1469 = vand.u32 %v1020, 2147483648
        %v1470 = vor.u32 1.1754944e-38, %v1469
        %v1471 = vsel %vm1468, %v1470, %v1466
        %v1472 = vmul.f32 1.0, %v1471
        %v1473 = vrcp.pop %v1021
        %v1474 = vmul.f32 %v1021, %v1473
        %v1475 = vsub.f32 1.0, %v1474
        %v1476 = vmul.f32 %v1473, %v1475
        %v1477 = vadd.f32 %v1473, %v1476
        %vm1478 = vweird.f32 %v1021
        %vm1479 = vweird.f32 %v1473
        %vm1480 = vmor %vm1478, %vm1479
        %v1481 = vsel %vm1480, %v1473, %v1477
        %v1482 = vand.u32 2147483647, %v1021
        %vm1483 = vcmp.eq.f32.partialorder %v1482, 8.507059e+37
        %v1484 = vand.u32 %v1021, 2147483648
        %v1485 = vor.u32 1.1754944e-38, %v1484
        %v1486 = vsel %vm1483, %v1485, %v1481
        %v1487 = vmul.f32 1.0, %v1486
        %v1488 = vrcp.pop %v1022
        %v1489 = vmul.f32 %v1022, %v1488
        %v1490 = vsub.f32 1.0, %v1489
        %v1491 = vmul.f32 %v1488, %v1490
        %v1492 = vadd.f32 %v1488, %v1491
        %vm1493 = vweird.f32 %v1022
        %vm1494 = vweird.f32 %v1488
        %vm1495 = vmor %vm1493, %vm1494
        %v1496 = vsel %vm1495, %v1488, %v1492
        %v1497 = vand.u32 2147483647, %v1022
        %vm1498 = vcmp.eq.f32.partialorder %v1497, 8.507059e+37
        %v1499 = vand.u32 %v1022, 2147483648
        %v1500 = vor.u32 1.1754944e-38, %v1499
        %v1501 = vsel %vm1498, %v1500, %v1496
        %v1502 = vmul.f32 1.0, %v1501
        %v1503 = vmul.f32 %v667, %v1037
        %v1504 = vmul.f32 %v670, %v1052
        %v1505 = vmul.f32 %v673, %v1067
        %v1506 = vmul.f32 %v676, %v1082
        %v1507 = vmul.f32 %v679, %v1097
        %v1508 = vmul.f32 %v682, %v1112
        %v1509 = vmul.f32 %v685, %v1127
        %v1510 = vmul.f32 %v688, %v1142
        %v1511 = vmul.f32 %v691, %v1157
        %v1512 = vmul.f32 %v694, %v1172
        %v1513 = vmul.f32 %v697, %v1187
        %v1514 = vmul.f32 %v700, %v1202
        %v1515 = vmul.f32 %v703, %v1217
        %v1516 = vmul.f32 %v706, %v1232
        %v1517 = vmul.f32 %v709, %v1247
        %v1518 = vmul.f32 %v712, %v1262
        %v1519 = vmul.f32 %v715, %v1277
        %v1520 = vmul.f32 %v718, %v1292
        %v1521 = vmul.f32 %v721, %v1307
        %v1522 = vmul.f32 %v724, %v1322
        %v1523 = vmul.f32 %v727, %v1337
        %v1524 = vmul.f32 %v730, %v1352
        %v1525 = vmul.f32 %v733, %v1367
        %v1526 = vmul.f32 %v736, %v1382
        %v1527 = vmul.f32 %v739, %v1397
        %v1528 = vmul.f32 %v742, %v1412
        %v1529 = vmul.f32 %v745, %v1427
        %v1530 = vmul.f32 %v748, %v1442
        %v1531 = vmul.f32 %v751, %v1457
        %v1532 = vmul.f32 %v754, %v1472
        %v1533 = vmul.f32 %v757, %v1487
        %v1534 = vmul.f32 %v760, %v1502
        %v1535 = vmul.f32 %v1503, %v800
        %v1536 = vmul.f32 %v1504, %v803
        %v1537 = vmul.f32 %v1505, %v806
        %v1538 = vmul.f32 %v1506, %v809
        %v1539 = vmul.f32 %v1507, %v812
        %v1540 = vmul.f32 %v1508, %v815
        %v1541 = vmul.f32 %v1509, %v818
        %v1542 = vmul.f32 %v1510, %v821
        %v1543 = vmul.f32 %v1511, %v824
        %v1544 = vmul.f32 %v1512, %v827
        %v1545 = vmul.f32 %v1513, %v830
        %v1546 = vmul.f32 %v1514, %v833
        %v1547 = vmul.f32 %v1515, %v836
        %v1548 = vmul.f32 %v1516, %v839
        %v1549 = vmul.f32 %v1517, %v842
        %v1550 = vmul.f32 %v1518, %v845
        %v1551 = vmul.f32 %v1519, %v848
        %v1552 = vmul.f32 %v1520, %v851
        %v1553 = vmul.f32 %v1521, %v854
        %v1554 = vmul.f32 %v1522, %v857
        %v1555 = vmul.f32 %v1523, %v860
        %v1556 = vmul.f32 %v1524, %v863
        %v1557 = vmul.f32 %v1525, %v866
        %v1558 = vmul.f32 %v1526, %v869
        %v1559 = vmul.f32 %v1527, %v872
        %v1560 = vmul.f32 %v1528, %v875
        %v1561 = vmul.f32 %v1529, %v878
        %v1562 = vmul.f32 %v1530, %v881
        %v1563 = vmul.f32 %v1531, %v884
        %v1564 = vmul.f32 %v1532, %v887
        %v1565 = vmul.f32 %v1533, %v890
        %v1566 = vmul.f32 %v1534, %v893
        %1567 = vst [vmem:[%s456] sm:$0xff] %v1535
        %1568 = vst [vmem:[%s456 + $0x8] sm:$0xff] %v1536
        %1569 = vst [vmem:[%s456 + $0x10] sm:$0xff] %v1537
        %1570 = vst [vmem:[%s456 + $0x18] sm:$0xff] %v1538
        %1571 = vst [vmem:[%s456 + $0x20] sm:$0xff] %v1539
        %1572 = vst [vmem:[%s456 + $0x28] sm:$0xff] %v1540
        %1573 = vst [vmem:[%s456 + $0x30] sm:$0xff] %v1541
        %1574 = vst [vmem:[%s456 + $0x38] sm:$0xff] %v1542
        %1575 = vst [vmem:[%s456 + $0x40] sm:$0xff] %v1543
        %1576 = vst [vmem:[%s456 + $0x48] sm:$0xff] %v1544
        %1577 = vst [vmem:[%s456 + $0x50] sm:$0xff] %v1545
        %1578 = vst [vmem:[%s456 + $0x58] sm:$0xff] %v1546
        %1579 = vst [vmem:[%s456 + $0x60] sm:$0xff] %v1547
        %1580 = vst [vmem:[%s456 + $0x68] sm:$0xff] %v1548
        %1581 = vst [vmem:[%s456 + $0x70] sm:$0xff] %v1549
        %1582 = vst [vmem:[%s456 + $0x78] sm:$0xff] %v1550
        %1583 = vst [vmem:[%s456 + $0x80] sm:$0xff] %v1551
        %1584 = vst [vmem:[%s456 + $0x88] sm:$0xff] %v1552
        %1585 = vst [vmem:[%s456 + $0x90] sm:$0xff] %v1553
        %1586 = vst [vmem:[%s456 + $0x98] sm:$0xff] %v1554
        %1587 = vst [vmem:[%s456 + $0xa0] sm:$0xff] %v1555
        %1588 = vst [vmem:[%s456 + $0xa8] sm:$0xff] %v1556
        %1589 = vst [vmem:[%s456 + $0xb0] sm:$0xff] %v1557
        %1590 = vst [vmem:[%s456 + $0xb8] sm:$0xff] %v1558
        %1591 = vst [vmem:[%s456 + $0xc0] sm:$0xff] %v1559
        %1592 = vst [vmem:[%s456 + $0xc8] sm:$0xff] %v1560
        %1593 = vst [vmem:[%s456 + $0xd0] sm:$0xff] %v1561
        %1594 = vst [vmem:[%s456 + $0xd8] sm:$0xff] %v1562
        %1595 = vst [vmem:[%s456 + $0xe0] sm:$0xff] %v1563
        %1596 = vst [vmem:[%s456 + $0xe8] sm:$0xff] %v1564
        %1597 = vst [vmem:[%s456 + $0xf0] sm:$0xff] %v1565
        %1598 = vst [vmem:[%s456 + $0xf8] sm:$0xff] %v1566
        %v1599 = vld [vmem:[%s7] sm:$0xff]
        %v1600 = vld [vmem:[%s7 + $0x8] sm:$0xff]
        %v1601 = vld [vmem:[%s7 + $0x10] sm:$0xff]
        %v1602 = vld [vmem:[%s7 + $0x18] sm:$0xff]
        %v1603 = vld [vmem:[%s7 + $0x20] sm:$0xff]
        %v1604 = vld [vmem:[%s7 + $0x28] sm:$0xff]
        %v1605 = vld [vmem:[%s7 + $0x30] sm:$0xff]
        %v1606 = vld [vmem:[%s7 + $0x38] sm:$0xff]
        %v1607 = vld [vmem:[%s7 + $0x40] sm:$0xff]
        %v1608 = vld [vmem:[%s7 + $0x48] sm:$0xff]
        %v1609 = vld [vmem:[%s7 + $0x50] sm:$0xff]
        %v1610 = vld [vmem:[%s7 + $0x58] sm:$0xff]
        %v1611 = vld [vmem:[%s7 + $0x60] sm:$0xff]
        %v1612 = vld [vmem:[%s7 + $0x68] sm:$0xff]
        %v1613 = vld [vmem:[%s7 + $0x70] sm:$0xff]
        %v1614 = vld [vmem:[%s7 + $0x78] sm:$0xff]
        %1615 = vmatpush.msra.mxu0 %v1614
        %1616 = vmatpush.msra.mxu0 %v1613
        %1617 = vmatpush.msra.mxu0 %v1612
        %1618 = vmatpush.msra.mxu0 %v1611
        %1619 = vmatpush.msra.mxu0 %v1610
        %1620 = vmatpush.msra.mxu0 %v1609
        %1621 = vmatpush.msra.mxu0 %v1608
        %1622 = vmatpush.msra.mxu0 %v1607
        %1623 = vmatpush.msra.mxu0 %v1606
        %1624 = vmatpush.msra.mxu0 %v1605
        %1625 = vmatpush.msra.mxu0 %v1604
        %1626 = vmatpush.msra.mxu0 %v1603
        %1627 = vmatpush.msra.mxu0 %v1602
        %1628 = vmatpush.msra.mxu0 %v1601
        %1629 = vmatpush.msra.mxu0 %v1600
        %1630 = vmatpush.msra.mxu0 %v1599
        %1631 = vmatmul.f32.gmra.mxu0 %v1535
        %v1632 = vpop.f32.mrf.mxu0
        %v1633 = vadd.f32 0.0, %v1632
        %1634 = vmatmul.f32.gmra.mxu0 %v1536
        %v1635 = vpop.f32.mrf.mxu0
        %v1636 = vadd.f32 0.0, %v1635
        %1637 = vmatmul.f32.gmra.mxu0 %v1537
        %v1638 = vpop.f32.mrf.mxu0
        %v1639 = vadd.f32 0.0, %v1638
        %1640 = vmatmul.f32.gmra.mxu0 %v1538
        %v1641 = vpop.f32.mrf.mxu0
        %v1642 = vadd.f32 0.0, %v1641
        %1643 = vmatmul.f32.gmra.mxu0 %v1539
        %v1644 = vpop.f32.mrf.mxu0
        %v1645 = vadd.f32 0.0, %v1644
        %1646 = vmatmul.f32.gmra.mxu0 %v1540
        %v1647 = vpop.f32.mrf.mxu0
        %v1648 = vadd.f32 0.0, %v1647
        %1649 = vmatmul.f32.gmra.mxu0 %v1541
        %v1650 = vpop.f32.mrf.mxu0
        %v1651 = vadd.f32 0.0, %v1650
        %1652 = vmatmul.f32.gmra.mxu0 %v1542
        %v1653 = vpop.f32.mrf.mxu0
        %v1654 = vadd.f32 0.0, %v1653
        %1655 = vmatmul.f32.gmra.mxu0 %v1543
        %v1656 = vpop.f32.mrf.mxu0
        %v1657 = vadd.f32 0.0, %v1656
        %1658 = vmatmul.f32.gmra.mxu0 %v1544
        %v1659 = vpop.f32.mrf.mxu0
        %v1660 = vadd.f32 0.0, %v1659
        %1661 = vmatmul.f32.gmra.mxu0 %v1545
        %v1662 = vpop.f32.mrf.mxu0
        %v1663 = vadd.f32 0.0, %v1662
        %1664 = vmatmul.f32.gmra.mxu0 %v1546
        %v1665 = vpop.f32.mrf.mxu0
        %v1666 = vadd.f32 0.0, %v1665
        %1667 = vmatmul.f32.gmra.mxu0 %v1547
        %v1668 = vpop.f32.mrf.mxu0
        %v1669 = vadd.f32 0.0, %v1668
        %1670 = vmatmul.f32.gmra.mxu0 %v1548
        %v1671 = vpop.f32.mrf.mxu0
        %v1672 = vadd.f32 0.0, %v1671
        %1673 = vmatmul.f32.gmra.mxu0 %v1549
        %v1674 = vpop.f32.mrf.mxu0
        %v1675 = vadd.f32 0.0, %v1674
        %1676 = vmatmul.f32.gmra.mxu0 %v1550
        %v1677 = vpop.f32.mrf.mxu0
        %v1678 = vadd.f32 0.0, %v1677
        %1679 = vmatmul.f32.gmra.mxu0 %v1551
        %v1680 = vpop.f32.mrf.mxu0
        %v1681 = vadd.f32 0.0, %v1680
        %1682 = vmatmul.f32.gmra.mxu0 %v1552
        %v1683 = vpop.f32.mrf.mxu0
        %v1684 = vadd.f32 0.0, %v1683
        %1685 = vmatmul.f32.gmra.mxu0 %v1553
        %v1686 = vpop.f32.mrf.mxu0
        %v1687 = vadd.f32 0.0, %v1686
        %1688 = vmatmul.f32.gmra.mxu0 %v1554
        %v1689 = vpop.f32.mrf.mxu0
        %v1690 = vadd.f32 0.0, %v1689
        %1691 = vmatmul.f32.gmra.mxu0 %v1555
        %v1692 = vpop.f32.mrf.mxu0
        %v1693 = vadd.f32 0.0, %v1692
        %1694 = vmatmul.f32.gmra.mxu0 %v1556
        %v1695 = vpop.f32.mrf.mxu0
        %v1696 = vadd.f32 0.0, %v1695
        %1697 = vmatmul.f32.gmra.mxu0 %v1557
        %v1698 = vpop.f32.mrf.mxu0
        %v1699 = vadd.f32 0.0, %v1698
        %1700 = vmatmul.f32.gmra.mxu0 %v1558
        %v1701 = vpop.f32.mrf.mxu0
        %v1702 = vadd.f32 0.0, %v1701
        %1703 = vmatmul.f32.gmra.mxu0 %v1559
        %v1704 = vpop.f32.mrf.mxu0
        %v1705 = vadd.f32 0.0, %v1704
        %1706 = vmatmul.f32.gmra.mxu0 %v1560
        %v1707 = vpop.f32.mrf.mxu0
        %v1708 = vadd.f32 0.0, %v1707
        %1709 = vmatmul.f32.gmra.mxu0 %v1561
        %v1710 = vpop.f32.mrf.mxu0
        %v1711 = vadd.f32 0.0, %v1710
        %1712 = vmatmul.f32.gmra.mxu0 %v1562
        %v1713 = vpop.f32.mrf.mxu0
        %v1714 = vadd.f32 0.0, %v1713
        %1715 = vmatmul.f32.gmra.mxu0 %v1563
        %v1716 = vpop.f32.mrf.mxu0
        %v1717 = vadd.f32 0.0, %v1716
        %1718 = vmatmul.f32.gmra.mxu0 %v1564
        %v1719 = vpop.f32.mrf.mxu0
        %v1720 = vadd.f32 0.0, %v1719
        %1721 = vmatmul.f32.gmra.mxu0 %v1565
        %v1722 = vpop.f32.mrf.mxu0
        %v1723 = vadd.f32 0.0, %v1722
        %1724 = vmatmul.f32.gmra.mxu0 %v1566
        %v1725 = vpop.f32.mrf.mxu0
        %v1726 = vadd.f32 0.0, %v1725
        %1727 = vdwg.mxu0
        %vm1728 = vcmask 64512
        %1729 = vst.msk [vmem:[%s462] sm:$0xff] %vm1728, %v1633
        %1730 = vst.msk [vmem:[%s462 + $0x8] sm:$0xff] %vm1728, %v1636
        %1731 = vst.msk [vmem:[%s462 + $0x10] sm:$0xff] %vm1728, %v1639
        %1732 = vst.msk [vmem:[%s462 + $0x18] sm:$0xff] %vm1728, %v1642
        %1733 = vst.msk [vmem:[%s462 + $0x20] sm:$0xff] %vm1728, %v1645
        %1734 = vst.msk [vmem:[%s462 + $0x28] sm:$0xff] %vm1728, %v1648
        %1735 = vst.msk [vmem:[%s462 + $0x30] sm:$0xff] %vm1728, %v1651
        %1736 = vst.msk [vmem:[%s462 + $0x38] sm:$0xff] %vm1728, %v1654
        %1737 = vst.msk [vmem:[%s462 + $0x40] sm:$0xff] %vm1728, %v1657
        %1738 = vst.msk [vmem:[%s462 + $0x48] sm:$0xff] %vm1728, %v1660
        %1739 = vst.msk [vmem:[%s462 + $0x50] sm:$0xff] %vm1728, %v1663
        %1740 = vst.msk [vmem:[%s462 + $0x58] sm:$0xff] %vm1728, %v1666
        %1741 = vst.msk [vmem:[%s462 + $0x60] sm:$0xff] %vm1728, %v1669
        %1742 = vst.msk [vmem:[%s462 + $0x68] sm:$0xff] %vm1728, %v1672
        %1743 = vst.msk [vmem:[%s462 + $0x70] sm:$0xff] %vm1728, %v1675
        %1744 = vst.msk [vmem:[%s462 + $0x78] sm:$0xff] %vm1728, %v1678
        %1745 = vst.msk [vmem:[%s462 + $0x80] sm:$0xff] %vm1728, %v1681
        %1746 = vst.msk [vmem:[%s462 + $0x88] sm:$0xff] %vm1728, %v1684
        %1747 = vst.msk [vmem:[%s462 + $0x90] sm:$0xff] %vm1728, %v1687
        %1748 = vst.msk [vmem:[%s462 + $0x98] sm:$0xff] %vm1728, %v1690
        %1749 = vst.msk [vmem:[%s462 + $0xa0] sm:$0xff] %vm1728, %v1693
        %1750 = vst.msk [vmem:[%s462 + $0xa8] sm:$0xff] %vm1728, %v1696
        %1751 = vst.msk [vmem:[%s462 + $0xb0] sm:$0xff] %vm1728, %v1699
        %1752 = vst.msk [vmem:[%s462 + $0xb8] sm:$0xff] %vm1728, %v1702
        %1753 = vst.msk [vmem:[%s462 + $0xc0] sm:$0xff] %vm1728, %v1705
        %1754 = vst.msk [vmem:[%s462 + $0xc8] sm:$0xff] %vm1728, %v1708
        %1755 = vst.msk [vmem:[%s462 + $0xd0] sm:$0xff] %vm1728, %v1711
        %1756 = vst.msk [vmem:[%s462 + $0xd8] sm:$0xff] %vm1728, %v1714
        %1757 = vst.msk [vmem:[%s462 + $0xe0] sm:$0xff] %vm1728, %v1717
        %1758 = vst.msk [vmem:[%s462 + $0xe8] sm:$0xff] %vm1728, %v1720
        %1759 = vst.msk [vmem:[%s462 + $0xf0] sm:$0xff] %vm1728, %v1723
        %1760 = vst.msk [vmem:[%s462 + $0xf8] sm:$0xff] %vm1728, %v1726
        %s1761 = smul.u32 32, %s27
        %p1762 = scmp.lt.s32.totalorder %s1761, 63
        %s1763 = scalar_select %p1762, %s1761, 63
        %s1764 = smul.addr %s1763, 8
        %s1765 = scalar_lea.vmem %s8, %s1764
        %s1766 = smul.u32 32, %s27
        %p1767 = scmp.lt.s32.totalorder %s1766, 63
        %s1768 = scalar_select %p1767, %s1766, 63
        %s1769 = smul.addr %s1768, 8
        %s1770 = scalar_lea.vmem %s9, %s1769
        // Predicated region
        $region81: #{moeff_forward.3} parent=51 // pred_check
          %p1771 = pneg %p218
        $region82: #{moeff_forward.3} parent=51 // pred_check_branch
          %1773 = sbr.rel (%p1771) target = $region84
        $region83: #{moeff_forward.3} parent=51 // pred_region
          %s1774 = smul.u32 32, %s27
        $region84: #{moeff_forward.3} parent=51 // pred_fallthru
          _
        // Predicated region
        $region85: #{moeff_forward.3} parent=51 // pred_check
          %p1775 = pneg %p244
        $region86: #{moeff_forward.3} parent=51 // pred_check_branch
          %1777 = sbr.rel (%p1775) target = $region88
        $region87: #{moeff_forward.3} parent=51 // pred_region
          %s1778 = smul.u32 32, %s27
        $region88: #{moeff_forward.3} parent=51 // pred_fallthru
          _
      $region52: #{moeff_forward.3} parent=5 // pred_fallthru
        _
      %p1779 = scmp.le.s32.totalorder 2, %s22
      // Predicated region
      $region89: #{moeff_forward.3} parent=5 // pred_check
        %p1780 = pneg %p1779
      $region90: #{moeff_forward.3} parent=5 // pred_check_branch
        %1782 = sbr.rel (%p1780) target = $region92
      $region91: #{moeff_forward.3} parent=5 // pred_region
        %s1783 = ssub.s32 %s22, 2
        // Predicated region
        $region93: #{moeff_forward.3} parent=91 // pred_check
          %p1784 = pneg %p224
        $region94: #{moeff_forward.3} parent=91 // pred_check_branch
          %1786 = sbr.rel (%p1784) target = $region96
        $region95: #{moeff_forward.3} parent=91 // pred_region
          %s1787 = smul.u32 32, %s28
          %p1788 = scmp.lt.s32.totalorder %s1787, 63
          %s1789 = scalar_select %p1788, %s1787, 63
          %s1790 = smul.addr %s1789, 8
          %s1791 = scalar_lea.vmem %s8, %s1790
        $region96: #{moeff_forward.3} parent=91 // pred_fallthru
          _
        // Predicated region
        $region97: #{moeff_forward.3} parent=91 // pred_check
          %p1792 = pneg %p250
        $region98: #{moeff_forward.3} parent=91 // pred_check_branch
          %1794 = sbr.rel (%p1792) target = $region100
        $region99: #{moeff_forward.3} parent=91 // pred_region
          %s1795 = smul.u32 32, %s28
          %p1796 = scmp.lt.s32.totalorder %s1795, 63
          %s1797 = scalar_select %p1796, %s1795, 63
          %s1798 = smul.addr %s1797, 8
          %s1799 = scalar_lea.vmem %s9, %s1798
        $region100: #{moeff_forward.3} parent=91 // pred_fallthru
          _
      $region92: #{moeff_forward.3} parent=5 // pred_fallthru
        _
    $region6: #{moeff_forward.3} parent=1 // loop_footer
      %s26 = sadd.s32 1, %s22
    $region7: #{moeff_forward.3} parent=1 // loop_footer_branch
      %21 = sbr.rel target = $region3
    $region8: #{moeff_forward.3} parent=1 // loop_exit
      _
    %1800 = vsyncpa [#allocation3], 1
    %s1801 = scalar_lea.sflag [#allocation3], 1
    %1802 = vsyncpa %s1801, 1
    %1803 = vsyncpa [#allocation5], 1
    %1804 = vsyncpa [#allocation8], 1
    %1805 = vsyncpa [#allocation11], 1

// kernel: moeff_forward.5
$region0: #{moeff_forward.5}
  #allocation0 [shape = 'u32[]', space=smem, size = 0x4, offset = 0x4, fixed_abs, tag = 'smem constant byte address 0x4 - core index']
  #allocation1 [shape = 'u32[72,128]{1,0:T(1,128)}', space=vmem, size = 0x9000, scoped, tag = 'internal scratch']
  %s0 = inlined_call_operand.vmem [shape: f32[512,128], index: 0, kind: input, shape index: {}]
  %s1 = inlined_call_operand.vmem [shape: f32[128,128], index: 1, kind: input, shape index: {}]
  %s2 = inlined_call_operand.vmem [shape: f32[1,128], index: 2, kind: input, shape index: {}]
  %s3 = inlined_call_operand.vmem [shape: f32[128,128], index: 3, kind: input, shape index: {}]
  %s4 = inlined_call_operand.vmem [shape: f32[1,128], index: 4, kind: input, shape index: {}]
  %s5 = inlined_call_operand.vmem [shape: f32[128,128], index: 5, kind: input, shape index: {}]
  %s6 = inlined_call_operand.vmem [shape: f32[1,128], index: 6, kind: input, shape index: {}]
  %s7 = inlined_call_operand.hbm [shape: f32[512,128], index: 7, kind: output, shape index: {}]
  %s8 = sld [smem:[#allocation0]]
  $region61: #{moeff_forward.5} parent=0
    _
  %s10 = ssub.s32 1, %s8
  %s11 = scalar_select 0, %s10, %s8
  $region1: #{moeff_forward.5} parent=0
    #allocation2 [shape = 'u8[262144]{0}', space=vmem, size = 0x40000, scoped, tag = 'output window, operand 0']
    #allocation3 [shape = 's32[2]{0}', space=sflag, size = 0x8, scoped, tag = 'scoped memory for moeff_forward.5']
    %12 = vsyncpa [#allocation3], 0
    %s13 = scalar_lea.sflag [#allocation3], 1
    %14 = vsyncpa %s13, 0
    loop: start=0, step=1, limit=4
    $region2: #{moeff_forward.5} parent=1 // loop_pre_header
      _
    $region3: #{moeff_forward.5} parent=1 // loop_header
      %s16 = sphi 0, %s20
      %p17 = scmp.ge.s32.totalorder %s16, 4
      %s26 = sphi 0, %s28
      %s29 = sphi 0, %s26
      %s30 = sphi 0, %s29
      %s46 = sphi 0, %s30
      %s50 = sphi 0, %s50
      %s52 = sphi 0, %s50
      %s53 = sphi 0, %s52
      %s67 = sphi 0, %s53
      %s71 = sphi 0, %s71
      %s73 = sphi 0, %s71
      %s74 = sphi 0, %s73
      %s88 = sphi 0, %s74
      %s92 = sphi 0, %s92
      %s94 = sphi 0, %s92
      %s95 = sphi 0, %s94
      %s109 = sphi 0, %s95
      %s113 = sphi 0, %s113
      %s115 = sphi 0, %s113
      %s116 = sphi 0, %s115
      %s130 = sphi 0, %s116
      %s134 = sphi 0, %s134
      %s136 = sphi 0, %s134
      %s137 = sphi 0, %s136
      %s151 = sphi 0, %s137
      %s155 = sphi 0, %s155
      %s157 = sphi 0, %s155
      %s158 = sphi 0, %s157
      %s172 = sphi 0, %s158
      %s178 = sphi 0, %s180
      %s181 = sphi 0, %s178
      %s182 = sphi 0, %s181
      %s198 = sphi 0, %s182
    $region4: #{moeff_forward.5} parent=1 // loop_header_branch
      %19 = sbr.rel (%p17) target = $region8
    $region5: #{moeff_forward.5} parent=1 // loop_body
      %s21 = ssub.s32 %s16, 1
      %s22 = ssub.s32 %s16, 2
      %s23 = sadd.s32 %s16, 1
      %s24 = ssub.s32 %s16, %s23
      %p25 = scmp.eq.s32.totalorder %s24, 0
      %s27 = sadd.s32 %s26, 1
      %s28 = scalar_select %p25, %s26, %s27
      %p31 = pneg %p25
      %p32 = scmp.eq.s32.totalorder %s16, 1
      %p33 = por %p31, %p32
      %p34 = scmp.ne.s32.totalorder %s26, %s29
      %p35 = scmp.eq.s32.totalorder %s16, 0
      %p36 = por %p34, %p35
      %p37 = scmp.ne.s32.totalorder %s26, %s29
      %p38 = scmp.eq.s32.totalorder %s21, 1
      %p39 = por %p37, %p38
      %p40 = scmp.ne.s32.totalorder %s29, %s30
      %p41 = scmp.eq.s32.totalorder %s21, 0
      %p42 = por %p40, %p41
      %p43 = scmp.ne.s32.totalorder %s29, %s30
      %p44 = scmp.eq.s32.totalorder %s22, 1
      %p45 = por %p43, %p44
      %p47 = scmp.ne.s32.totalorder %s30, %s46
      %p48 = scmp.eq.s32.totalorder %s22, 0
      %p49 = por %p47, %p48
      %s51 = sadd.s32 %s50, 1
      %p54 = scmp.eq.s32.totalorder %s16, 1
      %p55 = scmp.ne.s32.totalorder %s50, %s52
      %p56 = scmp.eq.s32.totalorder %s16, 0
      %p57 = por %p55, %p56
      %p58 = scmp.ne.s32.totalorder %s50, %s52
      %p59 = scmp.eq.s32.totalorder %s21, 1
      %p60 = por %p58, %p59
      %p61 = scmp.ne.s32.totalorder %s52, %s53
      %p62 = scmp.eq.s32.totalorder %s21, 0
      %p63 = por %p61, %p62
      %p64 = scmp.ne.s32.totalorder %s52, %s53
      %p65 = scmp.eq.s32.totalorder %s22, 1
      %p66 = por %p64, %p65
      %p68 = scmp.ne.s32.totalorder %s53, %s67
      %p69 = scmp.eq.s32.totalorder %s22, 0
      %p70 = por %p68, %p69
      %s72 = sadd.s32 %s71, 1
      %p75 = scmp.eq.s32.totalorder %s16, 1
      %p76 = scmp.ne.s32.totalorder %s71, %s73
      %p77 = scmp.eq.s32.totalorder %s16, 0
      %p78 = por %p76, %p77
      %p79 = scmp.ne.s32.totalorder %s71, %s73
      %p80 = scmp.eq.s32.totalorder %s21, 1
      %p81 = por %p79, %p80
      %p82 = scmp.ne.s32.totalorder %s73, %s74
      %p83 = scmp.eq.s32.totalorder %s21, 0
      %p84 = por %p82, %p83
      %p85 = scmp.ne.s32.totalorder %s73, %s74
      %p86 = scmp.eq.s32.totalorder %s22, 1
      %p87 = por %p85, %p86
      %p89 = scmp.ne.s32.totalorder %s74, %s88
      %p90 = scmp.eq.s32.totalorder %s22, 0
      %p91 = por %p89, %p90
      %s93 = sadd.s32 %s92, 1
      %p96 = scmp.eq.s32.totalorder %s16, 1
      %p97 = scmp.ne.s32.totalorder %s92, %s94
      %p98 = scmp.eq.s32.totalorder %s16, 0
      %p99 = por %p97, %p98
      %p100 = scmp.ne.s32.totalorder %s92, %s94
      %p101 = scmp.eq.s32.totalorder %s21, 1
      %p102 = por %p100, %p101
      %p103 = scmp.ne.s32.totalorder %s94, %s95
      %p104 = scmp.eq.s32.totalorder %s21, 0
      %p105 = por %p103, %p104
      %p106 = scmp.ne.s32.totalorder %s94, %s95
      %p107 = scmp.eq.s32.totalorder %s22, 1
      %p108 = por %p106, %p107
      %p110 = scmp.ne.s32.totalorder %s95, %s109
      %p111 = scmp.eq.s32.totalorder %s22, 0
      %p112 = por %p110, %p111
      %s114 = sadd.s32 %s113, 1
      %p117 = scmp.eq.s32.totalorder %s16, 1
      %p118 = scmp.ne.s32.totalorder %s113, %s115
      %p119 = scmp.eq.s32.totalorder %s16, 0
      %p120 = por %p118, %p119
      %p121 = scmp.ne.s32.totalorder %s113, %s115
      %p122 = scmp.eq.s32.totalorder %s21, 1
      %p123 = por %p121, %p122
      %p124 = scmp.ne.s32.totalorder %s115, %s116
      %p125 = scmp.eq.s32.totalorder %s21, 0
      %p126 = por %p124, %p125
      %p127 = scmp.ne.s32.totalorder %s115, %s116
      %p128 = scmp.eq.s32.totalorder %s22, 1
      %p129 = por %p127, %p128
      %p131 = scmp.ne.s32.totalorder %s116, %s130
      %p132 = scmp.eq.s32.totalorder %s22, 0
      %p133 = por %p131, %p132
      %s135 = sadd.s32 %s134, 1
      %p138 = scmp.eq.s32.totalorder %s16, 1
      %p139 = scmp.ne.s32.totalorder %s134, %s136
      %p140 = scmp.eq.s32.totalorder %s16, 0
      %p141 = por %p139, %p140
      %p142 = scmp.ne.s32.totalorder %s134, %s136
      %p143 = scmp.eq.s32.totalorder %s21, 1
      %p144 = por %p142, %p143
      %p145 = scmp.ne.s32.totalorder %s136, %s137
      %p146 = scmp.eq.s32.totalorder %s21, 0
      %p147 = por %p145, %p146
      %p148 = scmp.ne.s32.totalorder %s136, %s137
      %p149 = scmp.eq.s32.totalorder %s22, 1
      %p150 = por %p148, %p149
      %p152 = scmp.ne.s32.totalorder %s137, %s151
      %p153 = scmp.eq.s32.totalorder %s22, 0
      %p154 = por %p152, %p153
      %s156 = sadd.s32 %s155, 1
      %p159 = scmp.eq.s32.totalorder %s16, 1
      %p160 = scmp.ne.s32.totalorder %s155, %s157
      %p161 = scmp.eq.s32.totalorder %s16, 0
      %p162 = por %p160, %p161
      %p163 = scmp.ne.s32.totalorder %s155, %s157
      %p164 = scmp.eq.s32.totalorder %s21, 1
      %p165 = por %p163, %p164
      %p166 = scmp.ne.s32.totalorder %s157, %s158
      %p167 = scmp.eq.s32.totalorder %s21, 0
      %p168 = por %p166, %p167
      %p169 = scmp.ne.s32.totalorder %s157, %s158
      %p170 = scmp.eq.s32.totalorder %s22, 1
      %p171 = por %p169, %p170
      %p173 = scmp.ne.s32.totalorder %s158, %s172
      %p174 = scmp.eq.s32.totalorder %s22, 0
      %p175 = por %p173, %p174
      %s176 = ssub.s32 %s16, %s23
      %p177 = scmp.eq.s32.totalorder %s176, 0
      %s179 = sadd.s32 %s178, 1
      %s180 = scalar_select %p177, %s178, %s179
      %p183 = pneg %p177
      %p184 = scmp.eq.s32.totalorder %s16, 1
      %p185 = por %p183, %p184
      %p186 = scmp.ne.s32.totalorder %s178, %s181
      %p187 = scmp.eq.s32.totalorder %s16, 0
      %p188 = por %p186, %p187
      %p189 = scmp.ne.s32.totalorder %s178, %s181
      %p190 = scmp.eq.s32.totalorder %s21, 1
      %p191 = por %p189, %p190
      %p192 = scmp.ne.s32.totalorder %s181, %s182
      %p193 = scmp.eq.s32.totalorder %s21, 0
      %p194 = por %p192, %p193
      %p195 = scmp.ne.s32.totalorder %s181, %s182
      %p196 = scmp.eq.s32.totalorder %s22, 1
      %p197 = por %p195, %p196
      %p199 = scmp.ne.s32.totalorder %s182, %s198
      %p200 = scmp.eq.s32.totalorder %s22, 0
      %p201 = por %p199, %p200
      %p202 = scmp.le.s32.totalorder 1, %s16
      %p203 = scmp.lt.s32.totalorder %s16, 3
      %p204 = pnand %p202, %p203
      %p205 = pneg %p204
      // Predicated region
      $region9: #{moeff_forward.5} parent=5 // pred_check
        _
      $region10: #{moeff_forward.5} parent=5 // pred_check_branch
        %207 = sbr.rel (%p204) target = $region12
      $region11: #{moeff_forward.5} parent=5 // pred_region
        %s208 = ssub.s32 %s16, 1
        // Predicated region
        $region13: #{moeff_forward.5} parent=11 // pred_check
          %p209 = pneg %p63
        $region14: #{moeff_forward.5} parent=11 // pred_check_branch
          %211 = sbr.rel (%p209) target = $region16
        $region15: #{moeff_forward.5} parent=11 // pred_region
          _
        $region16: #{moeff_forward.5} parent=11 // pred_fallthru
          _
        // Predicated region
        $region17: #{moeff_forward.5} parent=11 // pred_check
          %p212 = pneg %p84
        $region18: #{moeff_forward.5} parent=11 // pred_check_branch
          %214 = sbr.rel (%p212) target = $region20
        $region19: #{moeff_forward.5} parent=11 // pred_region
          _
        $region20: #{moeff_forward.5} parent=11 // pred_fallthru
          _
        // Predicated region
        $region21: #{moeff_forward.5} parent=11 // pred_check
          %p215 = pneg %p105
        $region22: #{moeff_forward.5} parent=11 // pred_check_branch
          %217 = sbr.rel (%p215) target = $region24
        $region23: #{moeff_forward.5} parent=11 // pred_region
          _
        $region24: #{moeff_forward.5} parent=11 // pred_fallthru
          _
        // Predicated region
        $region25: #{moeff_forward.5} parent=11 // pred_check
          %p218 = pneg %p126
        $region26: #{moeff_forward.5} parent=11 // pred_check_branch
          %220 = sbr.rel (%p218) target = $region28
        $region27: #{moeff_forward.5} parent=11 // pred_region
          _
        $region28: #{moeff_forward.5} parent=11 // pred_fallthru
          _
        // Predicated region
        $region29: #{moeff_forward.5} parent=11 // pred_check
          %p221 = pneg %p147
        $region30: #{moeff_forward.5} parent=11 // pred_check_branch
          %223 = sbr.rel (%p221) target = $region32
        $region31: #{moeff_forward.5} parent=11 // pred_region
          _
        $region32: #{moeff_forward.5} parent=11 // pred_fallthru
          _
        // Predicated region
        $region33: #{moeff_forward.5} parent=11 // pred_check
          %p224 = pneg %p168
        $region34: #{moeff_forward.5} parent=11 // pred_check_branch
          %226 = sbr.rel (%p224) target = $region36
        $region35: #{moeff_forward.5} parent=11 // pred_region
          _
        $region36: #{moeff_forward.5} parent=11 // pred_fallthru
          _
      $region12: #{moeff_forward.5} parent=5 // pred_fallthru
        _
      %p227 = scmp.lt.s32.totalorder %s16, 2
      // Predicated region
      $region37: #{moeff_forward.5} parent=5 // pred_check
        %p228 = pneg %p227
      $region38: #{moeff_forward.5} parent=5 // pred_check_branch
        %230 = sbr.rel (%p228) target = $region40
      $region39: #{moeff_forward.5} parent=5 // pred_region
        // Predicated region
        $region41: #{moeff_forward.5} parent=39 // pred_check
          %p231 = pneg %p36
        $region42: #{moeff_forward.5} parent=39 // pred_check_branch
          %233 = sbr.rel (%p231) target = $region44
        $region43: #{moeff_forward.5} parent=39 // pred_region
          %s234 = smul.u32 32, %s16
          %p235 = scmp.lt.s32.totalorder %s234, 63
          %s236 = scalar_select %p235, %s234, 63
          %s237 = smul.addr %s236, 8
          %s238 = scalar_lea.vmem %s0, %s237
          %s239 = smul.u32 32, %s16
        $region44: #{moeff_forward.5} parent=39 // pred_fallthru
          _
      $region40: #{moeff_forward.5} parent=5 // pred_fallthru
        _
      %p240 = scmp.le.s32.totalorder 1, %s16
      %p241 = scmp.lt.s32.totalorder %s16, 3
      %p242 = pnand %p240, %p241
      %p243 = pneg %p242
      // Predicated region
      $region45: #{moeff_forward.5} parent=5 // pred_check
        _
      $region46: #{moeff_forward.5} parent=5 // pred_check_branch
        %245 = sbr.rel (%p242) target = $region48
      $region47: #{moeff_forward.5} parent=5 // pred_region
        %s246 = ssub.s32 %s16, 1
        %s247 = smul.u32 32, %s21
        %p248 = scmp.lt.s32.totalorder %s247, 63
        %s249 = scalar_select %p248, %s247, 63
        %s250 = smul.addr %s249, 8
        %s251 = scalar_lea.vmem %s0, %s250
        %p252 = pneg %p42
        %p253 = pneg %p39
        %p254 = pneg %p63
        %p255 = pneg %p60
        %p256 = pneg %p84
        %p257 = pneg %p81
        %p258 = pneg %p105
        %p259 = pneg %p102
        %p260 = pneg %p126
        %p261 = pneg %p123
        %p262 = pneg %p147
        %p263 = pneg %p144
        %p264 = pneg %p168
        %p265 = pneg %p165
        %p266 = pneg %p194
        %p267 = pneg %p191
        %s268 = sand.u32 %s181, 1
        %s269 = scalar_lea.sflag [#allocation3], %s268
        %s270 = sand.u32 %s181, 1
        %s271 = smul.addr %s270, 256
        %s272 = scalar_lea.vmem [#allocation2], %s271
        %s273 = smul.u32 32, %s21
        %p274 = scmp.lt.s32.totalorder %s273, 63
        %s275 = scalar_select %p274, %s273, 63
        %s276 = smul.addr %s275, 8
        %s277 = scalar_lea.vmem %s0, %s276
        %s278 = smul.u32 32, %s21
        %s279 = smul.u32 32, %s21
        %v280 = vld [vmem:[%s277] sm:$0xff]
        %v281 = vld [vmem:[%s277 + $0x8] sm:$0xff]
        %v282 = vld [vmem:[%s277 + $0x10] sm:$0xff]
        %v283 = vld [vmem:[%s277 + $0x18] sm:$0xff]
        %v284 = vld [vmem:[%s277 + $0x20] sm:$0xff]
        %v285 = vld [vmem:[%s277 + $0x28] sm:$0xff]
        %v286 = vld [vmem:[%s277 + $0x30] sm:$0xff]
        %v287 = vld [vmem:[%s277 + $0x38] sm:$0xff]
        %v288 = vld [vmem:[%s277 + $0x40] sm:$0xff]
        %v289 = vld [vmem:[%s277 + $0x48] sm:$0xff]
        %v290 = vld [vmem:[%s277 + $0x50] sm:$0xff]
        %v291 = vld [vmem:[%s277 + $0x58] sm:$0xff]
        %v292 = vld [vmem:[%s277 + $0x60] sm:$0xff]
        %v293 = vld [vmem:[%s277 + $0x68] sm:$0xff]
        %v294 = vld [vmem:[%s277 + $0x70] sm:$0xff]
        %v295 = vld [vmem:[%s277 + $0x78] sm:$0xff]
        %v296 = vld [vmem:[%s277 + $0x80] sm:$0xff]
        %v297 = vld [vmem:[%s277 + $0x88] sm:$0xff]
        %v298 = vld [vmem:[%s277 + $0x90] sm:$0xff]
        %v299 = vld [vmem:[%s277 + $0x98] sm:$0xff]
        %v300 = vld [vmem:[%s277 + $0xa0] sm:$0xff]
        %v301 = vld [vmem:[%s277 + $0xa8] sm:$0xff]
        %v302 = vld [vmem:[%s277 + $0xb0] sm:$0xff]
        %v303 = vld [vmem:[%s277 + $0xb8] sm:$0xff]
        %v304 = vld [vmem:[%s277 + $0xc0] sm:$0xff]
        %v305 = vld [vmem:[%s277 + $0xc8] sm:$0xff]
        %v306 = vld [vmem:[%s277 + $0xd0] sm:$0xff]
        %v307 = vld [vmem:[%s277 + $0xd8] sm:$0xff]
        %v308 = vld [vmem:[%s277 + $0xe0] sm:$0xff]
        %v309 = vld [vmem:[%s277 + $0xe8] sm:$0xff]
        %v310 = vld [vmem:[%s277 + $0xf0] sm:$0xff]
        %v311 = vld [vmem:[%s277 + $0xf8] sm:$0xff]
        %v312 = vld [vmem:[%s1] sm:$0xff]
        %v313 = vld [vmem:[%s1 + $0x8] sm:$0xff]
        %v314 = vld [vmem:[%s1 + $0x10] sm:$0xff]
        %v315 = vld [vmem:[%s1 + $0x18] sm:$0xff]
        %v316 = vld [vmem:[%s1 + $0x20] sm:$0xff]
        %v317 = vld [vmem:[%s1 + $0x28] sm:$0xff]
        %v318 = vld [vmem:[%s1 + $0x30] sm:$0xff]
        %v319 = vld [vmem:[%s1 + $0x38] sm:$0xff]
        %v320 = vld [vmem:[%s1 + $0x40] sm:$0xff]
        %v321 = vld [vmem:[%s1 + $0x48] sm:$0xff]
        %v322 = vld [vmem:[%s1 + $0x50] sm:$0xff]
        %v323 = vld [vmem:[%s1 + $0x58] sm:$0xff]
        %v324 = vld [vmem:[%s1 + $0x60] sm:$0xff]
        %v325 = vld [vmem:[%s1 + $0x68] sm:$0xff]
        %v326 = vld [vmem:[%s1 + $0x70] sm:$0xff]
        %v327 = vld [vmem:[%s1 + $0x78] sm:$0xff]
        %v328 = vld [vmem:[%s2] sm:$0x1]
        %v330 = vperm.slane %v328, 0
        %332 = vmatpush.msra.mxu0 %v327
        %333 = vmatpush.msra.mxu0 %v326
        %334 = vmatpush.msra.mxu0 %v325
        %335 = vmatpush.msra.mxu0 %v324
        %336 = vmatpush.msra.mxu0 %v323
        %337 = vmatpush.msra.mxu0 %v322
        %338 = vmatpush.msra.mxu0 %v321
        %339 = vmatpush.msra.mxu0 %v320
        %340 = vmatpush.msra.mxu0 %v319
        %341 = vmatpush.msra.mxu0 %v318
        %342 = vmatpush.msra.mxu0 %v317
        %343 = vmatpush.msra.mxu0 %v316
        %344 = vmatpush.msra.mxu0 %v315
        %345 = vmatpush.msra.mxu0 %v314
        %346 = vmatpush.msra.mxu0 %v313
        %347 = vmatpush.msra.mxu0 %v312
        %348 = vmatmul.f32.gmra.mxu0 %v280
        %v349 = vpop.f32.mrf.mxu0
        %v350 = vadd.f32 %v330, %v349
        %351 = vmatmul.f32.gmra.mxu0 %v281
        %v352 = vpop.f32.mrf.mxu0
        %v353 = vadd.f32 %v330, %v352
        %354 = vmatmul.f32.gmra.mxu0 %v282
        %v355 = vpop.f32.mrf.mxu0
        %v356 = vadd.f32 %v330, %v355
        %357 = vmatmul.f32.gmra.mxu0 %v283
        %v358 = vpop.f32.mrf.mxu0
        %v359 = vadd.f32 %v330, %v358
        %360 = vmatmul.f32.gmra.mxu0 %v284
        %v361 = vpop.f32.mrf.mxu0
        %v362 = vadd.f32 %v330, %v361
        %363 = vmatmul.f32.gmra.mxu0 %v285
        %v364 = vpop.f32.mrf.mxu0
        %v365 = vadd.f32 %v330, %v364
        %366 = vmatmul.f32.gmra.mxu0 %v286
        %v367 = vpop.f32.mrf.mxu0
        %v368 = vadd.f32 %v330, %v367
        %369 = vmatmul.f32.gmra.mxu0 %v287
        %v370 = vpop.f32.mrf.mxu0
        %v371 = vadd.f32 %v330, %v370
        %372 = vmatmul.f32.gmra.mxu0 %v288
        %v373 = vpop.f32.mrf.mxu0
        %v374 = vadd.f32 %v330, %v373
        %375 = vmatmul.f32.gmra.mxu0 %v289
        %v376 = vpop.f32.mrf.mxu0
        %v377 = vadd.f32 %v330, %v376
        %378 = vmatmul.f32.gmra.mxu0 %v290
        %v379 = vpop.f32.mrf.mxu0
        %v380 = vadd.f32 %v330, %v379
        %381 = vmatmul.f32.gmra.mxu0 %v291
        %v382 = vpop.f32.mrf.mxu0
        %v383 = vadd.f32 %v330, %v382
        %384 = vmatmul.f32.gmra.mxu0 %v292
        %v385 = vpop.f32.mrf.mxu0
        %v386 = vadd.f32 %v330, %v385
        %387 = vmatmul.f32.gmra.mxu0 %v293
        %v388 = vpop.f32.mrf.mxu0
        %v389 = vadd.f32 %v330, %v388
        %390 = vmatmul.f32.gmra.mxu0 %v294
        %v391 = vpop.f32.mrf.mxu0
        %v392 = vadd.f32 %v330, %v391
        %393 = vmatmul.f32.gmra.mxu0 %v295
        %v394 = vpop.f32.mrf.mxu0
        %v395 = vadd.f32 %v330, %v394
        %396 = vmatmul.f32.gmra.mxu0 %v296
        %v397 = vpop.f32.mrf.mxu0
        %v398 = vadd.f32 %v330, %v397
        %399 = vmatmul.f32.gmra.mxu0 %v297
        %v400 = vpop.f32.mrf.mxu0
        %v401 = vadd.f32 %v330, %v400
        %402 = vmatmul.f32.gmra.mxu0 %v298
        %v403 = vpop.f32.mrf.mxu0
        %v404 = vadd.f32 %v330, %v403
        %405 = vmatmul.f32.gmra.mxu0 %v299
        %v406 = vpop.f32.mrf.mxu0
        %v407 = vadd.f32 %v330, %v406
        %408 = vmatmul.f32.gmra.mxu0 %v300
        %v409 = vpop.f32.mrf.mxu0
        %v410 = vadd.f32 %v330, %v409
        %411 = vmatmul.f32.gmra.mxu0 %v301
        %v412 = vpop.f32.mrf.mxu0
        %v413 = vadd.f32 %v330, %v412
        %414 = vmatmul.f32.gmra.mxu0 %v302
        %v415 = vpop.f32.mrf.mxu0
        %v416 = vadd.f32 %v330, %v415
        %417 = vmatmul.f32.gmra.mxu0 %v303
        %v418 = vpop.f32.mrf.mxu0
        %v419 = vadd.f32 %v330, %v418
        %420 = vmatmul.f32.gmra.mxu0 %v304
        %v421 = vpop.f32.mrf.mxu0
        %v422 = vadd.f32 %v330, %v421
        %423 = vmatmul.f32.gmra.mxu0 %v305
        %v424 = vpop.f32.mrf.mxu0
        %v425 = vadd.f32 %v330, %v424
        %426 = vmatmul.f32.gmra.mxu0 %v306
        %v427 = vpop.f32.mrf.mxu0
        %v428 = vadd.f32 %v330, %v427
        %429 = vmatmul.f32.gmra.mxu0 %v307
        %v430 = vpop.f32.mrf.mxu0
        %v431 = vadd.f32 %v330, %v430
        %432 = vmatmul.f32.gmra.mxu0 %v308
        %v433 = vpop.f32.mrf.mxu0
        %v434 = vadd.f32 %v330, %v433
        %435 = vmatmul.f32.gmra.mxu0 %v309
        %v436 = vpop.f32.mrf.mxu0
        %v437 = vadd.f32 %v330, %v436
        %438 = vmatmul.f32.gmra.mxu0 %v310
        %v439 = vpop.f32.mrf.mxu0
        %v440 = vadd.f32 %v330, %v439
        %441 = vmatmul.f32.gmra.mxu0 %v311
        %v442 = vpop.f32.mrf.mxu0
        %v443 = vadd.f32 %v330, %v442
        %444 = vdwg.mxu0
        %v445 = vld [vmem:[%s3] sm:$0xff]
        %v446 = vld [vmem:[%s3 + $0x8] sm:$0xff]
        %v447 = vld [vmem:[%s3 + $0x10] sm:$0xff]
        %v448 = vld [vmem:[%s3 + $0x18] sm:$0xff]
        %v449 = vld [vmem:[%s3 + $0x20] sm:$0xff]
        %v450 = vld [vmem:[%s3 + $0x28] sm:$0xff]
        %v451 = vld [vmem:[%s3 + $0x30] sm:$0xff]
        %v452 = vld [vmem:[%s3 + $0x38] sm:$0xff]
        %v453 = vld [vmem:[%s3 + $0x40] sm:$0xff]
        %v454 = vld [vmem:[%s3 + $0x48] sm:$0xff]
        %v455 = vld [vmem:[%s3 + $0x50] sm:$0xff]
        %v456 = vld [vmem:[%s3 + $0x58] sm:$0xff]
        %v457 = vld [vmem:[%s3 + $0x60] sm:$0xff]
        %v458 = vld [vmem:[%s3 + $0x68] sm:$0xff]
        %v459 = vld [vmem:[%s3 + $0x70] sm:$0xff]
        %v460 = vld [vmem:[%s3 + $0x78] sm:$0xff]
        %v461 = vld [vmem:[%s4] sm:$0x1]
        %v463 = vperm.slane %v461, 0
        %465 = vmatpush.msra.mxu0 %v460
        %466 = vmatpush.msra.mxu0 %v459
        %467 = vmatpush.msra.mxu0 %v458
        %468 = vmatpush.msra.mxu0 %v457
        %469 = vmatpush.msra.mxu0 %v456
        %470 = vmatpush.msra.mxu0 %v455
        %471 = vmatpush.msra.mxu0 %v454
        %472 = vmatpush.msra.mxu0 %v453
        %473 = vmatpush.msra.mxu0 %v452
        %474 = vmatpush.msra.mxu0 %v451
        %475 = vmatpush.msra.mxu0 %v450
        %476 = vmatpush.msra.mxu0 %v449
        %477 = vmatpush.msra.mxu0 %v448
        %478 = vmatpush.msra.mxu0 %v447
        %479 = vmatpush.msra.mxu0 %v446
        %480 = vmatpush.msra.mxu0 %v445
        %481 = vmatmul.f32.gmra.mxu0 %v350
        %v482 = vpop.f32.mrf.mxu0
        %v483 = vadd.f32 %v463, %v482
        %484 = vmatmul.f32.gmra.mxu0 %v353
        %v485 = vpop.f32.mrf.mxu0
        %v486 = vadd.f32 %v463, %v485
        %487 = vmatmul.f32.gmra.mxu0 %v356
        %v488 = vpop.f32.mrf.mxu0
        %v489 = vadd.f32 %v463, %v488
        %490 = vmatmul.f32.gmra.mxu0 %v359
        %v491 = vpop.f32.mrf.mxu0
        %v492 = vadd.f32 %v463, %v491
        %493 = vmatmul.f32.gmra.mxu0 %v362
        %v494 = vpop.f32.mrf.mxu0
        %v495 = vadd.f32 %v463, %v494
        %496 = vmatmul.f32.gmra.mxu0 %v365
        %v497 = vpop.f32.mrf.mxu0
        %v498 = vadd.f32 %v463, %v497
        %499 = vmatmul.f32.gmra.mxu0 %v368
        %v500 = vpop.f32.mrf.mxu0
        %v501 = vadd.f32 %v463, %v500
        %502 = vmatmul.f32.gmra.mxu0 %v371
        %v503 = vpop.f32.mrf.mxu0
        %v504 = vadd.f32 %v463, %v503
        %505 = vmatmul.f32.gmra.mxu0 %v374
        %v506 = vpop.f32.mrf.mxu0
        %v507 = vadd.f32 %v463, %v506
        %508 = vmatmul.f32.gmra.mxu0 %v377
        %v509 = vpop.f32.mrf.mxu0
        %v510 = vadd.f32 %v463, %v509
        %511 = vmatmul.f32.gmra.mxu0 %v380
        %v512 = vpop.f32.mrf.mxu0
        %v513 = vadd.f32 %v463, %v512
        %514 = vmatmul.f32.gmra.mxu0 %v383
        %v515 = vpop.f32.mrf.mxu0
        %v516 = vadd.f32 %v463, %v515
        %517 = vmatmul.f32.gmra.mxu0 %v386
        %v518 = vpop.f32.mrf.mxu0
        %v519 = vadd.f32 %v463, %v518
        %520 = vmatmul.f32.gmra.mxu0 %v389
        %v521 = vpop.f32.mrf.mxu0
        %v522 = vadd.f32 %v463, %v521
        %523 = vmatmul.f32.gmra.mxu0 %v392
        %v524 = vpop.f32.mrf.mxu0
        %v525 = vadd.f32 %v463, %v524
        %526 = vmatmul.f32.gmra.mxu0 %v395
        %v527 = vpop.f32.mrf.mxu0
        %v528 = vadd.f32 %v463, %v527
        %529 = vmatmul.f32.gmra.mxu0 %v398
        %v530 = vpop.f32.mrf.mxu0
        %v531 = vadd.f32 %v463, %v530
        %532 = vmatmul.f32.gmra.mxu0 %v401
        %v533 = vpop.f32.mrf.mxu0
        %v534 = vadd.f32 %v463, %v533
        %535 = vmatmul.f32.gmra.mxu0 %v404
        %v536 = vpop.f32.mrf.mxu0
        %v537 = vadd.f32 %v463, %v536
        %538 = vmatmul.f32.gmra.mxu0 %v407
        %v539 = vpop.f32.mrf.mxu0
        %v540 = vadd.f32 %v463, %v539
        %541 = vmatmul.f32.gmra.mxu0 %v410
        %v542 = vpop.f32.mrf.mxu0
        %v543 = vadd.f32 %v463, %v542
        %544 = vmatmul.f32.gmra.mxu0 %v413
        %v545 = vpop.f32.mrf.mxu0
        %v546 = vadd.f32 %v463, %v545
        %547 = vmatmul.f32.gmra.mxu0 %v416
        %v548 = vpop.f32.mrf.mxu0
        %v549 = vadd.f32 %v463, %v548
        %550 = vmatmul.f32.gmra.mxu0 %v419
        %v551 = vpop.f32.mrf.mxu0
        %v552 = vadd.f32 %v463, %v551
        %553 = vmatmul.f32.gmra.mxu0 %v422
        %v554 = vpop.f32.mrf.mxu0
        %v555 = vadd.f32 %v463, %v554
        %556 = vmatmul.f32.gmra.mxu0 %v425
        %v557 = vpop.f32.mrf.mxu0
        %v558 = vadd.f32 %v463, %v557
        %559 = vmatmul.f32.gmra.mxu0 %v428
        %v560 = vpop.f32.mrf.mxu0
        %v561 = vadd.f32 %v463, %v560
        %562 = vmatmul.f32.gmra.mxu0 %v431
        %v563 = vpop.f32.mrf.mxu0
        %v564 = vadd.f32 %v463, %v563
        %565 = vmatmul.f32.gmra.mxu0 %v434
        %v566 = vpop.f32.mrf.mxu0
        %v567 = vadd.f32 %v463, %v566
        %568 = vmatmul.f32.gmra.mxu0 %v437
        %v569 = vpop.f32.mrf.mxu0
        %v570 = vadd.f32 %v463, %v569
        %571 = vmatmul.f32.gmra.mxu0 %v440
        %v572 = vpop.f32.mrf.mxu0
        %v573 = vadd.f32 %v463, %v572
        %574 = vmatmul.f32.gmra.mxu0 %v443
        %v575 = vpop.f32.mrf.mxu0
        %v576 = vadd.f32 %v463, %v575
        %577 = vdwg.mxu0
        %v578 = vld [vmem:[%s5] sm:$0xff]
        %v579 = vld [vmem:[%s5 + $0x8] sm:$0xff]
        %v580 = vld [vmem:[%s5 + $0x10] sm:$0xff]
        %v581 = vld [vmem:[%s5 + $0x18] sm:$0xff]
        %v582 = vld [vmem:[%s5 + $0x20] sm:$0xff]
        %v583 = vld [vmem:[%s5 + $0x28] sm:$0xff]
        %v584 = vld [vmem:[%s5 + $0x30] sm:$0xff]
        %v585 = vld [vmem:[%s5 + $0x38] sm:$0xff]
        %v586 = vld [vmem:[%s5 + $0x40] sm:$0xff]
        %v587 = vld [vmem:[%s5 + $0x48] sm:$0xff]
        %v588 = vld [vmem:[%s5 + $0x50] sm:$0xff]
        %v589 = vld [vmem:[%s5 + $0x58] sm:$0xff]
        %v590 = vld [vmem:[%s5 + $0x60] sm:$0xff]
        %v591 = vld [vmem:[%s5 + $0x68] sm:$0xff]
        %v592 = vld [vmem:[%s5 + $0x70] sm:$0xff]
        %v593 = vld [vmem:[%s5 + $0x78] sm:$0xff]
        %v594 = vld [vmem:[%s6] sm:$0x1]
        %v596 = vperm.slane %v594, 0
        %598 = vmatpush.msra.mxu0 %v593
        %599 = vmatpush.msra.mxu0 %v592
        %600 = vmatpush.msra.mxu0 %v591
        %601 = vmatpush.msra.mxu0 %v590
        %602 = vmatpush.msra.mxu0 %v589
        %603 = vmatpush.msra.mxu0 %v588
        %604 = vmatpush.msra.mxu0 %v587
        %605 = vmatpush.msra.mxu0 %v586
        %606 = vmatpush.msra.mxu0 %v585
        %607 = vmatpush.msra.mxu0 %v584
        %608 = vmatpush.msra.mxu0 %v583
        %609 = vmatpush.msra.mxu0 %v582
        %610 = vmatpush.msra.mxu0 %v581
        %611 = vmatpush.msra.mxu0 %v580
        %612 = vmatpush.msra.mxu0 %v579
        %613 = vmatpush.msra.mxu0 %v578
        %614 = vmatmul.f32.gmra.mxu0 %v350
        %v615 = vpop.f32.mrf.mxu0
        %v616 = vadd.f32 %v596, %v615
        %617 = vmatmul.f32.gmra.mxu0 %v353
        %v618 = vpop.f32.mrf.mxu0
        %v619 = vadd.f32 %v596, %v618
        %620 = vmatmul.f32.gmra.mxu0 %v356
        %v621 = vpop.f32.mrf.mxu0
        %v622 = vadd.f32 %v596, %v621
        %623 = vmatmul.f32.gmra.mxu0 %v359
        %v624 = vpop.f32.mrf.mxu0
        %v625 = vadd.f32 %v596, %v624
        %626 = vmatmul.f32.gmra.mxu0 %v362
        %v627 = vpop.f32.mrf.mxu0
        %v628 = vadd.f32 %v596, %v627
        %629 = vmatmul.f32.gmra.mxu0 %v365
        %v630 = vpop.f32.mrf.mxu0
        %v631 = vadd.f32 %v596, %v630
        %632 = vmatmul.f32.gmra.mxu0 %v368
        %v633 = vpop.f32.mrf.mxu0
        %v634 = vadd.f32 %v596, %v633
        %635 = vmatmul.f32.gmra.mxu0 %v371
        %v636 = vpop.f32.mrf.mxu0
        %v637 = vadd.f32 %v596, %v636
        %638 = vmatmul.f32.gmra.mxu0 %v374
        %v639 = vpop.f32.mrf.mxu0
        %v640 = vadd.f32 %v596, %v639
        %641 = vmatmul.f32.gmra.mxu0 %v377
        %v642 = vpop.f32.mrf.mxu0
        %v643 = vadd.f32 %v596, %v642
        %644 = vmatmul.f32.gmra.mxu0 %v380
        %v645 = vpop.f32.mrf.mxu0
        %v646 = vadd.f32 %v596, %v645
        %647 = vmatmul.f32.gmra.mxu0 %v383
        %v648 = vpop.f32.mrf.mxu0
        %v649 = vadd.f32 %v596, %v648
        %650 = vmatmul.f32.gmra.mxu0 %v386
        %v651 = vpop.f32.mrf.mxu0
        %v652 = vadd.f32 %v596, %v651
        %653 = vmatmul.f32.gmra.mxu0 %v389
        %v654 = vpop.f32.mrf.mxu0
        %v655 = vadd.f32 %v596, %v654
        %656 = vmatmul.f32.gmra.mxu0 %v392
        %v657 = vpop.f32.mrf.mxu0
        %v658 = vadd.f32 %v596, %v657
        %659 = vmatmul.f32.gmra.mxu0 %v395
        %v660 = vpop.f32.mrf.mxu0
        %v661 = vadd.f32 %v596, %v660
        %662 = vmatmul.f32.gmra.mxu0 %v398
        %v663 = vpop.f32.mrf.mxu0
        %v664 = vadd.f32 %v596, %v663
        %665 = vmatmul.f32.gmra.mxu0 %v401
        %v666 = vpop.f32.mrf.mxu0
        %v667 = vadd.f32 %v596, %v666
        %668 = vmatmul.f32.gmra.mxu0 %v404
        %v669 = vpop.f32.mrf.mxu0
        %v670 = vadd.f32 %v596, %v669
        %671 = vmatmul.f32.gmra.mxu0 %v407
        %v672 = vpop.f32.mrf.mxu0
        %v673 = vadd.f32 %v596, %v672
        %674 = vmatmul.f32.gmra.mxu0 %v410
        %v675 = vpop.f32.mrf.mxu0
        %v676 = vadd.f32 %v596, %v675
        %677 = vmatmul.f32.gmra.mxu0 %v413
        %v678 = vpop.f32.mrf.mxu0
        %v679 = vadd.f32 %v596, %v678
        %680 = vmatmul.f32.gmra.mxu0 %v416
        %v681 = vpop.f32.mrf.mxu0
        %v682 = vadd.f32 %v596, %v681
        %683 = vmatmul.f32.gmra.mxu0 %v419
        %v684 = vpop.f32.mrf.mxu0
        %v685 = vadd.f32 %v596, %v684
        %686 = vmatmul.f32.gmra.mxu0 %v422
        %v687 = vpop.f32.mrf.mxu0
        %v688 = vadd.f32 %v596, %v687
        %689 = vmatmul.f32.gmra.mxu0 %v425
        %v690 = vpop.f32.mrf.mxu0
        %v691 = vadd.f32 %v596, %v690
        %692 = vmatmul.f32.gmra.mxu0 %v428
        %v693 = vpop.f32.mrf.mxu0
        %v694 = vadd.f32 %v596, %v693
        %695 = vmatmul.f32.gmra.mxu0 %v431
        %v696 = vpop.f32.mrf.mxu0
        %v697 = vadd.f32 %v596, %v696
        %698 = vmatmul.f32.gmra.mxu0 %v434
        %v699 = vpop.f32.mrf.mxu0
        %v700 = vadd.f32 %v596, %v699
        %701 = vmatmul.f32.gmra.mxu0 %v437
        %v702 = vpop.f32.mrf.mxu0
        %v703 = vadd.f32 %v596, %v702
        %704 = vmatmul.f32.gmra.mxu0 %v440
        %v705 = vpop.f32.mrf.mxu0
        %v706 = vadd.f32 %v596, %v705
        %707 = vmatmul.f32.gmra.mxu0 %v443
        %v708 = vpop.f32.mrf.mxu0
        %v709 = vadd.f32 %v596, %v708
        %710 = vdwg.mxu0
        %v711 = vxor.u32 %v483, 2147483648
        %v712 = vxor.u32 %v486, 2147483648
        %v713 = vxor.u32 %v489, 2147483648
        %v714 = vxor.u32 %v492, 2147483648
        %v715 = vxor.u32 %v495, 2147483648
        %v716 = vxor.u32 %v498, 2147483648
        %v717 = vxor.u32 %v501, 2147483648
        %v718 = vxor.u32 %v504, 2147483648
        %v719 = vxor.u32 %v507, 2147483648
        %v720 = vxor.u32 %v510, 2147483648
        %v721 = vxor.u32 %v513, 2147483648
        %v722 = vxor.u32 %v516, 2147483648
        %v723 = vxor.u32 %v519, 2147483648
        %v724 = vxor.u32 %v522, 2147483648
        %v725 = vxor.u32 %v525, 2147483648
        %v726 = vxor.u32 %v528, 2147483648
        %v727 = vxor.u32 %v531, 2147483648
        %v728 = vxor.u32 %v534, 2147483648
        %v729 = vxor.u32 %v537, 2147483648
        %v730 = vxor.u32 %v540, 2147483648
        %v731 = vxor.u32 %v543, 2147483648
        %v732 = vxor.u32 %v546, 2147483648
        %v733 = vxor.u32 %v549, 2147483648
        %v734 = vxor.u32 %v552, 2147483648
        %v735 = vxor.u32 %v555, 2147483648
        %v736 = vxor.u32 %v558, 2147483648
        %v737 = vxor.u32 %v561, 2147483648
        %v738 = vxor.u32 %v564, 2147483648
        %v739 = vxor.u32 %v567, 2147483648
        %v740 = vxor.u32 %v570, 2147483648
        %v741 = vxor.u32 %v573, 2147483648
        %v742 = vxor.u32 %v576, 2147483648
        %v743 = vmul.f32 %v711, 1.442695
        %v744 = vpow.pop %v743
        %v745 = vmul.f32 %v712, 1.442695
        %v746 = vpow.pop %v745
        %v747 = vmul.f32 %v713, 1.442695
        %v748 = vpow.pop %v747
        %v749 = vmul.f32 %v714, 1.442695
        %v750 = vpow.pop %v749
        %v751 = vmul.f32 %v715, 1.442695
        %v752 = vpow.pop %v751
        %v753 = vmul.f32 %v716, 1.442695
        %v754 = vpow.pop %v753
        %v755 = vmul.f32 %v717, 1.442695
        %v756 = vpow.pop %v755
        %v757 = vmul.f32 %v718, 1.442695
        %v758 = vpow.pop %v757
        %v759 = vmul.f32 %v719, 1.442695
        %v760 = vpow.pop %v759
        %v761 = vmul.f32 %v720, 1.442695
        %v762 = vpow.pop %v761
        %v763 = vmul.f32 %v721, 1.442695
        %v764 = vpow.pop %v763
        %v765 = vmul.f32 %v722, 1.442695
        %v766 = vpow.pop %v765
        %v767 = vmul.f32 %v723, 1.442695
        %v768 = vpow.pop %v767
        %v769 = vmul.f32 %v724, 1.442695
        %v770 = vpow.pop %v769
        %v771 = vmul.f32 %v725, 1.442695
        %v772 = vpow.pop %v771
        %v773 = vmul.f32 %v726, 1.442695
        %v774 = vpow.pop %v773
        %v775 = vmul.f32 %v727, 1.442695
        %v776 = vpow.pop %v775
        %v777 = vmul.f32 %v728, 1.442695
        %v778 = vpow.pop %v777
        %v779 = vmul.f32 %v729, 1.442695
        %v780 = vpow.pop %v779
        %v781 = vmul.f32 %v730, 1.442695
        %v782 = vpow.pop %v781
        %v783 = vmul.f32 %v731, 1.442695
        %v784 = vpow.pop %v783
        %v785 = vmul.f32 %v732, 1.442695
        %v786 = vpow.pop %v785
        %v787 = vmul.f32 %v733, 1.442695
        %v788 = vpow.pop %v787
        %v789 = vmul.f32 %v734, 1.442695
        %v790 = vpow.pop %v789
        %v791 = vmul.f32 %v735, 1.442695
        %v792 = vpow.pop %v791
        %v793 = vmul.f32 %v736, 1.442695
        %v794 = vpow.pop %v793
        %v795 = vmul.f32 %v737, 1.442695
        %v796 = vpow.pop %v795
        %v797 = vmul.f32 %v738, 1.442695
        %v798 = vpow.pop %v797
        %v799 = vmul.f32 %v739, 1.442695
        %v800 = vpow.pop %v799
        %v801 = vmul.f32 %v740, 1.442695
        %v802 = vpow.pop %v801
        %v803 = vmul.f32 %v741, 1.442695
        %v804 = vpow.pop %v803
        %v805 = vmul.f32 %v742, 1.442695
        %v806 = vpow.pop %v805
        %v807 = vadd.f32 %v744, 1.0
        %v808 = vadd.f32 %v746, 1.0
        %v809 = vadd.f32 %v748, 1.0
        %v810 = vadd.f32 %v750, 1.0
        %v811 = vadd.f32 %v752, 1.0
        %v812 = vadd.f32 %v754, 1.0
        %v813 = vadd.f32 %v756, 1.0
        %v814 = vadd.f32 %v758, 1.0
        %v815 = vadd.f32 %v760, 1.0
        %v816 = vadd.f32 %v762, 1.0
        %v817 = vadd.f32 %v764, 1.0
        %v818 = vadd.f32 %v766, 1.0
        %v819 = vadd.f32 %v768, 1.0
        %v820 = vadd.f32 %v770, 1.0
        %v821 = vadd.f32 %v772, 1.0
        %v822 = vadd.f32 %v774, 1.0
        %v823 = vadd.f32 %v776, 1.0
        %v824 = vadd.f32 %v778, 1.0
        %v825 = vadd.f32 %v780, 1.0
        %v826 = vadd.f32 %v782, 1.0
        %v827 = vadd.f32 %v784, 1.0
        %v828 = vadd.f32 %v786, 1.0
        %v829 = vadd.f32 %v788, 1.0
        %v830 = vadd.f32 %v790, 1.0
        %v831 = vadd.f32 %v792, 1.0
        %v832 = vadd.f32 %v794, 1.0
        %v833 = vadd.f32 %v796, 1.0
        %v834 = vadd.f32 %v798, 1.0
        %v835 = vadd.f32 %v800, 1.0
        %v836 = vadd.f32 %v802, 1.0
        %v837 = vadd.f32 %v804, 1.0
        %v838 = vadd.f32 %v806, 1.0
        %v839 = vrcp.pop %v807
        %v840 = vmul.f32 %v807, %v839
        %v841 = vsub.f32 1.0, %v840
        %v842 = vmul.f32 %v839, %v841
        %v843 = vadd.f32 %v839, %v842
        %vm844 = vweird.f32 %v807
        %vm845 = vweird.f32 %v839
        %vm846 = vmor %vm844, %vm845
        %v847 = vsel %vm846, %v839, %v843
        %v848 = vand.u32 2147483647, %v807
        %vm849 = vcmp.eq.f32.partialorder %v848, 8.507059e+37
        %v850 = vand.u32 %v807, 2147483648
        %v851 = vor.u32 1.1754944e-38, %v850
        %v852 = vsel %vm849, %v851, %v847
        %v853 = vmul.f32 1.0, %v852
        %v854 = vrcp.pop %v808
        %v855 = vmul.f32 %v808, %v854
        %v856 = vsub.f32 1.0, %v855
        %v857 = vmul.f32 %v854, %v856
        %v858 = vadd.f32 %v854, %v857
        %vm859 = vweird.f32 %v808
        %vm860 = vweird.f32 %v854
        %vm861 = vmor %vm859, %vm860
        %v862 = vsel %vm861, %v854, %v858
        %v863 = vand.u32 2147483647, %v808
        %vm864 = vcmp.eq.f32.partialorder %v863, 8.507059e+37
        %v865 = vand.u32 %v808, 2147483648
        %v866 = vor.u32 1.1754944e-38, %v865
        %v867 = vsel %vm864, %v866, %v862
        %v868 = vmul.f32 1.0, %v867
        %v869 = vrcp.pop %v809
        %v870 = vmul.f32 %v809, %v869
        %v871 = vsub.f32 1.0, %v870
        %v872 = vmul.f32 %v869, %v871
        %v873 = vadd.f32 %v869, %v872
        %vm874 = vweird.f32 %v809
        %vm875 = vweird.f32 %v869
        %vm876 = vmor %vm874, %vm875
        %v877 = vsel %vm876, %v869, %v873
        %v878 = vand.u32 2147483647, %v809
        %vm879 = vcmp.eq.f32.partialorder %v878, 8.507059e+37
        %v880 = vand.u32 %v809, 2147483648
        %v881 = vor.u32 1.1754944e-38, %v880
        %v882 = vsel %vm879, %v881, %v877
        %v883 = vmul.f32 1.0, %v882
        %v884 = vrcp.pop %v810
        %v885 = vmul.f32 %v810, %v884
        %v886 = vsub.f32 1.0, %v885
        %v887 = vmul.f32 %v884, %v886
        %v888 = vadd.f32 %v884, %v887
        %vm889 = vweird.f32 %v810
        %vm890 = vweird.f32 %v884
        %vm891 = vmor %vm889, %vm890
        %v892 = vsel %vm891, %v884, %v888
        %v893 = vand.u32 2147483647, %v810
        %vm894 = vcmp.eq.f32.partialorder %v893, 8.507059e+37
        %v895 = vand.u32 %v810, 2147483648
        %v896 = vor.u32 1.1754944e-38, %v895
        %v897 = vsel %vm894, %v896, %v892
        %v898 = vmul.f32 1.0, %v897
        %v899 = vrcp.pop %v811
        %v900 = vmul.f32 %v811, %v899
        %v901 = vsub.f32 1.0, %v900
        %v902 = vmul.f32 %v899, %v901
        %v903 = vadd.f32 %v899, %v902
        %vm904 = vweird.f32 %v811
        %vm905 = vweird.f32 %v899
        %vm906 = vmor %vm904, %vm905
        %v907 = vsel %vm906, %v899, %v903
        %v908 = vand.u32 2147483647, %v811
        %vm909 = vcmp.eq.f32.partialorder %v908, 8.507059e+37
        %v910 = vand.u32 %v811, 2147483648
        %v911 = vor.u32 1.1754944e-38, %v910
        %v912 = vsel %vm909, %v911, %v907
        %v913 = vmul.f32 1.0, %v912
        %v914 = vrcp.pop %v812
        %v915 = vmul.f32 %v812, %v914
        %v916 = vsub.f32 1.0, %v915
        %v917 = vmul.f32 %v914, %v916
        %v918 = vadd.f32 %v914, %v917
        %vm919 = vweird.f32 %v812
        %vm920 = vweird.f32 %v914
        %vm921 = vmor %vm919, %vm920
        %v922 = vsel %vm921, %v914, %v918
        %v923 = vand.u32 2147483647, %v812
        %vm924 = vcmp.eq.f32.partialorder %v923, 8.507059e+37
        %v925 = vand.u32 %v812, 2147483648
        %v926 = vor.u32 1.1754944e-38, %v925
        %v927 = vsel %vm924, %v926, %v922
        %v928 = vmul.f32 1.0, %v927
        %v929 = vrcp.pop %v813
        %v930 = vmul.f32 %v813, %v929
        %v931 = vsub.f32 1.0, %v930
        %v932 = vmul.f32 %v929, %v931
        %v933 = vadd.f32 %v929, %v932
        %vm934 = vweird.f32 %v813
        %vm935 = vweird.f32 %v929
        %vm936 = vmor %vm934, %vm935
        %v937 = vsel %vm936, %v929, %v933
        %v938 = vand.u32 2147483647, %v813
        %vm939 = vcmp.eq.f32.partialorder %v938, 8.507059e+37
        %v940 = vand.u32 %v813, 2147483648
        %v941 = vor.u32 1.1754944e-38, %v940
        %v942 = vsel %vm939, %v941, %v937
        %v943 = vmul.f32 1.0, %v942
        %v944 = vrcp.pop %v814
        %v945 = vmul.f32 %v814, %v944
        %v946 = vsub.f32 1.0, %v945
        %v947 = vmul.f32 %v944, %v946
        %v948 = vadd.f32 %v944, %v947
        %vm949 = vweird.f32 %v814
        %vm950 = vweird.f32 %v944
        %vm951 = vmor %vm949, %vm950
        %v952 = vsel %vm951, %v944, %v948
        %v953 = vand.u32 2147483647, %v814
        %vm954 = vcmp.eq.f32.partialorder %v953, 8.507059e+37
        %v955 = vand.u32 %v814, 2147483648
        %v956 = vor.u32 1.1754944e-38, %v955
        %v957 = vsel %vm954, %v956, %v952
        %v958 = vmul.f32 1.0, %v957
        %v959 = vrcp.pop %v815
        %v960 = vmul.f32 %v815, %v959
        %v961 = vsub.f32 1.0, %v960
        %v962 = vmul.f32 %v959, %v961
        %v963 = vadd.f32 %v959, %v962
        %vm964 = vweird.f32 %v815
        %vm965 = vweird.f32 %v959
        %vm966 = vmor %vm964, %vm965
        %v967 = vsel %vm966, %v959, %v963
        %v968 = vand.u32 2147483647, %v815
        %vm969 = vcmp.eq.f32.partialorder %v968, 8.507059e+37
        %v970 = vand.u32 %v815, 2147483648
        %v971 = vor.u32 1.1754944e-38, %v970
        %v972 = vsel %vm969, %v971, %v967
        %v973 = vmul.f32 1.0, %v972
        %v974 = vrcp.pop %v816
        %v975 = vmul.f32 %v816, %v974
        %v976 = vsub.f32 1.0, %v975
        %v977 = vmul.f32 %v974, %v976
        %v978 = vadd.f32 %v974, %v977
        %vm979 = vweird.f32 %v816
        %vm980 = vweird.f32 %v974
        %vm981 = vmor %vm979, %vm980
        %v982 = vsel %vm981, %v974, %v978
        %v983 = vand.u32 2147483647, %v816
        %vm984 = vcmp.eq.f32.partialorder %v983, 8.507059e+37
        %v985 = vand.u32 %v816, 2147483648
        %v986 = vor.u32 1.1754944e-38, %v985
        %v987 = vsel %vm984, %v986, %v982
        %v988 = vmul.f32 1.0, %v987
        %v989 = vrcp.pop %v817
        %v990 = vmul.f32 %v817, %v989
        %v991 = vsub.f32 1.0, %v990
        %v992 = vmul.f32 %v989, %v991
        %v993 = vadd.f32 %v989, %v992
        %vm994 = vweird.f32 %v817
        %vm995 = vweird.f32 %v989
        %vm996 = vmor %vm994, %vm995
        %v997 = vsel %vm996, %v989, %v993
        %v998 = vand.u32 2147483647, %v817
        %vm999 = vcmp.eq.f32.partialorder %v998, 8.507059e+37
        %v1000 = vand.u32 %v817, 2147483648
        %v1001 = vor.u32 1.1754944e-38, %v1000
        %v1002 = vsel %vm999, %v1001, %v997
        %v1003 = vmul.f32 1.0, %v1002
        %v1004 = vrcp.pop %v818
        %v1005 = vmul.f32 %v818, %v1004
        %v1006 = vsub.f32 1.0, %v1005
        %v1007 = vmul.f32 %v1004, %v1006
        %v1008 = vadd.f32 %v1004, %v1007
        %vm1009 = vweird.f32 %v818
        %vm1010 = vweird.f32 %v1004
        %vm1011 = vmor %vm1009, %vm1010
        %v1012 = vsel %vm1011, %v1004, %v1008
        %v1013 = vand.u32 2147483647, %v818
        %vm1014 = vcmp.eq.f32.partialorder %v1013, 8.507059e+37
        %v1015 = vand.u32 %v818, 2147483648
        %v1016 = vor.u32 1.1754944e-38, %v1015
        %v1017 = vsel %vm1014, %v1016, %v1012
        %v1018 = vmul.f32 1.0, %v1017
        %v1019 = vrcp.pop %v819
        %v1020 = vmul.f32 %v819, %v1019
        %v1021 = vsub.f32 1.0, %v1020
        %v1022 = vmul.f32 %v1019, %v1021
        %v1023 = vadd.f32 %v1019, %v1022
        %vm1024 = vweird.f32 %v819
        %vm1025 = vweird.f32 %v1019
        %vm1026 = vmor %vm1024, %vm1025
        %v1027 = vsel %vm1026, %v1019, %v1023
        %v1028 = vand.u32 2147483647, %v819
        %vm1029 = vcmp.eq.f32.partialorder %v1028, 8.507059e+37
        %v1030 = vand.u32 %v819, 2147483648
        %v1031 = vor.u32 1.1754944e-38, %v1030
        %v1032 = vsel %vm1029, %v1031, %v1027
        %v1033 = vmul.f32 1.0, %v1032
        %v1034 = vrcp.pop %v820
        %v1035 = vmul.f32 %v820, %v1034
        %v1036 = vsub.f32 1.0, %v1035
        %v1037 = vmul.f32 %v1034, %v1036
        %v1038 = vadd.f32 %v1034, %v1037
        %vm1039 = vweird.f32 %v820
        %vm1040 = vweird.f32 %v1034
        %vm1041 = vmor %vm1039, %vm1040
        %v1042 = vsel %vm1041, %v1034, %v1038
        %v1043 = vand.u32 2147483647, %v820
        %vm1044 = vcmp.eq.f32.partialorder %v1043, 8.507059e+37
        %v1045 = vand.u32 %v820, 2147483648
        %v1046 = vor.u32 1.1754944e-38, %v1045
        %v1047 = vsel %vm1044, %v1046, %v1042
        %v1048 = vmul.f32 1.0, %v1047
        %v1049 = vrcp.pop %v821
        %v1050 = vmul.f32 %v821, %v1049
        %v1051 = vsub.f32 1.0, %v1050
        %v1052 = vmul.f32 %v1049, %v1051
        %v1053 = vadd.f32 %v1049, %v1052
        %vm1054 = vweird.f32 %v821
        %vm1055 = vweird.f32 %v1049
        %vm1056 = vmor %vm1054, %vm1055
        %v1057 = vsel %vm1056, %v1049, %v1053
        %v1058 = vand.u32 2147483647, %v821
        %vm1059 = vcmp.eq.f32.partialorder %v1058, 8.507059e+37
        %v1060 = vand.u32 %v821, 2147483648
        %v1061 = vor.u32 1.1754944e-38, %v1060
        %v1062 = vsel %vm1059, %v1061, %v1057
        %v1063 = vmul.f32 1.0, %v1062
        %v1064 = vrcp.pop %v822
        %v1065 = vmul.f32 %v822, %v1064
        %v1066 = vsub.f32 1.0, %v1065
        %v1067 = vmul.f32 %v1064, %v1066
        %v1068 = vadd.f32 %v1064, %v1067
        %vm1069 = vweird.f32 %v822
        %vm1070 = vweird.f32 %v1064
        %vm1071 = vmor %vm1069, %vm1070
        %v1072 = vsel %vm1071, %v1064, %v1068
        %v1073 = vand.u32 2147483647, %v822
        %vm1074 = vcmp.eq.f32.partialorder %v1073, 8.507059e+37
        %v1075 = vand.u32 %v822, 2147483648
        %v1076 = vor.u32 1.1754944e-38, %v1075
        %v1077 = vsel %vm1074, %v1076, %v1072
        %v1078 = vmul.f32 1.0, %v1077
        %v1079 = vrcp.pop %v823
        %v1080 = vmul.f32 %v823, %v1079
        %v1081 = vsub.f32 1.0, %v1080
        %v1082 = vmul.f32 %v1079, %v1081
        %v1083 = vadd.f32 %v1079, %v1082
        %vm1084 = vweird.f32 %v823
        %vm1085 = vweird.f32 %v1079
        %vm1086 = vmor %vm1084, %vm1085
        %v1087 = vsel %vm1086, %v1079, %v1083
        %v1088 = vand.u32 2147483647, %v823
        %vm1089 = vcmp.eq.f32.partialorder %v1088, 8.507059e+37
        %v1090 = vand.u32 %v823, 2147483648
        %v1091 = vor.u32 1.1754944e-38, %v1090
        %v1092 = vsel %vm1089, %v1091, %v1087
        %v1093 = vmul.f32 1.0, %v1092
        %v1094 = vrcp.pop %v824
        %v1095 = vmul.f32 %v824, %v1094
        %v1096 = vsub.f32 1.0, %v1095
        %v1097 = vmul.f32 %v1094, %v1096
        %v1098 = vadd.f32 %v1094, %v1097
        %vm1099 = vweird.f32 %v824
        %vm1100 = vweird.f32 %v1094
        %vm1101 = vmor %vm1099, %vm1100
        %v1102 = vsel %vm1101, %v1094, %v1098
        %v1103 = vand.u32 2147483647, %v824
        %vm1104 = vcmp.eq.f32.partialorder %v1103, 8.507059e+37
        %v1105 = vand.u32 %v824, 2147483648
        %v1106 = vor.u32 1.1754944e-38, %v1105
        %v1107 = vsel %vm1104, %v1106, %v1102
        %v1108 = vmul.f32 1.0, %v1107
        %v1109 = vrcp.pop %v825
        %v1110 = vmul.f32 %v825, %v1109
        %v1111 = vsub.f32 1.0, %v1110
        %v1112 = vmul.f32 %v1109, %v1111
        %v1113 = vadd.f32 %v1109, %v1112
        %vm1114 = vweird.f32 %v825
        %vm1115 = vweird.f32 %v1109
        %vm1116 = vmor %vm1114, %vm1115
        %v1117 = vsel %vm1116, %v1109, %v1113
        %v1118 = vand.u32 2147483647, %v825
        %vm1119 = vcmp.eq.f32.partialorder %v1118, 8.507059e+37
        %v1120 = vand.u32 %v825, 2147483648
        %v1121 = vor.u32 1.1754944e-38, %v1120
        %v1122 = vsel %vm1119, %v1121, %v1117
        %v1123 = vmul.f32 1.0, %v1122
        %v1124 = vrcp.pop %v826
        %v1125 = vmul.f32 %v826, %v1124
        %v1126 = vsub.f32 1.0, %v1125
        %v1127 = vmul.f32 %v1124, %v1126
        %v1128 = vadd.f32 %v1124, %v1127
        %vm1129 = vweird.f32 %v826
        %vm1130 = vweird.f32 %v1124
        %vm1131 = vmor %vm1129, %vm1130
        %v1132 = vsel %vm1131, %v1124, %v1128
        %v1133 = vand.u32 2147483647, %v826
        %vm1134 = vcmp.eq.f32.partialorder %v1133, 8.507059e+37
        %v1135 = vand.u32 %v826, 2147483648
        %v1136 = vor.u32 1.1754944e-38, %v1135
        %v1137 = vsel %vm1134, %v1136, %v1132
        %v1138 = vmul.f32 1.0, %v1137
        %v1139 = vrcp.pop %v827
        %v1140 = vmul.f32 %v827, %v1139
        %v1141 = vsub.f32 1.0, %v1140
        %v1142 = vmul.f32 %v1139, %v1141
        %v1143 = vadd.f32 %v1139, %v1142
        %vm1144 = vweird.f32 %v827
        %vm1145 = vweird.f32 %v1139
        %vm1146 = vmor %vm1144, %vm1145
        %v1147 = vsel %vm1146, %v1139, %v1143
        %v1148 = vand.u32 2147483647, %v827
        %vm1149 = vcmp.eq.f32.partialorder %v1148, 8.507059e+37
        %v1150 = vand.u32 %v827, 2147483648
        %v1151 = vor.u32 1.1754944e-38, %v1150
        %v1152 = vsel %vm1149, %v1151, %v1147
        %v1153 = vmul.f32 1.0, %v1152
        %v1154 = vrcp.pop %v828
        %v1155 = vmul.f32 %v828, %v1154
        %v1156 = vsub.f32 1.0, %v1155
        %v1157 = vmul.f32 %v1154, %v1156
        %v1158 = vadd.f32 %v1154, %v1157
        %vm1159 = vweird.f32 %v828
        %vm1160 = vweird.f32 %v1154
        %vm1161 = vmor %vm1159, %vm1160
        %v1162 = vsel %vm1161, %v1154, %v1158
        %v1163 = vand.u32 2147483647, %v828
        %vm1164 = vcmp.eq.f32.partialorder %v1163, 8.507059e+37
        %v1165 = vand.u32 %v828, 2147483648
        %v1166 = vor.u32 1.1754944e-38, %v1165
        %v1167 = vsel %vm1164, %v1166, %v1162
        %v1168 = vmul.f32 1.0, %v1167
        %v1169 = vrcp.pop %v829
        %v1170 = vmul.f32 %v829, %v1169
        %v1171 = vsub.f32 1.0, %v1170
        %v1172 = vmul.f32 %v1169, %v1171
        %v1173 = vadd.f32 %v1169, %v1172
        %vm1174 = vweird.f32 %v829
        %vm1175 = vweird.f32 %v1169
        %vm1176 = vmor %vm1174, %vm1175
        %v1177 = vsel %vm1176, %v1169, %v1173
        %v1178 = vand.u32 2147483647, %v829
        %vm1179 = vcmp.eq.f32.partialorder %v1178, 8.507059e+37
        %v1180 = vand.u32 %v829, 2147483648
        %v1181 = vor.u32 1.1754944e-38, %v1180
        %v1182 = vsel %vm1179, %v1181, %v1177
        %v1183 = vmul.f32 1.0, %v1182
        %v1184 = vrcp.pop %v830
        %v1185 = vmul.f32 %v830, %v1184
        %v1186 = vsub.f32 1.0, %v1185
        %v1187 = vmul.f32 %v1184, %v1186
        %v1188 = vadd.f32 %v1184, %v1187
        %vm1189 = vweird.f32 %v830
        %vm1190 = vweird.f32 %v1184
        %vm1191 = vmor %vm1189, %vm1190
        %v1192 = vsel %vm1191, %v1184, %v1188
        %v1193 = vand.u32 2147483647, %v830
        %vm1194 = vcmp.eq.f32.partialorder %v1193, 8.507059e+37
        %v1195 = vand.u32 %v830, 2147483648
        %v1196 = vor.u32 1.1754944e-38, %v1195
        %v1197 = vsel %vm1194, %v1196, %v1192
        %v1198 = vmul.f32 1.0, %v1197
        %v1199 = vrcp.pop %v831
        %v1200 = vmul.f32 %v831, %v1199
        %v1201 = vsub.f32 1.0, %v1200
        %v1202 = vmul.f32 %v1199, %v1201
        %v1203 = vadd.f32 %v1199, %v1202
        %vm1204 = vweird.f32 %v831
        %vm1205 = vweird.f32 %v1199
        %vm1206 = vmor %vm1204, %vm1205
        %v1207 = vsel %vm1206, %v1199, %v1203
        %v1208 = vand.u32 2147483647, %v831
        %vm1209 = vcmp.eq.f32.partialorder %v1208, 8.507059e+37
        %v1210 = vand.u32 %v831, 2147483648
        %v1211 = vor.u32 1.1754944e-38, %v1210
        %v1212 = vsel %vm1209, %v1211, %v1207
        %v1213 = vmul.f32 1.0, %v1212
        %v1214 = vrcp.pop %v832
        %v1215 = vmul.f32 %v832, %v1214
        %v1216 = vsub.f32 1.0, %v1215
        %v1217 = vmul.f32 %v1214, %v1216
        %v1218 = vadd.f32 %v1214, %v1217
        %vm1219 = vweird.f32 %v832
        %vm1220 = vweird.f32 %v1214
        %vm1221 = vmor %vm1219, %vm1220
        %v1222 = vsel %vm1221, %v1214, %v1218
        %v1223 = vand.u32 2147483647, %v832
        %vm1224 = vcmp.eq.f32.partialorder %v1223, 8.507059e+37
        %v1225 = vand.u32 %v832, 2147483648
        %v1226 = vor.u32 1.1754944e-38, %v1225
        %v1227 = vsel %vm1224, %v1226, %v1222
        %v1228 = vmul.f32 1.0, %v1227
        %v1229 = vrcp.pop %v833
        %v1230 = vmul.f32 %v833, %v1229
        %v1231 = vsub.f32 1.0, %v1230
        %v1232 = vmul.f32 %v1229, %v1231
        %v1233 = vadd.f32 %v1229, %v1232
        %vm1234 = vweird.f32 %v833
        %vm1235 = vweird.f32 %v1229
        %vm1236 = vmor %vm1234, %vm1235
        %v1237 = vsel %vm1236, %v1229, %v1233
        %v1238 = vand.u32 2147483647, %v833
        %vm1239 = vcmp.eq.f32.partialorder %v1238, 8.507059e+37
        %v1240 = vand.u32 %v833, 2147483648
        %v1241 = vor.u32 1.1754944e-38, %v1240
        %v1242 = vsel %vm1239, %v1241, %v1237
        %v1243 = vmul.f32 1.0, %v1242
        %v1244 = vrcp.pop %v834
        %v1245 = vmul.f32 %v834, %v1244
        %v1246 = vsub.f32 1.0, %v1245
        %v1247 = vmul.f32 %v1244, %v1246
        %v1248 = vadd.f32 %v1244, %v1247
        %vm1249 = vweird.f32 %v834
        %vm1250 = vweird.f32 %v1244
        %vm1251 = vmor %vm1249, %vm1250
        %v1252 = vsel %vm1251, %v1244, %v1248
        %v1253 = vand.u32 2147483647, %v834
        %vm1254 = vcmp.eq.f32.partialorder %v1253, 8.507059e+37
        %v1255 = vand.u32 %v834, 2147483648
        %v1256 = vor.u32 1.1754944e-38, %v1255
        %v1257 = vsel %vm1254, %v1256, %v1252
        %v1258 = vmul.f32 1.0, %v1257
        %v1259 = vrcp.pop %v835
        %v1260 = vmul.f32 %v835, %v1259
        %v1261 = vsub.f32 1.0, %v1260
        %v1262 = vmul.f32 %v1259, %v1261
        %v1263 = vadd.f32 %v1259, %v1262
        %vm1264 = vweird.f32 %v835
        %vm1265 = vweird.f32 %v1259
        %vm1266 = vmor %vm1264, %vm1265
        %v1267 = vsel %vm1266, %v1259, %v1263
        %v1268 = vand.u32 2147483647, %v835
        %vm1269 = vcmp.eq.f32.partialorder %v1268, 8.507059e+37
        %v1270 = vand.u32 %v835, 2147483648
        %v1271 = vor.u32 1.1754944e-38, %v1270
        %v1272 = vsel %vm1269, %v1271, %v1267
        %v1273 = vmul.f32 1.0, %v1272
        %v1274 = vrcp.pop %v836
        %v1275 = vmul.f32 %v836, %v1274
        %v1276 = vsub.f32 1.0, %v1275
        %v1277 = vmul.f32 %v1274, %v1276
        %v1278 = vadd.f32 %v1274, %v1277
        %vm1279 = vweird.f32 %v836
        %vm1280 = vweird.f32 %v1274
        %vm1281 = vmor %vm1279, %vm1280
        %v1282 = vsel %vm1281, %v1274, %v1278
        %v1283 = vand.u32 2147483647, %v836
        %vm1284 = vcmp.eq.f32.partialorder %v1283, 8.507059e+37
        %v1285 = vand.u32 %v836, 2147483648
        %v1286 = vor.u32 1.1754944e-38, %v1285
        %v1287 = vsel %vm1284, %v1286, %v1282
        %v1288 = vmul.f32 1.0, %v1287
        %v1289 = vrcp.pop %v837
        %v1290 = vmul.f32 %v837, %v1289
        %v1291 = vsub.f32 1.0, %v1290
        %v1292 = vmul.f32 %v1289, %v1291
        %v1293 = vadd.f32 %v1289, %v1292
        %vm1294 = vweird.f32 %v837
        %vm1295 = vweird.f32 %v1289
        %vm1296 = vmor %vm1294, %vm1295
        %v1297 = vsel %vm1296, %v1289, %v1293
        %v1298 = vand.u32 2147483647, %v837
        %vm1299 = vcmp.eq.f32.partialorder %v1298, 8.507059e+37
        %v1300 = vand.u32 %v837, 2147483648
        %v1301 = vor.u32 1.1754944e-38, %v1300
        %v1302 = vsel %vm1299, %v1301, %v1297
        %v1303 = vmul.f32 1.0, %v1302
        %v1304 = vrcp.pop %v838
        %v1305 = vmul.f32 %v838, %v1304
        %v1306 = vsub.f32 1.0, %v1305
        %v1307 = vmul.f32 %v1304, %v1306
        %v1308 = vadd.f32 %v1304, %v1307
        %vm1309 = vweird.f32 %v838
        %vm1310 = vweird.f32 %v1304
        %vm1311 = vmor %vm1309, %vm1310
        %v1312 = vsel %vm1311, %v1304, %v1308
        %v1313 = vand.u32 2147483647, %v838
        %vm1314 = vcmp.eq.f32.partialorder %v1313, 8.507059e+37
        %v1315 = vand.u32 %v838, 2147483648
        %v1316 = vor.u32 1.1754944e-38, %v1315
        %v1317 = vsel %vm1314, %v1316, %v1312
        %v1318 = vmul.f32 1.0, %v1317
        %v1319 = vmul.f32 %v483, %v853
        %v1320 = vmul.f32 %v486, %v868
        %v1321 = vmul.f32 %v489, %v883
        %v1322 = vmul.f32 %v492, %v898
        %v1323 = vmul.f32 %v495, %v913
        %v1324 = vmul.f32 %v498, %v928
        %v1325 = vmul.f32 %v501, %v943
        %v1326 = vmul.f32 %v504, %v958
        %v1327 = vmul.f32 %v507, %v973
        %v1328 = vmul.f32 %v510, %v988
        %v1329 = vmul.f32 %v513, %v1003
        %v1330 = vmul.f32 %v516, %v1018
        %v1331 = vmul.f32 %v519, %v1033
        %v1332 = vmul.f32 %v522, %v1048
        %v1333 = vmul.f32 %v525, %v1063
        %v1334 = vmul.f32 %v528, %v1078
        %v1335 = vmul.f32 %v531, %v1093
        %v1336 = vmul.f32 %v534, %v1108
        %v1337 = vmul.f32 %v537, %v1123
        %v1338 = vmul.f32 %v540, %v1138
        %v1339 = vmul.f32 %v543, %v1153
        %v1340 = vmul.f32 %v546, %v1168
        %v1341 = vmul.f32 %v549, %v1183
        %v1342 = vmul.f32 %v552, %v1198
        %v1343 = vmul.f32 %v555, %v1213
        %v1344 = vmul.f32 %v558, %v1228
        %v1345 = vmul.f32 %v561, %v1243
        %v1346 = vmul.f32 %v564, %v1258
        %v1347 = vmul.f32 %v567, %v1273
        %v1348 = vmul.f32 %v570, %v1288
        %v1349 = vmul.f32 %v573, %v1303
        %v1350 = vmul.f32 %v576, %v1318
        %v1351 = vmul.f32 %v1319, %v616
        %v1352 = vmul.f32 %v1320, %v619
        %v1353 = vmul.f32 %v1321, %v622
        %v1354 = vmul.f32 %v1322, %v625
        %v1355 = vmul.f32 %v1323, %v628
        %v1356 = vmul.f32 %v1324, %v631
        %v1357 = vmul.f32 %v1325, %v634
        %v1358 = vmul.f32 %v1326, %v637
        %v1359 = vmul.f32 %v1327, %v640
        %v1360 = vmul.f32 %v1328, %v643
        %v1361 = vmul.f32 %v1329, %v646
        %v1362 = vmul.f32 %v1330, %v649
        %v1363 = vmul.f32 %v1331, %v652
        %v1364 = vmul.f32 %v1332, %v655
        %v1365 = vmul.f32 %v1333, %v658
        %v1366 = vmul.f32 %v1334, %v661
        %v1367 = vmul.f32 %v1335, %v664
        %v1368 = vmul.f32 %v1336, %v667
        %v1369 = vmul.f32 %v1337, %v670
        %v1370 = vmul.f32 %v1338, %v673
        %v1371 = vmul.f32 %v1339, %v676
        %v1372 = vmul.f32 %v1340, %v679
        %v1373 = vmul.f32 %v1341, %v682
        %v1374 = vmul.f32 %v1342, %v685
        %v1375 = vmul.f32 %v1343, %v688
        %v1376 = vmul.f32 %v1344, %v691
        %v1377 = vmul.f32 %v1345, %v694
        %v1378 = vmul.f32 %v1346, %v697
        %v1379 = vmul.f32 %v1347, %v700
        %v1380 = vmul.f32 %v1348, %v703
        %v1381 = vmul.f32 %v1349, %v706
        %v1382 = vmul.f32 %v1350, %v709
        %1383 = vst [vmem:[%s272] sm:$0xff] %v1351
        %1384 = vst [vmem:[%s272 + $0x8] sm:$0xff] %v1352
        %1385 = vst [vmem:[%s272 + $0x10] sm:$0xff] %v1353
        %1386 = vst [vmem:[%s272 + $0x18] sm:$0xff] %v1354
        %1387 = vst [vmem:[%s272 + $0x20] sm:$0xff] %v1355
        %1388 = vst [vmem:[%s272 + $0x28] sm:$0xff] %v1356
        %1389 = vst [vmem:[%s272 + $0x30] sm:$0xff] %v1357
        %1390 = vst [vmem:[%s272 + $0x38] sm:$0xff] %v1358
        %1391 = vst [vmem:[%s272 + $0x40] sm:$0xff] %v1359
        %1392 = vst [vmem:[%s272 + $0x48] sm:$0xff] %v1360
        %1393 = vst [vmem:[%s272 + $0x50] sm:$0xff] %v1361
        %1394 = vst [vmem:[%s272 + $0x58] sm:$0xff] %v1362
        %1395 = vst [vmem:[%s272 + $0x60] sm:$0xff] %v1363
        %1396 = vst [vmem:[%s272 + $0x68] sm:$0xff] %v1364
        %1397 = vst [vmem:[%s272 + $0x70] sm:$0xff] %v1365
        %1398 = vst [vmem:[%s272 + $0x78] sm:$0xff] %v1366
        %1399 = vst [vmem:[%s272 + $0x80] sm:$0xff] %v1367
        %1400 = vst [vmem:[%s272 + $0x88] sm:$0xff] %v1368
        %1401 = vst [vmem:[%s272 + $0x90] sm:$0xff] %v1369
        %1402 = vst [vmem:[%s272 + $0x98] sm:$0xff] %v1370
        %1403 = vst [vmem:[%s272 + $0xa0] sm:$0xff] %v1371
        %1404 = vst [vmem:[%s272 + $0xa8] sm:$0xff] %v1372
        %1405 = vst [vmem:[%s272 + $0xb0] sm:$0xff] %v1373
        %1406 = vst [vmem:[%s272 + $0xb8] sm:$0xff] %v1374
        %1407 = vst [vmem:[%s272 + $0xc0] sm:$0xff] %v1375
        %1408 = vst [vmem:[%s272 + $0xc8] sm:$0xff] %v1376
        %1409 = vst [vmem:[%s272 + $0xd0] sm:$0xff] %v1377
        %1410 = vst [vmem:[%s272 + $0xd8] sm:$0xff] %v1378
        %1411 = vst [vmem:[%s272 + $0xe0] sm:$0xff] %v1379
        %1412 = vst [vmem:[%s272 + $0xe8] sm:$0xff] %v1380
        %1413 = vst [vmem:[%s272 + $0xf0] sm:$0xff] %v1381
        %1414 = vst [vmem:[%s272 + $0xf8] sm:$0xff] %v1382
        %s1415 = sand.u32 %s181, 1
        %s1416 = scalar_lea.sflag [#allocation3], %s1415
        %s1417 = sand.u32 %s181, 1
        %s1418 = smul.addr %s1417, 256
        %s1419 = scalar_lea.vmem [#allocation2], %s1418
        // Predicated region
        $region49: #{moeff_forward.5} parent=47 // pred_check
          %p1420 = pneg %p191
        $region50: #{moeff_forward.5} parent=47 // pred_check_branch
          %1422 = sbr.rel (%p1420) target = $region52
        $region51: #{moeff_forward.5} parent=47 // pred_region
          %s1423 = smul.u32 32, %s21
          %1425 = vsyncadd %s1416, 0
          %s1426 = smul.addr %s1423, 8
          %s1427 = scalar_lea.hbm %s7, %s1426
          %s1428 = sshll.u32 %s1419, 4
          %s1429 = int_to_ptr.vmem [resolvable:$true] %s1428
          %s1430 = sshll.u32 %s1427, 4
          %s1431 = int_to_ptr.hbm [resolvable:$true] %s1430
          %1436 = dma.vmem_to_hbm [thread:$0]  %s1429, 4096, %s1431, %s1416, 128, 128, 8
        $region52: #{moeff_forward.5} parent=47 // pred_fallthru
          _
      $region48: #{moeff_forward.5} parent=5 // pred_fallthru
        _
      %p1437 = scmp.le.s32.totalorder 2, %s16
      // Predicated region
      $region53: #{moeff_forward.5} parent=5 // pred_check
        %p1438 = pneg %p1437
      $region54: #{moeff_forward.5} parent=5 // pred_check_branch
        %1440 = sbr.rel (%p1438) target = $region56
      $region55: #{moeff_forward.5} parent=5 // pred_region
        %s1441 = ssub.s32 %s16, 2
        // Predicated region
        $region57: #{moeff_forward.5} parent=55 // pred_check
          %p1442 = pneg %p197
        $region58: #{moeff_forward.5} parent=55 // pred_check_branch
          %1444 = sbr.rel (%p1442) target = $region60
        $region59: #{moeff_forward.5} parent=55 // pred_region
          %s1445 = sand.u32 %s182, 1
          %s1446 = scalar_lea.sflag [#allocation3], %s1445
          %s1447 = sand.u32 %s182, 1
          %s1448 = smul.addr %s1447, 256
          %s1449 = scalar_lea.vmem [#allocation2], %s1448
          %1451 = dma.done %s1446, 4096
        $region60: #{moeff_forward.5} parent=55 // pred_fallthru
          _
      $region56: #{moeff_forward.5} parent=5 // pred_fallthru
        _
    $region6: #{moeff_forward.5} parent=1 // loop_footer
      %s20 = sadd.s32 1, %s16
    $region7: #{moeff_forward.5} parent=1 // loop_footer_branch
      %15 = sbr.rel target = $region3
    $region8: #{moeff_forward.5} parent=1 // loop_exit
      _
    %1452 = vsyncpa [#allocation3], 1
    %s1453 = scalar_lea.sflag [#allocation3], 1
    %1454 = vsyncpa %s1453, 1

// kernel: moeff_forward.4
$region0: #{moeff_forward.4}
  #allocation0 [shape = 'u32[]', space=smem, size = 0x4, offset = 0x4, fixed_abs, tag = 'smem constant byte address 0x4 - core index']
  #allocation1 [shape = 'u32[72,128]{1,0:T(1,128)}', space=vmem, size = 0x9000, scoped, tag = 'internal scratch']
  #allocation2 [shape = 'f32[256,128]{1,0:T(8,128)}', space=vmem, size = 0x20000, scoped, tag = 'scratch operand']
  #allocation3 [shape = 's32[1]{0}', space=sflag, size = 0x4, scoped, tag = 'scoped memory for moeff_forward.4']
  #allocation4 [shape = 'u8[1024]{0}', space=smem, size = 0x400, scoped, tag = 'prefetched SMEM operand 0']
  %s0 = inlined_call_operand.vmem [shape: s32[2,8], index: 0, kind: input, shape index: {}]
  %s1 = inlined_call_operand.vmem [shape: f32[512,128], index: 1, kind: input, shape index: {}]
  %s2 = inlined_call_operand.vmem [shape: f32[8,512,1], index: 2, kind: input, shape index: {}]
  %s3 = inlined_call_operand.vmem [shape: f32[8,128,128], index: 3, kind: input, shape index: {}]
  %s4 = inlined_call_operand.vmem [shape: f32[8,128,128], index: 4, kind: input, shape index: {}]
  %s5 = inlined_call_operand.vmem [shape: f32[8,128,128], index: 5, kind: input, shape index: {}]
  %s6 = inlined_call_operand.vmem [shape: f32[128,256], index: 6, kind: input, shape index: {}]
  %s7 = inlined_call_operand.vmem [shape: f32[128,256], index: 7, kind: input, shape index: {}]
  %s8 = inlined_call_operand.vmem [shape: f32[256,128], index: 8, kind: input, shape index: {}]
  %s9 = inlined_call_operand.vmem [shape: f32[512,128], index: 9, kind: output, shape index: {}]
  %s10 = sld [smem:[#allocation0]]
  $region77: #{moeff_forward.4} parent=0
    _
  %s12 = ssub.s32 1, %s10
  %s13 = scalar_select 0, %s12, %s10
  %s15 = sshll.u32 %s0, 4
  %s16 = int_to_ptr.vmem [resolvable:$true] %s15
  %18 = dma.vmem_to_smem %s16, 32, [#allocation4], [#allocation3]
  %20 = dma.done [#allocation3], 32
  %21 = sfence
  loop: start=0, step=1, limit=18
  $region2: #{moeff_forward.4} parent=0 // loop_pre_header
    _
  $region3: #{moeff_forward.4} parent=0 // loop_header
    %s23 = sphi 0, %s27
    %p24 = scmp.ge.s32.totalorder %s23, 18
    %s30 = sphi 0, %s42
    %s31 = sphi 0, %s38
    %s32 = sphi 0, %s30
    %s33 = sphi 0, %s31
    %s34 = sphi 0, %s32
    %s35 = sphi 0, %s33
    %s45 = sphi 0, %s47
    %s48 = sphi 0, %s45
    %s49 = sphi 0, %s48
    %s65 = sphi 0, %s49
    %s73 = sphi 0, %s75
    %s76 = sphi 0, %s73
    %s77 = sphi 0, %s76
    %s93 = sphi 0, %s77
    %s99 = sphi 0, %s101
    %s102 = sphi 0, %s99
    %s103 = sphi 0, %s102
    %s119 = sphi 0, %s103
    %s125 = sphi 0, %s127
    %s128 = sphi 0, %s125
    %s129 = sphi 0, %s128
    %s145 = sphi 0, %s129
    %s151 = sphi 0, %s153
    %s154 = sphi 0, %s151
    %s155 = sphi 0, %s154
    %s171 = sphi 0, %s155
    %s175 = sphi 0, %s175
    %s177 = sphi 0, %s175
    %s178 = sphi 0, %s177
    %s192 = sphi 0, %s178
    %s196 = sphi 0, %s196
    %s198 = sphi 0, %s196
    %s199 = sphi 0, %s198
    %s213 = sphi 0, %s199
    %s217 = sphi 0, %s217
    %s219 = sphi 0, %s217
    %s220 = sphi 0, %s219
    %s234 = sphi 0, %s220
    %s240 = sphi 0, %s242
    %s243 = sphi 0, %s240
    %s244 = sphi 0, %s243
    %s260 = sphi 0, %s244
  $region4: #{moeff_forward.4} parent=0 // loop_header_branch
    %26 = sbr.rel (%p24) target = $region8
  $region5: #{moeff_forward.4} parent=0 // loop_body
    %s28 = ssub.s32 %s23, 1
    %s29 = ssub.s32 %s23, 2
    %s36 = sadd.s32 1, %s31
    %p37 = scmp.ge.s32.totalorder %s36, 8
    %s38 = scalar_select %p37, 0, %s36
    %s39 = sadd.s32 1, %s30
    %s40 = scalar_select %p37, %s39, %s30
    %p41 = scmp.ge.s32.totalorder %s40, 2
    %s42 = scalar_select %p41, 0, %s40
    %s43 = ssub.s32 %s30, %s42
    %p44 = scmp.eq.s32.totalorder %s43, 0
    %s46 = sadd.s32 %s45, 1
    %s47 = scalar_select %p44, %s45, %s46
    %p50 = pneg %p44
    %p51 = scmp.eq.s32.totalorder %s23, 15
    %p52 = por %p50, %p51
    %p53 = scmp.ne.s32.totalorder %s45, %s48
    %p54 = scmp.eq.s32.totalorder %s23, 0
    %p55 = por %p53, %p54
    %p56 = scmp.ne.s32.totalorder %s45, %s48
    %p57 = scmp.eq.s32.totalorder %s28, 15
    %p58 = por %p56, %p57
    %p59 = scmp.ne.s32.totalorder %s48, %s49
    %p60 = scmp.eq.s32.totalorder %s28, 0
    %p61 = por %p59, %p60
    %p62 = scmp.ne.s32.totalorder %s48, %s49
    %p63 = scmp.eq.s32.totalorder %s29, 15
    %p64 = por %p62, %p63
    %p66 = scmp.ne.s32.totalorder %s49, %s65
    %p67 = scmp.eq.s32.totalorder %s29, 0
    %p68 = por %p66, %p67
    %s69 = ssub.s32 %s31, %s38
    %s70 = ssub.s32 %s30, %s42
    %s71 = sor.u32 %s69, %s70
    %p72 = scmp.eq.s32.totalorder %s71, 0
    %s74 = sadd.s32 %s73, 1
    %s75 = scalar_select %p72, %s73, %s74
    %p78 = pneg %p72
    %p79 = scmp.eq.s32.totalorder %s23, 15
    %p80 = por %p78, %p79
    %p81 = scmp.ne.s32.totalorder %s73, %s76
    %p82 = scmp.eq.s32.totalorder %s23, 0
    %p83 = por %p81, %p82
    %p84 = scmp.ne.s32.totalorder %s73, %s76
    %p85 = scmp.eq.s32.totalorder %s28, 15
    %p86 = por %p84, %p85
    %p87 = scmp.ne.s32.totalorder %s76, %s77
    %p88 = scmp.eq.s32.totalorder %s28, 0
    %p89 = por %p87, %p88
    %p90 = scmp.ne.s32.totalorder %s76, %s77
    %p91 = scmp.eq.s32.totalorder %s29, 15
    %p92 = por %p90, %p91
    %p94 = scmp.ne.s32.totalorder %s77, %s93
    %p95 = scmp.eq.s32.totalorder %s29, 0
    %p96 = por %p94, %p95
    %s97 = ssub.s32 %s31, %s38
    %p98 = scmp.eq.s32.totalorder %s97, 0
    %s100 = sadd.s32 %s99, 1
    %s101 = scalar_select %p98, %s99, %s100
    %p104 = pneg %p98
    %p105 = scmp.eq.s32.totalorder %s23, 15
    %p106 = por %p104, %p105
    %p107 = scmp.ne.s32.totalorder %s99, %s102
    %p108 = scmp.eq.s32.totalorder %s23, 0
    %p109 = por %p107, %p108
    %p110 = scmp.ne.s32.totalorder %s99, %s102
    %p111 = scmp.eq.s32.totalorder %s28, 15
    %p112 = por %p110, %p111
    %p113 = scmp.ne.s32.totalorder %s102, %s103
    %p114 = scmp.eq.s32.totalorder %s28, 0
    %p115 = por %p113, %p114
    %p116 = scmp.ne.s32.totalorder %s102, %s103
    %p117 = scmp.eq.s32.totalorder %s29, 15
    %p118 = por %p116, %p117
    %p120 = scmp.ne.s32.totalorder %s103, %s119
    %p121 = scmp.eq.s32.totalorder %s29, 0
    %p122 = por %p120, %p121
    %s123 = ssub.s32 %s31, %s38
    %p124 = scmp.eq.s32.totalorder %s123, 0
    %s126 = sadd.s32 %s125, 1
    %s127 = scalar_select %p124, %s125, %s126
    %p130 = pneg %p124
    %p131 = scmp.eq.s32.totalorder %s23, 15
    %p132 = por %p130, %p131
    %p133 = scmp.ne.s32.totalorder %s125, %s128
    %p134 = scmp.eq.s32.totalorder %s23, 0
    %p135 = por %p133, %p134
    %p136 = scmp.ne.s32.totalorder %s125, %s128
    %p137 = scmp.eq.s32.totalorder %s28, 15
    %p138 = por %p136, %p137
    %p139 = scmp.ne.s32.totalorder %s128, %s129
    %p140 = scmp.eq.s32.totalorder %s28, 0
    %p141 = por %p139, %p140
    %p142 = scmp.ne.s32.totalorder %s128, %s129
    %p143 = scmp.eq.s32.totalorder %s29, 15
    %p144 = por %p142, %p143
    %p146 = scmp.ne.s32.totalorder %s129, %s145
    %p147 = scmp.eq.s32.totalorder %s29, 0
    %p148 = por %p146, %p147
    %s149 = ssub.s32 %s31, %s38
    %p150 = scmp.eq.s32.totalorder %s149, 0
    %s152 = sadd.s32 %s151, 1
    %s153 = scalar_select %p150, %s151, %s152
    %p156 = pneg %p150
    %p157 = scmp.eq.s32.totalorder %s23, 15
    %p158 = por %p156, %p157
    %p159 = scmp.ne.s32.totalorder %s151, %s154
    %p160 = scmp.eq.s32.totalorder %s23, 0
    %p161 = por %p159, %p160
    %p162 = scmp.ne.s32.totalorder %s151, %s154
    %p163 = scmp.eq.s32.totalorder %s28, 15
    %p164 = por %p162, %p163
    %p165 = scmp.ne.s32.totalorder %s154, %s155
    %p166 = scmp.eq.s32.totalorder %s28, 0
    %p167 = por %p165, %p166
    %p168 = scmp.ne.s32.totalorder %s154, %s155
    %p169 = scmp.eq.s32.totalorder %s29, 15
    %p170 = por %p168, %p169
    %p172 = scmp.ne.s32.totalorder %s155, %s171
    %p173 = scmp.eq.s32.totalorder %s29, 0
    %p174 = por %p172, %p173
    %s176 = sadd.s32 %s175, 1
    %p179 = scmp.eq.s32.totalorder %s23, 15
    %p180 = scmp.ne.s32.totalorder %s175, %s177
    %p181 = scmp.eq.s32.totalorder %s23, 0
    %p182 = por %p180, %p181
    %p183 = scmp.ne.s32.totalorder %s175, %s177
    %p184 = scmp.eq.s32.totalorder %s28, 15
    %p185 = por %p183, %p184
    %p186 = scmp.ne.s32.totalorder %s177, %s178
    %p187 = scmp.eq.s32.totalorder %s28, 0
    %p188 = por %p186, %p187
    %p189 = scmp.ne.s32.totalorder %s177, %s178
    %p190 = scmp.eq.s32.totalorder %s29, 15
    %p191 = por %p189, %p190
    %p193 = scmp.ne.s32.totalorder %s178, %s192
    %p194 = scmp.eq.s32.totalorder %s29, 0
    %p195 = por %p193, %p194
    %s197 = sadd.s32 %s196, 1
    %p200 = scmp.eq.s32.totalorder %s23, 15
    %p201 = scmp.ne.s32.totalorder %s196, %s198
    %p202 = scmp.eq.s32.totalorder %s23, 0
    %p203 = por %p201, %p202
    %p204 = scmp.ne.s32.totalorder %s196, %s198
    %p205 = scmp.eq.s32.totalorder %s28, 15
    %p206 = por %p204, %p205
    %p207 = scmp.ne.s32.totalorder %s198, %s199
    %p208 = scmp.eq.s32.totalorder %s28, 0
    %p209 = por %p207, %p208
    %p210 = scmp.ne.s32.totalorder %s198, %s199
    %p211 = scmp.eq.s32.totalorder %s29, 15
    %p212 = por %p210, %p211
    %p214 = scmp.ne.s32.totalorder %s199, %s213
    %p215 = scmp.eq.s32.totalorder %s29, 0
    %p216 = por %p214, %p215
    %s218 = sadd.s32 %s217, 1
    %p221 = scmp.eq.s32.totalorder %s23, 15
    %p222 = scmp.ne.s32.totalorder %s217, %s219
    %p223 = scmp.eq.s32.totalorder %s23, 0
    %p224 = por %p222, %p223
    %p225 = scmp.ne.s32.totalorder %s217, %s219
    %p226 = scmp.eq.s32.totalorder %s28, 15
    %p227 = por %p225, %p226
    %p228 = scmp.ne.s32.totalorder %s219, %s220
    %p229 = scmp.eq.s32.totalorder %s28, 0
    %p230 = por %p228, %p229
    %p231 = scmp.ne.s32.totalorder %s219, %s220
    %p232 = scmp.eq.s32.totalorder %s29, 15
    %p233 = por %p231, %p232
    %p235 = scmp.ne.s32.totalorder %s220, %s234
    %p236 = scmp.eq.s32.totalorder %s29, 0
    %p237 = por %p235, %p236
    %s238 = ssub.s32 %s30, %s42
    %p239 = scmp.eq.s32.totalorder %s238, 0
    %s241 = sadd.s32 %s240, 1
    %s242 = scalar_select %p239, %s240, %s241
    %p245 = pneg %p239
    %p246 = scmp.eq.s32.totalorder %s23, 15
    %p247 = por %p245, %p246
    %p248 = scmp.ne.s32.totalorder %s240, %s243
    %p249 = scmp.eq.s32.totalorder %s23, 0
    %p250 = por %p248, %p249
    %p251 = scmp.ne.s32.totalorder %s240, %s243
    %p252 = scmp.eq.s32.totalorder %s28, 15
    %p253 = por %p251, %p252
    %p254 = scmp.ne.s32.totalorder %s243, %s244
    %p255 = scmp.eq.s32.totalorder %s28, 0
    %p256 = por %p254, %p255
    %p257 = scmp.ne.s32.totalorder %s243, %s244
    %p258 = scmp.eq.s32.totalorder %s29, 15
    %p259 = por %p257, %p258
    %p261 = scmp.ne.s32.totalorder %s244, %s260
    %p262 = scmp.eq.s32.totalorder %s29, 0
    %p263 = por %p261, %p262
    %p264 = scmp.le.s32.totalorder 1, %s23
    %p265 = scmp.lt.s32.totalorder %s23, 17
    %p266 = pnand %p264, %p265
    %p267 = pneg %p266
    // Predicated region
    $region9: #{moeff_forward.4} parent=5 // pred_check
      _
    $region10: #{moeff_forward.4} parent=5 // pred_check_branch
      %269 = sbr.rel (%p266) target = $region12
    $region11: #{moeff_forward.4} parent=5 // pred_region
      %s270 = ssub.s32 %s23, 1
      // Predicated region
      $region13: #{moeff_forward.4} parent=11 // pred_check
        %p271 = pneg %p188
      $region14: #{moeff_forward.4} parent=11 // pred_check_branch
        %273 = sbr.rel (%p271) target = $region16
      $region15: #{moeff_forward.4} parent=11 // pred_region
        _
      $region16: #{moeff_forward.4} parent=11 // pred_fallthru
        _
      // Predicated region
      $region17: #{moeff_forward.4} parent=11 // pred_check
        %p274 = pneg %p209
      $region18: #{moeff_forward.4} parent=11 // pred_check_branch
        %276 = sbr.rel (%p274) target = $region20
      $region19: #{moeff_forward.4} parent=11 // pred_region
        _
      $region20: #{moeff_forward.4} parent=11 // pred_fallthru
        _
      // Predicated region
      $region21: #{moeff_forward.4} parent=11 // pred_check
        %p277 = pneg %p230
      $region22: #{moeff_forward.4} parent=11 // pred_check_branch
        %279 = sbr.rel (%p277) target = $region24
      $region23: #{moeff_forward.4} parent=11 // pred_region
        _
      $region24: #{moeff_forward.4} parent=11 // pred_fallthru
        _
    $region12: #{moeff_forward.4} parent=5 // pred_fallthru
      _
    %p280 = scmp.lt.s32.totalorder %s23, 16
    // Predicated region
    $region25: #{moeff_forward.4} parent=5 // pred_check
      %p281 = pneg %p280
    $region26: #{moeff_forward.4} parent=5 // pred_check_branch
      %283 = sbr.rel (%p281) target = $region28
    $region27: #{moeff_forward.4} parent=5 // pred_region
      // Predicated region
      $region29: #{moeff_forward.4} parent=27 // pred_check
        %p284 = pneg %p55
      $region30: #{moeff_forward.4} parent=27 // pred_check_branch
        %286 = sbr.rel (%p284) target = $region32
      $region31: #{moeff_forward.4} parent=27 // pred_region
        %s287 = smul.u32 32, %s30
        %p288 = scmp.lt.s32.totalorder %s287, 63
        %s289 = scalar_select %p288, %s287, 63
        %s290 = smul.addr %s289, 8
        %s291 = scalar_lea.vmem %s1, %s290
        %s292 = smul.u32 32, %s30
      $region32: #{moeff_forward.4} parent=27 // pred_fallthru
        _
      // Predicated region
      $region33: #{moeff_forward.4} parent=27 // pred_check
        %p293 = pneg %p83
      $region34: #{moeff_forward.4} parent=27 // pred_check_branch
        %295 = sbr.rel (%p293) target = $region36
      $region35: #{moeff_forward.4} parent=27 // pred_region
        %s296 = smul.u32 32, %s30
        %p297 = scmp.lt.s32.totalorder %s31, 7
        %s298 = scalar_select %p297, %s31, 7
        %p299 = scmp.lt.s32.totalorder %s296, 63
        %s300 = scalar_select %p299, %s296, 63
        %s301 = smul.addr %s298, 64
        %s302 = sadd.s32 %s300, %s301
        %s303 = smul.addr %s302, 8
        %s304 = scalar_lea.vmem %s2, %s303
        %s305 = smul.u32 32, %s30
      $region36: #{moeff_forward.4} parent=27 // pred_fallthru
        _
      // Predicated region
      $region37: #{moeff_forward.4} parent=27 // pred_check
        %p306 = pneg %p109
      $region38: #{moeff_forward.4} parent=27 // pred_check_branch
        %308 = sbr.rel (%p306) target = $region40
      $region39: #{moeff_forward.4} parent=27 // pred_region
        %p309 = scmp.lt.s32.totalorder %s31, 7
        %s310 = scalar_select %p309, %s31, 7
        %s311 = smul.addr %s310, 16
        %s312 = smul.addr %s311, 8
        %s313 = scalar_lea.vmem %s3, %s312
      $region40: #{moeff_forward.4} parent=27 // pred_fallthru
        _
      // Predicated region
      $region41: #{moeff_forward.4} parent=27 // pred_check
        %p314 = pneg %p135
      $region42: #{moeff_forward.4} parent=27 // pred_check_branch
        %316 = sbr.rel (%p314) target = $region44
      $region43: #{moeff_forward.4} parent=27 // pred_region
        %p317 = scmp.lt.s32.totalorder %s31, 7
        %s318 = scalar_select %p317, %s31, 7
        %s319 = smul.addr %s318, 16
        %s320 = smul.addr %s319, 8
        %s321 = scalar_lea.vmem %s4, %s320
      $region44: #{moeff_forward.4} parent=27 // pred_fallthru
        _
      // Predicated region
      $region45: #{moeff_forward.4} parent=27 // pred_check
        %p322 = pneg %p161
      $region46: #{moeff_forward.4} parent=27 // pred_check_branch
        %324 = sbr.rel (%p322) target = $region48
      $region47: #{moeff_forward.4} parent=27 // pred_region
        %p325 = scmp.lt.s32.totalorder %s31, 7
        %s326 = scalar_select %p325, %s31, 7
        %s327 = smul.addr %s326, 16
        %s328 = smul.addr %s327, 8
        %s329 = scalar_lea.vmem %s5, %s328
      $region48: #{moeff_forward.4} parent=27 // pred_fallthru
        _
    $region28: #{moeff_forward.4} parent=5 // pred_fallthru
      _
    %p330 = scmp.le.s32.totalorder 1, %s23
    %p331 = scmp.lt.s32.totalorder %s23, 17
    %p332 = pnand %p330, %p331
    %p333 = pneg %p332
    // Predicated region
    $region49: #{moeff_forward.4} parent=5 // pred_check
      _
    $region50: #{moeff_forward.4} parent=5 // pred_check_branch
      %335 = sbr.rel (%p332) target = $region52
    $region51: #{moeff_forward.4} parent=5 // pred_region
      %s336 = ssub.s32 %s23, 1
      %s337 = smul.u32 32, %s32
      %p338 = scmp.lt.s32.totalorder %s337, 63
      %s339 = scalar_select %p338, %s337, 63
      %s340 = smul.addr %s339, 8
      %s341 = scalar_lea.vmem %s1, %s340
      %p342 = pneg %p61
      %p343 = pneg %p58
      %s344 = smul.u32 32, %s32
      %p345 = scmp.lt.s32.totalorder %s33, 7
      %s346 = scalar_select %p345, %s33, 7
      %p347 = scmp.lt.s32.totalorder %s344, 63
      %s348 = scalar_select %p347, %s344, 63
      %s349 = smul.addr %s346, 64
      %s350 = sadd.s32 %s348, %s349
      %s351 = smul.addr %s350, 8
      %s352 = scalar_lea.vmem %s2, %s351
      %p353 = pneg %p89
      %p354 = pneg %p86
      %p355 = scmp.lt.s32.totalorder %s33, 7
      %s356 = scalar_select %p355, %s33, 7
      %s357 = smul.addr %s356, 16
      %s358 = smul.addr %s357, 8
      %s359 = scalar_lea.vmem %s3, %s358
      %p360 = pneg %p115
      %p361 = pneg %p112
      %p362 = scmp.lt.s32.totalorder %s33, 7
      %s363 = scalar_select %p362, %s33, 7
      %s364 = smul.addr %s363, 16
      %s365 = smul.addr %s364, 8
      %s366 = scalar_lea.vmem %s4, %s365
      %p367 = pneg %p141
      %p368 = pneg %p138
      %p369 = scmp.lt.s32.totalorder %s33, 7
      %s370 = scalar_select %p369, %s33, 7
      %s371 = smul.addr %s370, 16
      %s372 = smul.addr %s371, 8
      %s373 = scalar_lea.vmem %s5, %s372
      %p374 = pneg %p167
      %p375 = pneg %p164
      %p376 = pneg %p188
      %p377 = pneg %p185
      %p378 = pneg %p209
      %p379 = pneg %p206
      %p380 = pneg %p230
      %p381 = pneg %p227
      %p382 = pneg %p256
      %p383 = pneg %p253
      %s384 = smul.u32 32, %s32
      %p385 = scmp.lt.s32.totalorder %s384, 63
      %s386 = scalar_select %p385, %s384, 63
      %s387 = smul.addr %s386, 8
      %s388 = scalar_lea.vmem %s9, %s387
      %s389 = smul.u32 32, %s32
      %p390 = scmp.lt.s32.totalorder %s389, 63
      %s391 = scalar_select %p390, %s389, 63
      %s392 = smul.addr %s391, 8
      %s393 = scalar_lea.vmem %s1, %s392
      %s394 = smul.u32 32, %s32
      %s395 = smul.u32 32, %s32
      %p396 = scmp.lt.s32.totalorder %s33, 7
      %s397 = scalar_select %p396, %s33, 7
      %p398 = scmp.lt.s32.totalorder %s395, 63
      %s399 = scalar_select %p398, %s395, 63
      %s400 = smul.addr %s397, 64
      %s401 = sadd.s32 %s399, %s400
      %s402 = smul.addr %s401, 8
      %s403 = scalar_lea.vmem %s2, %s402
      %s404 = smul.u32 32, %s32
      %p405 = scmp.lt.s32.totalorder %s33, 7
      %s406 = scalar_select %p405, %s33, 7
      %s407 = smul.addr %s406, 16
      %s408 = smul.addr %s407, 8
      %s409 = scalar_lea.vmem %s3, %s408
      %p410 = scmp.lt.s32.totalorder %s33, 7
      %s411 = scalar_select %p410, %s33, 7
      %s412 = smul.addr %s411, 16
      %s413 = smul.addr %s412, 8
      %s414 = scalar_lea.vmem %s4, %s413
      %p415 = scmp.lt.s32.totalorder %s33, 7
      %s416 = scalar_select %p415, %s33, 7
      %s417 = smul.addr %s416, 16
      %s418 = smul.addr %s417, 8
      %s419 = scalar_lea.vmem %s5, %s418
      %s420 = smul.u32 32, %s32
      %p421 = scmp.lt.s32.totalorder %s420, 63
      %s422 = scalar_select %p421, %s420, 63
      %s423 = smul.addr %s422, 8
      %s424 = scalar_lea.vmem %s9, %s423
      %s425 = smul.u32 32, %s32
      %v426 = vld [vmem:[%s393] sm:$0xff]
      %v427 = vld [vmem:[%s393 + $0x8] sm:$0xff]
      %v428 = vld [vmem:[%s393 + $0x10] sm:$0xff]
      %v429 = vld [vmem:[%s393 + $0x18] sm:$0xff]
      %v430 = vld [vmem:[%s393 + $0x20] sm:$0xff]
      %v431 = vld [vmem:[%s393 + $0x28] sm:$0xff]
      %v432 = vld [vmem:[%s393 + $0x30] sm:$0xff]
      %v433 = vld [vmem:[%s393 + $0x38] sm:$0xff]
      %v434 = vld [vmem:[%s393 + $0x40] sm:$0xff]
      %v435 = vld [vmem:[%s393 + $0x48] sm:$0xff]
      %v436 = vld [vmem:[%s393 + $0x50] sm:$0xff]
      %v437 = vld [vmem:[%s393 + $0x58] sm:$0xff]
      %v438 = vld [vmem:[%s393 + $0x60] sm:$0xff]
      %v439 = vld [vmem:[%s393 + $0x68] sm:$0xff]
      %v440 = vld [vmem:[%s393 + $0x70] sm:$0xff]
      %v441 = vld [vmem:[%s393 + $0x78] sm:$0xff]
      %v442 = vld [vmem:[%s393 + $0x80] sm:$0xff]
      %v443 = vld [vmem:[%s393 + $0x88] sm:$0xff]
      %v444 = vld [vmem:[%s393 + $0x90] sm:$0xff]
      %v445 = vld [vmem:[%s393 + $0x98] sm:$0xff]
      %v446 = vld [vmem:[%s393 + $0xa0] sm:$0xff]
      %v447 = vld [vmem:[%s393 + $0xa8] sm:$0xff]
      %v448 = vld [vmem:[%s393 + $0xb0] sm:$0xff]
      %v449 = vld [vmem:[%s393 + $0xb8] sm:$0xff]
      %v450 = vld [vmem:[%s393 + $0xc0] sm:$0xff]
      %v451 = vld [vmem:[%s393 + $0xc8] sm:$0xff]
      %v452 = vld [vmem:[%s393 + $0xd0] sm:$0xff]
      %v453 = vld [vmem:[%s393 + $0xd8] sm:$0xff]
      %v454 = vld [vmem:[%s393 + $0xe0] sm:$0xff]
      %v455 = vld [vmem:[%s393 + $0xe8] sm:$0xff]
      %v456 = vld [vmem:[%s393 + $0xf0] sm:$0xff]
      %v457 = vld [vmem:[%s393 + $0xf8] sm:$0xff]
      %p458 = scmp.eq.s32.totalorder %s33, 0
      // Predicated region
      $region53: #{moeff_forward.4} parent=51 // pred_check
        %p459 = pneg %p458
      $region54: #{moeff_forward.4} parent=51 // pred_check_branch
        %461 = sbr.rel (%p459) target = $region56
      $region55: #{moeff_forward.4} parent=51 // pred_region
        %v462 = vld [vmem:[%s6] sm:$0xff]
        %v463 = vld [vmem:[%s6 + $0x8] sm:$0xff]
        %v464 = vld [vmem:[%s6 + $0x10] sm:$0xff]
        %v465 = vld [vmem:[%s6 + $0x18] sm:$0xff]
        %v466 = vld [vmem:[%s6 + $0x20] sm:$0xff]
        %v467 = vld [vmem:[%s6 + $0x28] sm:$0xff]
        %v468 = vld [vmem:[%s6 + $0x30] sm:$0xff]
        %v469 = vld [vmem:[%s6 + $0x38] sm:$0xff]
        %v470 = vld [vmem:[%s6 + $0x40] sm:$0xff]
        %v471 = vld [vmem:[%s6 + $0x48] sm:$0xff]
        %v472 = vld [vmem:[%s6 + $0x50] sm:$0xff]
        %v473 = vld [vmem:[%s6 + $0x58] sm:$0xff]
        %v474 = vld [vmem:[%s6 + $0x60] sm:$0xff]
        %v475 = vld [vmem:[%s6 + $0x68] sm:$0xff]
        %v476 = vld [vmem:[%s6 + $0x70] sm:$0xff]
        %v477 = vld [vmem:[%s6 + $0x78] sm:$0xff]
        %v478 = vld [vmem:[%s6 + $0x80] sm:$0xff]
        %v479 = vld [vmem:[%s6 + $0x88] sm:$0xff]
        %v480 = vld [vmem:[%s6 + $0x90] sm:$0xff]
        %v481 = vld [vmem:[%s6 + $0x98] sm:$0xff]
        %v482 = vld [vmem:[%s6 + $0xa0] sm:$0xff]
        %v483 = vld [vmem:[%s6 + $0xa8] sm:$0xff]
        %v484 = vld [vmem:[%s6 + $0xb0] sm:$0xff]
        %v485 = vld [vmem:[%s6 + $0xb8] sm:$0xff]
        %v486 = vld [vmem:[%s6 + $0xc0] sm:$0xff]
        %v487 = vld [vmem:[%s6 + $0xc8] sm:$0xff]
        %v488 = vld [vmem:[%s6 + $0xd0] sm:$0xff]
        %v489 = vld [vmem:[%s6 + $0xd8] sm:$0xff]
        %v490 = vld [vmem:[%s6 + $0xe0] sm:$0xff]
        %v491 = vld [vmem:[%s6 + $0xe8] sm:$0xff]
        %v492 = vld [vmem:[%s6 + $0xf0] sm:$0xff]
        %v493 = vld [vmem:[%s6 + $0xf8] sm:$0xff]
        %494 = vmatpush.msra.mxu0 %v492
        %495 = vmatpush.msra.mxu0 %v490
        %496 = vmatpush.msra.mxu0 %v488
        %497 = vmatpush.msra.mxu0 %v486
        %498 = vmatpush.msra.mxu0 %v484
        %499 = vmatpush.msra.mxu0 %v482
        %500 = vmatpush.msra.mxu0 %v480
        %501 = vmatpush.msra.mxu0 %v478
        %502 = vmatpush.msra.mxu0 %v476
        %503 = vmatpush.msra.mxu0 %v474
        %504 = vmatpush.msra.mxu0 %v472
        %505 = vmatpush.msra.mxu0 %v470
        %506 = vmatpush.msra.mxu0 %v468
        %507 = vmatpush.msra.mxu0 %v466
        %508 = vmatpush.msra.mxu0 %v464
        %509 = vmatpush.msra.mxu0 %v462
        %510 = vmatmul.f32.gmra.mxu0 %v426
        %v511 = vpop.f32.mrf.mxu0
        %v512 = vadd.f32 0.0, %v511
        %513 = vmatmul.f32.gmra.mxu0 %v427
        %v514 = vpop.f32.mrf.mxu0
        %v515 = vadd.f32 0.0, %v514
        %516 = vmatmul.f32.gmra.mxu0 %v428
        %v517 = vpop.f32.mrf.mxu0
        %v518 = vadd.f32 0.0, %v517
        %519 = vmatmul.f32.gmra.mxu0 %v429
        %v520 = vpop.f32.mrf.mxu0
        %v521 = vadd.f32 0.0, %v520
        %522 = vmatmul.f32.gmra.mxu0 %v430
        %v523 = vpop.f32.mrf.mxu0
        %v524 = vadd.f32 0.0, %v523
        %525 = vmatmul.f32.gmra.mxu0 %v431
        %v526 = vpop.f32.mrf.mxu0
        %v527 = vadd.f32 0.0, %v526
        %528 = vmatmul.f32.gmra.mxu0 %v432
        %v529 = vpop.f32.mrf.mxu0
        %v530 = vadd.f32 0.0, %v529
        %531 = vmatmul.f32.gmra.mxu0 %v433
        %v532 = vpop.f32.mrf.mxu0
        %v533 = vadd.f32 0.0, %v532
        %534 = vmatmul.f32.gmra.mxu0 %v434
        %v535 = vpop.f32.mrf.mxu0
        %v536 = vadd.f32 0.0, %v535
        %537 = vmatmul.f32.gmra.mxu0 %v435
        %v538 = vpop.f32.mrf.mxu0
        %v539 = vadd.f32 0.0, %v538
        %540 = vmatmul.f32.gmra.mxu0 %v436
        %v541 = vpop.f32.mrf.mxu0
        %v542 = vadd.f32 0.0, %v541
        %543 = vmatmul.f32.gmra.mxu0 %v437
        %v544 = vpop.f32.mrf.mxu0
        %v545 = vadd.f32 0.0, %v544
        %546 = vmatmul.f32.gmra.mxu0 %v438
        %v547 = vpop.f32.mrf.mxu0
        %v548 = vadd.f32 0.0, %v547
        %549 = vmatmul.f32.gmra.mxu0 %v439
        %v550 = vpop.f32.mrf.mxu0
        %v551 = vadd.f32 0.0, %v550
        %552 = vmatmul.f32.gmra.mxu0 %v440
        %v553 = vpop.f32.mrf.mxu0
        %v554 = vadd.f32 0.0, %v553
        %555 = vmatmul.f32.gmra.mxu0 %v441
        %v556 = vpop.f32.mrf.mxu0
        %v557 = vadd.f32 0.0, %v556
        %558 = vmatmul.f32.gmra.mxu0 %v442
        %v559 = vpop.f32.mrf.mxu0
        %v560 = vadd.f32 0.0, %v559
        %561 = vmatmul.f32.gmra.mxu0 %v443
        %v562 = vpop.f32.mrf.mxu0
        %v563 = vadd.f32 0.0, %v562
        %564 = vmatmul.f32.gmra.mxu0 %v444
        %v565 = vpop.f32.mrf.mxu0
        %v566 = vadd.f32 0.0, %v565
        %567 = vmatmul.f32.gmra.mxu0 %v445
        %v568 = vpop.f32.mrf.mxu0
        %v569 = vadd.f32 0.0, %v568
        %570 = vmatmul.f32.gmra.mxu0 %v446
        %v571 = vpop.f32.mrf.mxu0
        %v572 = vadd.f32 0.0, %v571
        %573 = vmatmul.f32.gmra.mxu0 %v447
        %v574 = vpop.f32.mrf.mxu0
        %v575 = vadd.f32 0.0, %v574
        %576 = vmatmul.f32.gmra.mxu0 %v448
        %v577 = vpop.f32.mrf.mxu0
        %v578 = vadd.f32 0.0, %v577
        %579 = vmatmul.f32.gmra.mxu0 %v449
        %v580 = vpop.f32.mrf.mxu0
        %v581 = vadd.f32 0.0, %v580
        %582 = vmatmul.f32.gmra.mxu0 %v450
        %v583 = vpop.f32.mrf.mxu0
        %v584 = vadd.f32 0.0, %v583
        %585 = vmatmul.f32.gmra.mxu0 %v451
        %v586 = vpop.f32.mrf.mxu0
        %v587 = vadd.f32 0.0, %v586
        %588 = vmatmul.f32.gmra.mxu0 %v452
        %v589 = vpop.f32.mrf.mxu0
        %v590 = vadd.f32 0.0, %v589
        %591 = vmatmul.f32.gmra.mxu0 %v453
        %v592 = vpop.f32.mrf.mxu0
        %v593 = vadd.f32 0.0, %v592
        %594 = vmatmul.f32.gmra.mxu0 %v454
        %v595 = vpop.f32.mrf.mxu0
        %v596 = vadd.f32 0.0, %v595
        %597 = vmatmul.f32.gmra.mxu0 %v455
        %v598 = vpop.f32.mrf.mxu0
        %v599 = vadd.f32 0.0, %v598
        %600 = vmatmul.f32.gmra.mxu0 %v456
        %v601 = vpop.f32.mrf.mxu0
        %v602 = vadd.f32 0.0, %v601
        %603 = vmatmul.f32.gmra.mxu0 %v457
        %v604 = vpop.f32.mrf.mxu0
        %v605 = vadd.f32 0.0, %v604
        %606 = vdwg.mxu0
        %607 = vmatpush.msra.mxu0 %v493
        %608 = vmatpush.msra.mxu0 %v491
        %609 = vmatpush.msra.mxu0 %v489
        %610 = vmatpush.msra.mxu0 %v487
        %611 = vmatpush.msra.mxu0 %v485
        %612 = vmatpush.msra.mxu0 %v483
        %613 = vmatpush.msra.mxu0 %v481
        %614 = vmatpush.msra.mxu0 %v479
        %615 = vmatpush.msra.mxu0 %v477
        %616 = vmatpush.msra.mxu0 %v475
        %617 = vmatpush.msra.mxu0 %v473
        %618 = vmatpush.msra.mxu0 %v471
        %619 = vmatpush.msra.mxu0 %v469
        %620 = vmatpush.msra.mxu0 %v467
        %621 = vmatpush.msra.mxu0 %v465
        %622 = vmatpush.msra.mxu0 %v463
        %623 = vmatmul.f32.gmra.mxu0 %v426
        %v624 = vpop.f32.mrf.mxu0
        %v625 = vadd.f32 0.0, %v624
        %626 = vmatmul.f32.gmra.mxu0 %v427
        %v627 = vpop.f32.mrf.mxu0
        %v628 = vadd.f32 0.0, %v627
        %629 = vmatmul.f32.gmra.mxu0 %v428
        %v630 = vpop.f32.mrf.mxu0
        %v631 = vadd.f32 0.0, %v630
        %632 = vmatmul.f32.gmra.mxu0 %v429
        %v633 = vpop.f32.mrf.mxu0
        %v634 = vadd.f32 0.0, %v633
        %635 = vmatmul.f32.gmra.mxu0 %v430
        %v636 = vpop.f32.mrf.mxu0
        %v637 = vadd.f32 0.0, %v636
        %638 = vmatmul.f32.gmra.mxu0 %v431
        %v639 = vpop.f32.mrf.mxu0
        %v640 = vadd.f32 0.0, %v639
        %641 = vmatmul.f32.gmra.mxu0 %v432
        %v642 = vpop.f32.mrf.mxu0
        %v643 = vadd.f32 0.0, %v642
        %644 = vmatmul.f32.gmra.mxu0 %v433
        %v645 = vpop.f32.mrf.mxu0
        %v646 = vadd.f32 0.0, %v645
        %647 = vmatmul.f32.gmra.mxu0 %v434
        %v648 = vpop.f32.mrf.mxu0
        %v649 = vadd.f32 0.0, %v648
        %650 = vmatmul.f32.gmra.mxu0 %v435
        %v651 = vpop.f32.mrf.mxu0
        %v652 = vadd.f32 0.0, %v651
        %653 = vmatmul.f32.gmra.mxu0 %v436
        %v654 = vpop.f32.mrf.mxu0
        %v655 = vadd.f32 0.0, %v654
        %656 = vmatmul.f32.gmra.mxu0 %v437
        %v657 = vpop.f32.mrf.mxu0
        %v658 = vadd.f32 0.0, %v657
        %659 = vmatmul.f32.gmra.mxu0 %v438
        %v660 = vpop.f32.mrf.mxu0
        %v661 = vadd.f32 0.0, %v660
        %662 = vmatmul.f32.gmra.mxu0 %v439
        %v663 = vpop.f32.mrf.mxu0
        %v664 = vadd.f32 0.0, %v663
        %665 = vmatmul.f32.gmra.mxu0 %v440
        %v666 = vpop.f32.mrf.mxu0
        %v667 = vadd.f32 0.0, %v666
        %668 = vmatmul.f32.gmra.mxu0 %v441
        %v669 = vpop.f32.mrf.mxu0
        %v670 = vadd.f32 0.0, %v669
        %671 = vmatmul.f32.gmra.mxu0 %v442
        %v672 = vpop.f32.mrf.mxu0
        %v673 = vadd.f32 0.0, %v672
        %674 = vmatmul.f32.gmra.mxu0 %v443
        %v675 = vpop.f32.mrf.mxu0
        %v676 = vadd.f32 0.0, %v675
        %677 = vmatmul.f32.gmra.mxu0 %v444
        %v678 = vpop.f32.mrf.mxu0
        %v679 = vadd.f32 0.0, %v678
        %680 = vmatmul.f32.gmra.mxu0 %v445
        %v681 = vpop.f32.mrf.mxu0
        %v682 = vadd.f32 0.0, %v681
        %683 = vmatmul.f32.gmra.mxu0 %v446
        %v684 = vpop.f32.mrf.mxu0
        %v685 = vadd.f32 0.0, %v684
        %686 = vmatmul.f32.gmra.mxu0 %v447
        %v687 = vpop.f32.mrf.mxu0
        %v688 = vadd.f32 0.0, %v687
        %689 = vmatmul.f32.gmra.mxu0 %v448
        %v690 = vpop.f32.mrf.mxu0
        %v691 = vadd.f32 0.0, %v690
        %692 = vmatmul.f32.gmra.mxu0 %v449
        %v693 = vpop.f32.mrf.mxu0
        %v694 = vadd.f32 0.0, %v693
        %695 = vmatmul.f32.gmra.mxu0 %v450
        %v696 = vpop.f32.mrf.mxu0
        %v697 = vadd.f32 0.0, %v696
        %698 = vmatmul.f32.gmra.mxu0 %v451
        %v699 = vpop.f32.mrf.mxu0
        %v700 = vadd.f32 0.0, %v699
        %701 = vmatmul.f32.gmra.mxu0 %v452
        %v702 = vpop.f32.mrf.mxu0
        %v703 = vadd.f32 0.0, %v702
        %704 = vmatmul.f32.gmra.mxu0 %v453
        %v705 = vpop.f32.mrf.mxu0
        %v706 = vadd.f32 0.0, %v705
        %707 = vmatmul.f32.gmra.mxu0 %v454
        %v708 = vpop.f32.mrf.mxu0
        %v709 = vadd.f32 0.0, %v708
        %710 = vmatmul.f32.gmra.mxu0 %v455
        %v711 = vpop.f32.mrf.mxu0
        %v712 = vadd.f32 0.0, %v711
        %713 = vmatmul.f32.gmra.mxu0 %v456
        %v714 = vpop.f32.mrf.mxu0
        %v715 = vadd.f32 0.0, %v714
        %716 = vmatmul.f32.gmra.mxu0 %v457
        %v717 = vpop.f32.mrf.mxu0
        %v718 = vadd.f32 0.0, %v717
        %719 = vdwg.mxu0
        %v720 = vxor.u32 %v512, 2147483648
        %v721 = vxor.u32 %v625, 2147483648
        %v722 = vxor.u32 %v515, 2147483648
        %v723 = vxor.u32 %v628, 2147483648
        %v724 = vxor.u32 %v518, 2147483648
        %v725 = vxor.u32 %v631, 2147483648
        %v726 = vxor.u32 %v521, 2147483648
        %v727 = vxor.u32 %v634, 2147483648
        %v728 = vxor.u32 %v524, 2147483648
        %v729 = vxor.u32 %v637, 2147483648
        %v730 = vxor.u32 %v527, 2147483648
        %v731 = vxor.u32 %v640, 2147483648
        %v732 = vxor.u32 %v530, 2147483648
        %v733 = vxor.u32 %v643, 2147483648
        %v734 = vxor.u32 %v533, 2147483648
        %v735 = vxor.u32 %v646, 2147483648
        %v736 = vxor.u32 %v536, 2147483648
        %v737 = vxor.u32 %v649, 2147483648
        %v738 = vxor.u32 %v539, 2147483648
        %v739 = vxor.u32 %v652, 2147483648
        %v740 = vxor.u32 %v542, 2147483648
        %v741 = vxor.u32 %v655, 2147483648
        %v742 = vxor.u32 %v545, 2147483648
        %v743 = vxor.u32 %v658, 2147483648
        %v744 = vxor.u32 %v548, 2147483648
        %v745 = vxor.u32 %v661, 2147483648
        %v746 = vxor.u32 %v551, 2147483648
        %v747 = vxor.u32 %v664, 2147483648
        %v748 = vxor.u32 %v554, 2147483648
        %v749 = vxor.u32 %v667, 2147483648
        %v750 = vxor.u32 %v557, 2147483648
        %v751 = vxor.u32 %v670, 2147483648
        %v752 = vxor.u32 %v560, 2147483648
        %v753 = vxor.u32 %v673, 2147483648
        %v754 = vxor.u32 %v563, 2147483648
        %v755 = vxor.u32 %v676, 2147483648
        %v756 = vxor.u32 %v566, 2147483648
        %v757 = vxor.u32 %v679, 2147483648
        %v758 = vxor.u32 %v569, 2147483648
        %v759 = vxor.u32 %v682, 2147483648
        %v760 = vxor.u32 %v572, 2147483648
        %v761 = vxor.u32 %v685, 2147483648
        %v762 = vxor.u32 %v575, 2147483648
        %v763 = vxor.u32 %v688, 2147483648
        %v764 = vxor.u32 %v578, 2147483648
        %v765 = vxor.u32 %v691, 2147483648
        %v766 = vxor.u32 %v581, 2147483648
        %v767 = vxor.u32 %v694, 2147483648
        %v768 = vxor.u32 %v584, 2147483648
        %v769 = vxor.u32 %v697, 2147483648
        %v770 = vxor.u32 %v587, 2147483648
        %v771 = vxor.u32 %v700, 2147483648
        %v772 = vxor.u32 %v590, 2147483648
        %v773 = vxor.u32 %v703, 2147483648
        %v774 = vxor.u32 %v593, 2147483648
        %v775 = vxor.u32 %v706, 2147483648
        %v776 = vxor.u32 %v596, 2147483648
        %v777 = vxor.u32 %v709, 2147483648
        %v778 = vxor.u32 %v599, 2147483648
        %v779 = vxor.u32 %v712, 2147483648
        %v780 = vxor.u32 %v602, 2147483648
        %v781 = vxor.u32 %v715, 2147483648
        %v782 = vxor.u32 %v605, 2147483648
        %v783 = vxor.u32 %v718, 2147483648
        %v784 = vmul.f32 %v720, 1.442695
        %v785 = vpow.pop %v784
        %v786 = vmul.f32 %v721, 1.442695
        %v787 = vpow.pop %v786
        %v788 = vmul.f32 %v722, 1.442695
        %v789 = vpow.pop %v788
        %v790 = vmul.f32 %v723, 1.442695
        %v791 = vpow.pop %v790
        %v792 = vmul.f32 %v724, 1.442695
        %v793 = vpow.pop %v792
        %v794 = vmul.f32 %v725, 1.442695
        %v795 = vpow.pop %v794
        %v796 = vmul.f32 %v726, 1.442695
        %v797 = vpow.pop %v796
        %v798 = vmul.f32 %v727, 1.442695
        %v799 = vpow.pop %v798
        %v800 = vmul.f32 %v728, 1.442695
        %v801 = vpow.pop %v800
        %v802 = vmul.f32 %v729, 1.442695
        %v803 = vpow.pop %v802
        %v804 = vmul.f32 %v730, 1.442695
        %v805 = vpow.pop %v804
        %v806 = vmul.f32 %v731, 1.442695
        %v807 = vpow.pop %v806
        %v808 = vmul.f32 %v732, 1.442695
        %v809 = vpow.pop %v808
        %v810 = vmul.f32 %v733, 1.442695
        %v811 = vpow.pop %v810
        %v812 = vmul.f32 %v734, 1.442695
        %v813 = vpow.pop %v812
        %v814 = vmul.f32 %v735, 1.442695
        %v815 = vpow.pop %v814
        %v816 = vmul.f32 %v736, 1.442695
        %v817 = vpow.pop %v816
        %v818 = vmul.f32 %v737, 1.442695
        %v819 = vpow.pop %v818
        %v820 = vmul.f32 %v738, 1.442695
        %v821 = vpow.pop %v820
        %v822 = vmul.f32 %v739, 1.442695
        %v823 = vpow.pop %v822
        %v824 = vmul.f32 %v740, 1.442695
        %v825 = vpow.pop %v824
        %v826 = vmul.f32 %v741, 1.442695
        %v827 = vpow.pop %v826
        %v828 = vmul.f32 %v742, 1.442695
        %v829 = vpow.pop %v828
        %v830 = vmul.f32 %v743, 1.442695
        %v831 = vpow.pop %v830
        %v832 = vmul.f32 %v744, 1.442695
        %v833 = vpow.pop %v832
        %v834 = vmul.f32 %v745, 1.442695
        %v835 = vpow.pop %v834
        %v836 = vmul.f32 %v746, 1.442695
        %v837 = vpow.pop %v836
        %v838 = vmul.f32 %v747, 1.442695
        %v839 = vpow.pop %v838
        %v840 = vmul.f32 %v748, 1.442695
        %v841 = vpow.pop %v840
        %v842 = vmul.f32 %v749, 1.442695
        %v843 = vpow.pop %v842
        %v844 = vmul.f32 %v750, 1.442695
        %v845 = vpow.pop %v844
        %v846 = vmul.f32 %v751, 1.442695
        %v847 = vpow.pop %v846
        %v848 = vmul.f32 %v752, 1.442695
        %v849 = vpow.pop %v848
        %v850 = vmul.f32 %v753, 1.442695
        %v851 = vpow.pop %v850
        %v852 = vmul.f32 %v754, 1.442695
        %v853 = vpow.pop %v852
        %v854 = vmul.f32 %v755, 1.442695
        %v855 = vpow.pop %v854
        %v856 = vmul.f32 %v756, 1.442695
        %v857 = vpow.pop %v856
        %v858 = vmul.f32 %v757, 1.442695
        %v859 = vpow.pop %v858
        %v860 = vmul.f32 %v758, 1.442695
        %v861 = vpow.pop %v860
        %v862 = vmul.f32 %v759, 1.442695
        %v863 = vpow.pop %v862
        %v864 = vmul.f32 %v760, 1.442695
        %v865 = vpow.pop %v864
        %v866 = vmul.f32 %v761, 1.442695
        %v867 = vpow.pop %v866
        %v868 = vmul.f32 %v762, 1.442695
        %v869 = vpow.pop %v868
        %v870 = vmul.f32 %v763, 1.442695
        %v871 = vpow.pop %v870
        %v872 = vmul.f32 %v764, 1.442695
        %v873 = vpow.pop %v872
        %v874 = vmul.f32 %v765, 1.442695
        %v875 = vpow.pop %v874
        %v876 = vmul.f32 %v766, 1.442695
        %v877 = vpow.pop %v876
        %v878 = vmul.f32 %v767, 1.442695
        %v879 = vpow.pop %v878
        %v880 = vmul.f32 %v768, 1.442695
        %v881 = vpow.pop %v880
        %v882 = vmul.f32 %v769, 1.442695
        %v883 = vpow.pop %v882
        %v884 = vmul.f32 %v770, 1.442695
        %v885 = vpow.pop %v884
        %v886 = vmul.f32 %v771, 1.442695
        %v887 = vpow.pop %v886
        %v888 = vmul.f32 %v772, 1.442695
        %v889 = vpow.pop %v888
        %v890 = vmul.f32 %v773, 1.442695
        %v891 = vpow.pop %v890
        %v892 = vmul.f32 %v774, 1.442695
        %v893 = vpow.pop %v892
        %v894 = vmul.f32 %v775, 1.442695
        %v895 = vpow.pop %v894
        %v896 = vmul.f32 %v776, 1.442695
        %v897 = vpow.pop %v896
        %v898 = vmul.f32 %v777, 1.442695
        %v899 = vpow.pop %v898
        %v900 = vmul.f32 %v778, 1.442695
        %v901 = vpow.pop %v900
        %v902 = vmul.f32 %v779, 1.442695
        %v903 = vpow.pop %v902
        %v904 = vmul.f32 %v780, 1.442695
        %v905 = vpow.pop %v904
        %v906 = vmul.f32 %v781, 1.442695
        %v907 = vpow.pop %v906
        %v908 = vmul.f32 %v782, 1.442695
        %v909 = vpow.pop %v908
        %v910 = vmul.f32 %v783, 1.442695
        %v911 = vpow.pop %v910
        %v912 = vadd.f32 %v785, 1.0
        %v913 = vadd.f32 %v787, 1.0
        %v914 = vadd.f32 %v789, 1.0
        %v915 = vadd.f32 %v791, 1.0
        %v916 = vadd.f32 %v793, 1.0
        %v917 = vadd.f32 %v795, 1.0
        %v918 = vadd.f32 %v797, 1.0
        %v919 = vadd.f32 %v799, 1.0
        %v920 = vadd.f32 %v801, 1.0
        %v921 = vadd.f32 %v803, 1.0
        %v922 = vadd.f32 %v805, 1.0
        %v923 = vadd.f32 %v807, 1.0
        %v924 = vadd.f32 %v809, 1.0
        %v925 = vadd.f32 %v811, 1.0
        %v926 = vadd.f32 %v813, 1.0
        %v927 = vadd.f32 %v815, 1.0
        %v928 = vadd.f32 %v817, 1.0
        %v929 = vadd.f32 %v819, 1.0
        %v930 = vadd.f32 %v821, 1.0
        %v931 = vadd.f32 %v823, 1.0
        %v932 = vadd.f32 %v825, 1.0
        %v933 = vadd.f32 %v827, 1.0
        %v934 = vadd.f32 %v829, 1.0
        %v935 = vadd.f32 %v831, 1.0
        %v936 = vadd.f32 %v833, 1.0
        %v937 = vadd.f32 %v835, 1.0
        %v938 = vadd.f32 %v837, 1.0
        %v939 = vadd.f32 %v839, 1.0
        %v940 = vadd.f32 %v841, 1.0
        %v941 = vadd.f32 %v843, 1.0
        %v942 = vadd.f32 %v845, 1.0
        %v943 = vadd.f32 %v847, 1.0
        %v944 = vadd.f32 %v849, 1.0
        %v945 = vadd.f32 %v851, 1.0
        %v946 = vadd.f32 %v853, 1.0
        %v947 = vadd.f32 %v855, 1.0
        %v948 = vadd.f32 %v857, 1.0
        %v949 = vadd.f32 %v859, 1.0
        %v950 = vadd.f32 %v861, 1.0
        %v951 = vadd.f32 %v863, 1.0
        %v952 = vadd.f32 %v865, 1.0
        %v953 = vadd.f32 %v867, 1.0
        %v954 = vadd.f32 %v869, 1.0
        %v955 = vadd.f32 %v871, 1.0
        %v956 = vadd.f32 %v873, 1.0
        %v957 = vadd.f32 %v875, 1.0
        %v958 = vadd.f32 %v877, 1.0
        %v959 = vadd.f32 %v879, 1.0
        %v960 = vadd.f32 %v881, 1.0
        %v961 = vadd.f32 %v883, 1.0
        %v962 = vadd.f32 %v885, 1.0
        %v963 = vadd.f32 %v887, 1.0
        %v964 = vadd.f32 %v889, 1.0
        %v965 = vadd.f32 %v891, 1.0
        %v966 = vadd.f32 %v893, 1.0
        %v967 = vadd.f32 %v895, 1.0
        %v968 = vadd.f32 %v897, 1.0
        %v969 = vadd.f32 %v899, 1.0
        %v970 = vadd.f32 %v901, 1.0
        %v971 = vadd.f32 %v903, 1.0
        %v972 = vadd.f32 %v905, 1.0
        %v973 = vadd.f32 %v907, 1.0
        %v974 = vadd.f32 %v909, 1.0
        %v975 = vadd.f32 %v911, 1.0
        %v976 = vrcp.pop %v912
        %v977 = vmul.f32 %v912, %v976
        %v978 = vsub.f32 1.0, %v977
        %v979 = vmul.f32 %v976, %v978
        %v980 = vadd.f32 %v976, %v979
        %vm981 = vweird.f32 %v912
        %vm982 = vweird.f32 %v976
        %vm983 = vmor %vm981, %vm982
        %v984 = vsel %vm983, %v976, %v980
        %v985 = vand.u32 2147483647, %v912
        %vm986 = vcmp.eq.f32.partialorder %v985, 8.507059e+37
        %v987 = vand.u32 %v912, 2147483648
        %v988 = vor.u32 1.1754944e-38, %v987
        %v989 = vsel %vm986, %v988, %v984
        %v990 = vmul.f32 1.0, %v989
        %v991 = vrcp.pop %v913
        %v992 = vmul.f32 %v913, %v991
        %v993 = vsub.f32 1.0, %v992
        %v994 = vmul.f32 %v991, %v993
        %v995 = vadd.f32 %v991, %v994
        %vm996 = vweird.f32 %v913
        %vm997 = vweird.f32 %v991
        %vm998 = vmor %vm996, %vm997
        %v999 = vsel %vm998, %v991, %v995
        %v1000 = vand.u32 2147483647, %v913
        %vm1001 = vcmp.eq.f32.partialorder %v1000, 8.507059e+37
        %v1002 = vand.u32 %v913, 2147483648
        %v1003 = vor.u32 1.1754944e-38, %v1002
        %v1004 = vsel %vm1001, %v1003, %v999
        %v1005 = vmul.f32 1.0, %v1004
        %v1006 = vrcp.pop %v914
        %v1007 = vmul.f32 %v914, %v1006
        %v1008 = vsub.f32 1.0, %v1007
        %v1009 = vmul.f32 %v1006, %v1008
        %v1010 = vadd.f32 %v1006, %v1009
        %vm1011 = vweird.f32 %v914
        %vm1012 = vweird.f32 %v1006
        %vm1013 = vmor %vm1011, %vm1012
        %v1014 = vsel %vm1013, %v1006, %v1010
        %v1015 = vand.u32 2147483647, %v914
        %vm1016 = vcmp.eq.f32.partialorder %v1015, 8.507059e+37
        %v1017 = vand.u32 %v914, 2147483648
        %v1018 = vor.u32 1.1754944e-38, %v1017
        %v1019 = vsel %vm1016, %v1018, %v1014
        %v1020 = vmul.f32 1.0, %v1019
        %v1021 = vrcp.pop %v915
        %v1022 = vmul.f32 %v915, %v1021
        %v1023 = vsub.f32 1.0, %v1022
        %v1024 = vmul.f32 %v1021, %v1023
        %v1025 = vadd.f32 %v1021, %v1024
        %vm1026 = vweird.f32 %v915
        %vm1027 = vweird.f32 %v1021
        %vm1028 = vmor %vm1026, %vm1027
        %v1029 = vsel %vm1028, %v1021, %v1025
        %v1030 = vand.u32 2147483647, %v915
        %vm1031 = vcmp.eq.f32.partialorder %v1030, 8.507059e+37
        %v1032 = vand.u32 %v915, 2147483648
        %v1033 = vor.u32 1.1754944e-38, %v1032
        %v1034 = vsel %vm1031, %v1033, %v1029
        %v1035 = vmul.f32 1.0, %v1034
        %v1036 = vrcp.pop %v916
        %v1037 = vmul.f32 %v916, %v1036
        %v1038 = vsub.f32 1.0, %v1037
        %v1039 = vmul.f32 %v1036, %v1038
        %v1040 = vadd.f32 %v1036, %v1039
        %vm1041 = vweird.f32 %v916
        %vm1042 = vweird.f32 %v1036
        %vm1043 = vmor %vm1041, %vm1042
        %v1044 = vsel %vm1043, %v1036, %v1040
        %v1045 = vand.u32 2147483647, %v916
        %vm1046 = vcmp.eq.f32.partialorder %v1045, 8.507059e+37
        %v1047 = vand.u32 %v916, 2147483648
        %v1048 = vor.u32 1.1754944e-38, %v1047
        %v1049 = vsel %vm1046, %v1048, %v1044
        %v1050 = vmul.f32 1.0, %v1049
        %v1051 = vrcp.pop %v917
        %v1052 = vmul.f32 %v917, %v1051
        %v1053 = vsub.f32 1.0, %v1052
        %v1054 = vmul.f32 %v1051, %v1053
        %v1055 = vadd.f32 %v1051, %v1054
        %vm1056 = vweird.f32 %v917
        %vm1057 = vweird.f32 %v1051
        %vm1058 = vmor %vm1056, %vm1057
        %v1059 = vsel %vm1058, %v1051, %v1055
        %v1060 = vand.u32 2147483647, %v917
        %vm1061 = vcmp.eq.f32.partialorder %v1060, 8.507059e+37
        %v1062 = vand.u32 %v917, 2147483648
        %v1063 = vor.u32 1.1754944e-38, %v1062
        %v1064 = vsel %vm1061, %v1063, %v1059
        %v1065 = vmul.f32 1.0, %v1064
        %v1066 = vrcp.pop %v918
        %v1067 = vmul.f32 %v918, %v1066
        %v1068 = vsub.f32 1.0, %v1067
        %v1069 = vmul.f32 %v1066, %v1068
        %v1070 = vadd.f32 %v1066, %v1069
        %vm1071 = vweird.f32 %v918
        %vm1072 = vweird.f32 %v1066
        %vm1073 = vmor %vm1071, %vm1072
        %v1074 = vsel %vm1073, %v1066, %v1070
        %v1075 = vand.u32 2147483647, %v918
        %vm1076 = vcmp.eq.f32.partialorder %v1075, 8.507059e+37
        %v1077 = vand.u32 %v918, 2147483648
        %v1078 = vor.u32 1.1754944e-38, %v1077
        %v1079 = vsel %vm1076, %v1078, %v1074
        %v1080 = vmul.f32 1.0, %v1079
        %v1081 = vrcp.pop %v919
        %v1082 = vmul.f32 %v919, %v1081
        %v1083 = vsub.f32 1.0, %v1082
        %v1084 = vmul.f32 %v1081, %v1083
        %v1085 = vadd.f32 %v1081, %v1084
        %vm1086 = vweird.f32 %v919
        %vm1087 = vweird.f32 %v1081
        %vm1088 = vmor %vm1086, %vm1087
        %v1089 = vsel %vm1088, %v1081, %v1085
        %v1090 = vand.u32 2147483647, %v919
        %vm1091 = vcmp.eq.f32.partialorder %v1090, 8.507059e+37
        %v1092 = vand.u32 %v919, 2147483648
        %v1093 = vor.u32 1.1754944e-38, %v1092
        %v1094 = vsel %vm1091, %v1093, %v1089
        %v1095 = vmul.f32 1.0, %v1094
        %v1096 = vrcp.pop %v920
        %v1097 = vmul.f32 %v920, %v1096
        %v1098 = vsub.f32 1.0, %v1097
        %v1099 = vmul.f32 %v1096, %v1098
        %v1100 = vadd.f32 %v1096, %v1099
        %vm1101 = vweird.f32 %v920
        %vm1102 = vweird.f32 %v1096
        %vm1103 = vmor %vm1101, %vm1102
        %v1104 = vsel %vm1103, %v1096, %v1100
        %v1105 = vand.u32 2147483647, %v920
        %vm1106 = vcmp.eq.f32.partialorder %v1105, 8.507059e+37
        %v1107 = vand.u32 %v920, 2147483648
        %v1108 = vor.u32 1.1754944e-38, %v1107
        %v1109 = vsel %vm1106, %v1108, %v1104
        %v1110 = vmul.f32 1.0, %v1109
        %v1111 = vrcp.pop %v921
        %v1112 = vmul.f32 %v921, %v1111
        %v1113 = vsub.f32 1.0, %v1112
        %v1114 = vmul.f32 %v1111, %v1113
        %v1115 = vadd.f32 %v1111, %v1114
        %vm1116 = vweird.f32 %v921
        %vm1117 = vweird.f32 %v1111
        %vm1118 = vmor %vm1116, %vm1117
        %v1119 = vsel %vm1118, %v1111, %v1115
        %v1120 = vand.u32 2147483647, %v921
        %vm1121 = vcmp.eq.f32.partialorder %v1120, 8.507059e+37
        %v1122 = vand.u32 %v921, 2147483648
        %v1123 = vor.u32 1.1754944e-38, %v1122
        %v1124 = vsel %vm1121, %v1123, %v1119
        %v1125 = vmul.f32 1.0, %v1124
        %v1126 = vrcp.pop %v922
        %v1127 = vmul.f32 %v922, %v1126
        %v1128 = vsub.f32 1.0, %v1127
        %v1129 = vmul.f32 %v1126, %v1128
        %v1130 = vadd.f32 %v1126, %v1129
        %vm1131 = vweird.f32 %v922
        %vm1132 = vweird.f32 %v1126
        %vm1133 = vmor %vm1131, %vm1132
        %v1134 = vsel %vm1133, %v1126, %v1130
        %v1135 = vand.u32 2147483647, %v922
        %vm1136 = vcmp.eq.f32.partialorder %v1135, 8.507059e+37
        %v1137 = vand.u32 %v922, 2147483648
        %v1138 = vor.u32 1.1754944e-38, %v1137
        %v1139 = vsel %vm1136, %v1138, %v1134
        %v1140 = vmul.f32 1.0, %v1139
        %v1141 = vrcp.pop %v923
        %v1142 = vmul.f32 %v923, %v1141
        %v1143 = vsub.f32 1.0, %v1142
        %v1144 = vmul.f32 %v1141, %v1143
        %v1145 = vadd.f32 %v1141, %v1144
        %vm1146 = vweird.f32 %v923
        %vm1147 = vweird.f32 %v1141
        %vm1148 = vmor %vm1146, %vm1147
        %v1149 = vsel %vm1148, %v1141, %v1145
        %v1150 = vand.u32 2147483647, %v923
        %vm1151 = vcmp.eq.f32.partialorder %v1150, 8.507059e+37
        %v1152 = vand.u32 %v923, 2147483648
        %v1153 = vor.u32 1.1754944e-38, %v1152
        %v1154 = vsel %vm1151, %v1153, %v1149
        %v1155 = vmul.f32 1.0, %v1154
        %v1156 = vrcp.pop %v924
        %v1157 = vmul.f32 %v924, %v1156
        %v1158 = vsub.f32 1.0, %v1157
        %v1159 = vmul.f32 %v1156, %v1158
        %v1160 = vadd.f32 %v1156, %v1159
        %vm1161 = vweird.f32 %v924
        %vm1162 = vweird.f32 %v1156
        %vm1163 = vmor %vm1161, %vm1162
        %v1164 = vsel %vm1163, %v1156, %v1160
        %v1165 = vand.u32 2147483647, %v924
        %vm1166 = vcmp.eq.f32.partialorder %v1165, 8.507059e+37
        %v1167 = vand.u32 %v924, 2147483648
        %v1168 = vor.u32 1.1754944e-38, %v1167
        %v1169 = vsel %vm1166, %v1168, %v1164
        %v1170 = vmul.f32 1.0, %v1169
        %v1171 = vrcp.pop %v925
        %v1172 = vmul.f32 %v925, %v1171
        %v1173 = vsub.f32 1.0, %v1172
        %v1174 = vmul.f32 %v1171, %v1173
        %v1175 = vadd.f32 %v1171, %v1174
        %vm1176 = vweird.f32 %v925
        %vm1177 = vweird.f32 %v1171
        %vm1178 = vmor %vm1176, %vm1177
        %v1179 = vsel %vm1178, %v1171, %v1175
        %v1180 = vand.u32 2147483647, %v925
        %vm1181 = vcmp.eq.f32.partialorder %v1180, 8.507059e+37
        %v1182 = vand.u32 %v925, 2147483648
        %v1183 = vor.u32 1.1754944e-38, %v1182
        %v1184 = vsel %vm1181, %v1183, %v1179
        %v1185 = vmul.f32 1.0, %v1184
        %v1186 = vrcp.pop %v926
        %v1187 = vmul.f32 %v926, %v1186
        %v1188 = vsub.f32 1.0, %v1187
        %v1189 = vmul.f32 %v1186, %v1188
        %v1190 = vadd.f32 %v1186, %v1189
        %vm1191 = vweird.f32 %v926
        %vm1192 = vweird.f32 %v1186
        %vm1193 = vmor %vm1191, %vm1192
        %v1194 = vsel %vm1193, %v1186, %v1190
        %v1195 = vand.u32 2147483647, %v926
        %vm1196 = vcmp.eq.f32.partialorder %v1195, 8.507059e+37
        %v1197 = vand.u32 %v926, 2147483648
        %v1198 = vor.u32 1.1754944e-38, %v1197
        %v1199 = vsel %vm1196, %v1198, %v1194
        %v1200 = vmul.f32 1.0, %v1199
        %v1201 = vrcp.pop %v927
        %v1202 = vmul.f32 %v927, %v1201
        %v1203 = vsub.f32 1.0, %v1202
        %v1204 = vmul.f32 %v1201, %v1203
        %v1205 = vadd.f32 %v1201, %v1204
        %vm1206 = vweird.f32 %v927
        %vm1207 = vweird.f32 %v1201
        %vm1208 = vmor %vm1206, %vm1207
        %v1209 = vsel %vm1208, %v1201, %v1205
        %v1210 = vand.u32 2147483647, %v927
        %vm1211 = vcmp.eq.f32.partialorder %v1210, 8.507059e+37
        %v1212 = vand.u32 %v927, 2147483648
        %v1213 = vor.u32 1.1754944e-38, %v1212
        %v1214 = vsel %vm1211, %v1213, %v1209
        %v1215 = vmul.f32 1.0, %v1214
        %v1216 = vrcp.pop %v928
        %v1217 = vmul.f32 %v928, %v1216
        %v1218 = vsub.f32 1.0, %v1217
        %v1219 = vmul.f32 %v1216, %v1218
        %v1220 = vadd.f32 %v1216, %v1219
        %vm1221 = vweird.f32 %v928
        %vm1222 = vweird.f32 %v1216
        %vm1223 = vmor %vm1221, %vm1222
        %v1224 = vsel %vm1223, %v1216, %v1220
        %v1225 = vand.u32 2147483647, %v928
        %vm1226 = vcmp.eq.f32.partialorder %v1225, 8.507059e+37
        %v1227 = vand.u32 %v928, 2147483648
        %v1228 = vor.u32 1.1754944e-38, %v1227
        %v1229 = vsel %vm1226, %v1228, %v1224
        %v1230 = vmul.f32 1.0, %v1229
        %v1231 = vrcp.pop %v929
        %v1232 = vmul.f32 %v929, %v1231
        %v1233 = vsub.f32 1.0, %v1232
        %v1234 = vmul.f32 %v1231, %v1233
        %v1235 = vadd.f32 %v1231, %v1234
        %vm1236 = vweird.f32 %v929
        %vm1237 = vweird.f32 %v1231
        %vm1238 = vmor %vm1236, %vm1237
        %v1239 = vsel %vm1238, %v1231, %v1235
        %v1240 = vand.u32 2147483647, %v929
        %vm1241 = vcmp.eq.f32.partialorder %v1240, 8.507059e+37
        %v1242 = vand.u32 %v929, 2147483648
        %v1243 = vor.u32 1.1754944e-38, %v1242
        %v1244 = vsel %vm1241, %v1243, %v1239
        %v1245 = vmul.f32 1.0, %v1244
        %v1246 = vrcp.pop %v930
        %v1247 = vmul.f32 %v930, %v1246
        %v1248 = vsub.f32 1.0, %v1247
        %v1249 = vmul.f32 %v1246, %v1248
        %v1250 = vadd.f32 %v1246, %v1249
        %vm1251 = vweird.f32 %v930
        %vm1252 = vweird.f32 %v1246
        %vm1253 = vmor %vm1251, %vm1252
        %v1254 = vsel %vm1253, %v1246, %v1250
        %v1255 = vand.u32 2147483647, %v930
        %vm1256 = vcmp.eq.f32.partialorder %v1255, 8.507059e+37
        %v1257 = vand.u32 %v930, 2147483648
        %v1258 = vor.u32 1.1754944e-38, %v1257
        %v1259 = vsel %vm1256, %v1258, %v1254
        %v1260 = vmul.f32 1.0, %v1259
        %v1261 = vrcp.pop %v931
        %v1262 = vmul.f32 %v931, %v1261
        %v1263 = vsub.f32 1.0, %v1262
        %v1264 = vmul.f32 %v1261, %v1263
        %v1265 = vadd.f32 %v1261, %v1264
        %vm1266 = vweird.f32 %v931
        %vm1267 = vweird.f32 %v1261
        %vm1268 = vmor %vm1266, %vm1267
        %v1269 = vsel %vm1268, %v1261, %v1265
        %v1270 = vand.u32 2147483647, %v931
        %vm1271 = vcmp.eq.f32.partialorder %v1270, 8.507059e+37
        %v1272 = vand.u32 %v931, 2147483648
        %v1273 = vor.u32 1.1754944e-38, %v1272
        %v1274 = vsel %vm1271, %v1273, %v1269
        %v1275 = vmul.f32 1.0, %v1274
        %v1276 = vrcp.pop %v932
        %v1277 = vmul.f32 %v932, %v1276
        %v1278 = vsub.f32 1.0, %v1277
        %v1279 = vmul.f32 %v1276, %v1278
        %v1280 = vadd.f32 %v1276, %v1279
        %vm1281 = vweird.f32 %v932
        %vm1282 = vweird.f32 %v1276
        %vm1283 = vmor %vm1281, %vm1282
        %v1284 = vsel %vm1283, %v1276, %v1280
        %v1285 = vand.u32 2147483647, %v932
        %vm1286 = vcmp.eq.f32.partialorder %v1285, 8.507059e+37
        %v1287 = vand.u32 %v932, 2147483648
        %v1288 = vor.u32 1.1754944e-38, %v1287
        %v1289 = vsel %vm1286, %v1288, %v1284
        %v1290 = vmul.f32 1.0, %v1289
        %v1291 = vrcp.pop %v933
        %v1292 = vmul.f32 %v933, %v1291
        %v1293 = vsub.f32 1.0, %v1292
        %v1294 = vmul.f32 %v1291, %v1293
        %v1295 = vadd.f32 %v1291, %v1294
        %vm1296 = vweird.f32 %v933
        %vm1297 = vweird.f32 %v1291
        %vm1298 = vmor %vm1296, %vm1297
        %v1299 = vsel %vm1298, %v1291, %v1295
        %v1300 = vand.u32 2147483647, %v933
        %vm1301 = vcmp.eq.f32.partialorder %v1300, 8.507059e+37
        %v1302 = vand.u32 %v933, 2147483648
        %v1303 = vor.u32 1.1754944e-38, %v1302
        %v1304 = vsel %vm1301, %v1303, %v1299
        %v1305 = vmul.f32 1.0, %v1304
        %v1306 = vrcp.pop %v934
        %v1307 = vmul.f32 %v934, %v1306
        %v1308 = vsub.f32 1.0, %v1307
        %v1309 = vmul.f32 %v1306, %v1308
        %v1310 = vadd.f32 %v1306, %v1309
        %vm1311 = vweird.f32 %v934
        %vm1312 = vweird.f32 %v1306
        %vm1313 = vmor %vm1311, %vm1312
        %v1314 = vsel %vm1313, %v1306, %v1310
        %v1315 = vand.u32 2147483647, %v934
        %vm1316 = vcmp.eq.f32.partialorder %v1315, 8.507059e+37
        %v1317 = vand.u32 %v934, 2147483648
        %v1318 = vor.u32 1.1754944e-38, %v1317
        %v1319 = vsel %vm1316, %v1318, %v1314
        %v1320 = vmul.f32 1.0, %v1319
        %v1321 = vrcp.pop %v935
        %v1322 = vmul.f32 %v935, %v1321
        %v1323 = vsub.f32 1.0, %v1322
        %v1324 = vmul.f32 %v1321, %v1323
        %v1325 = vadd.f32 %v1321, %v1324
        %vm1326 = vweird.f32 %v935
        %vm1327 = vweird.f32 %v1321
        %vm1328 = vmor %vm1326, %vm1327
        %v1329 = vsel %vm1328, %v1321, %v1325
        %v1330 = vand.u32 2147483647, %v935
        %vm1331 = vcmp.eq.f32.partialorder %v1330, 8.507059e+37
        %v1332 = vand.u32 %v935, 2147483648
        %v1333 = vor.u32 1.1754944e-38, %v1332
        %v1334 = vsel %vm1331, %v1333, %v1329
        %v1335 = vmul.f32 1.0, %v1334
        %v1336 = vrcp.pop %v936
        %v1337 = vmul.f32 %v936, %v1336
        %v1338 = vsub.f32 1.0, %v1337
        %v1339 = vmul.f32 %v1336, %v1338
        %v1340 = vadd.f32 %v1336, %v1339
        %vm1341 = vweird.f32 %v936
        %vm1342 = vweird.f32 %v1336
        %vm1343 = vmor %vm1341, %vm1342
        %v1344 = vsel %vm1343, %v1336, %v1340
        %v1345 = vand.u32 2147483647, %v936
        %vm1346 = vcmp.eq.f32.partialorder %v1345, 8.507059e+37
        %v1347 = vand.u32 %v936, 2147483648
        %v1348 = vor.u32 1.1754944e-38, %v1347
        %v1349 = vsel %vm1346, %v1348, %v1344
        %v1350 = vmul.f32 1.0, %v1349
        %v1351 = vrcp.pop %v937
        %v1352 = vmul.f32 %v937, %v1351
        %v1353 = vsub.f32 1.0, %v1352
        %v1354 = vmul.f32 %v1351, %v1353
        %v1355 = vadd.f32 %v1351, %v1354
        %vm1356 = vweird.f32 %v937
        %vm1357 = vweird.f32 %v1351
        %vm1358 = vmor %vm1356, %vm1357
        %v1359 = vsel %vm1358, %v1351, %v1355
        %v1360 = vand.u32 2147483647, %v937
        %vm1361 = vcmp.eq.f32.partialorder %v1360, 8.507059e+37
        %v1362 = vand.u32 %v937, 2147483648
        %v1363 = vor.u32 1.1754944e-38, %v1362
        %v1364 = vsel %vm1361, %v1363, %v1359
        %v1365 = vmul.f32 1.0, %v1364
        %v1366 = vrcp.pop %v938
        %v1367 = vmul.f32 %v938, %v1366
        %v1368 = vsub.f32 1.0, %v1367
        %v1369 = vmul.f32 %v1366, %v1368
        %v1370 = vadd.f32 %v1366, %v1369
        %vm1371 = vweird.f32 %v938
        %vm1372 = vweird.f32 %v1366
        %vm1373 = vmor %vm1371, %vm1372
        %v1374 = vsel %vm1373, %v1366, %v1370
        %v1375 = vand.u32 2147483647, %v938
        %vm1376 = vcmp.eq.f32.partialorder %v1375, 8.507059e+37
        %v1377 = vand.u32 %v938, 2147483648
        %v1378 = vor.u32 1.1754944e-38, %v1377
        %v1379 = vsel %vm1376, %v1378, %v1374
        %v1380 = vmul.f32 1.0, %v1379
        %v1381 = vrcp.pop %v939
        %v1382 = vmul.f32 %v939, %v1381
        %v1383 = vsub.f32 1.0, %v1382
        %v1384 = vmul.f32 %v1381, %v1383
        %v1385 = vadd.f32 %v1381, %v1384
        %vm1386 = vweird.f32 %v939
        %vm1387 = vweird.f32 %v1381
        %vm1388 = vmor %vm1386, %vm1387
        %v1389 = vsel %vm1388, %v1381, %v1385
        %v1390 = vand.u32 2147483647, %v939
        %vm1391 = vcmp.eq.f32.partialorder %v1390, 8.507059e+37
        %v1392 = vand.u32 %v939, 2147483648
        %v1393 = vor.u32 1.1754944e-38, %v1392
        %v1394 = vsel %vm1391, %v1393, %v1389
        %v1395 = vmul.f32 1.0, %v1394
        %v1396 = vrcp.pop %v940
        %v1397 = vmul.f32 %v940, %v1396
        %v1398 = vsub.f32 1.0, %v1397
        %v1399 = vmul.f32 %v1396, %v1398
        %v1400 = vadd.f32 %v1396, %v1399
        %vm1401 = vweird.f32 %v940
        %vm1402 = vweird.f32 %v1396
        %vm1403 = vmor %vm1401, %vm1402
        %v1404 = vsel %vm1403, %v1396, %v1400
        %v1405 = vand.u32 2147483647, %v940
        %vm1406 = vcmp.eq.f32.partialorder %v1405, 8.507059e+37
        %v1407 = vand.u32 %v940, 2147483648
        %v1408 = vor.u32 1.1754944e-38, %v1407
        %v1409 = vsel %vm1406, %v1408, %v1404
        %v1410 = vmul.f32 1.0, %v1409
        %v1411 = vrcp.pop %v941
        %v1412 = vmul.f32 %v941, %v1411
        %v1413 = vsub.f32 1.0, %v1412
        %v1414 = vmul.f32 %v1411, %v1413
        %v1415 = vadd.f32 %v1411, %v1414
        %vm1416 = vweird.f32 %v941
        %vm1417 = vweird.f32 %v1411
        %vm1418 = vmor %vm1416, %vm1417
        %v1419 = vsel %vm1418, %v1411, %v1415
        %v1420 = vand.u32 2147483647, %v941
        %vm1421 = vcmp.eq.f32.partialorder %v1420, 8.507059e+37
        %v1422 = vand.u32 %v941, 2147483648
        %v1423 = vor.u32 1.1754944e-38, %v1422
        %v1424 = vsel %vm1421, %v1423, %v1419
        %v1425 = vmul.f32 1.0, %v1424
        %v1426 = vrcp.pop %v942
        %v1427 = vmul.f32 %v942, %v1426
        %v1428 = vsub.f32 1.0, %v1427
        %v1429 = vmul.f32 %v1426, %v1428
        %v1430 = vadd.f32 %v1426, %v1429
        %vm1431 = vweird.f32 %v942
        %vm1432 = vweird.f32 %v1426
        %vm1433 = vmor %vm1431, %vm1432
        %v1434 = vsel %vm1433, %v1426, %v1430
        %v1435 = vand.u32 2147483647, %v942
        %vm1436 = vcmp.eq.f32.partialorder %v1435, 8.507059e+37
        %v1437 = vand.u32 %v942, 2147483648
        %v1438 = vor.u32 1.1754944e-38, %v1437
        %v1439 = vsel %vm1436, %v1438, %v1434
        %v1440 = vmul.f32 1.0, %v1439
        %v1441 = vrcp.pop %v943
        %v1442 = vmul.f32 %v943, %v1441
        %v1443 = vsub.f32 1.0, %v1442
        %v1444 = vmul.f32 %v1441, %v1443
        %v1445 = vadd.f32 %v1441, %v1444
        %vm1446 = vweird.f32 %v943
        %vm1447 = vweird.f32 %v1441
        %vm1448 = vmor %vm1446, %vm1447
        %v1449 = vsel %vm1448, %v1441, %v1445
        %v1450 = vand.u32 2147483647, %v943
        %vm1451 = vcmp.eq.f32.partialorder %v1450, 8.507059e+37
        %v1452 = vand.u32 %v943, 2147483648
        %v1453 = vor.u32 1.1754944e-38, %v1452
        %v1454 = vsel %vm1451, %v1453, %v1449
        %v1455 = vmul.f32 1.0, %v1454
        %v1456 = vrcp.pop %v944
        %v1457 = vmul.f32 %v944, %v1456
        %v1458 = vsub.f32 1.0, %v1457
        %v1459 = vmul.f32 %v1456, %v1458
        %v1460 = vadd.f32 %v1456, %v1459
        %vm1461 = vweird.f32 %v944
        %vm1462 = vweird.f32 %v1456
        %vm1463 = vmor %vm1461, %vm1462
        %v1464 = vsel %vm1463, %v1456, %v1460
        %v1465 = vand.u32 2147483647, %v944
        %vm1466 = vcmp.eq.f32.partialorder %v1465, 8.507059e+37
        %v1467 = vand.u32 %v944, 2147483648
        %v1468 = vor.u32 1.1754944e-38, %v1467
        %v1469 = vsel %vm1466, %v1468, %v1464
        %v1470 = vmul.f32 1.0, %v1469
        %v1471 = vrcp.pop %v945
        %v1472 = vmul.f32 %v945, %v1471
        %v1473 = vsub.f32 1.0, %v1472
        %v1474 = vmul.f32 %v1471, %v1473
        %v1475 = vadd.f32 %v1471, %v1474
        %vm1476 = vweird.f32 %v945
        %vm1477 = vweird.f32 %v1471
        %vm1478 = vmor %vm1476, %vm1477
        %v1479 = vsel %vm1478, %v1471, %v1475
        %v1480 = vand.u32 2147483647, %v945
        %vm1481 = vcmp.eq.f32.partialorder %v1480, 8.507059e+37
        %v1482 = vand.u32 %v945, 2147483648
        %v1483 = vor.u32 1.1754944e-38, %v1482
        %v1484 = vsel %vm1481, %v1483, %v1479
        %v1485 = vmul.f32 1.0, %v1484
        %v1486 = vrcp.pop %v946
        %v1487 = vmul.f32 %v946, %v1486
        %v1488 = vsub.f32 1.0, %v1487
        %v1489 = vmul.f32 %v1486, %v1488
        %v1490 = vadd.f32 %v1486, %v1489
        %vm1491 = vweird.f32 %v946
        %vm1492 = vweird.f32 %v1486
        %vm1493 = vmor %vm1491, %vm1492
        %v1494 = vsel %vm1493, %v1486, %v1490
        %v1495 = vand.u32 2147483647, %v946
        %vm1496 = vcmp.eq.f32.partialorder %v1495, 8.507059e+37
        %v1497 = vand.u32 %v946, 2147483648
        %v1498 = vor.u32 1.1754944e-38, %v1497
        %v1499 = vsel %vm1496, %v1498, %v1494
        %v1500 = vmul.f32 1.0, %v1499
        %v1501 = vrcp.pop %v947
        %v1502 = vmul.f32 %v947, %v1501
        %v1503 = vsub.f32 1.0, %v1502
        %v1504 = vmul.f32 %v1501, %v1503
        %v1505 = vadd.f32 %v1501, %v1504
        %vm1506 = vweird.f32 %v947
        %vm1507 = vweird.f32 %v1501
        %vm1508 = vmor %vm1506, %vm1507
        %v1509 = vsel %vm1508, %v1501, %v1505
        %v1510 = vand.u32 2147483647, %v947
        %vm1511 = vcmp.eq.f32.partialorder %v1510, 8.507059e+37
        %v1512 = vand.u32 %v947, 2147483648
        %v1513 = vor.u32 1.1754944e-38, %v1512
        %v1514 = vsel %vm1511, %v1513, %v1509
        %v1515 = vmul.f32 1.0, %v1514
        %v1516 = vrcp.pop %v948
        %v1517 = vmul.f32 %v948, %v1516
        %v1518 = vsub.f32 1.0, %v1517
        %v1519 = vmul.f32 %v1516, %v1518
        %v1520 = vadd.f32 %v1516, %v1519
        %vm1521 = vweird.f32 %v948
        %vm1522 = vweird.f32 %v1516
        %vm1523 = vmor %vm1521, %vm1522
        %v1524 = vsel %vm1523, %v1516, %v1520
        %v1525 = vand.u32 2147483647, %v948
        %vm1526 = vcmp.eq.f32.partialorder %v1525, 8.507059e+37
        %v1527 = vand.u32 %v948, 2147483648
        %v1528 = vor.u32 1.1754944e-38, %v1527
        %v1529 = vsel %vm1526, %v1528, %v1524
        %v1530 = vmul.f32 1.0, %v1529
        %v1531 = vrcp.pop %v949
        %v1532 = vmul.f32 %v949, %v1531
        %v1533 = vsub.f32 1.0, %v1532
        %v1534 = vmul.f32 %v1531, %v1533
        %v1535 = vadd.f32 %v1531, %v1534
        %vm1536 = vweird.f32 %v949
        %vm1537 = vweird.f32 %v1531
        %vm1538 = vmor %vm1536, %vm1537
        %v1539 = vsel %vm1538, %v1531, %v1535
        %v1540 = vand.u32 2147483647, %v949
        %vm1541 = vcmp.eq.f32.partialorder %v1540, 8.507059e+37
        %v1542 = vand.u32 %v949, 2147483648
        %v1543 = vor.u32 1.1754944e-38, %v1542
        %v1544 = vsel %vm1541, %v1543, %v1539
        %v1545 = vmul.f32 1.0, %v1544
        %v1546 = vrcp.pop %v950
        %v1547 = vmul.f32 %v950, %v1546
        %v1548 = vsub.f32 1.0, %v1547
        %v1549 = vmul.f32 %v1546, %v1548
        %v1550 = vadd.f32 %v1546, %v1549
        %vm1551 = vweird.f32 %v950
        %vm1552 = vweird.f32 %v1546
        %vm1553 = vmor %vm1551, %vm1552
        %v1554 = vsel %vm1553, %v1546, %v1550
        %v1555 = vand.u32 2147483647, %v950
        %vm1556 = vcmp.eq.f32.partialorder %v1555, 8.507059e+37
        %v1557 = vand.u32 %v950, 2147483648
        %v1558 = vor.u32 1.1754944e-38, %v1557
        %v1559 = vsel %vm1556, %v1558, %v1554
        %v1560 = vmul.f32 1.0, %v1559
        %v1561 = vrcp.pop %v951
        %v1562 = vmul.f32 %v951, %v1561
        %v1563 = vsub.f32 1.0, %v1562
        %v1564 = vmul.f32 %v1561, %v1563
        %v1565 = vadd.f32 %v1561, %v1564
        %vm1566 = vweird.f32 %v951
        %vm1567 = vweird.f32 %v1561
        %vm1568 = vmor %vm1566, %vm1567
        %v1569 = vsel %vm1568, %v1561, %v1565
        %v1570 = vand.u32 2147483647, %v951
        %vm1571 = vcmp.eq.f32.partialorder %v1570, 8.507059e+37
        %v1572 = vand.u32 %v951, 2147483648
        %v1573 = vor.u32 1.1754944e-38, %v1572
        %v1574 = vsel %vm1571, %v1573, %v1569
        %v1575 = vmul.f32 1.0, %v1574
        %v1576 = vrcp.pop %v952
        %v1577 = vmul.f32 %v952, %v1576
        %v1578 = vsub.f32 1.0, %v1577
        %v1579 = vmul.f32 %v1576, %v1578
        %v1580 = vadd.f32 %v1576, %v1579
        %vm1581 = vweird.f32 %v952
        %vm1582 = vweird.f32 %v1576
        %vm1583 = vmor %vm1581, %vm1582
        %v1584 = vsel %vm1583, %v1576, %v1580
        %v1585 = vand.u32 2147483647, %v952
        %vm1586 = vcmp.eq.f32.partialorder %v1585, 8.507059e+37
        %v1587 = vand.u32 %v952, 2147483648
        %v1588 = vor.u32 1.1754944e-38, %v1587
        %v1589 = vsel %vm1586, %v1588, %v1584
        %v1590 = vmul.f32 1.0, %v1589
        %v1591 = vrcp.pop %v953
        %v1592 = vmul.f32 %v953, %v1591
        %v1593 = vsub.f32 1.0, %v1592
        %v1594 = vmul.f32 %v1591, %v1593
        %v1595 = vadd.f32 %v1591, %v1594
        %vm1596 = vweird.f32 %v953
        %vm1597 = vweird.f32 %v1591
        %vm1598 = vmor %vm1596, %vm1597
        %v1599 = vsel %vm1598, %v1591, %v1595
        %v1600 = vand.u32 2147483647, %v953
        %vm1601 = vcmp.eq.f32.partialorder %v1600, 8.507059e+37
        %v1602 = vand.u32 %v953, 2147483648
        %v1603 = vor.u32 1.1754944e-38, %v1602
        %v1604 = vsel %vm1601, %v1603, %v1599
        %v1605 = vmul.f32 1.0, %v1604
        %v1606 = vrcp.pop %v954
        %v1607 = vmul.f32 %v954, %v1606
        %v1608 = vsub.f32 1.0, %v1607
        %v1609 = vmul.f32 %v1606, %v1608
        %v1610 = vadd.f32 %v1606, %v1609
        %vm1611 = vweird.f32 %v954
        %vm1612 = vweird.f32 %v1606
        %vm1613 = vmor %vm1611, %vm1612
        %v1614 = vsel %vm1613, %v1606, %v1610
        %v1615 = vand.u32 2147483647, %v954
        %vm1616 = vcmp.eq.f32.partialorder %v1615, 8.507059e+37
        %v1617 = vand.u32 %v954, 2147483648
        %v1618 = vor.u32 1.1754944e-38, %v1617
        %v1619 = vsel %vm1616, %v1618, %v1614
        %v1620 = vmul.f32 1.0, %v1619
        %v1621 = vrcp.pop %v955
        %v1622 = vmul.f32 %v955, %v1621
        %v1623 = vsub.f32 1.0, %v1622
        %v1624 = vmul.f32 %v1621, %v1623
        %v1625 = vadd.f32 %v1621, %v1624
        %vm1626 = vweird.f32 %v955
        %vm1627 = vweird.f32 %v1621
        %vm1628 = vmor %vm1626, %vm1627
        %v1629 = vsel %vm1628, %v1621, %v1625
        %v1630 = vand.u32 2147483647, %v955
        %vm1631 = vcmp.eq.f32.partialorder %v1630, 8.507059e+37
        %v1632 = vand.u32 %v955, 2147483648
        %v1633 = vor.u32 1.1754944e-38, %v1632
        %v1634 = vsel %vm1631, %v1633, %v1629
        %v1635 = vmul.f32 1.0, %v1634
        %v1636 = vrcp.pop %v956
        %v1637 = vmul.f32 %v956, %v1636
        %v1638 = vsub.f32 1.0, %v1637
        %v1639 = vmul.f32 %v1636, %v1638
        %v1640 = vadd.f32 %v1636, %v1639
        %vm1641 = vweird.f32 %v956
        %vm1642 = vweird.f32 %v1636
        %vm1643 = vmor %vm1641, %vm1642
        %v1644 = vsel %vm1643, %v1636, %v1640
        %v1645 = vand.u32 2147483647, %v956
        %vm1646 = vcmp.eq.f32.partialorder %v1645, 8.507059e+37
        %v1647 = vand.u32 %v956, 2147483648
        %v1648 = vor.u32 1.1754944e-38, %v1647
        %v1649 = vsel %vm1646, %v1648, %v1644
        %v1650 = vmul.f32 1.0, %v1649
        %v1651 = vrcp.pop %v957
        %v1652 = vmul.f32 %v957, %v1651
        %v1653 = vsub.f32 1.0, %v1652
        %v1654 = vmul.f32 %v1651, %v1653
        %v1655 = vadd.f32 %v1651, %v1654
        %vm1656 = vweird.f32 %v957
        %vm1657 = vweird.f32 %v1651
        %vm1658 = vmor %vm1656, %vm1657
        %v1659 = vsel %vm1658, %v1651, %v1655
        %v1660 = vand.u32 2147483647, %v957
        %vm1661 = vcmp.eq.f32.partialorder %v1660, 8.507059e+37
        %v1662 = vand.u32 %v957, 2147483648
        %v1663 = vor.u32 1.1754944e-38, %v1662
        %v1664 = vsel %vm1661, %v1663, %v1659
        %v1665 = vmul.f32 1.0, %v1664
        %v1666 = vrcp.pop %v958
        %v1667 = vmul.f32 %v958, %v1666
        %v1668 = vsub.f32 1.0, %v1667
        %v1669 = vmul.f32 %v1666, %v1668
        %v1670 = vadd.f32 %v1666, %v1669
        %vm1671 = vweird.f32 %v958
        %vm1672 = vweird.f32 %v1666
        %vm1673 = vmor %vm1671, %vm1672
        %v1674 = vsel %vm1673, %v1666, %v1670
        %v1675 = vand.u32 2147483647, %v958
        %vm1676 = vcmp.eq.f32.partialorder %v1675, 8.507059e+37
        %v1677 = vand.u32 %v958, 2147483648
        %v1678 = vor.u32 1.1754944e-38, %v1677
        %v1679 = vsel %vm1676, %v1678, %v1674
        %v1680 = vmul.f32 1.0, %v1679
        %v1681 = vrcp.pop %v959
        %v1682 = vmul.f32 %v959, %v1681
        %v1683 = vsub.f32 1.0, %v1682
        %v1684 = vmul.f32 %v1681, %v1683
        %v1685 = vadd.f32 %v1681, %v1684
        %vm1686 = vweird.f32 %v959
        %vm1687 = vweird.f32 %v1681
        %vm1688 = vmor %vm1686, %vm1687
        %v1689 = vsel %vm1688, %v1681, %v1685
        %v1690 = vand.u32 2147483647, %v959
        %vm1691 = vcmp.eq.f32.partialorder %v1690, 8.507059e+37
        %v1692 = vand.u32 %v959, 2147483648
        %v1693 = vor.u32 1.1754944e-38, %v1692
        %v1694 = vsel %vm1691, %v1693, %v1689
        %v1695 = vmul.f32 1.0, %v1694
        %v1696 = vrcp.pop %v960
        %v1697 = vmul.f32 %v960, %v1696
        %v1698 = vsub.f32 1.0, %v1697
        %v1699 = vmul.f32 %v1696, %v1698
        %v1700 = vadd.f32 %v1696, %v1699
        %vm1701 = vweird.f32 %v960
        %vm1702 = vweird.f32 %v1696
        %vm1703 = vmor %vm1701, %vm1702
        %v1704 = vsel %vm1703, %v1696, %v1700
        %v1705 = vand.u32 2147483647, %v960
        %vm1706 = vcmp.eq.f32.partialorder %v1705, 8.507059e+37
        %v1707 = vand.u32 %v960, 2147483648
        %v1708 = vor.u32 1.1754944e-38, %v1707
        %v1709 = vsel %vm1706, %v1708, %v1704
        %v1710 = vmul.f32 1.0, %v1709
        %v1711 = vrcp.pop %v961
        %v1712 = vmul.f32 %v961, %v1711
        %v1713 = vsub.f32 1.0, %v1712
        %v1714 = vmul.f32 %v1711, %v1713
        %v1715 = vadd.f32 %v1711, %v1714
        %vm1716 = vweird.f32 %v961
        %vm1717 = vweird.f32 %v1711
        %vm1718 = vmor %vm1716, %vm1717
        %v1719 = vsel %vm1718, %v1711, %v1715
        %v1720 = vand.u32 2147483647, %v961
        %vm1721 = vcmp.eq.f32.partialorder %v1720, 8.507059e+37
        %v1722 = vand.u32 %v961, 2147483648
        %v1723 = vor.u32 1.1754944e-38, %v1722
        %v1724 = vsel %vm1721, %v1723, %v1719
        %v1725 = vmul.f32 1.0, %v1724
        %v1726 = vrcp.pop %v962
        %v1727 = vmul.f32 %v962, %v1726
        %v1728 = vsub.f32 1.0, %v1727
        %v1729 = vmul.f32 %v1726, %v1728
        %v1730 = vadd.f32 %v1726, %v1729
        %vm1731 = vweird.f32 %v962
        %vm1732 = vweird.f32 %v1726
        %vm1733 = vmor %vm1731, %vm1732
        %v1734 = vsel %vm1733, %v1726, %v1730
        %v1735 = vand.u32 2147483647, %v962
        %vm1736 = vcmp.eq.f32.partialorder %v1735, 8.507059e+37
        %v1737 = vand.u32 %v962, 2147483648
        %v1738 = vor.u32 1.1754944e-38, %v1737
        %v1739 = vsel %vm1736, %v1738, %v1734
        %v1740 = vmul.f32 1.0, %v1739
        %v1741 = vrcp.pop %v963
        %v1742 = vmul.f32 %v963, %v1741
        %v1743 = vsub.f32 1.0, %v1742
        %v1744 = vmul.f32 %v1741, %v1743
        %v1745 = vadd.f32 %v1741, %v1744
        %vm1746 = vweird.f32 %v963
        %vm1747 = vweird.f32 %v1741
        %vm1748 = vmor %vm1746, %vm1747
        %v1749 = vsel %vm1748, %v1741, %v1745
        %v1750 = vand.u32 2147483647, %v963
        %vm1751 = vcmp.eq.f32.partialorder %v1750, 8.507059e+37
        %v1752 = vand.u32 %v963, 2147483648
        %v1753 = vor.u32 1.1754944e-38, %v1752
        %v1754 = vsel %vm1751, %v1753, %v1749
        %v1755 = vmul.f32 1.0, %v1754
        %v1756 = vrcp.pop %v964
        %v1757 = vmul.f32 %v964, %v1756
        %v1758 = vsub.f32 1.0, %v1757
        %v1759 = vmul.f32 %v1756, %v1758
        %v1760 = vadd.f32 %v1756, %v1759
        %vm1761 = vweird.f32 %v964
        %vm1762 = vweird.f32 %v1756
        %vm1763 = vmor %vm1761, %vm1762
        %v1764 = vsel %vm1763, %v1756, %v1760
        %v1765 = vand.u32 2147483647, %v964
        %vm1766 = vcmp.eq.f32.partialorder %v1765, 8.507059e+37
        %v1767 = vand.u32 %v964, 2147483648
        %v1768 = vor.u32 1.1754944e-38, %v1767
        %v1769 = vsel %vm1766, %v1768, %v1764
        %v1770 = vmul.f32 1.0, %v1769
        %v1771 = vrcp.pop %v965
        %v1772 = vmul.f32 %v965, %v1771
        %v1773 = vsub.f32 1.0, %v1772
        %v1774 = vmul.f32 %v1771, %v1773
        %v1775 = vadd.f32 %v1771, %v1774
        %vm1776 = vweird.f32 %v965
        %vm1777 = vweird.f32 %v1771
        %vm1778 = vmor %vm1776, %vm1777
        %v1779 = vsel %vm1778, %v1771, %v1775
        %v1780 = vand.u32 2147483647, %v965
        %vm1781 = vcmp.eq.f32.partialorder %v1780, 8.507059e+37
        %v1782 = vand.u32 %v965, 2147483648
        %v1783 = vor.u32 1.1754944e-38, %v1782
        %v1784 = vsel %vm1781, %v1783, %v1779
        %v1785 = vmul.f32 1.0, %v1784
        %v1786 = vrcp.pop %v966
        %v1787 = vmul.f32 %v966, %v1786
        %v1788 = vsub.f32 1.0, %v1787
        %v1789 = vmul.f32 %v1786, %v1788
        %v1790 = vadd.f32 %v1786, %v1789
        %vm1791 = vweird.f32 %v966
        %vm1792 = vweird.f32 %v1786
        %vm1793 = vmor %vm1791, %vm1792
        %v1794 = vsel %vm1793, %v1786, %v1790
        %v1795 = vand.u32 2147483647, %v966
        %vm1796 = vcmp.eq.f32.partialorder %v1795, 8.507059e+37
        %v1797 = vand.u32 %v966, 2147483648
        %v1798 = vor.u32 1.1754944e-38, %v1797
        %v1799 = vsel %vm1796, %v1798, %v1794
        %v1800 = vmul.f32 1.0, %v1799
        %v1801 = vrcp.pop %v967
        %v1802 = vmul.f32 %v967, %v1801
        %v1803 = vsub.f32 1.0, %v1802
        %v1804 = vmul.f32 %v1801, %v1803
        %v1805 = vadd.f32 %v1801, %v1804
        %vm1806 = vweird.f32 %v967
        %vm1807 = vweird.f32 %v1801
        %vm1808 = vmor %vm1806, %vm1807
        %v1809 = vsel %vm1808, %v1801, %v1805
        %v1810 = vand.u32 2147483647, %v967
        %vm1811 = vcmp.eq.f32.partialorder %v1810, 8.507059e+37
        %v1812 = vand.u32 %v967, 2147483648
        %v1813 = vor.u32 1.1754944e-38, %v1812
        %v1814 = vsel %vm1811, %v1813, %v1809
        %v1815 = vmul.f32 1.0, %v1814
        %v1816 = vrcp.pop %v968
        %v1817 = vmul.f32 %v968, %v1816
        %v1818 = vsub.f32 1.0, %v1817
        %v1819 = vmul.f32 %v1816, %v1818
        %v1820 = vadd.f32 %v1816, %v1819
        %vm1821 = vweird.f32 %v968
        %vm1822 = vweird.f32 %v1816
        %vm1823 = vmor %vm1821, %vm1822
        %v1824 = vsel %vm1823, %v1816, %v1820
        %v1825 = vand.u32 2147483647, %v968
        %vm1826 = vcmp.eq.f32.partialorder %v1825, 8.507059e+37
        %v1827 = vand.u32 %v968, 2147483648
        %v1828 = vor.u32 1.1754944e-38, %v1827
        %v1829 = vsel %vm1826, %v1828, %v1824
        %v1830 = vmul.f32 1.0, %v1829
        %v1831 = vrcp.pop %v969
        %v1832 = vmul.f32 %v969, %v1831
        %v1833 = vsub.f32 1.0, %v1832
        %v1834 = vmul.f32 %v1831, %v1833
        %v1835 = vadd.f32 %v1831, %v1834
        %vm1836 = vweird.f32 %v969
        %vm1837 = vweird.f32 %v1831
        %vm1838 = vmor %vm1836, %vm1837
        %v1839 = vsel %vm1838, %v1831, %v1835
        %v1840 = vand.u32 2147483647, %v969
        %vm1841 = vcmp.eq.f32.partialorder %v1840, 8.507059e+37
        %v1842 = vand.u32 %v969, 2147483648
        %v1843 = vor.u32 1.1754944e-38, %v1842
        %v1844 = vsel %vm1841, %v1843, %v1839
        %v1845 = vmul.f32 1.0, %v1844
        %v1846 = vrcp.pop %v970
        %v1847 = vmul.f32 %v970, %v1846
        %v1848 = vsub.f32 1.0, %v1847
        %v1849 = vmul.f32 %v1846, %v1848
        %v1850 = vadd.f32 %v1846, %v1849
        %vm1851 = vweird.f32 %v970
        %vm1852 = vweird.f32 %v1846
        %vm1853 = vmor %vm1851, %vm1852
        %v1854 = vsel %vm1853, %v1846, %v1850
        %v1855 = vand.u32 2147483647, %v970
        %vm1856 = vcmp.eq.f32.partialorder %v1855, 8.507059e+37
        %v1857 = vand.u32 %v970, 2147483648
        %v1858 = vor.u32 1.1754944e-38, %v1857
        %v1859 = vsel %vm1856, %v1858, %v1854
        %v1860 = vmul.f32 1.0, %v1859
        %v1861 = vrcp.pop %v971
        %v1862 = vmul.f32 %v971, %v1861
        %v1863 = vsub.f32 1.0, %v1862
        %v1864 = vmul.f32 %v1861, %v1863
        %v1865 = vadd.f32 %v1861, %v1864
        %vm1866 = vweird.f32 %v971
        %vm1867 = vweird.f32 %v1861
        %vm1868 = vmor %vm1866, %vm1867
        %v1869 = vsel %vm1868, %v1861, %v1865
        %v1870 = vand.u32 2147483647, %v971
        %vm1871 = vcmp.eq.f32.partialorder %v1870, 8.507059e+37
        %v1872 = vand.u32 %v971, 2147483648
        %v1873 = vor.u32 1.1754944e-38, %v1872
        %v1874 = vsel %vm1871, %v1873, %v1869
        %v1875 = vmul.f32 1.0, %v1874
        %v1876 = vrcp.pop %v972
        %v1877 = vmul.f32 %v972, %v1876
        %v1878 = vsub.f32 1.0, %v1877
        %v1879 = vmul.f32 %v1876, %v1878
        %v1880 = vadd.f32 %v1876, %v1879
        %vm1881 = vweird.f32 %v972
        %vm1882 = vweird.f32 %v1876
        %vm1883 = vmor %vm1881, %vm1882
        %v1884 = vsel %vm1883, %v1876, %v1880
        %v1885 = vand.u32 2147483647, %v972
        %vm1886 = vcmp.eq.f32.partialorder %v1885, 8.507059e+37
        %v1887 = vand.u32 %v972, 2147483648
        %v1888 = vor.u32 1.1754944e-38, %v1887
        %v1889 = vsel %vm1886, %v1888, %v1884
        %v1890 = vmul.f32 1.0, %v1889
        %v1891 = vrcp.pop %v973
        %v1892 = vmul.f32 %v973, %v1891
        %v1893 = vsub.f32 1.0, %v1892
        %v1894 = vmul.f32 %v1891, %v1893
        %v1895 = vadd.f32 %v1891, %v1894
        %vm1896 = vweird.f32 %v973
        %vm1897 = vweird.f32 %v1891
        %vm1898 = vmor %vm1896, %vm1897
        %v1899 = vsel %vm1898, %v1891, %v1895
        %v1900 = vand.u32 2147483647, %v973
        %vm1901 = vcmp.eq.f32.partialorder %v1900, 8.507059e+37
        %v1902 = vand.u32 %v973, 2147483648
        %v1903 = vor.u32 1.1754944e-38, %v1902
        %v1904 = vsel %vm1901, %v1903, %v1899
        %v1905 = vmul.f32 1.0, %v1904
        %v1906 = vrcp.pop %v974
        %v1907 = vmul.f32 %v974, %v1906
        %v1908 = vsub.f32 1.0, %v1907
        %v1909 = vmul.f32 %v1906, %v1908
        %v1910 = vadd.f32 %v1906, %v1909
        %vm1911 = vweird.f32 %v974
        %vm1912 = vweird.f32 %v1906
        %vm1913 = vmor %vm1911, %vm1912
        %v1914 = vsel %vm1913, %v1906, %v1910
        %v1915 = vand.u32 2147483647, %v974
        %vm1916 = vcmp.eq.f32.partialorder %v1915, 8.507059e+37
        %v1917 = vand.u32 %v974, 2147483648
        %v1918 = vor.u32 1.1754944e-38, %v1917
        %v1919 = vsel %vm1916, %v1918, %v1914
        %v1920 = vmul.f32 1.0, %v1919
        %v1921 = vrcp.pop %v975
        %v1922 = vmul.f32 %v975, %v1921
        %v1923 = vsub.f32 1.0, %v1922
        %v1924 = vmul.f32 %v1921, %v1923
        %v1925 = vadd.f32 %v1921, %v1924
        %vm1926 = vweird.f32 %v975
        %vm1927 = vweird.f32 %v1921
        %vm1928 = vmor %vm1926, %vm1927
        %v1929 = vsel %vm1928, %v1921, %v1925
        %v1930 = vand.u32 2147483647, %v975
        %vm1931 = vcmp.eq.f32.partialorder %v1930, 8.507059e+37
        %v1932 = vand.u32 %v975, 2147483648
        %v1933 = vor.u32 1.1754944e-38, %v1932
        %v1934 = vsel %vm1931, %v1933, %v1929
        %v1935 = vmul.f32 1.0, %v1934
        %v1936 = vmul.f32 %v512, %v990
        %v1937 = vmul.f32 %v625, %v1005
        %v1938 = vmul.f32 %v515, %v1020
        %v1939 = vmul.f32 %v628, %v1035
        %v1940 = vmul.f32 %v518, %v1050
        %v1941 = vmul.f32 %v631, %v1065
        %v1942 = vmul.f32 %v521, %v1080
        %v1943 = vmul.f32 %v634, %v1095
        %v1944 = vmul.f32 %v524, %v1110
        %v1945 = vmul.f32 %v637, %v1125
        %v1946 = vmul.f32 %v527, %v1140
        %v1947 = vmul.f32 %v640, %v1155
        %v1948 = vmul.f32 %v530, %v1170
        %v1949 = vmul.f32 %v643, %v1185
        %v1950 = vmul.f32 %v533, %v1200
        %v1951 = vmul.f32 %v646, %v1215
        %v1952 = vmul.f32 %v536, %v1230
        %v1953 = vmul.f32 %v649, %v1245
        %v1954 = vmul.f32 %v539, %v1260
        %v1955 = vmul.f32 %v652, %v1275
        %v1956 = vmul.f32 %v542, %v1290
        %v1957 = vmul.f32 %v655, %v1305
        %v1958 = vmul.f32 %v545, %v1320
        %v1959 = vmul.f32 %v658, %v1335
        %v1960 = vmul.f32 %v548, %v1350
        %v1961 = vmul.f32 %v661, %v1365
        %v1962 = vmul.f32 %v551, %v1380
        %v1963 = vmul.f32 %v664, %v1395
        %v1964 = vmul.f32 %v554, %v1410
        %v1965 = vmul.f32 %v667, %v1425
        %v1966 = vmul.f32 %v557, %v1440
        %v1967 = vmul.f32 %v670, %v1455
        %v1968 = vmul.f32 %v560, %v1470
        %v1969 = vmul.f32 %v673, %v1485
        %v1970 = vmul.f32 %v563, %v1500
        %v1971 = vmul.f32 %v676, %v1515
        %v1972 = vmul.f32 %v566, %v1530
        %v1973 = vmul.f32 %v679, %v1545
        %v1974 = vmul.f32 %v569, %v1560
        %v1975 = vmul.f32 %v682, %v1575
        %v1976 = vmul.f32 %v572, %v1590
        %v1977 = vmul.f32 %v685, %v1605
        %v1978 = vmul.f32 %v575, %v1620
        %v1979 = vmul.f32 %v688, %v1635
        %v1980 = vmul.f32 %v578, %v1650
        %v1981 = vmul.f32 %v691, %v1665
        %v1982 = vmul.f32 %v581, %v1680
        %v1983 = vmul.f32 %v694, %v1695
        %v1984 = vmul.f32 %v584, %v1710
        %v1985 = vmul.f32 %v697, %v1725
        %v1986 = vmul.f32 %v587, %v1740
        %v1987 = vmul.f32 %v700, %v1755
        %v1988 = vmul.f32 %v590, %v1770
        %v1989 = vmul.f32 %v703, %v1785
        %v1990 = vmul.f32 %v593, %v1800
        %v1991 = vmul.f32 %v706, %v1815
        %v1992 = vmul.f32 %v596, %v1830
        %v1993 = vmul.f32 %v709, %v1845
        %v1994 = vmul.f32 %v599, %v1860
        %v1995 = vmul.f32 %v712, %v1875
        %v1996 = vmul.f32 %v602, %v1890
        %v1997 = vmul.f32 %v715, %v1905
        %v1998 = vmul.f32 %v605, %v1920
        %v1999 = vmul.f32 %v718, %v1935
        %v2000 = vld [vmem:[%s7] sm:$0xff]
        %v2001 = vld [vmem:[%s7 + $0x8] sm:$0xff]
        %v2002 = vld [vmem:[%s7 + $0x10] sm:$0xff]
        %v2003 = vld [vmem:[%s7 + $0x18] sm:$0xff]
        %v2004 = vld [vmem:[%s7 + $0x20] sm:$0xff]
        %v2005 = vld [vmem:[%s7 + $0x28] sm:$0xff]
        %v2006 = vld [vmem:[%s7 + $0x30] sm:$0xff]
        %v2007 = vld [vmem:[%s7 + $0x38] sm:$0xff]
        %v2008 = vld [vmem:[%s7 + $0x40] sm:$0xff]
        %v2009 = vld [vmem:[%s7 + $0x48] sm:$0xff]
        %v2010 = vld [vmem:[%s7 + $0x50] sm:$0xff]
        %v2011 = vld [vmem:[%s7 + $0x58] sm:$0xff]
        %v2012 = vld [vmem:[%s7 + $0x60] sm:$0xff]
        %v2013 = vld [vmem:[%s7 + $0x68] sm:$0xff]
        %v2014 = vld [vmem:[%s7 + $0x70] sm:$0xff]
        %v2015 = vld [vmem:[%s7 + $0x78] sm:$0xff]
        %v2016 = vld [vmem:[%s7 + $0x80] sm:$0xff]
        %v2017 = vld [vmem:[%s7 + $0x88] sm:$0xff]
        %v2018 = vld [vmem:[%s7 + $0x90] sm:$0xff]
        %v2019 = vld [vmem:[%s7 + $0x98] sm:$0xff]
        %v2020 = vld [vmem:[%s7 + $0xa0] sm:$0xff]
        %v2021 = vld [vmem:[%s7 + $0xa8] sm:$0xff]
        %v2022 = vld [vmem:[%s7 + $0xb0] sm:$0xff]
        %v2023 = vld [vmem:[%s7 + $0xb8] sm:$0xff]
        %v2024 = vld [vmem:[%s7 + $0xc0] sm:$0xff]
        %v2025 = vld [vmem:[%s7 + $0xc8] sm:$0xff]
        %v2026 = vld [vmem:[%s7 + $0xd0] sm:$0xff]
        %v2027 = vld [vmem:[%s7 + $0xd8] sm:$0xff]
        %v2028 = vld [vmem:[%s7 + $0xe0] sm:$0xff]
        %v2029 = vld [vmem:[%s7 + $0xe8] sm:$0xff]
        %v2030 = vld [vmem:[%s7 + $0xf0] sm:$0xff]
        %v2031 = vld [vmem:[%s7 + $0xf8] sm:$0xff]
        %2032 = vmatpush.msra.mxu0 %v2030
        %2033 = vmatpush.msra.mxu0 %v2028
        %2034 = vmatpush.msra.mxu0 %v2026
        %2035 = vmatpush.msra.mxu0 %v2024
        %2036 = vmatpush.msra.mxu0 %v2022
        %2037 = vmatpush.msra.mxu0 %v2020
        %2038 = vmatpush.msra.mxu0 %v2018
        %2039 = vmatpush.msra.mxu0 %v2016
        %2040 = vmatpush.msra.mxu0 %v2014
        %2041 = vmatpush.msra.mxu0 %v2012
        %2042 = vmatpush.msra.mxu0 %v2010
        %2043 = vmatpush.msra.mxu0 %v2008
        %2044 = vmatpush.msra.mxu0 %v2006
        %2045 = vmatpush.msra.mxu0 %v2004
        %2046 = vmatpush.msra.mxu0 %v2002
        %2047 = vmatpush.msra.mxu0 %v2000
        %2048 = vmatmul.f32.gmra.mxu0 %v426
        %v2049 = vpop.f32.mrf.mxu0
        %v2050 = vadd.f32 0.0, %v2049
        %2051 = vmatmul.f32.gmra.mxu0 %v427
        %v2052 = vpop.f32.mrf.mxu0
        %v2053 = vadd.f32 0.0, %v2052
        %2054 = vmatmul.f32.gmra.mxu0 %v428
        %v2055 = vpop.f32.mrf.mxu0
        %v2056 = vadd.f32 0.0, %v2055
        %2057 = vmatmul.f32.gmra.mxu0 %v429
        %v2058 = vpop.f32.mrf.mxu0
        %v2059 = vadd.f32 0.0, %v2058
        %2060 = vmatmul.f32.gmra.mxu0 %v430
        %v2061 = vpop.f32.mrf.mxu0
        %v2062 = vadd.f32 0.0, %v2061
        %2063 = vmatmul.f32.gmra.mxu0 %v431
        %v2064 = vpop.f32.mrf.mxu0
        %v2065 = vadd.f32 0.0, %v2064
        %2066 = vmatmul.f32.gmra.mxu0 %v432
        %v2067 = vpop.f32.mrf.mxu0
        %v2068 = vadd.f32 0.0, %v2067
        %2069 = vmatmul.f32.gmra.mxu0 %v433
        %v2070 = vpop.f32.mrf.mxu0
        %v2071 = vadd.f32 0.0, %v2070
        %2072 = vmatmul.f32.gmra.mxu0 %v434
        %v2073 = vpop.f32.mrf.mxu0
        %v2074 = vadd.f32 0.0, %v2073
        %2075 = vmatmul.f32.gmra.mxu0 %v435
        %v2076 = vpop.f32.mrf.mxu0
        %v2077 = vadd.f32 0.0, %v2076
        %2078 = vmatmul.f32.gmra.mxu0 %v436
        %v2079 = vpop.f32.mrf.mxu0
        %v2080 = vadd.f32 0.0, %v2079
        %2081 = vmatmul.f32.gmra.mxu0 %v437
        %v2082 = vpop.f32.mrf.mxu0
        %v2083 = vadd.f32 0.0, %v2082
        %2084 = vmatmul.f32.gmra.mxu0 %v438
        %v2085 = vpop.f32.mrf.mxu0
        %v2086 = vadd.f32 0.0, %v2085
        %2087 = vmatmul.f32.gmra.mxu0 %v439
        %v2088 = vpop.f32.mrf.mxu0
        %v2089 = vadd.f32 0.0, %v2088
        %2090 = vmatmul.f32.gmra.mxu0 %v440
        %v2091 = vpop.f32.mrf.mxu0
        %v2092 = vadd.f32 0.0, %v2091
        %2093 = vmatmul.f32.gmra.mxu0 %v441
        %v2094 = vpop.f32.mrf.mxu0
        %v2095 = vadd.f32 0.0, %v2094
        %2096 = vmatmul.f32.gmra.mxu0 %v442
        %v2097 = vpop.f32.mrf.mxu0
        %v2098 = vadd.f32 0.0, %v2097
        %2099 = vmatmul.f32.gmra.mxu0 %v443
        %v2100 = vpop.f32.mrf.mxu0
        %v2101 = vadd.f32 0.0, %v2100
        %2102 = vmatmul.f32.gmra.mxu0 %v444
        %v2103 = vpop.f32.mrf.mxu0
        %v2104 = vadd.f32 0.0, %v2103
        %2105 = vmatmul.f32.gmra.mxu0 %v445
        %v2106 = vpop.f32.mrf.mxu0
        %v2107 = vadd.f32 0.0, %v2106
        %2108 = vmatmul.f32.gmra.mxu0 %v446
        %v2109 = vpop.f32.mrf.mxu0
        %v2110 = vadd.f32 0.0, %v2109
        %2111 = vmatmul.f32.gmra.mxu0 %v447
        %v2112 = vpop.f32.mrf.mxu0
        %v2113 = vadd.f32 0.0, %v2112
        %2114 = vmatmul.f32.gmra.mxu0 %v448
        %v2115 = vpop.f32.mrf.mxu0
        %v2116 = vadd.f32 0.0, %v2115
        %2117 = vmatmul.f32.gmra.mxu0 %v449
        %v2118 = vpop.f32.mrf.mxu0
        %v2119 = vadd.f32 0.0, %v2118
        %2120 = vmatmul.f32.gmra.mxu0 %v450
        %v2121 = vpop.f32.mrf.mxu0
        %v2122 = vadd.f32 0.0, %v2121
        %2123 = vmatmul.f32.gmra.mxu0 %v451
        %v2124 = vpop.f32.mrf.mxu0
        %v2125 = vadd.f32 0.0, %v2124
        %2126 = vmatmul.f32.gmra.mxu0 %v452
        %v2127 = vpop.f32.mrf.mxu0
        %v2128 = vadd.f32 0.0, %v2127
        %2129 = vmatmul.f32.gmra.mxu0 %v453
        %v2130 = vpop.f32.mrf.mxu0
        %v2131 = vadd.f32 0.0, %v2130
        %2132 = vmatmul.f32.gmra.mxu0 %v454
        %v2133 = vpop.f32.mrf.mxu0
        %v2134 = vadd.f32 0.0, %v2133
        %2135 = vmatmul.f32.gmra.mxu0 %v455
        %v2136 = vpop.f32.mrf.mxu0
        %v2137 = vadd.f32 0.0, %v2136
        %2138 = vmatmul.f32.gmra.mxu0 %v456
        %v2139 = vpop.f32.mrf.mxu0
        %v2140 = vadd.f32 0.0, %v2139
        %2141 = vmatmul.f32.gmra.mxu0 %v457
        %v2142 = vpop.f32.mrf.mxu0
        %v2143 = vadd.f32 0.0, %v2142
        %2144 = vdwg.mxu0
        %2145 = vmatpush.msra.mxu0 %v2031
        %2146 = vmatpush.msra.mxu0 %v2029
        %2147 = vmatpush.msra.mxu0 %v2027
        %2148 = vmatpush.msra.mxu0 %v2025
        %2149 = vmatpush.msra.mxu0 %v2023
        %2150 = vmatpush.msra.mxu0 %v2021
        %2151 = vmatpush.msra.mxu0 %v2019
        %2152 = vmatpush.msra.mxu0 %v2017
        %2153 = vmatpush.msra.mxu0 %v2015
        %2154 = vmatpush.msra.mxu0 %v2013
        %2155 = vmatpush.msra.mxu0 %v2011
        %2156 = vmatpush.msra.mxu0 %v2009
        %2157 = vmatpush.msra.mxu0 %v2007
        %2158 = vmatpush.msra.mxu0 %v2005
        %2159 = vmatpush.msra.mxu0 %v2003
        %2160 = vmatpush.msra.mxu0 %v2001
        %2161 = vmatmul.f32.gmra.mxu0 %v426
        %v2162 = vpop.f32.mrf.mxu0
        %v2163 = vadd.f32 0.0, %v2162
        %2164 = vmatmul.f32.gmra.mxu0 %v427
        %v2165 = vpop.f32.mrf.mxu0
        %v2166 = vadd.f32 0.0, %v2165
        %2167 = vmatmul.f32.gmra.mxu0 %v428
        %v2168 = vpop.f32.mrf.mxu0
        %v2169 = vadd.f32 0.0, %v2168
        %2170 = vmatmul.f32.gmra.mxu0 %v429
        %v2171 = vpop.f32.mrf.mxu0
        %v2172 = vadd.f32 0.0, %v2171
        %2173 = vmatmul.f32.gmra.mxu0 %v430
        %v2174 = vpop.f32.mrf.mxu0
        %v2175 = vadd.f32 0.0, %v2174
        %2176 = vmatmul.f32.gmra.mxu0 %v431
        %v2177 = vpop.f32.mrf.mxu0
        %v2178 = vadd.f32 0.0, %v2177
        %2179 = vmatmul.f32.gmra.mxu0 %v432
        %v2180 = vpop.f32.mrf.mxu0
        %v2181 = vadd.f32 0.0, %v2180
        %2182 = vmatmul.f32.gmra.mxu0 %v433
        %v2183 = vpop.f32.mrf.mxu0
        %v2184 = vadd.f32 0.0, %v2183
        %2185 = vmatmul.f32.gmra.mxu0 %v434
        %v2186 = vpop.f32.mrf.mxu0
        %v2187 = vadd.f32 0.0, %v2186
        %2188 = vmatmul.f32.gmra.mxu0 %v435
        %v2189 = vpop.f32.mrf.mxu0
        %v2190 = vadd.f32 0.0, %v2189
        %2191 = vmatmul.f32.gmra.mxu0 %v436
        %v2192 = vpop.f32.mrf.mxu0
        %v2193 = vadd.f32 0.0, %v2192
        %2194 = vmatmul.f32.gmra.mxu0 %v437
        %v2195 = vpop.f32.mrf.mxu0
        %v2196 = vadd.f32 0.0, %v2195
        %2197 = vmatmul.f32.gmra.mxu0 %v438
        %v2198 = vpop.f32.mrf.mxu0
        %v2199 = vadd.f32 0.0, %v2198
        %2200 = vmatmul.f32.gmra.mxu0 %v439
        %v2201 = vpop.f32.mrf.mxu0
        %v2202 = vadd.f32 0.0, %v2201
        %2203 = vmatmul.f32.gmra.mxu0 %v440
        %v2204 = vpop.f32.mrf.mxu0
        %v2205 = vadd.f32 0.0, %v2204
        %2206 = vmatmul.f32.gmra.mxu0 %v441
        %v2207 = vpop.f32.mrf.mxu0
        %v2208 = vadd.f32 0.0, %v2207
        %2209 = vmatmul.f32.gmra.mxu0 %v442
        %v2210 = vpop.f32.mrf.mxu0
        %v2211 = vadd.f32 0.0, %v2210
        %2212 = vmatmul.f32.gmra.mxu0 %v443
        %v2213 = vpop.f32.mrf.mxu0
        %v2214 = vadd.f32 0.0, %v2213
        %2215 = vmatmul.f32.gmra.mxu0 %v444
        %v2216 = vpop.f32.mrf.mxu0
        %v2217 = vadd.f32 0.0, %v2216
        %2218 = vmatmul.f32.gmra.mxu0 %v445
        %v2219 = vpop.f32.mrf.mxu0
        %v2220 = vadd.f32 0.0, %v2219
        %2221 = vmatmul.f32.gmra.mxu0 %v446
        %v2222 = vpop.f32.mrf.mxu0
        %v2223 = vadd.f32 0.0, %v2222
        %2224 = vmatmul.f32.gmra.mxu0 %v447
        %v2225 = vpop.f32.mrf.mxu0
        %v2226 = vadd.f32 0.0, %v2225
        %2227 = vmatmul.f32.gmra.mxu0 %v448
        %v2228 = vpop.f32.mrf.mxu0
        %v2229 = vadd.f32 0.0, %v2228
        %2230 = vmatmul.f32.gmra.mxu0 %v449
        %v2231 = vpop.f32.mrf.mxu0
        %v2232 = vadd.f32 0.0, %v2231
        %2233 = vmatmul.f32.gmra.mxu0 %v450
        %v2234 = vpop.f32.mrf.mxu0
        %v2235 = vadd.f32 0.0, %v2234
        %2236 = vmatmul.f32.gmra.mxu0 %v451
        %v2237 = vpop.f32.mrf.mxu0
        %v2238 = vadd.f32 0.0, %v2237
        %2239 = vmatmul.f32.gmra.mxu0 %v452
        %v2240 = vpop.f32.mrf.mxu0
        %v2241 = vadd.f32 0.0, %v2240
        %2242 = vmatmul.f32.gmra.mxu0 %v453
        %v2243 = vpop.f32.mrf.mxu0
        %v2244 = vadd.f32 0.0, %v2243
        %2245 = vmatmul.f32.gmra.mxu0 %v454
        %v2246 = vpop.f32.mrf.mxu0
        %v2247 = vadd.f32 0.0, %v2246
        %2248 = vmatmul.f32.gmra.mxu0 %v455
        %v2249 = vpop.f32.mrf.mxu0
        %v2250 = vadd.f32 0.0, %v2249
        %2251 = vmatmul.f32.gmra.mxu0 %v456
        %v2252 = vpop.f32.mrf.mxu0
        %v2253 = vadd.f32 0.0, %v2252
        %2254 = vmatmul.f32.gmra.mxu0 %v457
        %v2255 = vpop.f32.mrf.mxu0
        %v2256 = vadd.f32 0.0, %v2255
        %2257 = vdwg.mxu0
        %v2258 = vmul.f32 %v1936, %v2050
        %v2259 = vmul.f32 %v1937, %v2163
        %v2260 = vmul.f32 %v1938, %v2053
        %v2261 = vmul.f32 %v1939, %v2166
        %v2262 = vmul.f32 %v1940, %v2056
        %v2263 = vmul.f32 %v1941, %v2169
        %v2264 = vmul.f32 %v1942, %v2059
        %v2265 = vmul.f32 %v1943, %v2172
        %v2266 = vmul.f32 %v1944, %v2062
        %v2267 = vmul.f32 %v1945, %v2175
        %v2268 = vmul.f32 %v1946, %v2065
        %v2269 = vmul.f32 %v1947, %v2178
        %v2270 = vmul.f32 %v1948, %v2068
        %v2271 = vmul.f32 %v1949, %v2181
        %v2272 = vmul.f32 %v1950, %v2071
        %v2273 = vmul.f32 %v1951, %v2184
        %v2274 = vmul.f32 %v1952, %v2074
        %v2275 = vmul.f32 %v1953, %v2187
        %v2276 = vmul.f32 %v1954, %v2077
        %v2277 = vmul.f32 %v1955, %v2190
        %v2278 = vmul.f32 %v1956, %v2080
        %v2279 = vmul.f32 %v1957, %v2193
        %v2280 = vmul.f32 %v1958, %v2083
        %v2281 = vmul.f32 %v1959, %v2196
        %v2282 = vmul.f32 %v1960, %v2086
        %v2283 = vmul.f32 %v1961, %v2199
        %v2284 = vmul.f32 %v1962, %v2089
        %v2285 = vmul.f32 %v1963, %v2202
        %v2286 = vmul.f32 %v1964, %v2092
        %v2287 = vmul.f32 %v1965, %v2205
        %v2288 = vmul.f32 %v1966, %v2095
        %v2289 = vmul.f32 %v1967, %v2208
        %v2290 = vmul.f32 %v1968, %v2098
        %v2291 = vmul.f32 %v1969, %v2211
        %v2292 = vmul.f32 %v1970, %v2101
        %v2293 = vmul.f32 %v1971, %v2214
        %v2294 = vmul.f32 %v1972, %v2104
        %v2295 = vmul.f32 %v1973, %v2217
        %v2296 = vmul.f32 %v1974, %v2107
        %v2297 = vmul.f32 %v1975, %v2220
        %v2298 = vmul.f32 %v1976, %v2110
        %v2299 = vmul.f32 %v1977, %v2223
        %v2300 = vmul.f32 %v1978, %v2113
        %v2301 = vmul.f32 %v1979, %v2226
        %v2302 = vmul.f32 %v1980, %v2116
        %v2303 = vmul.f32 %v1981, %v2229
        %v2304 = vmul.f32 %v1982, %v2119
        %v2305 = vmul.f32 %v1983, %v2232
        %v2306 = vmul.f32 %v1984, %v2122
        %v2307 = vmul.f32 %v1985, %v2235
        %v2308 = vmul.f32 %v1986, %v2125
        %v2309 = vmul.f32 %v1987, %v2238
        %v2310 = vmul.f32 %v1988, %v2128
        %v2311 = vmul.f32 %v1989, %v2241
        %v2312 = vmul.f32 %v1990, %v2131
        %v2313 = vmul.f32 %v1991, %v2244
        %v2314 = vmul.f32 %v1992, %v2134
        %v2315 = vmul.f32 %v1993, %v2247
        %v2316 = vmul.f32 %v1994, %v2137
        %v2317 = vmul.f32 %v1995, %v2250
        %v2318 = vmul.f32 %v1996, %v2140
        %v2319 = vmul.f32 %v1997, %v2253
        %v2320 = vmul.f32 %v1998, %v2143
        %v2321 = vmul.f32 %v1999, %v2256
        %v2322 = vld [vmem:[%s8] sm:$0xff]
        %v2323 = vld [vmem:[%s8 + $0x8] sm:$0xff]
        %v2324 = vld [vmem:[%s8 + $0x10] sm:$0xff]
        %v2325 = vld [vmem:[%s8 + $0x18] sm:$0xff]
        %v2326 = vld [vmem:[%s8 + $0x20] sm:$0xff]
        %v2327 = vld [vmem:[%s8 + $0x28] sm:$0xff]
        %v2328 = vld [vmem:[%s8 + $0x30] sm:$0xff]
        %v2329 = vld [vmem:[%s8 + $0x38] sm:$0xff]
        %v2330 = vld [vmem:[%s8 + $0x40] sm:$0xff]
        %v2331 = vld [vmem:[%s8 + $0x48] sm:$0xff]
        %v2332 = vld [vmem:[%s8 + $0x50] sm:$0xff]
        %v2333 = vld [vmem:[%s8 + $0x58] sm:$0xff]
        %v2334 = vld [vmem:[%s8 + $0x60] sm:$0xff]
        %v2335 = vld [vmem:[%s8 + $0x68] sm:$0xff]
        %v2336 = vld [vmem:[%s8 + $0x70] sm:$0xff]
        %v2337 = vld [vmem:[%s8 + $0x78] sm:$0xff]
        %v2338 = vld [vmem:[%s8 + $0x80] sm:$0xff]
        %v2339 = vld [vmem:[%s8 + $0x88] sm:$0xff]
        %v2340 = vld [vmem:[%s8 + $0x90] sm:$0xff]
        %v2341 = vld [vmem:[%s8 + $0x98] sm:$0xff]
        %v2342 = vld [vmem:[%s8 + $0xa0] sm:$0xff]
        %v2343 = vld [vmem:[%s8 + $0xa8] sm:$0xff]
        %v2344 = vld [vmem:[%s8 + $0xb0] sm:$0xff]
        %v2345 = vld [vmem:[%s8 + $0xb8] sm:$0xff]
        %v2346 = vld [vmem:[%s8 + $0xc0] sm:$0xff]
        %v2347 = vld [vmem:[%s8 + $0xc8] sm:$0xff]
        %v2348 = vld [vmem:[%s8 + $0xd0] sm:$0xff]
        %v2349 = vld [vmem:[%s8 + $0xd8] sm:$0xff]
        %v2350 = vld [vmem:[%s8 + $0xe0] sm:$0xff]
        %v2351 = vld [vmem:[%s8 + $0xe8] sm:$0xff]
        %v2352 = vld [vmem:[%s8 + $0xf0] sm:$0xff]
        %v2353 = vld [vmem:[%s8 + $0xf8] sm:$0xff]
        %2354 = vmatpush.msra.mxu0 %v2337
        %2355 = vmatpush.msra.mxu0 %v2336
        %2356 = vmatpush.msra.mxu0 %v2335
        %2357 = vmatpush.msra.mxu0 %v2334
        %2358 = vmatpush.msra.mxu0 %v2333
        %2359 = vmatpush.msra.mxu0 %v2332
        %2360 = vmatpush.msra.mxu0 %v2331
        %2361 = vmatpush.msra.mxu0 %v2330
        %2362 = vmatpush.msra.mxu0 %v2329
        %2363 = vmatpush.msra.mxu0 %v2328
        %2364 = vmatpush.msra.mxu0 %v2327
        %2365 = vmatpush.msra.mxu0 %v2326
        %2366 = vmatpush.msra.mxu0 %v2325
        %2367 = vmatpush.msra.mxu0 %v2324
        %2368 = vmatpush.msra.mxu0 %v2323
        %2369 = vmatpush.msra.mxu0 %v2322
        %2370 = vmatmul.f32.gmra.mxu0 %v2258
        %v2371 = vpop.f32.mrf.mxu0
        %v2372 = vadd.f32 0.0, %v2371
        %2373 = vmatmul.f32.gmra.mxu0 %v2260
        %v2374 = vpop.f32.mrf.mxu0
        %v2375 = vadd.f32 0.0, %v2374
        %2376 = vmatmul.f32.gmra.mxu0 %v2262
        %v2377 = vpop.f32.mrf.mxu0
        %v2378 = vadd.f32 0.0, %v2377
        %2379 = vmatmul.f32.gmra.mxu0 %v2264
        %v2380 = vpop.f32.mrf.mxu0
        %v2381 = vadd.f32 0.0, %v2380
        %2382 = vmatmul.f32.gmra.mxu0 %v2266
        %v2383 = vpop.f32.mrf.mxu0
        %v2384 = vadd.f32 0.0, %v2383
        %2385 = vmatmul.f32.gmra.mxu0 %v2268
        %v2386 = vpop.f32.mrf.mxu0
        %v2387 = vadd.f32 0.0, %v2386
        %2388 = vmatmul.f32.gmra.mxu0 %v2270
        %v2389 = vpop.f32.mrf.mxu0
        %v2390 = vadd.f32 0.0, %v2389
        %2391 = vmatmul.f32.gmra.mxu0 %v2272
        %v2392 = vpop.f32.mrf.mxu0
        %v2393 = vadd.f32 0.0, %v2392
        %2394 = vmatmul.f32.gmra.mxu0 %v2274
        %v2395 = vpop.f32.mrf.mxu0
        %v2396 = vadd.f32 0.0, %v2395
        %2397 = vmatmul.f32.gmra.mxu0 %v2276
        %v2398 = vpop.f32.mrf.mxu0
        %v2399 = vadd.f32 0.0, %v2398
        %2400 = vmatmul.f32.gmra.mxu0 %v2278
        %v2401 = vpop.f32.mrf.mxu0
        %v2402 = vadd.f32 0.0, %v2401
        %2403 = vmatmul.f32.gmra.mxu0 %v2280
        %v2404 = vpop.f32.mrf.mxu0
        %v2405 = vadd.f32 0.0, %v2404
        %2406 = vmatmul.f32.gmra.mxu0 %v2282
        %v2407 = vpop.f32.mrf.mxu0
        %v2408 = vadd.f32 0.0, %v2407
        %2409 = vmatmul.f32.gmra.mxu0 %v2284
        %v2410 = vpop.f32.mrf.mxu0
        %v2411 = vadd.f32 0.0, %v2410
        %2412 = vmatmul.f32.gmra.mxu0 %v2286
        %v2413 = vpop.f32.mrf.mxu0
        %v2414 = vadd.f32 0.0, %v2413
        %2415 = vmatmul.f32.gmra.mxu0 %v2288
        %v2416 = vpop.f32.mrf.mxu0
        %v2417 = vadd.f32 0.0, %v2416
        %2418 = vmatmul.f32.gmra.mxu0 %v2290
        %v2419 = vpop.f32.mrf.mxu0
        %v2420 = vadd.f32 0.0, %v2419
        %2421 = vmatmul.f32.gmra.mxu0 %v2292
        %v2422 = vpop.f32.mrf.mxu0
        %v2423 = vadd.f32 0.0, %v2422
        %2424 = vmatmul.f32.gmra.mxu0 %v2294
        %v2425 = vpop.f32.mrf.mxu0
        %v2426 = vadd.f32 0.0, %v2425
        %2427 = vmatmul.f32.gmra.mxu0 %v2296
        %v2428 = vpop.f32.mrf.mxu0
        %v2429 = vadd.f32 0.0, %v2428
        %2430 = vmatmul.f32.gmra.mxu0 %v2298
        %v2431 = vpop.f32.mrf.mxu0
        %v2432 = vadd.f32 0.0, %v2431
        %2433 = vmatmul.f32.gmra.mxu0 %v2300
        %v2434 = vpop.f32.mrf.mxu0
        %v2435 = vadd.f32 0.0, %v2434
        %2436 = vmatmul.f32.gmra.mxu0 %v2302
        %v2437 = vpop.f32.mrf.mxu0
        %v2438 = vadd.f32 0.0, %v2437
        %2439 = vmatmul.f32.gmra.mxu0 %v2304
        %v2440 = vpop.f32.mrf.mxu0
        %v2441 = vadd.f32 0.0, %v2440
        %2442 = vmatmul.f32.gmra.mxu0 %v2306
        %v2443 = vpop.f32.mrf.mxu0
        %v2444 = vadd.f32 0.0, %v2443
        %2445 = vmatmul.f32.gmra.mxu0 %v2308
        %v2446 = vpop.f32.mrf.mxu0
        %v2447 = vadd.f32 0.0, %v2446
        %2448 = vmatmul.f32.gmra.mxu0 %v2310
        %v2449 = vpop.f32.mrf.mxu0
        %v2450 = vadd.f32 0.0, %v2449
        %2451 = vmatmul.f32.gmra.mxu0 %v2312
        %v2452 = vpop.f32.mrf.mxu0
        %v2453 = vadd.f32 0.0, %v2452
        %2454 = vmatmul.f32.gmra.mxu0 %v2314
        %v2455 = vpop.f32.mrf.mxu0
        %v2456 = vadd.f32 0.0, %v2455
        %2457 = vmatmul.f32.gmra.mxu0 %v2316
        %v2458 = vpop.f32.mrf.mxu0
        %v2459 = vadd.f32 0.0, %v2458
        %2460 = vmatmul.f32.gmra.mxu0 %v2318
        %v2461 = vpop.f32.mrf.mxu0
        %v2462 = vadd.f32 0.0, %v2461
        %2463 = vmatmul.f32.gmra.mxu0 %v2320
        %v2464 = vpop.f32.mrf.mxu0
        %v2465 = vadd.f32 0.0, %v2464
        %2466 = vdwg.mxu0
        %2467 = vmatpush.msra.mxu0 %v2353
        %2468 = vmatpush.msra.mxu0 %v2352
        %2469 = vmatpush.msra.mxu0 %v2351
        %2470 = vmatpush.msra.mxu0 %v2350
        %2471 = vmatpush.msra.mxu0 %v2349
        %2472 = vmatpush.msra.mxu0 %v2348
        %2473 = vmatpush.msra.mxu0 %v2347
        %2474 = vmatpush.msra.mxu0 %v2346
        %2475 = vmatpush.msra.mxu0 %v2345
        %2476 = vmatpush.msra.mxu0 %v2344
        %2477 = vmatpush.msra.mxu0 %v2343
        %2478 = vmatpush.msra.mxu0 %v2342
        %2479 = vmatpush.msra.mxu0 %v2341
        %2480 = vmatpush.msra.mxu0 %v2340
        %2481 = vmatpush.msra.mxu0 %v2339
        %2482 = vmatpush.msra.mxu0 %v2338
        %2483 = vmatmul.f32.gmra.mxu0 %v2259
        %v2484 = vpop.f32.mrf.mxu0
        %v2485 = vadd.f32 %v2372, %v2484
        %2486 = vmatmul.f32.gmra.mxu0 %v2261
        %v2487 = vpop.f32.mrf.mxu0
        %v2488 = vadd.f32 %v2375, %v2487
        %2489 = vmatmul.f32.gmra.mxu0 %v2263
        %v2490 = vpop.f32.mrf.mxu0
        %v2491 = vadd.f32 %v2378, %v2490
        %2492 = vmatmul.f32.gmra.mxu0 %v2265
        %v2493 = vpop.f32.mrf.mxu0
        %v2494 = vadd.f32 %v2381, %v2493
        %2495 = vmatmul.f32.gmra.mxu0 %v2267
        %v2496 = vpop.f32.mrf.mxu0
        %v2497 = vadd.f32 %v2384, %v2496
        %2498 = vmatmul.f32.gmra.mxu0 %v2269
        %v2499 = vpop.f32.mrf.mxu0
        %v2500 = vadd.f32 %v2387, %v2499
        %2501 = vmatmul.f32.gmra.mxu0 %v2271
        %v2502 = vpop.f32.mrf.mxu0
        %v2503 = vadd.f32 %v2390, %v2502
        %2504 = vmatmul.f32.gmra.mxu0 %v2273
        %v2505 = vpop.f32.mrf.mxu0
        %v2506 = vadd.f32 %v2393, %v2505
        %2507 = vmatmul.f32.gmra.mxu0 %v2275
        %v2508 = vpop.f32.mrf.mxu0
        %v2509 = vadd.f32 %v2396, %v2508
        %2510 = vmatmul.f32.gmra.mxu0 %v2277
        %v2511 = vpop.f32.mrf.mxu0
        %v2512 = vadd.f32 %v2399, %v2511
        %2513 = vmatmul.f32.gmra.mxu0 %v2279
        %v2514 = vpop.f32.mrf.mxu0
        %v2515 = vadd.f32 %v2402, %v2514
        %2516 = vmatmul.f32.gmra.mxu0 %v2281
        %v2517 = vpop.f32.mrf.mxu0
        %v2518 = vadd.f32 %v2405, %v2517
        %2519 = vmatmul.f32.gmra.mxu0 %v2283
        %v2520 = vpop.f32.mrf.mxu0
        %v2521 = vadd.f32 %v2408, %v2520
        %2522 = vmatmul.f32.gmra.mxu0 %v2285
        %v2523 = vpop.f32.mrf.mxu0
        %v2524 = vadd.f32 %v2411, %v2523
        %2525 = vmatmul.f32.gmra.mxu0 %v2287
        %v2526 = vpop.f32.mrf.mxu0
        %v2527 = vadd.f32 %v2414, %v2526
        %2528 = vmatmul.f32.gmra.mxu0 %v2289
        %v2529 = vpop.f32.mrf.mxu0
        %v2530 = vadd.f32 %v2417, %v2529
        %2531 = vmatmul.f32.gmra.mxu0 %v2291
        %v2532 = vpop.f32.mrf.mxu0
        %v2533 = vadd.f32 %v2420, %v2532
        %2534 = vmatmul.f32.gmra.mxu0 %v2293
        %v2535 = vpop.f32.mrf.mxu0
        %v2536 = vadd.f32 %v2423, %v2535
        %2537 = vmatmul.f32.gmra.mxu0 %v2295
        %v2538 = vpop.f32.mrf.mxu0
        %v2539 = vadd.f32 %v2426, %v2538
        %2540 = vmatmul.f32.gmra.mxu0 %v2297
        %v2541 = vpop.f32.mrf.mxu0
        %v2542 = vadd.f32 %v2429, %v2541
        %2543 = vmatmul.f32.gmra.mxu0 %v2299
        %v2544 = vpop.f32.mrf.mxu0
        %v2545 = vadd.f32 %v2432, %v2544
        %2546 = vmatmul.f32.gmra.mxu0 %v2301
        %v2547 = vpop.f32.mrf.mxu0
        %v2548 = vadd.f32 %v2435, %v2547
        %2549 = vmatmul.f32.gmra.mxu0 %v2303
        %v2550 = vpop.f32.mrf.mxu0
        %v2551 = vadd.f32 %v2438, %v2550
        %2552 = vmatmul.f32.gmra.mxu0 %v2305
        %v2553 = vpop.f32.mrf.mxu0
        %v2554 = vadd.f32 %v2441, %v2553
        %2555 = vmatmul.f32.gmra.mxu0 %v2307
        %v2556 = vpop.f32.mrf.mxu0
        %v2557 = vadd.f32 %v2444, %v2556
        %2558 = vmatmul.f32.gmra.mxu0 %v2309
        %v2559 = vpop.f32.mrf.mxu0
        %v2560 = vadd.f32 %v2447, %v2559
        %2561 = vmatmul.f32.gmra.mxu0 %v2311
        %v2562 = vpop.f32.mrf.mxu0
        %v2563 = vadd.f32 %v2450, %v2562
        %2564 = vmatmul.f32.gmra.mxu0 %v2313
        %v2565 = vpop.f32.mrf.mxu0
        %v2566 = vadd.f32 %v2453, %v2565
        %2567 = vmatmul.f32.gmra.mxu0 %v2315
        %v2568 = vpop.f32.mrf.mxu0
        %v2569 = vadd.f32 %v2456, %v2568
        %2570 = vmatmul.f32.gmra.mxu0 %v2317
        %v2571 = vpop.f32.mrf.mxu0
        %v2572 = vadd.f32 %v2459, %v2571
        %2573 = vmatmul.f32.gmra.mxu0 %v2319
        %v2574 = vpop.f32.mrf.mxu0
        %v2575 = vadd.f32 %v2462, %v2574
        %2576 = vmatmul.f32.gmra.mxu0 %v2321
        %v2577 = vpop.f32.mrf.mxu0
        %v2578 = vadd.f32 %v2465, %v2577
        %2579 = vdwg.mxu0
        %2580 = vst [vmem:[#allocation2] sm:$0xff] %v2485
        %2581 = vst [vmem:[#allocation2 + $0x8] sm:$0xff] %v2488
        %2582 = vst [vmem:[#allocation2 + $0x10] sm:$0xff] %v2491
        %2583 = vst [vmem:[#allocation2 + $0x18] sm:$0xff] %v2494
        %2584 = vst [vmem:[#allocation2 + $0x20] sm:$0xff] %v2497
        %2585 = vst [vmem:[#allocation2 + $0x28] sm:$0xff] %v2500
        %2586 = vst [vmem:[#allocation2 + $0x30] sm:$0xff] %v2503
        %2587 = vst [vmem:[#allocation2 + $0x38] sm:$0xff] %v2506
        %2588 = vst [vmem:[#allocation2 + $0x40] sm:$0xff] %v2509
        %2589 = vst [vmem:[#allocation2 + $0x48] sm:$0xff] %v2512
        %2590 = vst [vmem:[#allocation2 + $0x50] sm:$0xff] %v2515
        %2591 = vst [vmem:[#allocation2 + $0x58] sm:$0xff] %v2518
        %2592 = vst [vmem:[#allocation2 + $0x60] sm:$0xff] %v2521
        %2593 = vst [vmem:[#allocation2 + $0x68] sm:$0xff] %v2524
        %2594 = vst [vmem:[#allocation2 + $0x70] sm:$0xff] %v2527
        %2595 = vst [vmem:[#allocation2 + $0x78] sm:$0xff] %v2530
        %2596 = vst [vmem:[#allocation2 + $0x80] sm:$0xff] %v2533
        %2597 = vst [vmem:[#allocation2 + $0x88] sm:$0xff] %v2536
        %2598 = vst [vmem:[#allocation2 + $0x90] sm:$0xff] %v2539
        %2599 = vst [vmem:[#allocation2 + $0x98] sm:$0xff] %v2542
        %2600 = vst [vmem:[#allocation2 + $0xa0] sm:$0xff] %v2545
        %2601 = vst [vmem:[#allocation2 + $0xa8] sm:$0xff] %v2548
        %2602 = vst [vmem:[#allocation2 + $0xb0] sm:$0xff] %v2551
        %2603 = vst [vmem:[#allocation2 + $0xb8] sm:$0xff] %v2554
        %2604 = vst [vmem:[#allocation2 + $0xc0] sm:$0xff] %v2557
        %2605 = vst [vmem:[#allocation2 + $0xc8] sm:$0xff] %v2560
        %2606 = vst [vmem:[#allocation2 + $0xd0] sm:$0xff] %v2563
        %2607 = vst [vmem:[#allocation2 + $0xd8] sm:$0xff] %v2566
        %2608 = vst [vmem:[#allocation2 + $0xe0] sm:$0xff] %v2569
        %2609 = vst [vmem:[#allocation2 + $0xe8] sm:$0xff] %v2572
        %2610 = vst [vmem:[#allocation2 + $0xf0] sm:$0xff] %v2575
        %2611 = vst [vmem:[#allocation2 + $0xf8] sm:$0xff] %v2578
      $region56: #{moeff_forward.4} parent=51 // pred_fallthru
        _
      %s2612 = sshra.s32 %s33, 7
      %s2613 = sand.u32 %s33, 127
      %s2614 = sadd.s32 %s2612, %s32
      %s2615 = smul.u32 %s2614, 128
      %s2616 = sshra.s32 %s33, 7
      %s2617 = sand.u32 %s33, 127
      %s2618 = sadd.s32 %s2615, %s2617
      %s2619 = sld [smem:[#allocation4 + %s2618]]
      %p2620 = scmp.gt.s32.totalorder %s2619, 0
      // Predicated region
      $region57: #{moeff_forward.4} parent=51 // pred_check
        %p2621 = pneg %p2620
      $region58: #{moeff_forward.4} parent=51 // pred_check_branch
        %2623 = sbr.rel (%p2621) target = $region60
      $region59: #{moeff_forward.4} parent=51 // pred_region
        %v2624 = vld [vmem:[%s409] sm:$0xff]
        %v2625 = vld [vmem:[%s409 + $0x8] sm:$0xff]
        %v2626 = vld [vmem:[%s409 + $0x10] sm:$0xff]
        %v2627 = vld [vmem:[%s409 + $0x18] sm:$0xff]
        %v2628 = vld [vmem:[%s409 + $0x20] sm:$0xff]
        %v2629 = vld [vmem:[%s409 + $0x28] sm:$0xff]
        %v2630 = vld [vmem:[%s409 + $0x30] sm:$0xff]
        %v2631 = vld [vmem:[%s409 + $0x38] sm:$0xff]
        %v2632 = vld [vmem:[%s409 + $0x40] sm:$0xff]
        %v2633 = vld [vmem:[%s409 + $0x48] sm:$0xff]
        %v2634 = vld [vmem:[%s409 + $0x50] sm:$0xff]
        %v2635 = vld [vmem:[%s409 + $0x58] sm:$0xff]
        %v2636 = vld [vmem:[%s409 + $0x60] sm:$0xff]
        %v2637 = vld [vmem:[%s409 + $0x68] sm:$0xff]
        %v2638 = vld [vmem:[%s409 + $0x70] sm:$0xff]
        %v2639 = vld [vmem:[%s409 + $0x78] sm:$0xff]
        %2640 = vmatpush.msra.mxu0 %v2639
        %2641 = vmatpush.msra.mxu0 %v2638
        %2642 = vmatpush.msra.mxu0 %v2637
        %2643 = vmatpush.msra.mxu0 %v2636
        %2644 = vmatpush.msra.mxu0 %v2635
        %2645 = vmatpush.msra.mxu0 %v2634
        %2646 = vmatpush.msra.mxu0 %v2633
        %2647 = vmatpush.msra.mxu0 %v2632
        %2648 = vmatpush.msra.mxu0 %v2631
        %2649 = vmatpush.msra.mxu0 %v2630
        %2650 = vmatpush.msra.mxu0 %v2629
        %2651 = vmatpush.msra.mxu0 %v2628
        %2652 = vmatpush.msra.mxu0 %v2627
        %2653 = vmatpush.msra.mxu0 %v2626
        %2654 = vmatpush.msra.mxu0 %v2625
        %2655 = vmatpush.msra.mxu0 %v2624
        %2656 = vmatmul.f32.gmra.mxu0 %v426
        %v2657 = vpop.f32.mrf.mxu0
        %v2658 = vadd.f32 0.0, %v2657
        %2659 = vmatmul.f32.gmra.mxu0 %v427
        %v2660 = vpop.f32.mrf.mxu0
        %v2661 = vadd.f32 0.0, %v2660
        %2662 = vmatmul.f32.gmra.mxu0 %v428
        %v2663 = vpop.f32.mrf.mxu0
        %v2664 = vadd.f32 0.0, %v2663
        %2665 = vmatmul.f32.gmra.mxu0 %v429
        %v2666 = vpop.f32.mrf.mxu0
        %v2667 = vadd.f32 0.0, %v2666
        %2668 = vmatmul.f32.gmra.mxu0 %v430
        %v2669 = vpop.f32.mrf.mxu0
        %v2670 = vadd.f32 0.0, %v2669
        %2671 = vmatmul.f32.gmra.mxu0 %v431
        %v2672 = vpop.f32.mrf.mxu0
        %v2673 = vadd.f32 0.0, %v2672
        %2674 = vmatmul.f32.gmra.mxu0 %v432
        %v2675 = vpop.f32.mrf.mxu0
        %v2676 = vadd.f32 0.0, %v2675
        %2677 = vmatmul.f32.gmra.mxu0 %v433
        %v2678 = vpop.f32.mrf.mxu0
        %v2679 = vadd.f32 0.0, %v2678
        %2680 = vmatmul.f32.gmra.mxu0 %v434
        %v2681 = vpop.f32.mrf.mxu0
        %v2682 = vadd.f32 0.0, %v2681
        %2683 = vmatmul.f32.gmra.mxu0 %v435
        %v2684 = vpop.f32.mrf.mxu0
        %v2685 = vadd.f32 0.0, %v2684
        %2686 = vmatmul.f32.gmra.mxu0 %v436
        %v2687 = vpop.f32.mrf.mxu0
        %v2688 = vadd.f32 0.0, %v2687
        %2689 = vmatmul.f32.gmra.mxu0 %v437
        %v2690 = vpop.f32.mrf.mxu0
        %v2691 = vadd.f32 0.0, %v2690
        %2692 = vmatmul.f32.gmra.mxu0 %v438
        %v2693 = vpop.f32.mrf.mxu0
        %v2694 = vadd.f32 0.0, %v2693
        %2695 = vmatmul.f32.gmra.mxu0 %v439
        %v2696 = vpop.f32.mrf.mxu0
        %v2697 = vadd.f32 0.0, %v2696
        %2698 = vmatmul.f32.gmra.mxu0 %v440
        %v2699 = vpop.f32.mrf.mxu0
        %v2700 = vadd.f32 0.0, %v2699
        %2701 = vmatmul.f32.gmra.mxu0 %v441
        %v2702 = vpop.f32.mrf.mxu0
        %v2703 = vadd.f32 0.0, %v2702
        %2704 = vmatmul.f32.gmra.mxu0 %v442
        %v2705 = vpop.f32.mrf.mxu0
        %v2706 = vadd.f32 0.0, %v2705
        %2707 = vmatmul.f32.gmra.mxu0 %v443
        %v2708 = vpop.f32.mrf.mxu0
        %v2709 = vadd.f32 0.0, %v2708
        %2710 = vmatmul.f32.gmra.mxu0 %v444
        %v2711 = vpop.f32.mrf.mxu0
        %v2712 = vadd.f32 0.0, %v2711
        %2713 = vmatmul.f32.gmra.mxu0 %v445
        %v2714 = vpop.f32.mrf.mxu0
        %v2715 = vadd.f32 0.0, %v2714
        %2716 = vmatmul.f32.gmra.mxu0 %v446
        %v2717 = vpop.f32.mrf.mxu0
        %v2718 = vadd.f32 0.0, %v2717
        %2719 = vmatmul.f32.gmra.mxu0 %v447
        %v2720 = vpop.f32.mrf.mxu0
        %v2721 = vadd.f32 0.0, %v2720
        %2722 = vmatmul.f32.gmra.mxu0 %v448
        %v2723 = vpop.f32.mrf.mxu0
        %v2724 = vadd.f32 0.0, %v2723
        %2725 = vmatmul.f32.gmra.mxu0 %v449
        %v2726 = vpop.f32.mrf.mxu0
        %v2727 = vadd.f32 0.0, %v2726
        %2728 = vmatmul.f32.gmra.mxu0 %v450
        %v2729 = vpop.f32.mrf.mxu0
        %v2730 = vadd.f32 0.0, %v2729
        %2731 = vmatmul.f32.gmra.mxu0 %v451
        %v2732 = vpop.f32.mrf.mxu0
        %v2733 = vadd.f32 0.0, %v2732
        %2734 = vmatmul.f32.gmra.mxu0 %v452
        %v2735 = vpop.f32.mrf.mxu0
        %v2736 = vadd.f32 0.0, %v2735
        %2737 = vmatmul.f32.gmra.mxu0 %v453
        %v2738 = vpop.f32.mrf.mxu0
        %v2739 = vadd.f32 0.0, %v2738
        %2740 = vmatmul.f32.gmra.mxu0 %v454
        %v2741 = vpop.f32.mrf.mxu0
        %v2742 = vadd.f32 0.0, %v2741
        %2743 = vmatmul.f32.gmra.mxu0 %v455
        %v2744 = vpop.f32.mrf.mxu0
        %v2745 = vadd.f32 0.0, %v2744
        %2746 = vmatmul.f32.gmra.mxu0 %v456
        %v2747 = vpop.f32.mrf.mxu0
        %v2748 = vadd.f32 0.0, %v2747
        %2749 = vmatmul.f32.gmra.mxu0 %v457
        %v2750 = vpop.f32.mrf.mxu0
        %v2751 = vadd.f32 0.0, %v2750
        %2752 = vdwg.mxu0
        %v2753 = vxor.u32 %v2658, 2147483648
        %v2754 = vxor.u32 %v2661, 2147483648
        %v2755 = vxor.u32 %v2664, 2147483648
        %v2756 = vxor.u32 %v2667, 2147483648
        %v2757 = vxor.u32 %v2670, 2147483648
        %v2758 = vxor.u32 %v2673, 2147483648
        %v2759 = vxor.u32 %v2676, 2147483648
        %v2760 = vxor.u32 %v2679, 2147483648
        %v2761 = vxor.u32 %v2682, 2147483648
        %v2762 = vxor.u32 %v2685, 2147483648
        %v2763 = vxor.u32 %v2688, 2147483648
        %v2764 = vxor.u32 %v2691, 2147483648
        %v2765 = vxor.u32 %v2694, 2147483648
        %v2766 = vxor.u32 %v2697, 2147483648
        %v2767 = vxor.u32 %v2700, 2147483648
        %v2768 = vxor.u32 %v2703, 2147483648
        %v2769 = vxor.u32 %v2706, 2147483648
        %v2770 = vxor.u32 %v2709, 2147483648
        %v2771 = vxor.u32 %v2712, 2147483648
        %v2772 = vxor.u32 %v2715, 2147483648
        %v2773 = vxor.u32 %v2718, 2147483648
        %v2774 = vxor.u32 %v2721, 2147483648
        %v2775 = vxor.u32 %v2724, 2147483648
        %v2776 = vxor.u32 %v2727, 2147483648
        %v2777 = vxor.u32 %v2730, 2147483648
        %v2778 = vxor.u32 %v2733, 2147483648
        %v2779 = vxor.u32 %v2736, 2147483648
        %v2780 = vxor.u32 %v2739, 2147483648
        %v2781 = vxor.u32 %v2742, 2147483648
        %v2782 = vxor.u32 %v2745, 2147483648
        %v2783 = vxor.u32 %v2748, 2147483648
        %v2784 = vxor.u32 %v2751, 2147483648
        %v2785 = vmul.f32 %v2753, 1.442695
        %v2786 = vpow.pop %v2785
        %v2787 = vmul.f32 %v2754, 1.442695
        %v2788 = vpow.pop %v2787
        %v2789 = vmul.f32 %v2755, 1.442695
        %v2790 = vpow.pop %v2789
        %v2791 = vmul.f32 %v2756, 1.442695
        %v2792 = vpow.pop %v2791
        %v2793 = vmul.f32 %v2757, 1.442695
        %v2794 = vpow.pop %v2793
        %v2795 = vmul.f32 %v2758, 1.442695
        %v2796 = vpow.pop %v2795
        %v2797 = vmul.f32 %v2759, 1.442695
        %v2798 = vpow.pop %v2797
        %v2799 = vmul.f32 %v2760, 1.442695
        %v2800 = vpow.pop %v2799
        %v2801 = vmul.f32 %v2761, 1.442695
        %v2802 = vpow.pop %v2801
        %v2803 = vmul.f32 %v2762, 1.442695
        %v2804 = vpow.pop %v2803
        %v2805 = vmul.f32 %v2763, 1.442695
        %v2806 = vpow.pop %v2805
        %v2807 = vmul.f32 %v2764, 1.442695
        %v2808 = vpow.pop %v2807
        %v2809 = vmul.f32 %v2765, 1.442695
        %v2810 = vpow.pop %v2809
        %v2811 = vmul.f32 %v2766, 1.442695
        %v2812 = vpow.pop %v2811
        %v2813 = vmul.f32 %v2767, 1.442695
        %v2814 = vpow.pop %v2813
        %v2815 = vmul.f32 %v2768, 1.442695
        %v2816 = vpow.pop %v2815
        %v2817 = vmul.f32 %v2769, 1.442695
        %v2818 = vpow.pop %v2817
        %v2819 = vmul.f32 %v2770, 1.442695
        %v2820 = vpow.pop %v2819
        %v2821 = vmul.f32 %v2771, 1.442695
        %v2822 = vpow.pop %v2821
        %v2823 = vmul.f32 %v2772, 1.442695
        %v2824 = vpow.pop %v2823
        %v2825 = vmul.f32 %v2773, 1.442695
        %v2826 = vpow.pop %v2825
        %v2827 = vmul.f32 %v2774, 1.442695
        %v2828 = vpow.pop %v2827
        %v2829 = vmul.f32 %v2775, 1.442695
        %v2830 = vpow.pop %v2829
        %v2831 = vmul.f32 %v2776, 1.442695
        %v2832 = vpow.pop %v2831
        %v2833 = vmul.f32 %v2777, 1.442695
        %v2834 = vpow.pop %v2833
        %v2835 = vmul.f32 %v2778, 1.442695
        %v2836 = vpow.pop %v2835
        %v2837 = vmul.f32 %v2779, 1.442695
        %v2838 = vpow.pop %v2837
        %v2839 = vmul.f32 %v2780, 1.442695
        %v2840 = vpow.pop %v2839
        %v2841 = vmul.f32 %v2781, 1.442695
        %v2842 = vpow.pop %v2841
        %v2843 = vmul.f32 %v2782, 1.442695
        %v2844 = vpow.pop %v2843
        %v2845 = vmul.f32 %v2783, 1.442695
        %v2846 = vpow.pop %v2845
        %v2847 = vmul.f32 %v2784, 1.442695
        %v2848 = vpow.pop %v2847
        %v2849 = vadd.f32 %v2786, 1.0
        %v2850 = vadd.f32 %v2788, 1.0
        %v2851 = vadd.f32 %v2790, 1.0
        %v2852 = vadd.f32 %v2792, 1.0
        %v2853 = vadd.f32 %v2794, 1.0
        %v2854 = vadd.f32 %v2796, 1.0
        %v2855 = vadd.f32 %v2798, 1.0
        %v2856 = vadd.f32 %v2800, 1.0
        %v2857 = vadd.f32 %v2802, 1.0
        %v2858 = vadd.f32 %v2804, 1.0
        %v2859 = vadd.f32 %v2806, 1.0
        %v2860 = vadd.f32 %v2808, 1.0
        %v2861 = vadd.f32 %v2810, 1.0
        %v2862 = vadd.f32 %v2812, 1.0
        %v2863 = vadd.f32 %v2814, 1.0
        %v2864 = vadd.f32 %v2816, 1.0
        %v2865 = vadd.f32 %v2818, 1.0
        %v2866 = vadd.f32 %v2820, 1.0
        %v2867 = vadd.f32 %v2822, 1.0
        %v2868 = vadd.f32 %v2824, 1.0
        %v2869 = vadd.f32 %v2826, 1.0
        %v2870 = vadd.f32 %v2828, 1.0
        %v2871 = vadd.f32 %v2830, 1.0
        %v2872 = vadd.f32 %v2832, 1.0
        %v2873 = vadd.f32 %v2834, 1.0
        %v2874 = vadd.f32 %v2836, 1.0
        %v2875 = vadd.f32 %v2838, 1.0
        %v2876 = vadd.f32 %v2840, 1.0
        %v2877 = vadd.f32 %v2842, 1.0
        %v2878 = vadd.f32 %v2844, 1.0
        %v2879 = vadd.f32 %v2846, 1.0
        %v2880 = vadd.f32 %v2848, 1.0
        %v2881 = vrcp.pop %v2849
        %v2882 = vmul.f32 %v2849, %v2881
        %v2883 = vsub.f32 1.0, %v2882
        %v2884 = vmul.f32 %v2881, %v2883
        %v2885 = vadd.f32 %v2881, %v2884
        %vm2886 = vweird.f32 %v2849
        %vm2887 = vweird.f32 %v2881
        %vm2888 = vmor %vm2886, %vm2887
        %v2889 = vsel %vm2888, %v2881, %v2885
        %v2890 = vand.u32 2147483647, %v2849
        %vm2891 = vcmp.eq.f32.partialorder %v2890, 8.507059e+37
        %v2892 = vand.u32 %v2849, 2147483648
        %v2893 = vor.u32 1.1754944e-38, %v2892
        %v2894 = vsel %vm2891, %v2893, %v2889
        %v2895 = vmul.f32 1.0, %v2894
        %v2896 = vrcp.pop %v2850
        %v2897 = vmul.f32 %v2850, %v2896
        %v2898 = vsub.f32 1.0, %v2897
        %v2899 = vmul.f32 %v2896, %v2898
        %v2900 = vadd.f32 %v2896, %v2899
        %vm2901 = vweird.f32 %v2850
        %vm2902 = vweird.f32 %v2896
        %vm2903 = vmor %vm2901, %vm2902
        %v2904 = vsel %vm2903, %v2896, %v2900
        %v2905 = vand.u32 2147483647, %v2850
        %vm2906 = vcmp.eq.f32.partialorder %v2905, 8.507059e+37
        %v2907 = vand.u32 %v2850, 2147483648
        %v2908 = vor.u32 1.1754944e-38, %v2907
        %v2909 = vsel %vm2906, %v2908, %v2904
        %v2910 = vmul.f32 1.0, %v2909
        %v2911 = vrcp.pop %v2851
        %v2912 = vmul.f32 %v2851, %v2911
        %v2913 = vsub.f32 1.0, %v2912
        %v2914 = vmul.f32 %v2911, %v2913
        %v2915 = vadd.f32 %v2911, %v2914
        %vm2916 = vweird.f32 %v2851
        %vm2917 = vweird.f32 %v2911
        %vm2918 = vmor %vm2916, %vm2917
        %v2919 = vsel %vm2918, %v2911, %v2915
        %v2920 = vand.u32 2147483647, %v2851
        %vm2921 = vcmp.eq.f32.partialorder %v2920, 8.507059e+37
        %v2922 = vand.u32 %v2851, 2147483648
        %v2923 = vor.u32 1.1754944e-38, %v2922
        %v2924 = vsel %vm2921, %v2923, %v2919
        %v2925 = vmul.f32 1.0, %v2924
        %v2926 = vrcp.pop %v2852
        %v2927 = vmul.f32 %v2852, %v2926
        %v2928 = vsub.f32 1.0, %v2927
        %v2929 = vmul.f32 %v2926, %v2928
        %v2930 = vadd.f32 %v2926, %v2929
        %vm2931 = vweird.f32 %v2852
        %vm2932 = vweird.f32 %v2926
        %vm2933 = vmor %vm2931, %vm2932
        %v2934 = vsel %vm2933, %v2926, %v2930
        %v2935 = vand.u32 2147483647, %v2852
        %vm2936 = vcmp.eq.f32.partialorder %v2935, 8.507059e+37
        %v2937 = vand.u32 %v2852, 2147483648
        %v2938 = vor.u32 1.1754944e-38, %v2937
        %v2939 = vsel %vm2936, %v2938, %v2934
        %v2940 = vmul.f32 1.0, %v2939
        %v2941 = vrcp.pop %v2853
        %v2942 = vmul.f32 %v2853, %v2941
        %v2943 = vsub.f32 1.0, %v2942
        %v2944 = vmul.f32 %v2941, %v2943
        %v2945 = vadd.f32 %v2941, %v2944
        %vm2946 = vweird.f32 %v2853
        %vm2947 = vweird.f32 %v2941
        %vm2948 = vmor %vm2946, %vm2947
        %v2949 = vsel %vm2948, %v2941, %v2945
        %v2950 = vand.u32 2147483647, %v2853
        %vm2951 = vcmp.eq.f32.partialorder %v2950, 8.507059e+37
        %v2952 = vand.u32 %v2853, 2147483648
        %v2953 = vor.u32 1.1754944e-38, %v2952
        %v2954 = vsel %vm2951, %v2953, %v2949
        %v2955 = vmul.f32 1.0, %v2954
        %v2956 = vrcp.pop %v2854
        %v2957 = vmul.f32 %v2854, %v2956
        %v2958 = vsub.f32 1.0, %v2957
        %v2959 = vmul.f32 %v2956, %v2958
        %v2960 = vadd.f32 %v2956, %v2959
        %vm2961 = vweird.f32 %v2854
        %vm2962 = vweird.f32 %v2956
        %vm2963 = vmor %vm2961, %vm2962
        %v2964 = vsel %vm2963, %v2956, %v2960
        %v2965 = vand.u32 2147483647, %v2854
        %vm2966 = vcmp.eq.f32.partialorder %v2965, 8.507059e+37
        %v2967 = vand.u32 %v2854, 2147483648
        %v2968 = vor.u32 1.1754944e-38, %v2967
        %v2969 = vsel %vm2966, %v2968, %v2964
        %v2970 = vmul.f32 1.0, %v2969
        %v2971 = vrcp.pop %v2855
        %v2972 = vmul.f32 %v2855, %v2971
        %v2973 = vsub.f32 1.0, %v2972
        %v2974 = vmul.f32 %v2971, %v2973
        %v2975 = vadd.f32 %v2971, %v2974
        %vm2976 = vweird.f32 %v2855
        %vm2977 = vweird.f32 %v2971
        %vm2978 = vmor %vm2976, %vm2977
        %v2979 = vsel %vm2978, %v2971, %v2975
        %v2980 = vand.u32 2147483647, %v2855
        %vm2981 = vcmp.eq.f32.partialorder %v2980, 8.507059e+37
        %v2982 = vand.u32 %v2855, 2147483648
        %v2983 = vor.u32 1.1754944e-38, %v2982
        %v2984 = vsel %vm2981, %v2983, %v2979
        %v2985 = vmul.f32 1.0, %v2984
        %v2986 = vrcp.pop %v2856
        %v2987 = vmul.f32 %v2856, %v2986
        %v2988 = vsub.f32 1.0, %v2987
        %v2989 = vmul.f32 %v2986, %v2988
        %v2990 = vadd.f32 %v2986, %v2989
        %vm2991 = vweird.f32 %v2856
        %vm2992 = vweird.f32 %v2986
        %vm2993 = vmor %vm2991, %vm2992
        %v2994 = vsel %vm2993, %v2986, %v2990
        %v2995 = vand.u32 2147483647, %v2856
        %vm2996 = vcmp.eq.f32.partialorder %v2995, 8.507059e+37
        %v2997 = vand.u32 %v2856, 2147483648
        %v2998 = vor.u32 1.1754944e-38, %v2997
        %v2999 = vsel %vm2996, %v2998, %v2994
        %v3000 = vmul.f32 1.0, %v2999
        %v3001 = vrcp.pop %v2857
        %v3002 = vmul.f32 %v2857, %v3001
        %v3003 = vsub.f32 1.0, %v3002
        %v3004 = vmul.f32 %v3001, %v3003
        %v3005 = vadd.f32 %v3001, %v3004
        %vm3006 = vweird.f32 %v2857
        %vm3007 = vweird.f32 %v3001
        %vm3008 = vmor %vm3006, %vm3007
        %v3009 = vsel %vm3008, %v3001, %v3005
        %v3010 = vand.u32 2147483647, %v2857
        %vm3011 = vcmp.eq.f32.partialorder %v3010, 8.507059e+37
        %v3012 = vand.u32 %v2857, 2147483648
        %v3013 = vor.u32 1.1754944e-38, %v3012
        %v3014 = vsel %vm3011, %v3013, %v3009
        %v3015 = vmul.f32 1.0, %v3014
        %v3016 = vrcp.pop %v2858
        %v3017 = vmul.f32 %v2858, %v3016
        %v3018 = vsub.f32 1.0, %v3017
        %v3019 = vmul.f32 %v3016, %v3018
        %v3020 = vadd.f32 %v3016, %v3019
        %vm3021 = vweird.f32 %v2858
        %vm3022 = vweird.f32 %v3016
        %vm3023 = vmor %vm3021, %vm3022
        %v3024 = vsel %vm3023, %v3016, %v3020
        %v3025 = vand.u32 2147483647, %v2858
        %vm3026 = vcmp.eq.f32.partialorder %v3025, 8.507059e+37
        %v3027 = vand.u32 %v2858, 2147483648
        %v3028 = vor.u32 1.1754944e-38, %v3027
        %v3029 = vsel %vm3026, %v3028, %v3024
        %v3030 = vmul.f32 1.0, %v3029
        %v3031 = vrcp.pop %v2859
        %v3032 = vmul.f32 %v2859, %v3031
        %v3033 = vsub.f32 1.0, %v3032
        %v3034 = vmul.f32 %v3031, %v3033
        %v3035 = vadd.f32 %v3031, %v3034
        %vm3036 = vweird.f32 %v2859
        %vm3037 = vweird.f32 %v3031
        %vm3038 = vmor %vm3036, %vm3037
        %v3039 = vsel %vm3038, %v3031, %v3035
        %v3040 = vand.u32 2147483647, %v2859
        %vm3041 = vcmp.eq.f32.partialorder %v3040, 8.507059e+37
        %v3042 = vand.u32 %v2859, 2147483648
        %v3043 = vor.u32 1.1754944e-38, %v3042
        %v3044 = vsel %vm3041, %v3043, %v3039
        %v3045 = vmul.f32 1.0, %v3044
        %v3046 = vrcp.pop %v2860
        %v3047 = vmul.f32 %v2860, %v3046
        %v3048 = vsub.f32 1.0, %v3047
        %v3049 = vmul.f32 %v3046, %v3048
        %v3050 = vadd.f32 %v3046, %v3049
        %vm3051 = vweird.f32 %v2860
        %vm3052 = vweird.f32 %v3046
        %vm3053 = vmor %vm3051, %vm3052
        %v3054 = vsel %vm3053, %v3046, %v3050
        %v3055 = vand.u32 2147483647, %v2860
        %vm3056 = vcmp.eq.f32.partialorder %v3055, 8.507059e+37
        %v3057 = vand.u32 %v2860, 2147483648
        %v3058 = vor.u32 1.1754944e-38, %v3057
        %v3059 = vsel %vm3056, %v3058, %v3054
        %v3060 = vmul.f32 1.0, %v3059
        %v3061 = vrcp.pop %v2861
        %v3062 = vmul.f32 %v2861, %v3061
        %v3063 = vsub.f32 1.0, %v3062
        %v3064 = vmul.f32 %v3061, %v3063
        %v3065 = vadd.f32 %v3061, %v3064
        %vm3066 = vweird.f32 %v2861
        %vm3067 = vweird.f32 %v3061
        %vm3068 = vmor %vm3066, %vm3067
        %v3069 = vsel %vm3068, %v3061, %v3065
        %v3070 = vand.u32 2147483647, %v2861
        %vm3071 = vcmp.eq.f32.partialorder %v3070, 8.507059e+37
        %v3072 = vand.u32 %v2861, 2147483648
        %v3073 = vor.u32 1.1754944e-38, %v3072
        %v3074 = vsel %vm3071, %v3073, %v3069
        %v3075 = vmul.f32 1.0, %v3074
        %v3076 = vrcp.pop %v2862
        %v3077 = vmul.f32 %v2862, %v3076
        %v3078 = vsub.f32 1.0, %v3077
        %v3079 = vmul.f32 %v3076, %v3078
        %v3080 = vadd.f32 %v3076, %v3079
        %vm3081 = vweird.f32 %v2862
        %vm3082 = vweird.f32 %v3076
        %vm3083 = vmor %vm3081, %vm3082
        %v3084 = vsel %vm3083, %v3076, %v3080
        %v3085 = vand.u32 2147483647, %v2862
        %vm3086 = vcmp.eq.f32.partialorder %v3085, 8.507059e+37
        %v3087 = vand.u32 %v2862, 2147483648
        %v3088 = vor.u32 1.1754944e-38, %v3087
        %v3089 = vsel %vm3086, %v3088, %v3084
        %v3090 = vmul.f32 1.0, %v3089
        %v3091 = vrcp.pop %v2863
        %v3092 = vmul.f32 %v2863, %v3091
        %v3093 = vsub.f32 1.0, %v3092
        %v3094 = vmul.f32 %v3091, %v3093
        %v3095 = vadd.f32 %v3091, %v3094
        %vm3096 = vweird.f32 %v2863
        %vm3097 = vweird.f32 %v3091
        %vm3098 = vmor %vm3096, %vm3097
        %v3099 = vsel %vm3098, %v3091, %v3095
        %v3100 = vand.u32 2147483647, %v2863
        %vm3101 = vcmp.eq.f32.partialorder %v3100, 8.507059e+37
        %v3102 = vand.u32 %v2863, 2147483648
        %v3103 = vor.u32 1.1754944e-38, %v3102
        %v3104 = vsel %vm3101, %v3103, %v3099
        %v3105 = vmul.f32 1.0, %v3104
        %v3106 = vrcp.pop %v2864
        %v3107 = vmul.f32 %v2864, %v3106
        %v3108 = vsub.f32 1.0, %v3107
        %v3109 = vmul.f32 %v3106, %v3108
        %v3110 = vadd.f32 %v3106, %v3109
        %vm3111 = vweird.f32 %v2864
        %vm3112 = vweird.f32 %v3106
        %vm3113 = vmor %vm3111, %vm3112
        %v3114 = vsel %vm3113, %v3106, %v3110
        %v3115 = vand.u32 2147483647, %v2864
        %vm3116 = vcmp.eq.f32.partialorder %v3115, 8.507059e+37
        %v3117 = vand.u32 %v2864, 2147483648
        %v3118 = vor.u32 1.1754944e-38, %v3117
        %v3119 = vsel %vm3116, %v3118, %v3114
        %v3120 = vmul.f32 1.0, %v3119
        %v3121 = vrcp.pop %v2865
        %v3122 = vmul.f32 %v2865, %v3121
        %v3123 = vsub.f32 1.0, %v3122
        %v3124 = vmul.f32 %v3121, %v3123
        %v3125 = vadd.f32 %v3121, %v3124
        %vm3126 = vweird.f32 %v2865
        %vm3127 = vweird.f32 %v3121
        %vm3128 = vmor %vm3126, %vm3127
        %v3129 = vsel %vm3128, %v3121, %v3125
        %v3130 = vand.u32 2147483647, %v2865
        %vm3131 = vcmp.eq.f32.partialorder %v3130, 8.507059e+37
        %v3132 = vand.u32 %v2865, 2147483648
        %v3133 = vor.u32 1.1754944e-38, %v3132
        %v3134 = vsel %vm3131, %v3133, %v3129
        %v3135 = vmul.f32 1.0, %v3134
        %v3136 = vrcp.pop %v2866
        %v3137 = vmul.f32 %v2866, %v3136
        %v3138 = vsub.f32 1.0, %v3137
        %v3139 = vmul.f32 %v3136, %v3138
        %v3140 = vadd.f32 %v3136, %v3139
        %vm3141 = vweird.f32 %v2866
        %vm3142 = vweird.f32 %v3136
        %vm3143 = vmor %vm3141, %vm3142
        %v3144 = vsel %vm3143, %v3136, %v3140
        %v3145 = vand.u32 2147483647, %v2866
        %vm3146 = vcmp.eq.f32.partialorder %v3145, 8.507059e+37
        %v3147 = vand.u32 %v2866, 2147483648
        %v3148 = vor.u32 1.1754944e-38, %v3147
        %v3149 = vsel %vm3146, %v3148, %v3144
        %v3150 = vmul.f32 1.0, %v3149
        %v3151 = vrcp.pop %v2867
        %v3152 = vmul.f32 %v2867, %v3151
        %v3153 = vsub.f32 1.0, %v3152
        %v3154 = vmul.f32 %v3151, %v3153
        %v3155 = vadd.f32 %v3151, %v3154
        %vm3156 = vweird.f32 %v2867
        %vm3157 = vweird.f32 %v3151
        %vm3158 = vmor %vm3156, %vm3157
        %v3159 = vsel %vm3158, %v3151, %v3155
        %v3160 = vand.u32 2147483647, %v2867
        %vm3161 = vcmp.eq.f32.partialorder %v3160, 8.507059e+37
        %v3162 = vand.u32 %v2867, 2147483648
        %v3163 = vor.u32 1.1754944e-38, %v3162
        %v3164 = vsel %vm3161, %v3163, %v3159
        %v3165 = vmul.f32 1.0, %v3164
        %v3166 = vrcp.pop %v2868
        %v3167 = vmul.f32 %v2868, %v3166
        %v3168 = vsub.f32 1.0, %v3167
        %v3169 = vmul.f32 %v3166, %v3168
        %v3170 = vadd.f32 %v3166, %v3169
        %vm3171 = vweird.f32 %v2868
        %vm3172 = vweird.f32 %v3166
        %vm3173 = vmor %vm3171, %vm3172
        %v3174 = vsel %vm3173, %v3166, %v3170
        %v3175 = vand.u32 2147483647, %v2868
        %vm3176 = vcmp.eq.f32.partialorder %v3175, 8.507059e+37
        %v3177 = vand.u32 %v2868, 2147483648
        %v3178 = vor.u32 1.1754944e-38, %v3177
        %v3179 = vsel %vm3176, %v3178, %v3174
        %v3180 = vmul.f32 1.0, %v3179
        %v3181 = vrcp.pop %v2869
        %v3182 = vmul.f32 %v2869, %v3181
        %v3183 = vsub.f32 1.0, %v3182
        %v3184 = vmul.f32 %v3181, %v3183
        %v3185 = vadd.f32 %v3181, %v3184
        %vm3186 = vweird.f32 %v2869
        %vm3187 = vweird.f32 %v3181
        %vm3188 = vmor %vm3186, %vm3187
        %v3189 = vsel %vm3188, %v3181, %v3185
        %v3190 = vand.u32 2147483647, %v2869
        %vm3191 = vcmp.eq.f32.partialorder %v3190, 8.507059e+37
        %v3192 = vand.u32 %v2869, 2147483648
        %v3193 = vor.u32 1.1754944e-38, %v3192
        %v3194 = vsel %vm3191, %v3193, %v3189
        %v3195 = vmul.f32 1.0, %v3194
        %v3196 = vrcp.pop %v2870
        %v3197 = vmul.f32 %v2870, %v3196
        %v3198 = vsub.f32 1.0, %v3197
        %v3199 = vmul.f32 %v3196, %v3198
        %v3200 = vadd.f32 %v3196, %v3199
        %vm3201 = vweird.f32 %v2870
        %vm3202 = vweird.f32 %v3196
        %vm3203 = vmor %vm3201, %vm3202
        %v3204 = vsel %vm3203, %v3196, %v3200
        %v3205 = vand.u32 2147483647, %v2870
        %vm3206 = vcmp.eq.f32.partialorder %v3205, 8.507059e+37
        %v3207 = vand.u32 %v2870, 2147483648
        %v3208 = vor.u32 1.1754944e-38, %v3207
        %v3209 = vsel %vm3206, %v3208, %v3204
        %v3210 = vmul.f32 1.0, %v3209
        %v3211 = vrcp.pop %v2871
        %v3212 = vmul.f32 %v2871, %v3211
        %v3213 = vsub.f32 1.0, %v3212
        %v3214 = vmul.f32 %v3211, %v3213
        %v3215 = vadd.f32 %v3211, %v3214
        %vm3216 = vweird.f32 %v2871
        %vm3217 = vweird.f32 %v3211
        %vm3218 = vmor %vm3216, %vm3217
        %v3219 = vsel %vm3218, %v3211, %v3215
        %v3220 = vand.u32 2147483647, %v2871
        %vm3221 = vcmp.eq.f32.partialorder %v3220, 8.507059e+37
        %v3222 = vand.u32 %v2871, 2147483648
        %v3223 = vor.u32 1.1754944e-38, %v3222
        %v3224 = vsel %vm3221, %v3223, %v3219
        %v3225 = vmul.f32 1.0, %v3224
        %v3226 = vrcp.pop %v2872
        %v3227 = vmul.f32 %v2872, %v3226
        %v3228 = vsub.f32 1.0, %v3227
        %v3229 = vmul.f32 %v3226, %v3228
        %v3230 = vadd.f32 %v3226, %v3229
        %vm3231 = vweird.f32 %v2872
        %vm3232 = vweird.f32 %v3226
        %vm3233 = vmor %vm3231, %vm3232
        %v3234 = vsel %vm3233, %v3226, %v3230
        %v3235 = vand.u32 2147483647, %v2872
        %vm3236 = vcmp.eq.f32.partialorder %v3235, 8.507059e+37
        %v3237 = vand.u32 %v2872, 2147483648
        %v3238 = vor.u32 1.1754944e-38, %v3237
        %v3239 = vsel %vm3236, %v3238, %v3234
        %v3240 = vmul.f32 1.0, %v3239
        %v3241 = vrcp.pop %v2873
        %v3242 = vmul.f32 %v2873, %v3241
        %v3243 = vsub.f32 1.0, %v3242
        %v3244 = vmul.f32 %v3241, %v3243
        %v3245 = vadd.f32 %v3241, %v3244
        %vm3246 = vweird.f32 %v2873
        %vm3247 = vweird.f32 %v3241
        %vm3248 = vmor %vm3246, %vm3247
        %v3249 = vsel %vm3248, %v3241, %v3245
        %v3250 = vand.u32 2147483647, %v2873
        %vm3251 = vcmp.eq.f32.partialorder %v3250, 8.507059e+37
        %v3252 = vand.u32 %v2873, 2147483648
        %v3253 = vor.u32 1.1754944e-38, %v3252
        %v3254 = vsel %vm3251, %v3253, %v3249
        %v3255 = vmul.f32 1.0, %v3254
        %v3256 = vrcp.pop %v2874
        %v3257 = vmul.f32 %v2874, %v3256
        %v3258 = vsub.f32 1.0, %v3257
        %v3259 = vmul.f32 %v3256, %v3258
        %v3260 = vadd.f32 %v3256, %v3259
        %vm3261 = vweird.f32 %v2874
        %vm3262 = vweird.f32 %v3256
        %vm3263 = vmor %vm3261, %vm3262
        %v3264 = vsel %vm3263, %v3256, %v3260
        %v3265 = vand.u32 2147483647, %v2874
        %vm3266 = vcmp.eq.f32.partialorder %v3265, 8.507059e+37
        %v3267 = vand.u32 %v2874, 2147483648
        %v3268 = vor.u32 1.1754944e-38, %v3267
        %v3269 = vsel %vm3266, %v3268, %v3264
        %v3270 = vmul.f32 1.0, %v3269
        %v3271 = vrcp.pop %v2875
        %v3272 = vmul.f32 %v2875, %v3271
        %v3273 = vsub.f32 1.0, %v3272
        %v3274 = vmul.f32 %v3271, %v3273
        %v3275 = vadd.f32 %v3271, %v3274
        %vm3276 = vweird.f32 %v2875
        %vm3277 = vweird.f32 %v3271
        %vm3278 = vmor %vm3276, %vm3277
        %v3279 = vsel %vm3278, %v3271, %v3275
        %v3280 = vand.u32 2147483647, %v2875
        %vm3281 = vcmp.eq.f32.partialorder %v3280, 8.507059e+37
        %v3282 = vand.u32 %v2875, 2147483648
        %v3283 = vor.u32 1.1754944e-38, %v3282
        %v3284 = vsel %vm3281, %v3283, %v3279
        %v3285 = vmul.f32 1.0, %v3284
        %v3286 = vrcp.pop %v2876
        %v3287 = vmul.f32 %v2876, %v3286
        %v3288 = vsub.f32 1.0, %v3287
        %v3289 = vmul.f32 %v3286, %v3288
        %v3290 = vadd.f32 %v3286, %v3289
        %vm3291 = vweird.f32 %v2876
        %vm3292 = vweird.f32 %v3286
        %vm3293 = vmor %vm3291, %vm3292
        %v3294 = vsel %vm3293, %v3286, %v3290
        %v3295 = vand.u32 2147483647, %v2876
        %vm3296 = vcmp.eq.f32.partialorder %v3295, 8.507059e+37
        %v3297 = vand.u32 %v2876, 2147483648
        %v3298 = vor.u32 1.1754944e-38, %v3297
        %v3299 = vsel %vm3296, %v3298, %v3294
        %v3300 = vmul.f32 1.0, %v3299
        %v3301 = vrcp.pop %v2877
        %v3302 = vmul.f32 %v2877, %v3301
        %v3303 = vsub.f32 1.0, %v3302
        %v3304 = vmul.f32 %v3301, %v3303
        %v3305 = vadd.f32 %v3301, %v3304
        %vm3306 = vweird.f32 %v2877
        %vm3307 = vweird.f32 %v3301
        %vm3308 = vmor %vm3306, %vm3307
        %v3309 = vsel %vm3308, %v3301, %v3305
        %v3310 = vand.u32 2147483647, %v2877
        %vm3311 = vcmp.eq.f32.partialorder %v3310, 8.507059e+37
        %v3312 = vand.u32 %v2877, 2147483648
        %v3313 = vor.u32 1.1754944e-38, %v3312
        %v3314 = vsel %vm3311, %v3313, %v3309
        %v3315 = vmul.f32 1.0, %v3314
        %v3316 = vrcp.pop %v2878
        %v3317 = vmul.f32 %v2878, %v3316
        %v3318 = vsub.f32 1.0, %v3317
        %v3319 = vmul.f32 %v3316, %v3318
        %v3320 = vadd.f32 %v3316, %v3319
        %vm3321 = vweird.f32 %v2878
        %vm3322 = vweird.f32 %v3316
        %vm3323 = vmor %vm3321, %vm3322
        %v3324 = vsel %vm3323, %v3316, %v3320
        %v3325 = vand.u32 2147483647, %v2878
        %vm3326 = vcmp.eq.f32.partialorder %v3325, 8.507059e+37
        %v3327 = vand.u32 %v2878, 2147483648
        %v3328 = vor.u32 1.1754944e-38, %v3327
        %v3329 = vsel %vm3326, %v3328, %v3324
        %v3330 = vmul.f32 1.0, %v3329
        %v3331 = vrcp.pop %v2879
        %v3332 = vmul.f32 %v2879, %v3331
        %v3333 = vsub.f32 1.0, %v3332
        %v3334 = vmul.f32 %v3331, %v3333
        %v3335 = vadd.f32 %v3331, %v3334
        %vm3336 = vweird.f32 %v2879
        %vm3337 = vweird.f32 %v3331
        %vm3338 = vmor %vm3336, %vm3337
        %v3339 = vsel %vm3338, %v3331, %v3335
        %v3340 = vand.u32 2147483647, %v2879
        %vm3341 = vcmp.eq.f32.partialorder %v3340, 8.507059e+37
        %v3342 = vand.u32 %v2879, 2147483648
        %v3343 = vor.u32 1.1754944e-38, %v3342
        %v3344 = vsel %vm3341, %v3343, %v3339
        %v3345 = vmul.f32 1.0, %v3344
        %v3346 = vrcp.pop %v2880
        %v3347 = vmul.f32 %v2880, %v3346
        %v3348 = vsub.f32 1.0, %v3347
        %v3349 = vmul.f32 %v3346, %v3348
        %v3350 = vadd.f32 %v3346, %v3349
        %vm3351 = vweird.f32 %v2880
        %vm3352 = vweird.f32 %v3346
        %vm3353 = vmor %vm3351, %vm3352
        %v3354 = vsel %vm3353, %v3346, %v3350
        %v3355 = vand.u32 2147483647, %v2880
        %vm3356 = vcmp.eq.f32.partialorder %v3355, 8.507059e+37
        %v3357 = vand.u32 %v2880, 2147483648
        %v3358 = vor.u32 1.1754944e-38, %v3357
        %v3359 = vsel %vm3356, %v3358, %v3354
        %v3360 = vmul.f32 1.0, %v3359
        %v3361 = vmul.f32 %v2658, %v2895
        %v3362 = vmul.f32 %v2661, %v2910
        %v3363 = vmul.f32 %v2664, %v2925
        %v3364 = vmul.f32 %v2667, %v2940
        %v3365 = vmul.f32 %v2670, %v2955
        %v3366 = vmul.f32 %v2673, %v2970
        %v3367 = vmul.f32 %v2676, %v2985
        %v3368 = vmul.f32 %v2679, %v3000
        %v3369 = vmul.f32 %v2682, %v3015
        %v3370 = vmul.f32 %v2685, %v3030
        %v3371 = vmul.f32 %v2688, %v3045
        %v3372 = vmul.f32 %v2691, %v3060
        %v3373 = vmul.f32 %v2694, %v3075
        %v3374 = vmul.f32 %v2697, %v3090
        %v3375 = vmul.f32 %v2700, %v3105
        %v3376 = vmul.f32 %v2703, %v3120
        %v3377 = vmul.f32 %v2706, %v3135
        %v3378 = vmul.f32 %v2709, %v3150
        %v3379 = vmul.f32 %v2712, %v3165
        %v3380 = vmul.f32 %v2715, %v3180
        %v3381 = vmul.f32 %v2718, %v3195
        %v3382 = vmul.f32 %v2721, %v3210
        %v3383 = vmul.f32 %v2724, %v3225
        %v3384 = vmul.f32 %v2727, %v3240
        %v3385 = vmul.f32 %v2730, %v3255
        %v3386 = vmul.f32 %v2733, %v3270
        %v3387 = vmul.f32 %v2736, %v3285
        %v3388 = vmul.f32 %v2739, %v3300
        %v3389 = vmul.f32 %v2742, %v3315
        %v3390 = vmul.f32 %v2745, %v3330
        %v3391 = vmul.f32 %v2748, %v3345
        %v3392 = vmul.f32 %v2751, %v3360
        %v3393 = vld [vmem:[%s414] sm:$0xff]
        %v3394 = vld [vmem:[%s414 + $0x8] sm:$0xff]
        %v3395 = vld [vmem:[%s414 + $0x10] sm:$0xff]
        %v3396 = vld [vmem:[%s414 + $0x18] sm:$0xff]
        %v3397 = vld [vmem:[%s414 + $0x20] sm:$0xff]
        %v3398 = vld [vmem:[%s414 + $0x28] sm:$0xff]
        %v3399 = vld [vmem:[%s414 + $0x30] sm:$0xff]
        %v3400 = vld [vmem:[%s414 + $0x38] sm:$0xff]
        %v3401 = vld [vmem:[%s414 + $0x40] sm:$0xff]
        %v3402 = vld [vmem:[%s414 + $0x48] sm:$0xff]
        %v3403 = vld [vmem:[%s414 + $0x50] sm:$0xff]
        %v3404 = vld [vmem:[%s414 + $0x58] sm:$0xff]
        %v3405 = vld [vmem:[%s414 + $0x60] sm:$0xff]
        %v3406 = vld [vmem:[%s414 + $0x68] sm:$0xff]
        %v3407 = vld [vmem:[%s414 + $0x70] sm:$0xff]
        %v3408 = vld [vmem:[%s414 + $0x78] sm:$0xff]
        %3409 = vmatpush.msra.mxu0 %v3408
        %3410 = vmatpush.msra.mxu0 %v3407
        %3411 = vmatpush.msra.mxu0 %v3406
        %3412 = vmatpush.msra.mxu0 %v3405
        %3413 = vmatpush.msra.mxu0 %v3404
        %3414 = vmatpush.msra.mxu0 %v3403
        %3415 = vmatpush.msra.mxu0 %v3402
        %3416 = vmatpush.msra.mxu0 %v3401
        %3417 = vmatpush.msra.mxu0 %v3400
        %3418 = vmatpush.msra.mxu0 %v3399
        %3419 = vmatpush.msra.mxu0 %v3398
        %3420 = vmatpush.msra.mxu0 %v3397
        %3421 = vmatpush.msra.mxu0 %v3396
        %3422 = vmatpush.msra.mxu0 %v3395
        %3423 = vmatpush.msra.mxu0 %v3394
        %3424 = vmatpush.msra.mxu0 %v3393
        %3425 = vmatmul.f32.gmra.mxu0 %v426
        %v3426 = vpop.f32.mrf.mxu0
        %v3427 = vadd.f32 0.0, %v3426
        %3428 = vmatmul.f32.gmra.mxu0 %v427
        %v3429 = vpop.f32.mrf.mxu0
        %v3430 = vadd.f32 0.0, %v3429
        %3431 = vmatmul.f32.gmra.mxu0 %v428
        %v3432 = vpop.f32.mrf.mxu0
        %v3433 = vadd.f32 0.0, %v3432
        %3434 = vmatmul.f32.gmra.mxu0 %v429
        %v3435 = vpop.f32.mrf.mxu0
        %v3436 = vadd.f32 0.0, %v3435
        %3437 = vmatmul.f32.gmra.mxu0 %v430
        %v3438 = vpop.f32.mrf.mxu0
        %v3439 = vadd.f32 0.0, %v3438
        %3440 = vmatmul.f32.gmra.mxu0 %v431
        %v3441 = vpop.f32.mrf.mxu0
        %v3442 = vadd.f32 0.0, %v3441
        %3443 = vmatmul.f32.gmra.mxu0 %v432
        %v3444 = vpop.f32.mrf.mxu0
        %v3445 = vadd.f32 0.0, %v3444
        %3446 = vmatmul.f32.gmra.mxu0 %v433
        %v3447 = vpop.f32.mrf.mxu0
        %v3448 = vadd.f32 0.0, %v3447
        %3449 = vmatmul.f32.gmra.mxu0 %v434
        %v3450 = vpop.f32.mrf.mxu0
        %v3451 = vadd.f32 0.0, %v3450
        %3452 = vmatmul.f32.gmra.mxu0 %v435
        %v3453 = vpop.f32.mrf.mxu0
        %v3454 = vadd.f32 0.0, %v3453
        %3455 = vmatmul.f32.gmra.mxu0 %v436
        %v3456 = vpop.f32.mrf.mxu0
        %v3457 = vadd.f32 0.0, %v3456
        %3458 = vmatmul.f32.gmra.mxu0 %v437
        %v3459 = vpop.f32.mrf.mxu0
        %v3460 = vadd.f32 0.0, %v3459
        %3461 = vmatmul.f32.gmra.mxu0 %v438
        %v3462 = vpop.f32.mrf.mxu0
        %v3463 = vadd.f32 0.0, %v3462
        %3464 = vmatmul.f32.gmra.mxu0 %v439
        %v3465 = vpop.f32.mrf.mxu0
        %v3466 = vadd.f32 0.0, %v3465
        %3467 = vmatmul.f32.gmra.mxu0 %v440
        %v3468 = vpop.f32.mrf.mxu0
        %v3469 = vadd.f32 0.0, %v3468
        %3470 = vmatmul.f32.gmra.mxu0 %v441
        %v3471 = vpop.f32.mrf.mxu0
        %v3472 = vadd.f32 0.0, %v3471
        %3473 = vmatmul.f32.gmra.mxu0 %v442
        %v3474 = vpop.f32.mrf.mxu0
        %v3475 = vadd.f32 0.0, %v3474
        %3476 = vmatmul.f32.gmra.mxu0 %v443
        %v3477 = vpop.f32.mrf.mxu0
        %v3478 = vadd.f32 0.0, %v3477
        %3479 = vmatmul.f32.gmra.mxu0 %v444
        %v3480 = vpop.f32.mrf.mxu0
        %v3481 = vadd.f32 0.0, %v3480
        %3482 = vmatmul.f32.gmra.mxu0 %v445
        %v3483 = vpop.f32.mrf.mxu0
        %v3484 = vadd.f32 0.0, %v3483
        %3485 = vmatmul.f32.gmra.mxu0 %v446
        %v3486 = vpop.f32.mrf.mxu0
        %v3487 = vadd.f32 0.0, %v3486
        %3488 = vmatmul.f32.gmra.mxu0 %v447
        %v3489 = vpop.f32.mrf.mxu0
        %v3490 = vadd.f32 0.0, %v3489
        %3491 = vmatmul.f32.gmra.mxu0 %v448
        %v3492 = vpop.f32.mrf.mxu0
        %v3493 = vadd.f32 0.0, %v3492
        %3494 = vmatmul.f32.gmra.mxu0 %v449
        %v3495 = vpop.f32.mrf.mxu0
        %v3496 = vadd.f32 0.0, %v3495
        %3497 = vmatmul.f32.gmra.mxu0 %v450
        %v3498 = vpop.f32.mrf.mxu0
        %v3499 = vadd.f32 0.0, %v3498
        %3500 = vmatmul.f32.gmra.mxu0 %v451
        %v3501 = vpop.f32.mrf.mxu0
        %v3502 = vadd.f32 0.0, %v3501
        %3503 = vmatmul.f32.gmra.mxu0 %v452
        %v3504 = vpop.f32.mrf.mxu0
        %v3505 = vadd.f32 0.0, %v3504
        %3506 = vmatmul.f32.gmra.mxu0 %v453
        %v3507 = vpop.f32.mrf.mxu0
        %v3508 = vadd.f32 0.0, %v3507
        %3509 = vmatmul.f32.gmra.mxu0 %v454
        %v3510 = vpop.f32.mrf.mxu0
        %v3511 = vadd.f32 0.0, %v3510
        %3512 = vmatmul.f32.gmra.mxu0 %v455
        %v3513 = vpop.f32.mrf.mxu0
        %v3514 = vadd.f32 0.0, %v3513
        %3515 = vmatmul.f32.gmra.mxu0 %v456
        %v3516 = vpop.f32.mrf.mxu0
        %v3517 = vadd.f32 0.0, %v3516
        %3518 = vmatmul.f32.gmra.mxu0 %v457
        %v3519 = vpop.f32.mrf.mxu0
        %v3520 = vadd.f32 0.0, %v3519
        %3521 = vdwg.mxu0
        %v3522 = vmul.f32 %v3361, %v3427
        %v3523 = vmul.f32 %v3362, %v3430
        %v3524 = vmul.f32 %v3363, %v3433
        %v3525 = vmul.f32 %v3364, %v3436
        %v3526 = vmul.f32 %v3365, %v3439
        %v3527 = vmul.f32 %v3366, %v3442
        %v3528 = vmul.f32 %v3367, %v3445
        %v3529 = vmul.f32 %v3368, %v3448
        %v3530 = vmul.f32 %v3369, %v3451
        %v3531 = vmul.f32 %v3370, %v3454
        %v3532 = vmul.f32 %v3371, %v3457
        %v3533 = vmul.f32 %v3372, %v3460
        %v3534 = vmul.f32 %v3373, %v3463
        %v3535 = vmul.f32 %v3374, %v3466
        %v3536 = vmul.f32 %v3375, %v3469
        %v3537 = vmul.f32 %v3376, %v3472
        %v3538 = vmul.f32 %v3377, %v3475
        %v3539 = vmul.f32 %v3378, %v3478
        %v3540 = vmul.f32 %v3379, %v3481
        %v3541 = vmul.f32 %v3380, %v3484
        %v3542 = vmul.f32 %v3381, %v3487
        %v3543 = vmul.f32 %v3382, %v3490
        %v3544 = vmul.f32 %v3383, %v3493
        %v3545 = vmul.f32 %v3384, %v3496
        %v3546 = vmul.f32 %v3385, %v3499
        %v3547 = vmul.f32 %v3386, %v3502
        %v3548 = vmul.f32 %v3387, %v3505
        %v3549 = vmul.f32 %v3388, %v3508
        %v3550 = vmul.f32 %v3389, %v3511
        %v3551 = vmul.f32 %v3390, %v3514
        %v3552 = vmul.f32 %v3391, %v3517
        %v3553 = vmul.f32 %v3392, %v3520
        %v3554 = vld [vmem:[%s419] sm:$0xff]
        %v3555 = vld [vmem:[%s419 + $0x8] sm:$0xff]
        %v3556 = vld [vmem:[%s419 + $0x10] sm:$0xff]
        %v3557 = vld [vmem:[%s419 + $0x18] sm:$0xff]
        %v3558 = vld [vmem:[%s419 + $0x20] sm:$0xff]
        %v3559 = vld [vmem:[%s419 + $0x28] sm:$0xff]
        %v3560 = vld [vmem:[%s419 + $0x30] sm:$0xff]
        %v3561 = vld [vmem:[%s419 + $0x38] sm:$0xff]
        %v3562 = vld [vmem:[%s419 + $0x40] sm:$0xff]
        %v3563 = vld [vmem:[%s419 + $0x48] sm:$0xff]
        %v3564 = vld [vmem:[%s419 + $0x50] sm:$0xff]
        %v3565 = vld [vmem:[%s419 + $0x58] sm:$0xff]
        %v3566 = vld [vmem:[%s419 + $0x60] sm:$0xff]
        %v3567 = vld [vmem:[%s419 + $0x68] sm:$0xff]
        %v3568 = vld [vmem:[%s419 + $0x70] sm:$0xff]
        %v3569 = vld [vmem:[%s419 + $0x78] sm:$0xff]
        %3570 = vmatpush.msra.mxu0 %v3569
        %3571 = vmatpush.msra.mxu0 %v3568
        %3572 = vmatpush.msra.mxu0 %v3567
        %3573 = vmatpush.msra.mxu0 %v3566
        %3574 = vmatpush.msra.mxu0 %v3565
        %3575 = vmatpush.msra.mxu0 %v3564
        %3576 = vmatpush.msra.mxu0 %v3563
        %3577 = vmatpush.msra.mxu0 %v3562
        %3578 = vmatpush.msra.mxu0 %v3561
        %3579 = vmatpush.msra.mxu0 %v3560
        %3580 = vmatpush.msra.mxu0 %v3559
        %3581 = vmatpush.msra.mxu0 %v3558
        %3582 = vmatpush.msra.mxu0 %v3557
        %3583 = vmatpush.msra.mxu0 %v3556
        %3584 = vmatpush.msra.mxu0 %v3555
        %3585 = vmatpush.msra.mxu0 %v3554
        %3586 = vmatmul.f32.gmra.mxu0 %v3522
        %v3587 = vpop.f32.mrf.mxu0
        %v3588 = vadd.f32 0.0, %v3587
        %3589 = vmatmul.f32.gmra.mxu0 %v3523
        %v3590 = vpop.f32.mrf.mxu0
        %v3591 = vadd.f32 0.0, %v3590
        %3592 = vmatmul.f32.gmra.mxu0 %v3524
        %v3593 = vpop.f32.mrf.mxu0
        %v3594 = vadd.f32 0.0, %v3593
        %3595 = vmatmul.f32.gmra.mxu0 %v3525
        %v3596 = vpop.f32.mrf.mxu0
        %v3597 = vadd.f32 0.0, %v3596
        %3598 = vmatmul.f32.gmra.mxu0 %v3526
        %v3599 = vpop.f32.mrf.mxu0
        %v3600 = vadd.f32 0.0, %v3599
        %3601 = vmatmul.f32.gmra.mxu0 %v3527
        %v3602 = vpop.f32.mrf.mxu0
        %v3603 = vadd.f32 0.0, %v3602
        %3604 = vmatmul.f32.gmra.mxu0 %v3528
        %v3605 = vpop.f32.mrf.mxu0
        %v3606 = vadd.f32 0.0, %v3605
        %3607 = vmatmul.f32.gmra.mxu0 %v3529
        %v3608 = vpop.f32.mrf.mxu0
        %v3609 = vadd.f32 0.0, %v3608
        %3610 = vmatmul.f32.gmra.mxu0 %v3530
        %v3611 = vpop.f32.mrf.mxu0
        %v3612 = vadd.f32 0.0, %v3611
        %3613 = vmatmul.f32.gmra.mxu0 %v3531
        %v3614 = vpop.f32.mrf.mxu0
        %v3615 = vadd.f32 0.0, %v3614
        %3616 = vmatmul.f32.gmra.mxu0 %v3532
        %v3617 = vpop.f32.mrf.mxu0
        %v3618 = vadd.f32 0.0, %v3617
        %3619 = vmatmul.f32.gmra.mxu0 %v3533
        %v3620 = vpop.f32.mrf.mxu0
        %v3621 = vadd.f32 0.0, %v3620
        %3622 = vmatmul.f32.gmra.mxu0 %v3534
        %v3623 = vpop.f32.mrf.mxu0
        %v3624 = vadd.f32 0.0, %v3623
        %3625 = vmatmul.f32.gmra.mxu0 %v3535
        %v3626 = vpop.f32.mrf.mxu0
        %v3627 = vadd.f32 0.0, %v3626
        %3628 = vmatmul.f32.gmra.mxu0 %v3536
        %v3629 = vpop.f32.mrf.mxu0
        %v3630 = vadd.f32 0.0, %v3629
        %3631 = vmatmul.f32.gmra.mxu0 %v3537
        %v3632 = vpop.f32.mrf.mxu0
        %v3633 = vadd.f32 0.0, %v3632
        %3634 = vmatmul.f32.gmra.mxu0 %v3538
        %v3635 = vpop.f32.mrf.mxu0
        %v3636 = vadd.f32 0.0, %v3635
        %3637 = vmatmul.f32.gmra.mxu0 %v3539
        %v3638 = vpop.f32.mrf.mxu0
        %v3639 = vadd.f32 0.0, %v3638
        %3640 = vmatmul.f32.gmra.mxu0 %v3540
        %v3641 = vpop.f32.mrf.mxu0
        %v3642 = vadd.f32 0.0, %v3641
        %3643 = vmatmul.f32.gmra.mxu0 %v3541
        %v3644 = vpop.f32.mrf.mxu0
        %v3645 = vadd.f32 0.0, %v3644
        %3646 = vmatmul.f32.gmra.mxu0 %v3542
        %v3647 = vpop.f32.mrf.mxu0
        %v3648 = vadd.f32 0.0, %v3647
        %3649 = vmatmul.f32.gmra.mxu0 %v3543
        %v3650 = vpop.f32.mrf.mxu0
        %v3651 = vadd.f32 0.0, %v3650
        %3652 = vmatmul.f32.gmra.mxu0 %v3544
        %v3653 = vpop.f32.mrf.mxu0
        %v3654 = vadd.f32 0.0, %v3653
        %3655 = vmatmul.f32.gmra.mxu0 %v3545
        %v3656 = vpop.f32.mrf.mxu0
        %v3657 = vadd.f32 0.0, %v3656
        %3658 = vmatmul.f32.gmra.mxu0 %v3546
        %v3659 = vpop.f32.mrf.mxu0
        %v3660 = vadd.f32 0.0, %v3659
        %3661 = vmatmul.f32.gmra.mxu0 %v3547
        %v3662 = vpop.f32.mrf.mxu0
        %v3663 = vadd.f32 0.0, %v3662
        %3664 = vmatmul.f32.gmra.mxu0 %v3548
        %v3665 = vpop.f32.mrf.mxu0
        %v3666 = vadd.f32 0.0, %v3665
        %3667 = vmatmul.f32.gmra.mxu0 %v3549
        %v3668 = vpop.f32.mrf.mxu0
        %v3669 = vadd.f32 0.0, %v3668
        %3670 = vmatmul.f32.gmra.mxu0 %v3550
        %v3671 = vpop.f32.mrf.mxu0
        %v3672 = vadd.f32 0.0, %v3671
        %3673 = vmatmul.f32.gmra.mxu0 %v3551
        %v3674 = vpop.f32.mrf.mxu0
        %v3675 = vadd.f32 0.0, %v3674
        %3676 = vmatmul.f32.gmra.mxu0 %v3552
        %v3677 = vpop.f32.mrf.mxu0
        %v3678 = vadd.f32 0.0, %v3677
        %3679 = vmatmul.f32.gmra.mxu0 %v3553
        %v3680 = vpop.f32.mrf.mxu0
        %v3681 = vadd.f32 0.0, %v3680
        %3682 = vdwg.mxu0
        %v3683 = vld [vmem:[#allocation2] sm:$0xff]
        %v3684 = vld [vmem:[#allocation2 + $0x8] sm:$0xff]
        %v3685 = vld [vmem:[#allocation2 + $0x10] sm:$0xff]
        %v3686 = vld [vmem:[#allocation2 + $0x18] sm:$0xff]
        %v3687 = vld [vmem:[#allocation2 + $0x20] sm:$0xff]
        %v3688 = vld [vmem:[#allocation2 + $0x28] sm:$0xff]
        %v3689 = vld [vmem:[#allocation2 + $0x30] sm:$0xff]
        %v3690 = vld [vmem:[#allocation2 + $0x38] sm:$0xff]
        %v3691 = vld [vmem:[#allocation2 + $0x40] sm:$0xff]
        %v3692 = vld [vmem:[#allocation2 + $0x48] sm:$0xff]
        %v3693 = vld [vmem:[#allocation2 + $0x50] sm:$0xff]
        %v3694 = vld [vmem:[#allocation2 + $0x58] sm:$0xff]
        %v3695 = vld [vmem:[#allocation2 + $0x60] sm:$0xff]
        %v3696 = vld [vmem:[#allocation2 + $0x68] sm:$0xff]
        %v3697 = vld [vmem:[#allocation2 + $0x70] sm:$0xff]
        %v3698 = vld [vmem:[#allocation2 + $0x78] sm:$0xff]
        %v3699 = vld [vmem:[#allocation2 + $0x80] sm:$0xff]
        %v3700 = vld [vmem:[#allocation2 + $0x88] sm:$0xff]
        %v3701 = vld [vmem:[#allocation2 + $0x90] sm:$0xff]
        %v3702 = vld [vmem:[#allocation2 + $0x98] sm:$0xff]
        %v3703 = vld [vmem:[#allocation2 + $0xa0] sm:$0xff]
        %v3704 = vld [vmem:[#allocation2 + $0xa8] sm:$0xff]
        %v3705 = vld [vmem:[#allocation2 + $0xb0] sm:$0xff]
        %v3706 = vld [vmem:[#allocation2 + $0xb8] sm:$0xff]
        %v3707 = vld [vmem:[#allocation2 + $0xc0] sm:$0xff]
        %v3708 = vld [vmem:[#allocation2 + $0xc8] sm:$0xff]
        %v3709 = vld [vmem:[#allocation2 + $0xd0] sm:$0xff]
        %v3710 = vld [vmem:[#allocation2 + $0xd8] sm:$0xff]
        %v3711 = vld [vmem:[#allocation2 + $0xe0] sm:$0xff]
        %v3712 = vld [vmem:[#allocation2 + $0xe8] sm:$0xff]
        %v3713 = vld [vmem:[#allocation2 + $0xf0] sm:$0xff]
        %v3714 = vld [vmem:[#allocation2 + $0xf8] sm:$0xff]
        %v3715 = vld [vmem:[%s403] sm:$0xff]
        %v3716 = vld [vmem:[%s403 + $0x8] sm:$0xff]
        %v3717 = vld [vmem:[%s403 + $0x10] sm:$0xff]
        %v3718 = vld [vmem:[%s403 + $0x18] sm:$0xff]
        %v3719 = vld [vmem:[%s403 + $0x20] sm:$0xff]
        %v3720 = vld [vmem:[%s403 + $0x28] sm:$0xff]
        %v3721 = vld [vmem:[%s403 + $0x30] sm:$0xff]
        %v3722 = vld [vmem:[%s403 + $0x38] sm:$0xff]
        %v3723 = vld [vmem:[%s403 + $0x40] sm:$0xff]
        %v3724 = vld [vmem:[%s403 + $0x48] sm:$0xff]
        %v3725 = vld [vmem:[%s403 + $0x50] sm:$0xff]
        %v3726 = vld [vmem:[%s403 + $0x58] sm:$0xff]
        %v3727 = vld [vmem:[%s403 + $0x60] sm:$0xff]
        %v3728 = vld [vmem:[%s403 + $0x68] sm:$0xff]
        %v3729 = vld [vmem:[%s403 + $0x70] sm:$0xff]
        %v3730 = vld [vmem:[%s403 + $0x78] sm:$0xff]
        %v3731 = vld [vmem:[%s403 + $0x80] sm:$0xff]
        %v3732 = vld [vmem:[%s403 + $0x88] sm:$0xff]
        %v3733 = vld [vmem:[%s403 + $0x90] sm:$0xff]
        %v3734 = vld [vmem:[%s403 + $0x98] sm:$0xff]
        %v3735 = vld [vmem:[%s403 + $0xa0] sm:$0xff]
        %v3736 = vld [vmem:[%s403 + $0xa8] sm:$0xff]
        %v3737 = vld [vmem:[%s403 + $0xb0] sm:$0xff]
        %v3738 = vld [vmem:[%s403 + $0xb8] sm:$0xff]
        %v3739 = vld [vmem:[%s403 + $0xc0] sm:$0xff]
        %v3740 = vld [vmem:[%s403 + $0xc8] sm:$0xff]
        %v3741 = vld [vmem:[%s403 + $0xd0] sm:$0xff]
        %v3742 = vld [vmem:[%s403 + $0xd8] sm:$0xff]
        %v3743 = vld [vmem:[%s403 + $0xe0] sm:$0xff]
        %v3744 = vld [vmem:[%s403 + $0xe8] sm:$0xff]
        %v3745 = vld [vmem:[%s403 + $0xf0] sm:$0xff]
        %v3746 = vld [vmem:[%s403 + $0xf8] sm:$0xff]
        %3748 = vset.pattern.permute.xlu0 0
        %3749 = vperm.xlu0 %3748, %v3715
        %v3750 = vpop.permute.xlu0 %3749
        %3753 = vset.pattern.permute.xlu0 0
        %3754 = vperm.xlu0 %3753, %v3716
        %v3755 = vpop.permute.xlu0 %3754
        %3758 = vset.pattern.permute.xlu0 0
        %3759 = vperm.xlu0 %3758, %v3717
        %v3760 = vpop.permute.xlu0 %3759
        %3763 = vset.pattern.permute.xlu0 0
        %3764 = vperm.xlu0 %3763, %v3718
        %v3765 = vpop.permute.xlu0 %3764
        %3768 = vset.pattern.permute.xlu0 0
        %3769 = vperm.xlu0 %3768, %v3719
        %v3770 = vpop.permute.xlu0 %3769
        %3773 = vset.pattern.permute.xlu0 0
        %3774 = vperm.xlu0 %3773, %v3720
        %v3775 = vpop.permute.xlu0 %3774
        %3778 = vset.pattern.permute.xlu0 0
        %3779 = vperm.xlu0 %3778, %v3721
        %v3780 = vpop.permute.xlu0 %3779
        %3783 = vset.pattern.permute.xlu0 0
        %3784 = vperm.xlu0 %3783, %v3722
        %v3785 = vpop.permute.xlu0 %3784
        %3788 = vset.pattern.permute.xlu0 0
        %3789 = vperm.xlu0 %3788, %v3723
        %v3790 = vpop.permute.xlu0 %3789
        %3793 = vset.pattern.permute.xlu0 0
        %3794 = vperm.xlu0 %3793, %v3724
        %v3795 = vpop.permute.xlu0 %3794
        %3798 = vset.pattern.permute.xlu0 0
        %3799 = vperm.xlu0 %3798, %v3725
        %v3800 = vpop.permute.xlu0 %3799
        %3803 = vset.pattern.permute.xlu0 0
        %3804 = vperm.xlu0 %3803, %v3726
        %v3805 = vpop.permute.xlu0 %3804
        %3808 = vset.pattern.permute.xlu0 0
        %3809 = vperm.xlu0 %3808, %v3727
        %v3810 = vpop.permute.xlu0 %3809
        %3813 = vset.pattern.permute.xlu0 0
        %3814 = vperm.xlu0 %3813, %v3728
        %v3815 = vpop.permute.xlu0 %3814
        %3818 = vset.pattern.permute.xlu0 0
        %3819 = vperm.xlu0 %3818, %v3729
        %v3820 = vpop.permute.xlu0 %3819
        %3823 = vset.pattern.permute.xlu0 0
        %3824 = vperm.xlu0 %3823, %v3730
        %v3825 = vpop.permute.xlu0 %3824
        %3828 = vset.pattern.permute.xlu0 0
        %3829 = vperm.xlu0 %3828, %v3731
        %v3830 = vpop.permute.xlu0 %3829
        %3833 = vset.pattern.permute.xlu0 0
        %3834 = vperm.xlu0 %3833, %v3732
        %v3835 = vpop.permute.xlu0 %3834
        %3838 = vset.pattern.permute.xlu0 0
        %3839 = vperm.xlu0 %3838, %v3733
        %v3840 = vpop.permute.xlu0 %3839
        %3843 = vset.pattern.permute.xlu0 0
        %3844 = vperm.xlu0 %3843, %v3734
        %v3845 = vpop.permute.xlu0 %3844
        %3848 = vset.pattern.permute.xlu0 0
        %3849 = vperm.xlu0 %3848, %v3735
        %v3850 = vpop.permute.xlu0 %3849
        %3853 = vset.pattern.permute.xlu0 0
        %3854 = vperm.xlu0 %3853, %v3736
        %v3855 = vpop.permute.xlu0 %3854
        %3858 = vset.pattern.permute.xlu0 0
        %3859 = vperm.xlu0 %3858, %v3737
        %v3860 = vpop.permute.xlu0 %3859
        %3863 = vset.pattern.permute.xlu0 0
        %3864 = vperm.xlu0 %3863, %v3738
        %v3865 = vpop.permute.xlu0 %3864
        %3868 = vset.pattern.permute.xlu0 0
        %3869 = vperm.xlu0 %3868, %v3739
        %v3870 = vpop.permute.xlu0 %3869
        %3873 = vset.pattern.permute.xlu0 0
        %3874 = vperm.xlu0 %3873, %v3740
        %v3875 = vpop.permute.xlu0 %3874
        %3878 = vset.pattern.permute.xlu0 0
        %3879 = vperm.xlu0 %3878, %v3741
        %v3880 = vpop.permute.xlu0 %3879
        %3883 = vset.pattern.permute.xlu0 0
        %3884 = vperm.xlu0 %3883, %v3742
        %v3885 = vpop.permute.xlu0 %3884
        %3888 = vset.pattern.permute.xlu0 0
        %3889 = vperm.xlu0 %3888, %v3743
        %v3890 = vpop.permute.xlu0 %3889
        %3893 = vset.pattern.permute.xlu0 0
        %3894 = vperm.xlu0 %3893, %v3744
        %v3895 = vpop.permute.xlu0 %3894
        %3898 = vset.pattern.permute.xlu0 0
        %3899 = vperm.xlu0 %3898, %v3745
        %v3900 = vpop.permute.xlu0 %3899
        %3903 = vset.pattern.permute.xlu0 0
        %3904 = vperm.xlu0 %3903, %v3746
        %v3905 = vpop.permute.xlu0 %3904
        %v3907 = vmul.f32 %v3750, %v3588
        %v3908 = vmul.f32 %v3755, %v3591
        %v3909 = vmul.f32 %v3760, %v3594
        %v3910 = vmul.f32 %v3765, %v3597
        %v3911 = vmul.f32 %v3770, %v3600
        %v3912 = vmul.f32 %v3775, %v3603
        %v3913 = vmul.f32 %v3780, %v3606
        %v3914 = vmul.f32 %v3785, %v3609
        %v3915 = vmul.f32 %v3790, %v3612
        %v3916 = vmul.f32 %v3795, %v3615
        %v3917 = vmul.f32 %v3800, %v3618
        %v3918 = vmul.f32 %v3805, %v3621
        %v3919 = vmul.f32 %v3810, %v3624
        %v3920 = vmul.f32 %v3815, %v3627
        %v3921 = vmul.f32 %v3820, %v3630
        %v3922 = vmul.f32 %v3825, %v3633
        %v3923 = vmul.f32 %v3830, %v3636
        %v3924 = vmul.f32 %v3835, %v3639
        %v3925 = vmul.f32 %v3840, %v3642
        %v3926 = vmul.f32 %v3845, %v3645
        %v3927 = vmul.f32 %v3850, %v3648
        %v3928 = vmul.f32 %v3855, %v3651
        %v3929 = vmul.f32 %v3860, %v3654
        %v3930 = vmul.f32 %v3865, %v3657
        %v3931 = vmul.f32 %v3870, %v3660
        %v3932 = vmul.f32 %v3875, %v3663
        %v3933 = vmul.f32 %v3880, %v3666
        %v3934 = vmul.f32 %v3885, %v3669
        %v3935 = vmul.f32 %v3890, %v3672
        %v3936 = vmul.f32 %v3895, %v3675
        %v3937 = vmul.f32 %v3900, %v3678
        %v3938 = vmul.f32 %v3905, %v3681
        %v3939 = vadd.f32 %v3683, %v3907
        %v3940 = vadd.f32 %v3684, %v3908
        %v3941 = vadd.f32 %v3685, %v3909
        %v3942 = vadd.f32 %v3686, %v3910
        %v3943 = vadd.f32 %v3687, %v3911
        %v3944 = vadd.f32 %v3688, %v3912
        %v3945 = vadd.f32 %v3689, %v3913
        %v3946 = vadd.f32 %v3690, %v3914
        %v3947 = vadd.f32 %v3691, %v3915
        %v3948 = vadd.f32 %v3692, %v3916
        %v3949 = vadd.f32 %v3693, %v3917
        %v3950 = vadd.f32 %v3694, %v3918
        %v3951 = vadd.f32 %v3695, %v3919
        %v3952 = vadd.f32 %v3696, %v3920
        %v3953 = vadd.f32 %v3697, %v3921
        %v3954 = vadd.f32 %v3698, %v3922
        %v3955 = vadd.f32 %v3699, %v3923
        %v3956 = vadd.f32 %v3700, %v3924
        %v3957 = vadd.f32 %v3701, %v3925
        %v3958 = vadd.f32 %v3702, %v3926
        %v3959 = vadd.f32 %v3703, %v3927
        %v3960 = vadd.f32 %v3704, %v3928
        %v3961 = vadd.f32 %v3705, %v3929
        %v3962 = vadd.f32 %v3706, %v3930
        %v3963 = vadd.f32 %v3707, %v3931
        %v3964 = vadd.f32 %v3708, %v3932
        %v3965 = vadd.f32 %v3709, %v3933
        %v3966 = vadd.f32 %v3710, %v3934
        %v3967 = vadd.f32 %v3711, %v3935
        %v3968 = vadd.f32 %v3712, %v3936
        %v3969 = vadd.f32 %v3713, %v3937
        %v3970 = vadd.f32 %v3714, %v3938
        %3971 = vst [vmem:[#allocation2] sm:$0xff] %v3939
        %3972 = vst [vmem:[#allocation2 + $0x8] sm:$0xff] %v3940
        %3973 = vst [vmem:[#allocation2 + $0x10] sm:$0xff] %v3941
        %3974 = vst [vmem:[#allocation2 + $0x18] sm:$0xff] %v3942
        %3975 = vst [vmem:[#allocation2 + $0x20] sm:$0xff] %v3943
        %3976 = vst [vmem:[#allocation2 + $0x28] sm:$0xff] %v3944
        %3977 = vst [vmem:[#allocation2 + $0x30] sm:$0xff] %v3945
        %3978 = vst [vmem:[#allocation2 + $0x38] sm:$0xff] %v3946
        %3979 = vst [vmem:[#allocation2 + $0x40] sm:$0xff] %v3947
        %3980 = vst [vmem:[#allocation2 + $0x48] sm:$0xff] %v3948
        %3981 = vst [vmem:[#allocation2 + $0x50] sm:$0xff] %v3949
        %3982 = vst [vmem:[#allocation2 + $0x58] sm:$0xff] %v3950
        %3983 = vst [vmem:[#allocation2 + $0x60] sm:$0xff] %v3951
        %3984 = vst [vmem:[#allocation2 + $0x68] sm:$0xff] %v3952
        %3985 = vst [vmem:[#allocation2 + $0x70] sm:$0xff] %v3953
        %3986 = vst [vmem:[#allocation2 + $0x78] sm:$0xff] %v3954
        %3987 = vst [vmem:[#allocation2 + $0x80] sm:$0xff] %v3955
        %3988 = vst [vmem:[#allocation2 + $0x88] sm:$0xff] %v3956
        %3989 = vst [vmem:[#allocation2 + $0x90] sm:$0xff] %v3957
        %3990 = vst [vmem:[#allocation2 + $0x98] sm:$0xff] %v3958
        %3991 = vst [vmem:[#allocation2 + $0xa0] sm:$0xff] %v3959
        %3992 = vst [vmem:[#allocation2 + $0xa8] sm:$0xff] %v3960
        %3993 = vst [vmem:[#allocation2 + $0xb0] sm:$0xff] %v3961
        %3994 = vst [vmem:[#allocation2 + $0xb8] sm:$0xff] %v3962
        %3995 = vst [vmem:[#allocation2 + $0xc0] sm:$0xff] %v3963
        %3996 = vst [vmem:[#allocation2 + $0xc8] sm:$0xff] %v3964
        %3997 = vst [vmem:[#allocation2 + $0xd0] sm:$0xff] %v3965
        %3998 = vst [vmem:[#allocation2 + $0xd8] sm:$0xff] %v3966
        %3999 = vst [vmem:[#allocation2 + $0xe0] sm:$0xff] %v3967
        %4000 = vst [vmem:[#allocation2 + $0xe8] sm:$0xff] %v3968
        %4001 = vst [vmem:[#allocation2 + $0xf0] sm:$0xff] %v3969
        %4002 = vst [vmem:[#allocation2 + $0xf8] sm:$0xff] %v3970
      $region60: #{moeff_forward.4} parent=51 // pred_fallthru
        _
      %p4003 = scmp.eq.s32.totalorder %s33, 7
      // Predicated region
      $region61: #{moeff_forward.4} parent=51 // pred_check
        %p4004 = pneg %p4003
      $region62: #{moeff_forward.4} parent=51 // pred_check_branch
        %4006 = sbr.rel (%p4004) target = $region64
      $region63: #{moeff_forward.4} parent=51 // pred_region
        %v4007 = vld [vmem:[#allocation2] sm:$0xff]
        %v4008 = vld [vmem:[#allocation2 + $0x8] sm:$0xff]
        %v4009 = vld [vmem:[#allocation2 + $0x10] sm:$0xff]
        %v4010 = vld [vmem:[#allocation2 + $0x18] sm:$0xff]
        %v4011 = vld [vmem:[#allocation2 + $0x20] sm:$0xff]
        %v4012 = vld [vmem:[#allocation2 + $0x28] sm:$0xff]
        %v4013 = vld [vmem:[#allocation2 + $0x30] sm:$0xff]
        %v4014 = vld [vmem:[#allocation2 + $0x38] sm:$0xff]
        %v4015 = vld [vmem:[#allocation2 + $0x40] sm:$0xff]
        %v4016 = vld [vmem:[#allocation2 + $0x48] sm:$0xff]
        %v4017 = vld [vmem:[#allocation2 + $0x50] sm:$0xff]
        %v4018 = vld [vmem:[#allocation2 + $0x58] sm:$0xff]
        %v4019 = vld [vmem:[#allocation2 + $0x60] sm:$0xff]
        %v4020 = vld [vmem:[#allocation2 + $0x68] sm:$0xff]
        %v4021 = vld [vmem:[#allocation2 + $0x70] sm:$0xff]
        %v4022 = vld [vmem:[#allocation2 + $0x78] sm:$0xff]
        %v4023 = vld [vmem:[#allocation2 + $0x80] sm:$0xff]
        %v4024 = vld [vmem:[#allocation2 + $0x88] sm:$0xff]
        %v4025 = vld [vmem:[#allocation2 + $0x90] sm:$0xff]
        %v4026 = vld [vmem:[#allocation2 + $0x98] sm:$0xff]
        %v4027 = vld [vmem:[#allocation2 + $0xa0] sm:$0xff]
        %v4028 = vld [vmem:[#allocation2 + $0xa8] sm:$0xff]
        %v4029 = vld [vmem:[#allocation2 + $0xb0] sm:$0xff]
        %v4030 = vld [vmem:[#allocation2 + $0xb8] sm:$0xff]
        %v4031 = vld [vmem:[#allocation2 + $0xc0] sm:$0xff]
        %v4032 = vld [vmem:[#allocation2 + $0xc8] sm:$0xff]
        %v4033 = vld [vmem:[#allocation2 + $0xd0] sm:$0xff]
        %v4034 = vld [vmem:[#allocation2 + $0xd8] sm:$0xff]
        %v4035 = vld [vmem:[#allocation2 + $0xe0] sm:$0xff]
        %v4036 = vld [vmem:[#allocation2 + $0xe8] sm:$0xff]
        %v4037 = vld [vmem:[#allocation2 + $0xf0] sm:$0xff]
        %v4038 = vld [vmem:[#allocation2 + $0xf8] sm:$0xff]
        %4039 = vst [vmem:[%s424] sm:$0xff] %v4007
        %4040 = vst [vmem:[%s424 + $0x8] sm:$0xff] %v4008
        %4041 = vst [vmem:[%s424 + $0x10] sm:$0xff] %v4009
        %4042 = vst [vmem:[%s424 + $0x18] sm:$0xff] %v4010
        %4043 = vst [vmem:[%s424 + $0x20] sm:$0xff] %v4011
        %4044 = vst [vmem:[%s424 + $0x28] sm:$0xff] %v4012
        %4045 = vst [vmem:[%s424 + $0x30] sm:$0xff] %v4013
        %4046 = vst [vmem:[%s424 + $0x38] sm:$0xff] %v4014
        %4047 = vst [vmem:[%s424 + $0x40] sm:$0xff] %v4015
        %4048 = vst [vmem:[%s424 + $0x48] sm:$0xff] %v4016
        %4049 = vst [vmem:[%s424 + $0x50] sm:$0xff] %v4017
        %4050 = vst [vmem:[%s424 + $0x58] sm:$0xff] %v4018
        %4051 = vst [vmem:[%s424 + $0x60] sm:$0xff] %v4019
        %4052 = vst [vmem:[%s424 + $0x68] sm:$0xff] %v4020
        %4053 = vst [vmem:[%s424 + $0x70] sm:$0xff] %v4021
        %4054 = vst [vmem:[%s424 + $0x78] sm:$0xff] %v4022
        %4055 = vst [vmem:[%s424 + $0x80] sm:$0xff] %v4023
        %4056 = vst [vmem:[%s424 + $0x88] sm:$0xff] %v4024
        %4057 = vst [vmem:[%s424 + $0x90] sm:$0xff] %v4025
        %4058 = vst [vmem:[%s424 + $0x98] sm:$0xff] %v4026
        %4059 = vst [vmem:[%s424 + $0xa0] sm:$0xff] %v4027
        %4060 = vst [vmem:[%s424 + $0xa8] sm:$0xff] %v4028
        %4061 = vst [vmem:[%s424 + $0xb0] sm:$0xff] %v4029
        %4062 = vst [vmem:[%s424 + $0xb8] sm:$0xff] %v4030
        %4063 = vst [vmem:[%s424 + $0xc0] sm:$0xff] %v4031
        %4064 = vst [vmem:[%s424 + $0xc8] sm:$0xff] %v4032
        %4065 = vst [vmem:[%s424 + $0xd0] sm:$0xff] %v4033
        %4066 = vst [vmem:[%s424 + $0xd8] sm:$0xff] %v4034
        %4067 = vst [vmem:[%s424 + $0xe0] sm:$0xff] %v4035
        %4068 = vst [vmem:[%s424 + $0xe8] sm:$0xff] %v4036
        %4069 = vst [vmem:[%s424 + $0xf0] sm:$0xff] %v4037
        %4070 = vst [vmem:[%s424 + $0xf8] sm:$0xff] %v4038
      $region64: #{moeff_forward.4} parent=51 // pred_fallthru
        _
      %s4071 = smul.u32 32, %s32
      %p4072 = scmp.lt.s32.totalorder %s4071, 63
      %s4073 = scalar_select %p4072, %s4071, 63
      %s4074 = smul.addr %s4073, 8
      %s4075 = scalar_lea.vmem %s9, %s4074
      // Predicated region
      $region65: #{moeff_forward.4} parent=51 // pred_check
        %p4076 = pneg %p253
      $region66: #{moeff_forward.4} parent=51 // pred_check_branch
        %4078 = sbr.rel (%p4076) target = $region68
      $region67: #{moeff_forward.4} parent=51 // pred_region
        %s4079 = smul.u32 32, %s32
      $region68: #{moeff_forward.4} parent=51 // pred_fallthru
        _
    $region52: #{moeff_forward.4} parent=5 // pred_fallthru
      _
    %p4080 = scmp.le.s32.totalorder 2, %s23
    // Predicated region
    $region69: #{moeff_forward.4} parent=5 // pred_check
      %p4081 = pneg %p4080
    $region70: #{moeff_forward.4} parent=5 // pred_check_branch
      %4083 = sbr.rel (%p4081) target = $region72
    $region71: #{moeff_forward.4} parent=5 // pred_region
      %s4084 = ssub.s32 %s23, 2
      // Predicated region
      $region73: #{moeff_forward.4} parent=71 // pred_check
        %p4085 = pneg %p259
      $region74: #{moeff_forward.4} parent=71 // pred_check_branch
        %4087 = sbr.rel (%p4085) target = $region76
      $region75: #{moeff_forward.4} parent=71 // pred_region
        %s4088 = smul.u32 32, %s34
        %p4089 = scmp.lt.s32.totalorder %s4088, 63
        %s4090 = scalar_select %p4089, %s4088, 63
        %s4091 = smul.addr %s4090, 8
        %s4092 = scalar_lea.vmem %s9, %s4091
      $region76: #{moeff_forward.4} parent=71 // pred_fallthru
        _
    $region72: #{moeff_forward.4} parent=5 // pred_fallthru
      _
  $region6: #{moeff_forward.4} parent=0 // loop_footer
    %s27 = sadd.s32 1, %s23
  $region7: #{moeff_forward.4} parent=0 // loop_footer_branch
    %22 = sbr.rel target = $region3
  $region8: #{moeff_forward.4} parent=0 // loop_exit
    _

</llo_original>
